<compile_context>
chip_gen: v7x
topology: tpu7x:2x2x1
jax: 0.10.0
libtpu: 0.0.40
codegen_flags: <defaults>
</compile_context>

<pallas_src>
import math
from functools import partial

import jax
import jax.numpy as jnp
from jax import lax
from jax.experimental import pallas as pl
from jax.experimental.pallas import tpu as pltpu


# bf16 matmul operands (f32 accumulate) for MXU peak on v5e/v6e/v7x; set to
# jnp.float32 to match the PyTorch reference numerics exactly.
MATMUL_DTYPE = jnp.bfloat16

# Large finite negative (avoids inf - inf -> NaN on masked score rows).
NEG_INF = -1e30

# Vocab-projection tiles (multiples of 256 for the v6e/v7x 256-wide MXU; also
# multiples of 128 for v5e).
TM_OUT, TN_OUT, TK_OUT = 256, 256, 512
# If the whole gridless linear fits in this budget, skip the tiled path.
_GRIDLESS_LINEAR_BYTES = 6 * 1024 * 1024

VMEM_SPEC = pl.BlockSpec(memory_space=pltpu.MemorySpace.VMEM)


def _const_spec(arr):
    """Full-array block, constant across the batch grid (weights / biases)."""
    nd = arr.ndim
    return pl.BlockSpec(arr.shape, lambda i, _nd=nd: (0,) * _nd)


def _round_up(x, m):
    return ((x + m - 1) // m) * m


# --------------------------- in-kernel helpers -------------------------------

def _add_layernorm(x, y, gamma, beta):
    # LayerNorm(x + y), eps = 1e-5 (PyTorch default), biased variance. f32 math.
    h = x + y
    mu = jnp.mean(h, axis=-1, keepdims=True)
    var = jnp.mean(jnp.square(h - mu), axis=-1, keepdims=True)
    return (h - mu) * lax.rsqrt(var + 1e-5) * gamma + beta


def _causal_mha(x, wqkv_h, bqkv_h, wp_h, bp, num_heads):
    """Head-batched causal self-attention on one (S, E) slice.

    wqkv_h: (H, E, 3*dh) MATMUL_DTYPE   bqkv_h: (H, 1, 3*dh) f32
    wp_h:   (H, dh, E)   MATMUL_DTYPE   bp:     (1, E)       f32
    Returns the pre-residual attention output, (S, E) f32.

    All matmuls are batched over the head axis (one MXU stream each); no
    in-kernel reshape/transpose/concatenate is required because the weights
    were pre-arranged per head outside the kernel.
    """
    s_len, e = x.shape
    dh = e // num_heads
    scale = 1.0 / math.sqrt(dh)

    xb = jnp.broadcast_to(x.astype(MATMUL_DTYPE)[None], (num_heads, s_len, e))
    # Fused per-head QKV projection: 'hse,hek->hsk'  -> (H, S, 3*dh), f32 + bias.
    qkv = lax.dot_general(xb, wqkv_h, (((2,), (1,)), ((0,), (0,))),
                          preferred_element_type=jnp.float32) + bqkv_h
    q = qkv[:, :, :dh]
    k = qkv[:, :, dh:2 * dh]
    v = qkv[:, :, 2 * dh:]

    # Scores: 'hsd,htd->hst'
    sc = lax.dot_general(q.astype(MATMUL_DTYPE), k.astype(MATMUL_DTYPE),
                         (((2,), (2,)), ((0,), (0,))),
                         preferred_element_type=jnp.float32) * scale
    # Causal mask generated in-kernel from iota (no HBM mask traffic).
    row = lax.broadcasted_iota(jnp.int32, (s_len, s_len), 0)
    col = lax.broadcasted_iota(jnp.int32, (s_len, s_len), 1)
    sc = jnp.where((col <= row)[None], sc, NEG_INF)

    sc = sc - jnp.max(sc, axis=-1, keepdims=True)
    p = jnp.exp(sc)
    p = p * pl.reciprocal(jnp.sum(p, axis=-1, keepdims=True), approx=True)
    # attn_drop == identity (eval mode)

    # Context: 'hst,htd->hsd'
    ctx = lax.dot_general(p.astype(MATMUL_DTYPE), v.astype(MATMUL_DTYPE),
                          (((2,), (1,)), ((0,), (0,))),
                          preferred_element_type=jnp.float32)
    # Output projection folded per head ('hsd,hde->hse') + sum over heads, so
    # the head merge needs no lane concatenate.
    yh = lax.dot_general(ctx.astype(MATMUL_DTYPE), wp_h,
                         (((2,), (1,)), ((0,), (0,))),
                         preferred_element_type=jnp.float32)       # (H, S, E)
    return jnp.sum(yh, axis=0) + bp


# --------------------------- fused kernels ------------------------------------

def _pool_project_kernel(feat_ref, wt_ref, b_ref, o_ref):
    # feat block: (1, C, HW) in the native NCHW layout (spatial flattened).
    # Global average pool over the HW (lane) axis -> (C, 1) column, then the
    # visual projection with the pre-transposed weight (D, C): (D,C)@(C,1).
    pooled = jnp.mean(feat_ref[0], axis=1, keepdims=True)            # (C, 1) f32
    o_ref[0] = (jnp.dot(wt_ref[...], pooled.astype(MATMUL_DTYPE),
                        preferred_element_type=jnp.float32)
                + b_ref[...])                                        # (D, 1) f32


def _decoder_layer_kernel(x_ref, mem_ref,
                          wqkv_ref, bqkv_ref, wp1_ref, bp1_ref, g1_ref, be1_ref,
                          wv2_ref, bv2_ref, wp2_ref, bp2_ref, g2_ref, be2_ref,
                          w1_ref, b1_ref, w2_ref, b2_ref, g3_ref, be3_ref,
                          o_ref, *, num_heads):
    """One full TransformerDecoderLayer for one batch element, fully fused:
    causal self-attention -> cross-attention(memory len 1) -> FFN, each with
    residual + LayerNorm, with the activations kept in VMEM throughout."""
    x = x_ref[0]                                      # (S, E) f32
    mem = mem_ref[0]                                  # (1, E) f32

    # --- masked (causal) multi-head self-attention + residual + LN1 ---------
    y = _causal_mha(x, wqkv_ref[...], bqkv_ref[...], wp1_ref[...], bp1_ref[...],
                    num_heads)
    x = _add_layernorm(x, y, g1_ref[...], be1_ref[...])

    # --- cross-attention over the single pooled visual token + LN2 ----------
    # Memory length is 1 -> softmax over one key is exactly 1, so attention
    # output == value projection of the memory token broadcast over S.
    # (Q/K projections and softmax are mathematically irrelevant and dropped.)
    v_mem = (jnp.dot(mem.astype(MATMUL_DTYPE), wv2_ref[...],
                     preferred_element_type=jnp.float32) + bv2_ref[...])  # (1, E)
    y_row = (jnp.dot(v_mem.astype(MATMUL_DTYPE), wp2_ref[...],
                     preferred_element_type=jnp.float32) + bp2_ref[...])  # (1, E)
    x = _add_layernorm(x, y_row, g2_ref[...], be2_ref[...])   # broadcast over S

    # --- feed-forward (Linear -> ReLU -> Linear) + residual + LN3 ------------
    h = (jnp.dot(x.astype(MATMUL_DTYPE), w1_ref[...],
                 preferred_element_type=jnp.float32) + b1_ref[...])
    h = jnp.maximum(h, 0.0)                            # ReLU (dropout == identity)
    y = (jnp.dot(h.astype(MATMUL_DTYPE), w2_ref[...],
                 preferred_element_type=jnp.float32) + b2_ref[...])
    o_ref[0] = _add_layernorm(x, y, g3_ref[...], be3_ref[...])


def _linear_kernel(x_ref, w_ref, b_ref, o_ref):
    o_ref[...] = (jnp.dot(x_ref[...].astype(MATMUL_DTYPE), w_ref[...],
                          preferred_element_type=jnp.float32)
                  + b_ref[...]).astype(o_ref.dtype)


def _linear_tiled_kernel(x_ref, w_ref, b_ref, o_ref, acc_ref):
    @pl.when(pl.program_id(2) == 0)
    def _():
        acc_ref[...] = jnp.zeros_like(acc_ref)
    acc_ref[...] += jnp.dot(x_ref[...].astype(MATMUL_DTYPE), w_ref[...],
                            preferred_element_type=jnp.float32)

    @pl.when(pl.program_id(2) == pl.num_programs(2) - 1)
    def _():
        o_ref[...] = (acc_ref[...] + b_ref[...]).astype(o_ref.dtype)


# --------------------------- pallas_call wrappers -----------------------------

def pool_and_project(feat, w_vis_t, b_vis_col):
    """feat: (N, 2048, HW) float32 (native NCHW, spatial flattened — no
    wrapper-side transpose of the big feature map).  Returns (N, 1, D)."""
    n, c, hw = feat.shape
    d = w_vis_t.shape[0]
    out = pl.pallas_call(
        _pool_project_kernel,
        out_shape=jax.ShapeDtypeStruct((n, d, 1), jnp.float32),
        grid=(n,),
        in_specs=[pl.BlockSpec((1, c, hw), lambda i: (i, 0, 0)),
                  _const_spec(w_vis_t), _const_spec(b_vis_col)],
        out_specs=pl.BlockSpec((1, d, 1), lambda i: (i, 0, 0)),
        compiler_params=pltpu.CompilerParams(dimension_semantics=("parallel",)),
    )(feat, w_vis_t, b_vis_col)
    # (N, D, 1) and (N, 1, D) share the same linear layout -> free reshape.
    return out.reshape(n, 1, d)


def decoder_layer(x, memory, lp, num_heads):
    """One fused pallas_call per decoder layer, gridded over the batch."""
    n, s, e = x.shape
    args = (x, memory,
            lp['wqkv_h'], lp['bqkv_h'], lp['wp1'], lp['bp1'], lp['ln1_g'], lp['ln1_b'],
            lp['wv2'], lp['bv2'], lp['wp2'], lp['bp2'], lp['ln2_g'], lp['ln2_b'],
            lp['w1'], lp['b1'], lp['w2'], lp['b2'], lp['ln3_g'], lp['ln3_b'])
    # NOTE: the constant weight/bias blocks are left at the default double
    # buffering for lowering robustness; pipeline_mode=pl.Buffered(1) would
    # halve their VMEM footprint further (bf16 pre-cast already halves it).
    in_specs = [pl.BlockSpec((1, s, e), lambda i: (i, 0, 0)),
                pl.BlockSpec((1, 1, e), lambda i: (i, 0, 0))]
    in_specs += [_const_spec(a) for a in args[2:]]
    return pl.pallas_call(
        partial(_decoder_layer_kernel, num_heads=num_heads),
        out_shape=jax.ShapeDtypeStruct((n, s, e), jnp.float32),
        grid=(n,),
        in_specs=in_specs,
        out_specs=pl.BlockSpec((1, s, e), lambda i: (i, 0, 0)),
        compiler_params=pltpu.CompilerParams(
            dimension_semantics=("parallel",),
            vmem_limit_bytes=48 * 1024 * 1024),
    )(*args)


def output_projection(x, w, b, *, tm=TM_OUT, tn=TN_OUT, tk=TK_OUT):
    """x:(M,K) @ w:(K,V) + b:(1,V) -> (M,V) f32.

    Dispatch is on VMEM footprint (not divisibility): small shapes run a single
    gridless call; large shapes are zero-padded up to tile multiples and run on
    a (M/tm, V/tn, K/tk) grid with an f32 VMEM accumulator, so ragged vocab
    sizes never hit a whole-weight-in-VMEM path."""
    x = x.astype(MATMUL_DTYPE)                       # one cast, reused by all tiles
    m, k = x.shape
    _, v = w.shape
    gridless_bytes = ((m * k + k * v) * jnp.dtype(MATMUL_DTYPE).itemsize
                      + (m * v + v) * 4)
    if gridless_bytes <= _GRIDLESS_LINEAR_BYTES:
        return pl.pallas_call(
            _linear_kernel,
            out_shape=jax.ShapeDtypeStruct((m, v), jnp.float32),
            in_specs=[VMEM_SPEC, VMEM_SPEC, VMEM_SPEC],
            out_specs=VMEM_SPEC,
        )(x, w, b)

    mp, kp, vp = _round_up(m, tm), _round_up(k, tk), _round_up(v, tn)
    xp = jnp.pad(x, ((0, mp - m), (0, kp - k))) if (mp != m or kp != k) else x
    wp_ = jnp.pad(w, ((0, kp - k), (0, vp - v))) if (kp != k or vp != v) else w
    bp_ = jnp.pad(b, ((0, 0), (0, vp - v))) if vp != v else b
    out = pl.pallas_call(
        _linear_tiled_kernel,
        out_shape=jax.ShapeDtypeStruct((mp, vp), jnp.float32),
        grid_spec=pltpu.PrefetchScalarGridSpec(
            num_scalar_prefetch=0,
            grid=(mp // tm, vp // tn, kp // tk),
            in_specs=[pl.BlockSpec((tm, tk), lambda i, j, kk: (i, kk)),
                      pl.BlockSpec((tk, tn), lambda i, j, kk: (kk, j)),
                      pl.BlockSpec((1, tn), lambda i, j, kk: (0, j))],
            out_specs=pl.BlockSpec((tm, tn), lambda i, j, kk: (i, j)),
            scratch_shapes=[pltpu.VMEM((tm, tn), jnp.float32)]),
        compiler_params=pltpu.CompilerParams(
            dimension_semantics=("parallel", "parallel", "arbitrary")),
    )(xp, wp_, bp_)
    return out[:m, :v]


# --------------------------- model forward ------------------------------------

def graph_captioning_forward(params, image_feat, captions, *, num_heads=8):
    n, t = captions.shape
    c = image_feat.shape[1]
    d = params['embedding'].shape[1]

    # Image-encoder tail: fused global-average-pool + visual projection on the
    # native NCHW layout (reshape (N,C,H,W)->(N,C,HW) is contiguous => free).
    feat = image_feat.reshape(n, c, -1)
    proj_feat = pool_and_project(feat, params['w_vis_t'], params['b_vis'])  # (N,1,D)

    # Token embedding gather + positional encoding: tiny elementwise; a
    # standalone pallas_call costs more than it saves, so left to XLA fusion.
    x = params['embedding'][captions] + params['pe'][:, :t, :]              # (N,T,D)
    # dropout == identity (eval mode)

    for lp in params['layers']:
        x = decoder_layer(x, proj_feat, lp, num_heads)

    scores = output_projection(x.reshape(n * t, d), params['w_out'], params['b_out'])
    return scores.reshape(n, t, params['w_out'].shape[1])


# --------------------------- parameters ---------------------------------------

def init_reference_params(key, vocab_size, d, num_heads, num_layers,
                          dim_ff=2048, max_length=5000):
    """f32 parameters with the reference init (N(0, 0.02) weights, zero biases,
    LayerNorm gamma=1 / beta=0), in (in, out) layout for x @ W."""
    assert d % num_heads == 0 and d % 2 == 0
    keys = iter(jax.random.split(key, 3 + num_layers * 8))

    def lin(k, fan_in, fan_out):
        return (jax.random.normal(k, (fan_in, fan_out), jnp.float32) * 0.02,
                jnp.zeros((fan_out,), jnp.float32))

    raw = {'embedding': jax.random.normal(next(keys), (vocab_size, d),
                                          jnp.float32) * 0.02}

    # Positional-encoding buffer (same formula as the PyTorch module).
    pos = jnp.arange(max_length, dtype=jnp.float32)[:, None]
    exps = jnp.power(10000.0, -jnp.arange(0, d, 2, dtype=jnp.float32) / d)
    pe = jnp.zeros((max_length, d), jnp.float32)
    pe = pe.at[:, 0::2].set(jnp.sin(pos * exps))
    pe = pe.at[:, 1::2].set(jnp.cos(pos * exps))
    raw['pe'] = pe[None]                                                 # (1, L, D)

    raw['w_vis'], raw['b_vis'] = lin(next(keys), 2048, d)

    layers = []
    for _ in range(num_layers):
        wq, bq = lin(next(keys), d, d)
        wk, bk = lin(next(keys), d, d)
        wv, bv = lin(next(keys), d, d)
        wp, bp = lin(next(keys), d, d)
        # Cross-attention Q/K projections exist in the PyTorch module but are
        # mathematically irrelevant (memory length 1 => softmax == 1), so only
        # the value / output projections are materialized.
        cwv, cbv = lin(next(keys), d, d)
        cwp, cbp = lin(next(keys), d, d)
        w1, b1 = lin(next(keys), d, dim_ff)
        w2, b2 = lin(next(keys), dim_ff, d)
        layers.append(dict(
            self_attn=dict(wq=wq, bq=bq, wk=wk, bk=bk, wv=wv, bv=bv, wp=wp, bp=bp),
            cross_attn=dict(wv=cwv, bv=cbv, wp=cwp, bp=cbp),
            w1=w1, b1=b1, w2=w2, b2=b2,
            ln1_g=jnp.ones((d,), jnp.float32), ln1_b=jnp.zeros((d,), jnp.float32),
            ln2_g=jnp.ones((d,), jnp.float32), ln2_b=jnp.zeros((d,), jnp.float32),
            ln3_g=jnp.ones((d,), jnp.float32), ln3_b=jnp.zeros((d,), jnp.float32)))
    raw['layers'] = layers

    raw['w_out'], raw['b_out'] = lin(next(keys), d, vocab_size)
    return raw


def prepare_params(raw, num_heads):
    """One-time (outside jit) kernel-layout prep: cast all weights to
    MATMUL_DTYPE, head-batch the self-attention weights, transpose the visual
    projection weight, reshape biases to row/column vectors."""
    d = raw['embedding'].shape[1]
    dh = d // num_heads
    mm = MATMUL_DTYPE

    def head_in(w):     # (E, E) -> (H, E, dh): per-head output columns
        return jnp.stack([w[:, h * dh:(h + 1) * dh] for h in range(num_heads)], 0)

    def head_out(w):    # (E, E) -> (H, dh, E): per-head input rows
        return jnp.stack([w[h * dh:(h + 1) * dh, :] for h in range(num_heads)], 0)

    def head_bias(b):   # (E,) -> (H, 1, dh)
        return b.reshape(num_heads, 1, dh)

    params = {
        'embedding': raw['embedding'],
        'pe': raw['pe'],
        'w_vis_t': raw['w_vis'].T.astype(mm),          # (D, 2048)
        'b_vis': raw['b_vis'].reshape(-1, 1),          # (D, 1) column
        'w_out': raw['w_out'].astype(mm),
        'b_out': raw['b_out'].reshape(1, -1),
        'layers': [],
    }
    for rl in raw['layers']:
        sa, ca = rl['self_attn'], rl['cross_attn']
        wqkv_h = jnp.concatenate(
            [head_in(sa['wq']), head_in(sa['wk']), head_in(sa['wv'])], axis=-1)
        bqkv_h = jnp.concatenate(
            [head_bias(sa['bq']), head_bias(sa['bk']), head_bias(sa['bv'])], axis=-1)
        params['layers'].append(dict(
            wqkv_h=wqkv_h.astype(mm), bqkv_h=bqkv_h,                # (H,E,3dh)/(H,1,3dh)
            wp1=head_out(sa['wp']).astype(mm), bp1=sa['bp'].reshape(1, -1),
            ln1_g=rl['ln1_g'].reshape(1, -1), ln1_b=rl['ln1_b'].reshape(1, -1),
            wv2=ca['wv'].astype(mm), bv2=ca['bv'].reshape(1, -1),
            wp2=ca['wp'].astype(mm), bp2=ca['bp'].reshape(1, -1),
            ln2_g=rl['ln2_g'].reshape(1, -1), ln2_b=rl['ln2_b'].reshape(1, -1),
            w1=rl['w1'].astype(mm), b1=rl['b1'].reshape(1, -1),
            w2=rl['w2'].astype(mm), b2=rl['b2'].reshape(1, -1),
            ln3_g=rl['ln3_g'].reshape(1, -1), ln3_b=rl['ln3_b'].reshape(1, -1)))
    return params


# --------------------------- demo ----------------------------------------------

if __name__ == "__main__":
    key = jax.random.PRNGKey(0)
    N, T = 2, 8               # batch, caption length
    D = 32                    # wordvec_dim (divisible by num_heads, even)
    NUM_HEADS = 8
    NUM_LAYERS = 2            # small for the demo (module default is 6)
    HF = WF = 4               # stand-in spatial size of the final resnet feature map

    word_to_idx = {'<NULL>': 0, '<START>': 1, '<END>': 2}
    for i in range(21):
        word_to_idx[f'w{i}'] = 3 + i
    VOCAB = len(word_to_idx)  # 24

    pkey, ikey, ckey = jax.random.split(key, 3)
    raw_params = init_reference_params(pkey, VOCAB, D, NUM_HEADS, NUM_LAYERS)
    params = prepare_params(raw_params, NUM_HEADS)    # one-time bf16 / head layout

    image_feat = jax.random.normal(ikey, (N, 2048, HF, WF), jnp.float32)   # NCHW
    captions = jax.random.randint(ckey, (N, T), 0, VOCAB, dtype=jnp.int32)

    fwd = jax.jit(partial(graph_captioning_forward, num_heads=NUM_HEADS))
    scores = jax.block_until_ready(fwd(params, image_feat, captions))

    assert scores.shape == (N, T, VOCAB)
    assert bool(jnp.all(jnp.isfinite(scores)))
    print("KERNEL_OK")
</pallas_src>

<mosaic_0001>
module attributes {stable_mosaic.version = 11 : i64} {
  func.func @_pool_project_kernel(%arg0: i32, %arg1: memref<1x2048x16xf32, #tpu.memory_space<vmem>>, %arg2: memref<32x2048xbf16, #tpu.memory_space<vmem>>, %arg3: memref<32x1xf32, #tpu.memory_space<vmem>>, %arg4: memref<1x32x1xf32, #tpu.memory_space<vmem>>) attributes {dimension_semantics = [#tpu.dimension_semantics<parallel>], iteration_bounds = array<i64: 2>, scalar_prefetch = 0 : i64, scratch_operands = 0 : i64, tpu.core_type = #tpu.core_type<tc>, window_params = [{transform_indices = @transform_0, window_bounds = array<i64: 1, 2048, 16>}, {pipeline_mode = #tpu.pipeline_mode<synchronous>, transform_indices = @transform_1, window_bounds = array<i64: 32, 2048>}, {pipeline_mode = #tpu.pipeline_mode<synchronous>, transform_indices = @transform_2, window_bounds = array<i64: 32, 1>}, {transform_indices = @transform_3, window_bounds = array<i64: 1, 32, 1>}]} {
    %c0 = arith.constant 0 : index
    %c0_0 = arith.constant 0 : index
    %c0_1 = arith.constant 0 : index
    %0 = vector.load %arg1[%c0, %c0_0, %c0_1] : memref<1x2048x16xf32, #tpu.memory_space<vmem>>, vector<1x2048x16xf32>
    %1 = vector.shape_cast %0 : vector<1x2048x16xf32> to vector<2048x16xf32>
    %cst = arith.constant dense<0.000000e+00> : vector<2048xf32>
    %2 = vector.multi_reduction <add>, %1, %cst [1] : vector<2048x16xf32> to vector<2048xf32>
    %3 = vector.shape_cast %2 : vector<2048xf32> to vector<2048x1xf32>
    %cst_2 = arith.constant 1.600000e+01 : f32
    %4 = vector.broadcast %cst_2 : f32 to vector<2048x1xf32>
    %5 = arith.divf %3, %4 : vector<2048x1xf32>
    %c0_3 = arith.constant 0 : index
    %c0_4 = arith.constant 0 : index
    %6 = vector.load %arg2[%c0_3, %c0_4] : memref<32x2048xbf16, #tpu.memory_space<vmem>>, vector<32x2048xbf16>
    %7 = arith.truncf %5 : vector<2048x1xf32> to vector<2048x1xbf16>
    %cst_5 = arith.constant dense<0.000000e+00> : vector<32x1xf32>
    %8 = tpu.matmul %6, %7, %cst_5 {dimension_numbers = #tpu.dot_dimension_numbers<[1], [0], [0], [1], [0, 0, 1, 1], [], []>} : vector<32x2048xbf16>, vector<2048x1xbf16>, vector<32x1xf32> -> vector<32x1xf32>
    %c0_6 = arith.constant 0 : index
    %c0_7 = arith.constant 0 : index
    %9 = vector.load %arg3[%c0_6, %c0_7] : memref<32x1xf32, #tpu.memory_space<vmem>>, vector<32x1xf32>
    %10 = arith.addf %8, %9 : vector<32x1xf32>
    %c0_8 = arith.constant 0 : index
    %c0_9 = arith.constant 0 : index
    %c0_10 = arith.constant 0 : index
    %11 = vector.load %arg4[%c0_8, %c0_9, %c0_10] : memref<1x32x1xf32, #tpu.memory_space<vmem>>, vector<1x32x1xf32>
    %12 = vector.shape_cast %11 : vector<1x32x1xf32> to vector<32x1xf32>
    %13 = vector.shape_cast %10 : vector<32x1xf32> to vector<1x32x1xf32>
    tpu.vector_store %arg4[%c0_8, %c0_9, %c0_10], %13 {strides = array<i32>} : memref<1x32x1xf32, #tpu.memory_space<vmem>>, vector<1x32x1xf32>,
    return
  }
  func.func @transform_0(%arg0: i32) -> (i32, i32, i32) {
    %c0_i32 = arith.constant 0 : i32
    %c0_i32_0 = arith.constant 0 : i32
    %c0_i32_1 = arith.constant 0 : i32
    return %arg0, %c0_i32, %c0_i32_0 : i32, i32, i32
  }
  func.func @transform_1(%arg0: i32) -> (i32, i32) {
    %c0_i32 = arith.constant 0 : i32
    %c0_i32_0 = arith.constant 0 : i32
    %c0_i32_1 = arith.constant 0 : i32
    return %c0_i32, %c0_i32_0 : i32, i32
  }
  func.func @transform_2(%arg0: i32) -> (i32, i32) {
    %c0_i32 = arith.constant 0 : i32
    %c0_i32_0 = arith.constant 0 : i32
    %c0_i32_1 = arith.constant 0 : i32
    return %c0_i32, %c0_i32_0 : i32, i32
  }
  func.func @transform_3(%arg0: i32) -> (i32, i32, i32) {
    %c0_i32 = arith.constant 0 : i32
    %c0_i32_0 = arith.constant 0 : i32
    %c0_i32_1 = arith.constant 0 : i32
    return %arg0, %c0_i32, %c0_i32_0 : i32, i32, i32
  }
}

module attributes {stable_mosaic.version = 11 : i64} {
  func.func @_decoder_layer_kernel(%arg0: i32, %arg1: memref<1x8x32xf32, #tpu.memory_space<vmem>>, %arg2: memref<1x1x32xf32, #tpu.memory_space<vmem>>, %arg3: memref<8x32x12xbf16, #tpu.memory_space<vmem>>, %arg4: memref<8x1x12xf32, #tpu.memory_space<vmem>>, %arg5: memref<8x4x32xbf16, #tpu.memory_space<vmem>>, %arg6: memref<1x32xf32, #tpu.memory_space<vmem>>, %arg7: memref<1x32xf32, #tpu.memory_space<vmem>>, %arg8: memref<1x32xf32, #tpu.memory_space<vmem>>, %arg9: memref<32x32xbf16, #tpu.memory_space<vmem>>, %arg10: memref<1x32xf32, #tpu.memory_space<vmem>>, %arg11: memref<32x32xbf16, #tpu.memory_space<vmem>>, %arg12: memref<1x32xf32, #tpu.memory_space<vmem>>, %arg13: memref<1x32xf32, #tpu.memory_space<vmem>>, %arg14: memref<1x32xf32, #tpu.memory_space<vmem>>, %arg15: memref<32x2048xbf16, #tpu.memory_space<vmem>>, %arg16: memref<1x2048xf32, #tpu.memory_space<vmem>>, %arg17: memref<2048x32xbf16, #tpu.memory_space<vmem>>, %arg18: memref<1x32xf32, #tpu.memory_space<vmem>>, %arg19: memref<1x32xf32, #tpu.memory_space<vmem>>, %arg20: memref<1x32xf32, #tpu.memory_space<vmem>>, %arg21: memref<1x8x32xf32, #tpu.memory_space<vmem>>) attributes {dimension_semantics = [#tpu.dimension_semantics<parallel>], iteration_bounds = array<i64: 2>, scalar_prefetch = 0 : i64, scratch_operands = 0 : i64, tpu.core_type = #tpu.core_type<tc>, window_params = [{transform_indices = @transform_0, window_bounds = array<i64: 1, 8, 32>}, {transform_indices = @transform_1, window_bounds = array<i64: 1, 1, 32>}, {pipeline_mode = #tpu.pipeline_mode<synchronous>, transform_indices = @transform_2, window_bounds = array<i64: 8, 32, 12>}, {pipeline_mode = #tpu.pipeline_mode<synchronous>, transform_indices = @transform_3, window_bounds = array<i64: 8, 1, 12>}, {pipeline_mode = #tpu.pipeline_mode<synchronous>, transform_indices = @transform_4, window_bounds = array<i64: 8, 4, 32>}, {pipeline_mode = #tpu.pipeline_mode<synchronous>, transform_indices = @transform_5, window_bounds = array<i64: 1, 32>}, {pipeline_mode = #tpu.pipeline_mode<synchronous>, transform_indices = @transform_6, window_bounds = array<i64: 1, 32>}, {pipeline_mode = #tpu.pipeline_mode<synchronous>, transform_indices = @transform_7, window_bounds = array<i64: 1, 32>}, {pipeline_mode = #tpu.pipeline_mode<synchronous>, transform_indices = @transform_8, window_bounds = array<i64: 32, 32>}, {pipeline_mode = #tpu.pipeline_mode<synchronous>, transform_indices = @transform_9, window_bounds = array<i64: 1, 32>}, {pipeline_mode = #tpu.pipeline_mode<synchronous>, transform_indices = @transform_10, window_bounds = array<i64: 32, 32>}, {pipeline_mode = #tpu.pipeline_mode<synchronous>, transform_indices = @transform_11, window_bounds = array<i64: 1, 32>}, {pipeline_mode = #tpu.pipeline_mode<synchronous>, transform_indices = @transform_12, window_bounds = array<i64: 1, 32>}, {pipeline_mode = #tpu.pipeline_mode<synchronous>, transform_indices = @transform_13, window_bounds = array<i64: 1, 32>}, {pipeline_mode = #tpu.pipeline_mode<synchronous>, transform_indices = @transform_14, window_bounds = array<i64: 32, 2048>}, {pipeline_mode = #tpu.pipeline_mode<synchronous>, transform_indices = @transform_15, window_bounds = array<i64: 1, 2048>}, {pipeline_mode = #tpu.pipeline_mode<synchronous>, transform_indices = @transform_16, window_bounds = array<i64: 2048, 32>}, {pipeline_mode = #tpu.pipeline_mode<synchronous>, transform_indices = @transform_17, window_bounds = array<i64: 1, 32>}, {pipeline_mode = #tpu.pipeline_mode<synchronous>, transform_indices = @transform_18, window_bounds = array<i64: 1, 32>}, {pipeline_mode = #tpu.pipeline_mode<synchronous>, transform_indices = @transform_19, window_bounds = array<i64: 1, 32>}, {transform_indices = @transform_20, window_bounds = array<i64: 1, 8, 32>}]} {
    %c0 = arith.constant 0 : index
    %c0_0 = arith.constant 0 : index
    %c0_1 = arith.constant 0 : index
    %0 = vector.load %arg1[%c0, %c0_0, %c0_1] : memref<1x8x32xf32, #tpu.memory_space<vmem>>, vector<1x8x32xf32>
    %1 = vector.shape_cast %0 : vector<1x8x32xf32> to vector<8x32xf32>
    %c0_2 = arith.constant 0 : index
    %c0_3 = arith.constant 0 : index
    %c0_4 = arith.constant 0 : index
    %2 = vector.load %arg2[%c0_2, %c0_3, %c0_4] : memref<1x1x32xf32, #tpu.memory_space<vmem>>, vector<1x1x32xf32>
    %3 = vector.shape_cast %2 : vector<1x1x32xf32> to vector<1x32xf32>
    %c0_5 = arith.constant 0 : index
    %c0_6 = arith.constant 0 : index
    %c0_7 = arith.constant 0 : index
    %4 = vector.load %arg3[%c0_5, %c0_6, %c0_7] : memref<8x32x12xbf16, #tpu.memory_space<vmem>>, vector<8x32x12xbf16>
    %c0_8 = arith.constant 0 : index
    %c0_9 = arith.constant 0 : index
    %c0_10 = arith.constant 0 : index
    %5 = vector.load %arg4[%c0_8, %c0_9, %c0_10] : memref<8x1x12xf32, #tpu.memory_space<vmem>>, vector<8x1x12xf32>
    %c0_11 = arith.constant 0 : index
    %c0_12 = arith.constant 0 : index
    %c0_13 = arith.constant 0 : index
    %6 = vector.load %arg5[%c0_11, %c0_12, %c0_13] : memref<8x4x32xbf16, #tpu.memory_space<vmem>>, vector<8x4x32xbf16>
    %c0_14 = arith.constant 0 : index
    %c0_15 = arith.constant 0 : index
    %7 = vector.load %arg6[%c0_14, %c0_15] : memref<1x32xf32, #tpu.memory_space<vmem>>, vector<1x32xf32>
    %8 = arith.truncf %1 : vector<8x32xf32> to vector<8x32xbf16>
    %9 = vector.shape_cast %8 : vector<8x32xbf16> to vector<1x8x32xbf16>
    %10 = vector.shape_cast %9 : vector<1x8x32xbf16> to vector<1x8x32xbf16>
    %11 = vector.broadcast %10 : vector<1x8x32xbf16> to vector<8x8x32xbf16>
    %cst = arith.constant dense<0.000000e+00> : vector<8x8x12xf32>
    %12 = tpu.matmul %11, %4, %cst {dimension_numbers = #tpu.dot_dimension_numbers<[2], [1], [1], [2], [0, 0, 0, 1, 1, 2], [0], [0]>} : vector<8x8x32xbf16>, vector<8x32x12xbf16>, vector<8x8x12xf32> -> vector<8x8x12xf32>
    %13 = vector.broadcast %5 : vector<8x1x12xf32> to vector<8x8x12xf32>
    %14 = arith.addf %12, %13 : vector<8x8x12xf32>
    %15 = vector.extract_strided_slice %14 {offsets = [0, 0, 0], sizes = [8, 8, 4], strides = [1, 1, 1]} : vector<8x8x12xf32> to vector<8x8x4xf32>
    %16 = vector.extract_strided_slice %14 {offsets = [0, 0, 4], sizes = [8, 8, 4], strides = [1, 1, 1]} : vector<8x8x12xf32> to vector<8x8x4xf32>
    %17 = vector.extract_strided_slice %14 {offsets = [0, 0, 8], sizes = [8, 8, 4], strides = [1, 1, 1]} : vector<8x8x12xf32> to vector<8x8x4xf32>
    %18 = arith.truncf %15 : vector<8x8x4xf32> to vector<8x8x4xbf16>
    %19 = arith.truncf %16 : vector<8x8x4xf32> to vector<8x8x4xbf16>
    %cst_16 = arith.constant dense<0.000000e+00> : vector<8x8x8xf32>
    %20 = tpu.matmul %18, %19, %cst_16 {dimension_numbers = #tpu.dot_dimension_numbers<[2], [2], [1], [1], [0, 0, 0, 1, 1, 1], [0], [0]>} : vector<8x8x4xbf16>, vector<8x8x4xbf16>, vector<8x8x8xf32> -> vector<8x8x8xf32>
    %cst_17 = arith.constant 5.000000e-01 : f32
    %21 = vector.broadcast %cst_17 : f32 to vector<8x8x8xf32>
    %22 = arith.mulf %20, %21 : vector<8x8x8xf32>
    %23 = tpu.iota {dimensions = array<i32: 0>} : vector<8x8xi32>
    %24 = tpu.iota {dimensions = array<i32: 1>} : vector<8x8xi32>
    %25 = arith.cmpi sle, %24, %23 : vector<8x8xi32>
    %26 = vector.shape_cast %25 : vector<8x8xi1> to vector<1x8x8xi1>
    %cst_18 = arith.constant -1.000000e+30 : f32
    %27 = vector.shape_cast %26 : vector<1x8x8xi1> to vector<1x8x8xi1>
    %28 = vector.broadcast %27 : vector<1x8x8xi1> to vector<8x8x8xi1>
    %29 = vector.broadcast %cst_18 : f32 to vector<8x8x8xf32>
    %30 = arith.select %28, %22, %29 : vector<8x8x8xi1>, vector<8x8x8xf32>
    %cst_19 = arith.constant dense<0xFF800000> : vector<8x8xf32>
    %31 = vector.multi_reduction <maximumf>, %30, %cst_19 [2] : vector<8x8x8xf32> to vector<8x8xf32>
    %32 = vector.shape_cast %31 : vector<8x8xf32> to vector<8x8x1xf32>
    %33 = vector.broadcast %32 : vector<8x8x1xf32> to vector<8x8x8xf32>
    %34 = arith.subf %30, %33 : vector<8x8x8xf32>
    %35 = math.exp %34 : vector<8x8x8xf32>
    %cst_20 = arith.constant dense<0.000000e+00> : vector<8x8xf32>
    %36 = vector.multi_reduction <add>, %35, %cst_20 [2] : vector<8x8x8xf32> to vector<8x8xf32>
    %37 = vector.shape_cast %36 : vector<8x8xf32> to vector<8x8x1xf32>
    %38 = tpu.reciprocal %37 {approx = true} : vector<8x8x1xf32> -> vector<8x8x1xf32>
    %39 = vector.broadcast %38 : vector<8x8x1xf32> to vector<8x8x8xf32>
    %40 = arith.mulf %35, %39 : vector<8x8x8xf32>
    %41 = arith.truncf %40 : vector<8x8x8xf32> to vector<8x8x8xbf16>
    %42 = arith.truncf %17 : vector<8x8x4xf32> to vector<8x8x4xbf16>
    %cst_21 = arith.constant dense<0.000000e+00> : vector<8x8x4xf32>
    %43 = tpu.matmul %41, %42, %cst_21 {dimension_numbers = #tpu.dot_dimension_numbers<[2], [1], [1], [2], [0, 0, 0, 1, 1, 2], [0], [0]>} : vector<8x8x8xbf16>, vector<8x8x4xbf16>, vector<8x8x4xf32> -> vector<8x8x4xf32>
    %44 = arith.truncf %43 : vector<8x8x4xf32> to vector<8x8x4xbf16>
    %cst_22 = arith.constant dense<0.000000e+00> : vector<8x8x32xf32>
    %45 = tpu.matmul %44, %6, %cst_22 {dimension_numbers = #tpu.dot_dimension_numbers<[2], [1], [1], [2], [0, 0, 0, 1, 1, 2], [0], [0]>} : vector<8x8x4xbf16>, vector<8x4x32xbf16>, vector<8x8x32xf32> -> vector<8x8x32xf32>
    %cst_23 = arith.constant dense<0.000000e+00> : vector<8x32xf32>
    %46 = vector.multi_reduction <add>, %45, %cst_23 [0] : vector<8x8x32xf32> to vector<8x32xf32>
    %47 = vector.broadcast %7 : vector<1x32xf32> to vector<8x32xf32>
    %48 = arith.addf %46, %47 : vector<8x32xf32>
    %c0_24 = arith.constant 0 : index
    %c0_25 = arith.constant 0 : index
    %49 = vector.load %arg7[%c0_24, %c0_25] : memref<1x32xf32, #tpu.memory_space<vmem>>, vector<1x32xf32>
    %c0_26 = arith.constant 0 : index
    %c0_27 = arith.constant 0 : index
    %50 = vector.load %arg8[%c0_26, %c0_27] : memref<1x32xf32, #tpu.memory_space<vmem>>, vector<1x32xf32>
    %51 = arith.addf %1, %48 : vector<8x32xf32>
    %cst_28 = arith.constant dense<0.000000e+00> : vector<8xf32>
    %52 = vector.multi_reduction <add>, %51, %cst_28 [1] : vector<8x32xf32> to vector<8xf32>
    %53 = vector.shape_cast %52 : vector<8xf32> to vector<8x1xf32>
    %cst_29 = arith.constant 3.200000e+01 : f32
    %54 = vector.broadcast %cst_29 : f32 to vector<8x1xf32>
    %55 = arith.divf %53, %54 : vector<8x1xf32>
    %56 = vector.broadcast %55 : vector<8x1xf32> to vector<8x32xf32>
    %57 = arith.subf %51, %56 : vector<8x32xf32>
    %58 = arith.mulf %57, %57 : vector<8x32xf32>
    %cst_30 = arith.constant dense<0.000000e+00> : vector<8xf32>
    %59 = vector.multi_reduction <add>, %58, %cst_30 [1] : vector<8x32xf32> to vector<8xf32>
    %60 = vector.shape_cast %59 : vector<8xf32> to vector<8x1xf32>
    %cst_31 = arith.constant 3.200000e+01 : f32
    %61 = vector.broadcast %cst_31 : f32 to vector<8x1xf32>
    %62 = arith.divf %60, %61 : vector<8x1xf32>
    %63 = vector.broadcast %55 : vector<8x1xf32> to vector<8x32xf32>
    %64 = arith.subf %51, %63 : vector<8x32xf32>
    %cst_32 = arith.constant 9.99999974E-6 : f32
    %65 = vector.broadcast %cst_32 : f32 to vector<8x1xf32>
    %66 = arith.addf %62, %65 : vector<8x1xf32>
    %67 = math.rsqrt %66 : vector<8x1xf32>
    %68 = vector.broadcast %67 : vector<8x1xf32> to vector<8x32xf32>
    %69 = arith.mulf %64, %68 : vector<8x32xf32>
    %70 = vector.broadcast %49 : vector<1x32xf32> to vector<8x32xf32>
    %71 = arith.mulf %69, %70 : vector<8x32xf32>
    %72 = vector.broadcast %50 : vector<1x32xf32> to vector<8x32xf32>
    %73 = arith.addf %71, %72 : vector<8x32xf32>
    %74 = arith.truncf %3 : vector<1x32xf32> to vector<1x32xbf16>
    %c0_33 = arith.constant 0 : index
    %c0_34 = arith.constant 0 : index
    %75 = vector.load %arg9[%c0_33, %c0_34] : memref<32x32xbf16, #tpu.memory_space<vmem>>, vector<32x32xbf16>
    %cst_35 = arith.constant dense<0.000000e+00> : vector<1x32xf32>
    %76 = tpu.matmul %74, %75, %cst_35 {dimension_numbers = #tpu.dot_dimension_numbers<[1], [0], [0], [1], [0, 0, 1, 1], [], []>} : vector<1x32xbf16>, vector<32x32xbf16>, vector<1x32xf32> -> vector<1x32xf32>
    %c0_36 = arith.constant 0 : index
    %c0_37 = arith.constant 0 : index
    %77 = vector.load %arg10[%c0_36, %c0_37] : memref<1x32xf32, #tpu.memory_space<vmem>>, vector<1x32xf32>
    %78 = arith.addf %76, %77 : vector<1x32xf32>
    %79 = arith.truncf %78 : vector<1x32xf32> to vector<1x32xbf16>
    %c0_38 = arith.constant 0 : index
    %c0_39 = arith.constant 0 : index
    %80 = vector.load %arg11[%c0_38, %c0_39] : memref<32x32xbf16, #tpu.memory_space<vmem>>, vector<32x32xbf16>
    %cst_40 = arith.constant dense<0.000000e+00> : vector<1x32xf32>
    %81 = tpu.matmul %79, %80, %cst_40 {dimension_numbers = #tpu.dot_dimension_numbers<[1], [0], [0], [1], [0, 0, 1, 1], [], []>} : vector<1x32xbf16>, vector<32x32xbf16>, vector<1x32xf32> -> vector<1x32xf32>
    %c0_41 = arith.constant 0 : index
    %c0_42 = arith.constant 0 : index
    %82 = vector.load %arg12[%c0_41, %c0_42] : memref<1x32xf32, #tpu.memory_space<vmem>>, vector<1x32xf32>
    %83 = arith.addf %81, %82 : vector<1x32xf32>
    %c0_43 = arith.constant 0 : index
    %c0_44 = arith.constant 0 : index
    %84 = vector.load %arg13[%c0_43, %c0_44] : memref<1x32xf32, #tpu.memory_space<vmem>>, vector<1x32xf32>
    %c0_45 = arith.constant 0 : index
    %c0_46 = arith.constant 0 : index
    %85 = vector.load %arg14[%c0_45, %c0_46] : memref<1x32xf32, #tpu.memory_space<vmem>>, vector<1x32xf32>
    %86 = vector.broadcast %83 : vector<1x32xf32> to vector<8x32xf32>
    %87 = arith.addf %73, %86 : vector<8x32xf32>
    %cst_47 = arith.constant dense<0.000000e+00> : vector<8xf32>
    %88 = vector.multi_reduction <add>, %87, %cst_47 [1] : vector<8x32xf32> to vector<8xf32>
    %89 = vector.shape_cast %88 : vector<8xf32> to vector<8x1xf32>
    %cst_48 = arith.constant 3.200000e+01 : f32
    %90 = vector.broadcast %cst_48 : f32 to vector<8x1xf32>
    %91 = arith.divf %89, %90 : vector<8x1xf32>
    %92 = vector.broadcast %91 : vector<8x1xf32> to vector<8x32xf32>
    %93 = arith.subf %87, %92 : vector<8x32xf32>
    %94 = arith.mulf %93, %93 : vector<8x32xf32>
    %cst_49 = arith.constant dense<0.000000e+00> : vector<8xf32>
    %95 = vector.multi_reduction <add>, %94, %cst_49 [1] : vector<8x32xf32> to vector<8xf32>
    %96 = vector.shape_cast %95 : vector<8xf32> to vector<8x1xf32>
    %cst_50 = arith.constant 3.200000e+01 : f32
    %97 = vector.broadcast %cst_50 : f32 to vector<8x1xf32>
    %98 = arith.divf %96, %97 : vector<8x1xf32>
    %99 = vector.broadcast %91 : vector<8x1xf32> to vector<8x32xf32>
    %100 = arith.subf %87, %99 : vector<8x32xf32>
    %cst_51 = arith.constant 9.99999974E-6 : f32
    %101 = vector.broadcast %cst_51 : f32 to vector<8x1xf32>
    %102 = arith.addf %98, %101 : vector<8x1xf32>
    %103 = math.rsqrt %102 : vector<8x1xf32>
    %104 = vector.broadcast %103 : vector<8x1xf32> to vector<8x32xf32>
    %105 = arith.mulf %100, %104 : vector<8x32xf32>
    %106 = vector.broadcast %84 : vector<1x32xf32> to vector<8x32xf32>
    %107 = arith.mulf %105, %106 : vector<8x32xf32>
    %108 = vector.broadcast %85 : vector<1x32xf32> to vector<8x32xf32>
    %109 = arith.addf %107, %108 : vector<8x32xf32>
    %110 = arith.truncf %109 : vector<8x32xf32> to vector<8x32xbf16>
    %c0_52 = arith.constant 0 : index
    %c0_53 = arith.constant 0 : index
    %111 = vector.load %arg15[%c0_52, %c0_53] : memref<32x2048xbf16, #tpu.memory_space<vmem>>, vector<32x2048xbf16>
    %cst_54 = arith.constant dense<0.000000e+00> : vector<8x2048xf32>
    %112 = tpu.matmul %110, %111, %cst_54 {dimension_numbers = #tpu.dot_dimension_numbers<[1], [0], [0], [1], [0, 0, 1, 1], [], []>} : vector<8x32xbf16>, vector<32x2048xbf16>, vector<8x2048xf32> -> vector<8x2048xf32>
    %c0_55 = arith.constant 0 : index
    %c0_56 = arith.constant 0 : index
    %113 = vector.load %arg16[%c0_55, %c0_56] : memref<1x2048xf32, #tpu.memory_space<vmem>>, vector<1x2048xf32>
    %114 = vector.broadcast %113 : vector<1x2048xf32> to vector<8x2048xf32>
    %115 = arith.addf %112, %114 : vector<8x2048xf32>
    %cst_57 = arith.constant 0.000000e+00 : f32
    %116 = vector.broadcast %cst_57 : f32 to vector<8x2048xf32>
    %117 = arith.maximumf %115, %116 : vector<8x2048xf32>
    %118 = arith.truncf %117 : vector<8x2048xf32> to vector<8x2048xbf16>
    %c0_58 = arith.constant 0 : index
    %c0_59 = arith.constant 0 : index
    %119 = vector.load %arg17[%c0_58, %c0_59] : memref<2048x32xbf16, #tpu.memory_space<vmem>>, vector<2048x32xbf16>
    %cst_60 = arith.constant dense<0.000000e+00> : vector<8x32xf32>
    %120 = tpu.matmul %118, %119, %cst_60 {dimension_numbers = #tpu.dot_dimension_numbers<[1], [0], [0], [1], [0, 0, 1, 1], [], []>} : vector<8x2048xbf16>, vector<2048x32xbf16>, vector<8x32xf32> -> vector<8x32xf32>
    %c0_61 = arith.constant 0 : index
    %c0_62 = arith.constant 0 : index
    %121 = vector.load %arg18[%c0_61, %c0_62] : memref<1x32xf32, #tpu.memory_space<vmem>>, vector<1x32xf32>
    %122 = vector.broadcast %121 : vector<1x32xf32> to vector<8x32xf32>
    %123 = arith.addf %120, %122 : vector<8x32xf32>
    %c0_63 = arith.constant 0 : index
    %c0_64 = arith.constant 0 : index
    %124 = vector.load %arg19[%c0_63, %c0_64] : memref<1x32xf32, #tpu.memory_space<vmem>>, vector<1x32xf32>
    %c0_65 = arith.constant 0 : index
    %c0_66 = arith.constant 0 : index
    %125 = vector.load %arg20[%c0_65, %c0_66] : memref<1x32xf32, #tpu.memory_space<vmem>>, vector<1x32xf32>
    %126 = arith.addf %109, %123 : vector<8x32xf32>
    %cst_67 = arith.constant dense<0.000000e+00> : vector<8xf32>
    %127 = vector.multi_reduction <add>, %126, %cst_67 [1] : vector<8x32xf32> to vector<8xf32>
    %128 = vector.shape_cast %127 : vector<8xf32> to vector<8x1xf32>
    %cst_68 = arith.constant 3.200000e+01 : f32
    %129 = vector.broadcast %cst_68 : f32 to vector<8x1xf32>
    %130 = arith.divf %128, %129 : vector<8x1xf32>
    %131 = vector.broadcast %130 : vector<8x1xf32> to vector<8x32xf32>
    %132 = arith.subf %126, %131 : vector<8x32xf32>
    %133 = arith.mulf %132, %132 : vector<8x32xf32>
    %cst_69 = arith.constant dense<0.000000e+00> : vector<8xf32>
    %134 = vector.multi_reduction <add>, %133, %cst_69 [1] : vector<8x32xf32> to vector<8xf32>
    %135 = vector.shape_cast %134 : vector<8xf32> to vector<8x1xf32>
    %cst_70 = arith.constant 3.200000e+01 : f32
    %136 = vector.broadcast %cst_70 : f32 to vector<8x1xf32>
    %137 = arith.divf %135, %136 : vector<8x1xf32>
    %138 = vector.broadcast %130 : vector<8x1xf32> to vector<8x32xf32>
    %139 = arith.subf %126, %138 : vector<8x32xf32>
    %cst_71 = arith.constant 9.99999974E-6 : f32
    %140 = vector.broadcast %cst_71 : f32 to vector<8x1xf32>
    %141 = arith.addf %137, %140 : vector<8x1xf32>
    %142 = math.rsqrt %141 : vector<8x1xf32>
    %143 = vector.broadcast %142 : vector<8x1xf32> to vector<8x32xf32>
    %144 = arith.mulf %139, %143 : vector<8x32xf32>
    %145 = vector.broadcast %124 : vector<1x32xf32> to vector<8x32xf32>
    %146 = arith.mulf %144, %145 : vector<8x32xf32>
    %147 = vector.broadcast %125 : vector<1x32xf32> to vector<8x32xf32>
    %148 = arith.addf %146, %147 : vector<8x32xf32>
    %c0_72 = arith.constant 0 : index
    %c0_73 = arith.constant 0 : index
    %c0_74 = arith.constant 0 : index
    %149 = vector.load %arg21[%c0_72, %c0_73, %c0_74] : memref<1x8x32xf32, #tpu.memory_space<vmem>>, vector<1x8x32xf32>
    %150 = vector.shape_cast %149 : vector<1x8x32xf32> to vector<8x32xf32>
    %151 = vector.shape_cast %148 : vector<8x32xf32> to vector<1x8x32xf32>
    tpu.vector_store %arg21[%c0_72, %c0_73, %c0_74], %151 {strides = array<i32>} : memref<1x8x32xf32, #tpu.memory_space<vmem>>, vector<1x8x32xf32>,
    return
  }
  func.func @transform_0(%arg0: i32) -> (i32, i32, i32) {
    %c0_i32 = arith.constant 0 : i32
    %c0_i32_0 = arith.constant 0 : i32
    %c0_i32_1 = arith.constant 0 : i32
    return %arg0, %c0_i32, %c0_i32_0 : i32, i32, i32
  }
  func.func @transform_1(%arg0: i32) -> (i32, i32, i32) {
    %c0_i32 = arith.constant 0 : i32
    %c0_i32_0 = arith.constant 0 : i32
    %c0_i32_1 = arith.constant 0 : i32
    return %arg0, %c0_i32, %c0_i32_0 : i32, i32, i32
  }
  func.func @transform_2(%arg0: i32) -> (i32, i32, i32) {
    %c0_i32 = arith.constant 0 : i32
    %c0_i32_0 = arith.constant 0 : i32
    %c0_i32_1 = arith.constant 0 : i32
    %c0_i32_2 = arith.constant 0 : i32
    return %c0_i32, %c0_i32_0, %c0_i32_1 : i32, i32, i32
  }
  func.func @transform_3(%arg0: i32) -> (i32, i32, i32) {
    %c0_i32 = arith.constant 0 : i32
    %c0_i32_0 = arith.constant 0 : i32
    %c0_i32_1 = arith.constant 0 : i32
    %c0_i32_2 = arith.constant 0 : i32
    return %c0_i32, %c0_i32_0, %c0_i32_1 : i32, i32, i32
  }
  func.func @transform_4(%arg0: i32) -> (i32, i32, i32) {
    %c0_i32 = arith.constant 0 : i32
    %c0_i32_0 = arith.constant 0 : i32
    %c0_i32_1 = arith.constant 0 : i32
    %c0_i32_2 = arith.constant 0 : i32
    return %c0_i32, %c0_i32_0, %c0_i32_1 : i32, i32, i32
  }
  func.func @transform_5(%arg0: i32) -> (i32, i32) {
    %c0_i32 = arith.constant 0 : i32
    %c0_i32_0 = arith.constant 0 : i32
    %c0_i32_1 = arith.constant 0 : i32
    return %c0_i32, %c0_i32_0 : i32, i32
  }
  func.func @transform_6(%arg0: i32) -> (i32, i32) {
    %c0_i32 = arith.constant 0 : i32
    %c0_i32_0 = arith.constant 0 : i32
    %c0_i32_1 = arith.constant 0 : i32
    return %c0_i32, %c0_i32_0 : i32, i32
  }
  func.func @transform_7(%arg0: i32) -> (i32, i32) {
    %c0_i32 = arith.constant 0 : i32
    %c0_i32_0 = arith.constant 0 : i32
    %c0_i32_1 = arith.constant 0 : i32
    return %c0_i32, %c0_i32_0 : i32, i32
  }
  func.func @transform_8(%arg0: i32) -> (i32, i32) {
    %c0_i32 = arith.constant 0 : i32
    %c0_i32_0 = arith.constant 0 : i32
    %c0_i32_1 = arith.constant 0 : i32
    return %c0_i32, %c0_i32_0 : i32, i32
  }
  func.func @transform_9(%arg0: i32) -> (i32, i32) {
    %c0_i32 = arith.constant 0 : i32
    %c0_i32_0 = arith.constant 0 : i32
    %c0_i32_1 = arith.constant 0 : i32
    return %c0_i32, %c0_i32_0 : i32, i32
  }
  func.func @transform_10(%arg0: i32) -> (i32, i32) {
    %c0_i32 = arith.constant 0 : i32
    %c0_i32_0 = arith.constant 0 : i32
    %c0_i32_1 = arith.constant 0 : i32
    return %c0_i32, %c0_i32_0 : i32, i32
  }
  func.func @transform_11(%arg0: i32) -> (i32, i32) {
    %c0_i32 = arith.constant 0 : i32
    %c0_i32_0 = arith.constant 0 : i32
    %c0_i32_1 = arith.constant 0 : i32
    return %c0_i32, %c0_i32_0 : i32, i32
  }
  func.func @transform_12(%arg0: i32) -> (i32, i32) {
    %c0_i32 = arith.constant 0 : i32
    %c0_i32_0 = arith.constant 0 : i32
    %c0_i32_1 = arith.constant 0 : i32
    return %c0_i32, %c0_i32_0 : i32, i32
  }
  func.func @transform_13(%arg0: i32) -> (i32, i32) {
    %c0_i32 = arith.constant 0 : i32
    %c0_i32_0 = arith.constant 0 : i32
    %c0_i32_1 = arith.constant 0 : i32
    return %c0_i32, %c0_i32_0 : i32, i32
  }
  func.func @transform_14(%arg0: i32) -> (i32, i32) {
    %c0_i32 = arith.constant 0 : i32
    %c0_i32_0 = arith.constant 0 : i32
    %c0_i32_1 = arith.constant 0 : i32
    return %c0_i32, %c0_i32_0 : i32, i32
  }
  func.func @transform_15(%arg0: i32) -> (i32, i32) {
    %c0_i32 = arith.constant 0 : i32
    %c0_i32_0 = arith.constant 0 : i32
    %c0_i32_1 = arith.constant 0 : i32
    return %c0_i32, %c0_i32_0 : i32, i32
  }
  func.func @transform_16(%arg0: i32) -> (i32, i32) {
    %c0_i32 = arith.constant 0 : i32
    %c0_i32_0 = arith.constant 0 : i32
    %c0_i32_1 = arith.constant 0 : i32
    return %c0_i32, %c0_i32_0 : i32, i32
  }
  func.func @transform_17(%arg0: i32) -> (i32, i32) {
    %c0_i32 = arith.constant 0 : i32
    %c0_i32_0 = arith.constant 0 : i32
    %c0_i32_1 = arith.constant 0 : i32
    return %c0_i32, %c0_i32_0 : i32, i32
  }
  func.func @transform_18(%arg0: i32) -> (i32, i32) {
    %c0_i32 = arith.constant 0 : i32
    %c0_i32_0 = arith.constant 0 : i32
    %c0_i32_1 = arith.constant 0 : i32
    return %c0_i32, %c0_i32_0 : i32, i32
  }
  func.func @transform_19(%arg0: i32) -> (i32, i32) {
    %c0_i32 = arith.constant 0 : i32
    %c0_i32_0 = arith.constant 0 : i32
    %c0_i32_1 = arith.constant 0 : i32
    return %c0_i32, %c0_i32_0 : i32, i32
  }
  func.func @transform_20(%arg0: i32) -> (i32, i32, i32) {
    %c0_i32 = arith.constant 0 : i32
    %c0_i32_0 = arith.constant 0 : i32
    %c0_i32_1 = arith.constant 0 : i32
    return %arg0, %c0_i32, %c0_i32_0 : i32, i32, i32
  }
}

module attributes {stable_mosaic.version = 11 : i64} {
  func.func @_linear_kernel(%arg0: memref<16x32xbf16, #tpu.memory_space<vmem>>, %arg1: memref<32x24xbf16, #tpu.memory_space<vmem>>, %arg2: memref<1x24xf32, #tpu.memory_space<vmem>>, %arg3: memref<16x24xf32, #tpu.memory_space<vmem>>) attributes {dimension_semantics = [], scalar_prefetch = 0 : i64, scratch_operands = 0 : i64, tpu.core_type = #tpu.core_type<tc>} {
    %c0 = arith.constant 0 : index
    %c0_0 = arith.constant 0 : index
    %0 = vector.load %arg0[%c0, %c0_0] : memref<16x32xbf16, #tpu.memory_space<vmem>>, vector<16x32xbf16>
    %c0_1 = arith.constant 0 : index
    %c0_2 = arith.constant 0 : index
    %1 = vector.load %arg1[%c0_1, %c0_2] : memref<32x24xbf16, #tpu.memory_space<vmem>>, vector<32x24xbf16>
    %cst = arith.constant dense<0.000000e+00> : vector<16x24xf32>
    %2 = tpu.matmul %0, %1, %cst {dimension_numbers = #tpu.dot_dimension_numbers<[1], [0], [0], [1], [0, 0, 1, 1], [], []>} : vector<16x32xbf16>, vector<32x24xbf16>, vector<16x24xf32> -> vector<16x24xf32>
    %c0_3 = arith.constant 0 : index
    %c0_4 = arith.constant 0 : index
    %3 = vector.load %arg2[%c0_3, %c0_4] : memref<1x24xf32, #tpu.memory_space<vmem>>, vector<1x24xf32>
    %4 = vector.broadcast %3 : vector<1x24xf32> to vector<16x24xf32>
    %5 = arith.addf %2, %4 : vector<16x24xf32>
    %c0_5 = arith.constant 0 : index
    %c0_6 = arith.constant 0 : index
    %6 = vector.load %arg3[%c0_5, %c0_6] : memref<16x24xf32, #tpu.memory_space<vmem>>, vector<16x24xf32>
    tpu.vector_store %arg3[%c0_5, %c0_6], %5 {strides = array<i32>} : memref<16x24xf32, #tpu.memory_space<vmem>>, vector<16x24xf32>,
    return
  }
}

</mosaic_0001>

<llo_original>
// kernel: graph_captioning_forward.4
$region0: #{graph_captioning_forward.4}
  #allocation0 [shape = 'u32[]', space=smem, size = 0x4, offset = 0x4, fixed_abs, tag = 'smem constant byte address 0x4 - core index']
  #allocation1 [shape = 'u32[144,128]{1,0:T(1,128)}', space=vmem, size = 0x12000, scoped, tag = 'internal scratch']
  %s0 = inlined_call_operand.vmem [shape: f32[2,2048,16], index: 0, kind: input, shape index: {}]
  %s1 = inlined_call_operand.vmem [shape: bf16[32,2048], index: 1, kind: input, shape index: {}]
  %s2 = inlined_call_operand.vmem [shape: f32[32,1], index: 2, kind: input, shape index: {}]
  %s3 = inlined_call_operand.vmem [shape: f32[2,32,1], index: 3, kind: output, shape index: {}]
  %s4 = sld [smem:[#allocation0]]
  $region45: #{graph_captioning_forward.4} parent=0
    _
  %s6 = ssub.s32 1, %s4
  %s7 = scalar_select 0, %s6, %s4
  loop: start=0, step=1, limit=4
  $region2: #{graph_captioning_forward.4} parent=0 // loop_pre_header
    _
  $region3: #{graph_captioning_forward.4} parent=0 // loop_header
    %s9 = sphi 0, %s13
    %p10 = scmp.ge.s32.totalorder %s9, 4
    %s19 = sphi 0, %s21
    %s22 = sphi 0, %s19
    %s23 = sphi 0, %s22
    %s39 = sphi 0, %s23
    %s43 = sphi 0, %s43
    %s45 = sphi 0, %s43
    %s46 = sphi 0, %s45
    %s60 = sphi 0, %s46
    %s64 = sphi 0, %s64
    %s66 = sphi 0, %s64
    %s67 = sphi 0, %s66
    %s81 = sphi 0, %s67
    %s87 = sphi 0, %s89
    %s90 = sphi 0, %s87
    %s91 = sphi 0, %s90
    %s107 = sphi 0, %s91
  $region4: #{graph_captioning_forward.4} parent=0 // loop_header_branch
    %12 = sbr.rel (%p10) target = $region8
  $region5: #{graph_captioning_forward.4} parent=0 // loop_body
    %s14 = ssub.s32 %s9, 1
    %s15 = ssub.s32 %s9, 2
    %s16 = sadd.s32 %s9, 1
    %s17 = ssub.s32 %s9, %s16
    %p18 = scmp.eq.s32.totalorder %s17, 0
    %s20 = sadd.s32 %s19, 1
    %s21 = scalar_select %p18, %s19, %s20
    %p24 = pneg %p18
    %p25 = scmp.eq.s32.totalorder %s9, 1
    %p26 = por %p24, %p25
    %p27 = scmp.ne.s32.totalorder %s19, %s22
    %p28 = scmp.eq.s32.totalorder %s9, 0
    %p29 = por %p27, %p28
    %p30 = scmp.ne.s32.totalorder %s19, %s22
    %p31 = scmp.eq.s32.totalorder %s14, 1
    %p32 = por %p30, %p31
    %p33 = scmp.ne.s32.totalorder %s22, %s23
    %p34 = scmp.eq.s32.totalorder %s14, 0
    %p35 = por %p33, %p34
    %p36 = scmp.ne.s32.totalorder %s22, %s23
    %p37 = scmp.eq.s32.totalorder %s15, 1
    %p38 = por %p36, %p37
    %p40 = scmp.ne.s32.totalorder %s23, %s39
    %p41 = scmp.eq.s32.totalorder %s15, 0
    %p42 = por %p40, %p41
    %s44 = sadd.s32 %s43, 1
    %p47 = scmp.eq.s32.totalorder %s9, 1
    %p48 = scmp.ne.s32.totalorder %s43, %s45
    %p49 = scmp.eq.s32.totalorder %s9, 0
    %p50 = por %p48, %p49
    %p51 = scmp.ne.s32.totalorder %s43, %s45
    %p52 = scmp.eq.s32.totalorder %s14, 1
    %p53 = por %p51, %p52
    %p54 = scmp.ne.s32.totalorder %s45, %s46
    %p55 = scmp.eq.s32.totalorder %s14, 0
    %p56 = por %p54, %p55
    %p57 = scmp.ne.s32.totalorder %s45, %s46
    %p58 = scmp.eq.s32.totalorder %s15, 1
    %p59 = por %p57, %p58
    %p61 = scmp.ne.s32.totalorder %s46, %s60
    %p62 = scmp.eq.s32.totalorder %s15, 0
    %p63 = por %p61, %p62
    %s65 = sadd.s32 %s64, 1
    %p68 = scmp.eq.s32.totalorder %s9, 1
    %p69 = scmp.ne.s32.totalorder %s64, %s66
    %p70 = scmp.eq.s32.totalorder %s9, 0
    %p71 = por %p69, %p70
    %p72 = scmp.ne.s32.totalorder %s64, %s66
    %p73 = scmp.eq.s32.totalorder %s14, 1
    %p74 = por %p72, %p73
    %p75 = scmp.ne.s32.totalorder %s66, %s67
    %p76 = scmp.eq.s32.totalorder %s14, 0
    %p77 = por %p75, %p76
    %p78 = scmp.ne.s32.totalorder %s66, %s67
    %p79 = scmp.eq.s32.totalorder %s15, 1
    %p80 = por %p78, %p79
    %p82 = scmp.ne.s32.totalorder %s67, %s81
    %p83 = scmp.eq.s32.totalorder %s15, 0
    %p84 = por %p82, %p83
    %s85 = ssub.s32 %s9, %s16
    %p86 = scmp.eq.s32.totalorder %s85, 0
    %s88 = sadd.s32 %s87, 1
    %s89 = scalar_select %p86, %s87, %s88
    %p92 = pneg %p86
    %p93 = scmp.eq.s32.totalorder %s9, 1
    %p94 = por %p92, %p93
    %p95 = scmp.ne.s32.totalorder %s87, %s90
    %p96 = scmp.eq.s32.totalorder %s9, 0
    %p97 = por %p95, %p96
    %p98 = scmp.ne.s32.totalorder %s87, %s90
    %p99 = scmp.eq.s32.totalorder %s14, 1
    %p100 = por %p98, %p99
    %p101 = scmp.ne.s32.totalorder %s90, %s91
    %p102 = scmp.eq.s32.totalorder %s14, 0
    %p103 = por %p101, %p102
    %p104 = scmp.ne.s32.totalorder %s90, %s91
    %p105 = scmp.eq.s32.totalorder %s15, 1
    %p106 = por %p104, %p105
    %p108 = scmp.ne.s32.totalorder %s91, %s107
    %p109 = scmp.eq.s32.totalorder %s15, 0
    %p110 = por %p108, %p109
    %p111 = scmp.le.s32.totalorder 1, %s9
    %p112 = scmp.lt.s32.totalorder %s9, 3
    %p113 = pnand %p111, %p112
    %p114 = pneg %p113
    // Predicated region
    $region9: #{graph_captioning_forward.4} parent=5 // pred_check
      _
    $region10: #{graph_captioning_forward.4} parent=5 // pred_check_branch
      %116 = sbr.rel (%p113) target = $region12
    $region11: #{graph_captioning_forward.4} parent=5 // pred_region
      %s117 = ssub.s32 %s9, 1
      // Predicated region
      $region13: #{graph_captioning_forward.4} parent=11 // pred_check
        %p118 = pneg %p56
      $region14: #{graph_captioning_forward.4} parent=11 // pred_check_branch
        %120 = sbr.rel (%p118) target = $region16
      $region15: #{graph_captioning_forward.4} parent=11 // pred_region
        _
      $region16: #{graph_captioning_forward.4} parent=11 // pred_fallthru
        _
      // Predicated region
      $region17: #{graph_captioning_forward.4} parent=11 // pred_check
        %p121 = pneg %p77
      $region18: #{graph_captioning_forward.4} parent=11 // pred_check_branch
        %123 = sbr.rel (%p121) target = $region20
      $region19: #{graph_captioning_forward.4} parent=11 // pred_region
        _
      $region20: #{graph_captioning_forward.4} parent=11 // pred_fallthru
        _
    $region12: #{graph_captioning_forward.4} parent=5 // pred_fallthru
      _
    %p124 = scmp.lt.s32.totalorder %s9, 2
    // Predicated region
    $region21: #{graph_captioning_forward.4} parent=5 // pred_check
      %p125 = pneg %p124
    $region22: #{graph_captioning_forward.4} parent=5 // pred_check_branch
      %127 = sbr.rel (%p125) target = $region24
    $region23: #{graph_captioning_forward.4} parent=5 // pred_region
      // Predicated region
      $region25: #{graph_captioning_forward.4} parent=23 // pred_check
        %p128 = pneg %p29
      $region26: #{graph_captioning_forward.4} parent=23 // pred_check_branch
        %130 = sbr.rel (%p128) target = $region28
      $region27: #{graph_captioning_forward.4} parent=23 // pred_region
        %p131 = scmp.lt.s32.totalorder %s9, 1
        %s132 = scalar_select %p131, %s9, 1
        %s133 = smul.addr %s132, 256
        %s134 = smul.addr %s133, 8
        %s135 = scalar_lea.vmem %s0, %s134
      $region28: #{graph_captioning_forward.4} parent=23 // pred_fallthru
        _
    $region24: #{graph_captioning_forward.4} parent=5 // pred_fallthru
      _
    %p136 = scmp.le.s32.totalorder 1, %s9
    %p137 = scmp.lt.s32.totalorder %s9, 3
    %p138 = pnand %p136, %p137
    %p139 = pneg %p138
    // Predicated region
    $region29: #{graph_captioning_forward.4} parent=5 // pred_check
      _
    $region30: #{graph_captioning_forward.4} parent=5 // pred_check_branch
      %141 = sbr.rel (%p138) target = $region32
    $region31: #{graph_captioning_forward.4} parent=5 // pred_region
      %s142 = ssub.s32 %s9, 1
      %p143 = scmp.lt.s32.totalorder %s14, 1
      %s144 = scalar_select %p143, %s14, 1
      %s145 = smul.addr %s144, 256
      %s146 = smul.addr %s145, 8
      %s147 = scalar_lea.vmem %s0, %s146
      %p148 = pneg %p35
      %p149 = pneg %p32
      %p150 = pneg %p56
      %p151 = pneg %p53
      %p152 = pneg %p77
      %p153 = pneg %p74
      %p154 = pneg %p103
      %p155 = pneg %p100
      %p156 = scmp.lt.s32.totalorder %s14, 1
      %s157 = scalar_select %p156, %s14, 1
      %s158 = smul.addr %s157, 4
      %s159 = smul.addr %s158, 8
      %s160 = scalar_lea.vmem %s3, %s159
      %p161 = scmp.lt.s32.totalorder %s14, 1
      %s162 = scalar_select %p161, %s14, 1
      %s163 = smul.addr %s162, 256
      %s164 = smul.addr %s163, 8
      %s165 = scalar_lea.vmem %s0, %s164
      %p166 = scmp.lt.s32.totalorder %s14, 1
      %s167 = scalar_select %p166, %s14, 1
      %s168 = smul.addr %s167, 4
      %s169 = smul.addr %s168, 8
      %s170 = scalar_lea.vmem %s3, %s169
      %v172 = vld [vmem:[%s165] sm:$0xff]
      %v173 = vld [vmem:[%s165 + $0x8] sm:$0xff]
      %v174 = vld [vmem:[%s165 + $0x10] sm:$0xff]
      %v175 = vld [vmem:[%s165 + $0x18] sm:$0xff]
      %v176 = vld [vmem:[%s165 + $0x20] sm:$0xff]
      %v177 = vld [vmem:[%s165 + $0x28] sm:$0xff]
      %v178 = vld [vmem:[%s165 + $0x30] sm:$0xff]
      %v179 = vld [vmem:[%s165 + $0x38] sm:$0xff]
      %v180 = vld [vmem:[%s165 + $0x40] sm:$0xff]
      %v181 = vld [vmem:[%s165 + $0x48] sm:$0xff]
      %v182 = vld [vmem:[%s165 + $0x50] sm:$0xff]
      %v183 = vld [vmem:[%s165 + $0x58] sm:$0xff]
      %v184 = vld [vmem:[%s165 + $0x60] sm:$0xff]
      %v185 = vld [vmem:[%s165 + $0x68] sm:$0xff]
      %v186 = vld [vmem:[%s165 + $0x70] sm:$0xff]
      %v187 = vld [vmem:[%s165 + $0x78] sm:$0xff]
      %v188 = vld [vmem:[%s165 + $0x80] sm:$0xff]
      %v189 = vld [vmem:[%s165 + $0x88] sm:$0xff]
      %v190 = vld [vmem:[%s165 + $0x90] sm:$0xff]
      %v191 = vld [vmem:[%s165 + $0x98] sm:$0xff]
      %v192 = vld [vmem:[%s165 + $0xa0] sm:$0xff]
      %v193 = vld [vmem:[%s165 + $0xa8] sm:$0xff]
      %v194 = vld [vmem:[%s165 + $0xb0] sm:$0xff]
      %v195 = vld [vmem:[%s165 + $0xb8] sm:$0xff]
      %v196 = vld [vmem:[%s165 + $0xc0] sm:$0xff]
      %v197 = vld [vmem:[%s165 + $0xc8] sm:$0xff]
      %v198 = vld [vmem:[%s165 + $0xd0] sm:$0xff]
      %v199 = vld [vmem:[%s165 + $0xd8] sm:$0xff]
      %v200 = vld [vmem:[%s165 + $0xe0] sm:$0xff]
      %v201 = vld [vmem:[%s165 + $0xe8] sm:$0xff]
      %v202 = vld [vmem:[%s165 + $0xf0] sm:$0xff]
      %v203 = vld [vmem:[%s165 + $0xf8] sm:$0xff]
      %v204 = vld [vmem:[%s165 + $0x100] sm:$0xff]
      %v205 = vld [vmem:[%s165 + $0x108] sm:$0xff]
      %v206 = vld [vmem:[%s165 + $0x110] sm:$0xff]
      %v207 = vld [vmem:[%s165 + $0x118] sm:$0xff]
      %v208 = vld [vmem:[%s165 + $0x120] sm:$0xff]
      %v209 = vld [vmem:[%s165 + $0x128] sm:$0xff]
      %v210 = vld [vmem:[%s165 + $0x130] sm:$0xff]
      %v211 = vld [vmem:[%s165 + $0x138] sm:$0xff]
      %v212 = vld [vmem:[%s165 + $0x140] sm:$0xff]
      %v213 = vld [vmem:[%s165 + $0x148] sm:$0xff]
      %v214 = vld [vmem:[%s165 + $0x150] sm:$0xff]
      %v215 = vld [vmem:[%s165 + $0x158] sm:$0xff]
      %v216 = vld [vmem:[%s165 + $0x160] sm:$0xff]
      %v217 = vld [vmem:[%s165 + $0x168] sm:$0xff]
      %v218 = vld [vmem:[%s165 + $0x170] sm:$0xff]
      %v219 = vld [vmem:[%s165 + $0x178] sm:$0xff]
      %v220 = vld [vmem:[%s165 + $0x180] sm:$0xff]
      %v221 = vld [vmem:[%s165 + $0x188] sm:$0xff]
      %v222 = vld [vmem:[%s165 + $0x190] sm:$0xff]
      %v223 = vld [vmem:[%s165 + $0x198] sm:$0xff]
      %v224 = vld [vmem:[%s165 + $0x1a0] sm:$0xff]
      %v225 = vld [vmem:[%s165 + $0x1a8] sm:$0xff]
      %v226 = vld [vmem:[%s165 + $0x1b0] sm:$0xff]
      %v227 = vld [vmem:[%s165 + $0x1b8] sm:$0xff]
      %v228 = vld [vmem:[%s165 + $0x1c0] sm:$0xff]
      %v229 = vld [vmem:[%s165 + $0x1c8] sm:$0xff]
      %v230 = vld [vmem:[%s165 + $0x1d0] sm:$0xff]
      %v231 = vld [vmem:[%s165 + $0x1d8] sm:$0xff]
      %v232 = vld [vmem:[%s165 + $0x1e0] sm:$0xff]
      %v233 = vld [vmem:[%s165 + $0x1e8] sm:$0xff]
      %v234 = vld [vmem:[%s165 + $0x1f0] sm:$0xff]
      %v235 = vld [vmem:[%s165 + $0x1f8] sm:$0xff]
      %v236 = vld [vmem:[%s165 + $0x200] sm:$0xff]
      %v237 = vld [vmem:[%s165 + $0x208] sm:$0xff]
      %v238 = vld [vmem:[%s165 + $0x210] sm:$0xff]
      %v239 = vld [vmem:[%s165 + $0x218] sm:$0xff]
      %v240 = vld [vmem:[%s165 + $0x220] sm:$0xff]
      %v241 = vld [vmem:[%s165 + $0x228] sm:$0xff]
      %v242 = vld [vmem:[%s165 + $0x230] sm:$0xff]
      %v243 = vld [vmem:[%s165 + $0x238] sm:$0xff]
      %v244 = vld [vmem:[%s165 + $0x240] sm:$0xff]
      %v245 = vld [vmem:[%s165 + $0x248] sm:$0xff]
      %v246 = vld [vmem:[%s165 + $0x250] sm:$0xff]
      %v247 = vld [vmem:[%s165 + $0x258] sm:$0xff]
      %v248 = vld [vmem:[%s165 + $0x260] sm:$0xff]
      %v249 = vld [vmem:[%s165 + $0x268] sm:$0xff]
      %v250 = vld [vmem:[%s165 + $0x270] sm:$0xff]
      %v251 = vld [vmem:[%s165 + $0x278] sm:$0xff]
      %v252 = vld [vmem:[%s165 + $0x280] sm:$0xff]
      %v253 = vld [vmem:[%s165 + $0x288] sm:$0xff]
      %v254 = vld [vmem:[%s165 + $0x290] sm:$0xff]
      %v255 = vld [vmem:[%s165 + $0x298] sm:$0xff]
      %v256 = vld [vmem:[%s165 + $0x2a0] sm:$0xff]
      %v257 = vld [vmem:[%s165 + $0x2a8] sm:$0xff]
      %v258 = vld [vmem:[%s165 + $0x2b0] sm:$0xff]
      %v259 = vld [vmem:[%s165 + $0x2b8] sm:$0xff]
      %v260 = vld [vmem:[%s165 + $0x2c0] sm:$0xff]
      %v261 = vld [vmem:[%s165 + $0x2c8] sm:$0xff]
      %v262 = vld [vmem:[%s165 + $0x2d0] sm:$0xff]
      %v263 = vld [vmem:[%s165 + $0x2d8] sm:$0xff]
      %v264 = vld [vmem:[%s165 + $0x2e0] sm:$0xff]
      %v265 = vld [vmem:[%s165 + $0x2e8] sm:$0xff]
      %v266 = vld [vmem:[%s165 + $0x2f0] sm:$0xff]
      %v267 = vld [vmem:[%s165 + $0x2f8] sm:$0xff]
      %v268 = vld [vmem:[%s165 + $0x300] sm:$0xff]
      %v269 = vld [vmem:[%s165 + $0x308] sm:$0xff]
      %v270 = vld [vmem:[%s165 + $0x310] sm:$0xff]
      %v271 = vld [vmem:[%s165 + $0x318] sm:$0xff]
      %v272 = vld [vmem:[%s165 + $0x320] sm:$0xff]
      %v273 = vld [vmem:[%s165 + $0x328] sm:$0xff]
      %v274 = vld [vmem:[%s165 + $0x330] sm:$0xff]
      %v275 = vld [vmem:[%s165 + $0x338] sm:$0xff]
      %v276 = vld [vmem:[%s165 + $0x340] sm:$0xff]
      %v277 = vld [vmem:[%s165 + $0x348] sm:$0xff]
      %v278 = vld [vmem:[%s165 + $0x350] sm:$0xff]
      %v279 = vld [vmem:[%s165 + $0x358] sm:$0xff]
      %v280 = vld [vmem:[%s165 + $0x360] sm:$0xff]
      %v281 = vld [vmem:[%s165 + $0x368] sm:$0xff]
      %v282 = vld [vmem:[%s165 + $0x370] sm:$0xff]
      %v283 = vld [vmem:[%s165 + $0x378] sm:$0xff]
      %v284 = vld [vmem:[%s165 + $0x380] sm:$0xff]
      %v285 = vld [vmem:[%s165 + $0x388] sm:$0xff]
      %v286 = vld [vmem:[%s165 + $0x390] sm:$0xff]
      %v287 = vld [vmem:[%s165 + $0x398] sm:$0xff]
      %v288 = vld [vmem:[%s165 + $0x3a0] sm:$0xff]
      %v289 = vld [vmem:[%s165 + $0x3a8] sm:$0xff]
      %v290 = vld [vmem:[%s165 + $0x3b0] sm:$0xff]
      %v291 = vld [vmem:[%s165 + $0x3b8] sm:$0xff]
      %v292 = vld [vmem:[%s165 + $0x3c0] sm:$0xff]
      %v293 = vld [vmem:[%s165 + $0x3c8] sm:$0xff]
      %v294 = vld [vmem:[%s165 + $0x3d0] sm:$0xff]
      %v295 = vld [vmem:[%s165 + $0x3d8] sm:$0xff]
      %v296 = vld [vmem:[%s165 + $0x3e0] sm:$0xff]
      %v297 = vld [vmem:[%s165 + $0x3e8] sm:$0xff]
      %v298 = vld [vmem:[%s165 + $0x3f0] sm:$0xff]
      %v299 = vld [vmem:[%s165 + $0x3f8] sm:$0xff]
      %v300 = vld [vmem:[%s165 + $0x400] sm:$0xff]
      %v301 = vld [vmem:[%s165 + $0x408] sm:$0xff]
      %v302 = vld [vmem:[%s165 + $0x410] sm:$0xff]
      %v303 = vld [vmem:[%s165 + $0x418] sm:$0xff]
      %v304 = vld [vmem:[%s165 + $0x420] sm:$0xff]
      %v305 = vld [vmem:[%s165 + $0x428] sm:$0xff]
      %v306 = vld [vmem:[%s165 + $0x430] sm:$0xff]
      %v307 = vld [vmem:[%s165 + $0x438] sm:$0xff]
      %v308 = vld [vmem:[%s165 + $0x440] sm:$0xff]
      %v309 = vld [vmem:[%s165 + $0x448] sm:$0xff]
      %v310 = vld [vmem:[%s165 + $0x450] sm:$0xff]
      %v311 = vld [vmem:[%s165 + $0x458] sm:$0xff]
      %v312 = vld [vmem:[%s165 + $0x460] sm:$0xff]
      %v313 = vld [vmem:[%s165 + $0x468] sm:$0xff]
      %v314 = vld [vmem:[%s165 + $0x470] sm:$0xff]
      %v315 = vld [vmem:[%s165 + $0x478] sm:$0xff]
      %v316 = vld [vmem:[%s165 + $0x480] sm:$0xff]
      %v317 = vld [vmem:[%s165 + $0x488] sm:$0xff]
      %v318 = vld [vmem:[%s165 + $0x490] sm:$0xff]
      %v319 = vld [vmem:[%s165 + $0x498] sm:$0xff]
      %v320 = vld [vmem:[%s165 + $0x4a0] sm:$0xff]
      %v321 = vld [vmem:[%s165 + $0x4a8] sm:$0xff]
      %v322 = vld [vmem:[%s165 + $0x4b0] sm:$0xff]
      %v323 = vld [vmem:[%s165 + $0x4b8] sm:$0xff]
      %v324 = vld [vmem:[%s165 + $0x4c0] sm:$0xff]
      %v325 = vld [vmem:[%s165 + $0x4c8] sm:$0xff]
      %v326 = vld [vmem:[%s165 + $0x4d0] sm:$0xff]
      %v327 = vld [vmem:[%s165 + $0x4d8] sm:$0xff]
      %v328 = vld [vmem:[%s165 + $0x4e0] sm:$0xff]
      %v329 = vld [vmem:[%s165 + $0x4e8] sm:$0xff]
      %v330 = vld [vmem:[%s165 + $0x4f0] sm:$0xff]
      %v331 = vld [vmem:[%s165 + $0x4f8] sm:$0xff]
      %v332 = vld [vmem:[%s165 + $0x500] sm:$0xff]
      %v333 = vld [vmem:[%s165 + $0x508] sm:$0xff]
      %v334 = vld [vmem:[%s165 + $0x510] sm:$0xff]
      %v335 = vld [vmem:[%s165 + $0x518] sm:$0xff]
      %v336 = vld [vmem:[%s165 + $0x520] sm:$0xff]
      %v337 = vld [vmem:[%s165 + $0x528] sm:$0xff]
      %v338 = vld [vmem:[%s165 + $0x530] sm:$0xff]
      %v339 = vld [vmem:[%s165 + $0x538] sm:$0xff]
      %v340 = vld [vmem:[%s165 + $0x540] sm:$0xff]
      %v341 = vld [vmem:[%s165 + $0x548] sm:$0xff]
      %v342 = vld [vmem:[%s165 + $0x550] sm:$0xff]
      %v343 = vld [vmem:[%s165 + $0x558] sm:$0xff]
      %v344 = vld [vmem:[%s165 + $0x560] sm:$0xff]
      %v345 = vld [vmem:[%s165 + $0x568] sm:$0xff]
      %v346 = vld [vmem:[%s165 + $0x570] sm:$0xff]
      %v347 = vld [vmem:[%s165 + $0x578] sm:$0xff]
      %v348 = vld [vmem:[%s165 + $0x580] sm:$0xff]
      %v349 = vld [vmem:[%s165 + $0x588] sm:$0xff]
      %v350 = vld [vmem:[%s165 + $0x590] sm:$0xff]
      %v351 = vld [vmem:[%s165 + $0x598] sm:$0xff]
      %v352 = vld [vmem:[%s165 + $0x5a0] sm:$0xff]
      %v353 = vld [vmem:[%s165 + $0x5a8] sm:$0xff]
      %v354 = vld [vmem:[%s165 + $0x5b0] sm:$0xff]
      %v355 = vld [vmem:[%s165 + $0x5b8] sm:$0xff]
      %v356 = vld [vmem:[%s165 + $0x5c0] sm:$0xff]
      %v357 = vld [vmem:[%s165 + $0x5c8] sm:$0xff]
      %v358 = vld [vmem:[%s165 + $0x5d0] sm:$0xff]
      %v359 = vld [vmem:[%s165 + $0x5d8] sm:$0xff]
      %v360 = vld [vmem:[%s165 + $0x5e0] sm:$0xff]
      %v361 = vld [vmem:[%s165 + $0x5e8] sm:$0xff]
      %v362 = vld [vmem:[%s165 + $0x5f0] sm:$0xff]
      %v363 = vld [vmem:[%s165 + $0x5f8] sm:$0xff]
      %v364 = vld [vmem:[%s165 + $0x600] sm:$0xff]
      %v365 = vld [vmem:[%s165 + $0x608] sm:$0xff]
      %v366 = vld [vmem:[%s165 + $0x610] sm:$0xff]
      %v367 = vld [vmem:[%s165 + $0x618] sm:$0xff]
      %v368 = vld [vmem:[%s165 + $0x620] sm:$0xff]
      %v369 = vld [vmem:[%s165 + $0x628] sm:$0xff]
      %v370 = vld [vmem:[%s165 + $0x630] sm:$0xff]
      %v371 = vld [vmem:[%s165 + $0x638] sm:$0xff]
      %v372 = vld [vmem:[%s165 + $0x640] sm:$0xff]
      %v373 = vld [vmem:[%s165 + $0x648] sm:$0xff]
      %v374 = vld [vmem:[%s165 + $0x650] sm:$0xff]
      %v375 = vld [vmem:[%s165 + $0x658] sm:$0xff]
      %v376 = vld [vmem:[%s165 + $0x660] sm:$0xff]
      %v377 = vld [vmem:[%s165 + $0x668] sm:$0xff]
      %v378 = vld [vmem:[%s165 + $0x670] sm:$0xff]
      %v379 = vld [vmem:[%s165 + $0x678] sm:$0xff]
      %v380 = vld [vmem:[%s165 + $0x680] sm:$0xff]
      %v381 = vld [vmem:[%s165 + $0x688] sm:$0xff]
      %v382 = vld [vmem:[%s165 + $0x690] sm:$0xff]
      %v383 = vld [vmem:[%s165 + $0x698] sm:$0xff]
      %v384 = vld [vmem:[%s165 + $0x6a0] sm:$0xff]
      %v385 = vld [vmem:[%s165 + $0x6a8] sm:$0xff]
      %v386 = vld [vmem:[%s165 + $0x6b0] sm:$0xff]
      %v387 = vld [vmem:[%s165 + $0x6b8] sm:$0xff]
      %v388 = vld [vmem:[%s165 + $0x6c0] sm:$0xff]
      %v389 = vld [vmem:[%s165 + $0x6c8] sm:$0xff]
      %v390 = vld [vmem:[%s165 + $0x6d0] sm:$0xff]
      %v391 = vld [vmem:[%s165 + $0x6d8] sm:$0xff]
      %v392 = vld [vmem:[%s165 + $0x6e0] sm:$0xff]
      %v393 = vld [vmem:[%s165 + $0x6e8] sm:$0xff]
      %v394 = vld [vmem:[%s165 + $0x6f0] sm:$0xff]
      %v395 = vld [vmem:[%s165 + $0x6f8] sm:$0xff]
      %v396 = vld [vmem:[%s165 + $0x700] sm:$0xff]
      %v397 = vld [vmem:[%s165 + $0x708] sm:$0xff]
      %v398 = vld [vmem:[%s165 + $0x710] sm:$0xff]
      %v399 = vld [vmem:[%s165 + $0x718] sm:$0xff]
      %v400 = vld [vmem:[%s165 + $0x720] sm:$0xff]
      %v401 = vld [vmem:[%s165 + $0x728] sm:$0xff]
      %v402 = vld [vmem:[%s165 + $0x730] sm:$0xff]
      %v403 = vld [vmem:[%s165 + $0x738] sm:$0xff]
      %v404 = vld [vmem:[%s165 + $0x740] sm:$0xff]
      %v405 = vld [vmem:[%s165 + $0x748] sm:$0xff]
      %v406 = vld [vmem:[%s165 + $0x750] sm:$0xff]
      %v407 = vld [vmem:[%s165 + $0x758] sm:$0xff]
      %v408 = vld [vmem:[%s165 + $0x760] sm:$0xff]
      %v409 = vld [vmem:[%s165 + $0x768] sm:$0xff]
      %v410 = vld [vmem:[%s165 + $0x770] sm:$0xff]
      %v411 = vld [vmem:[%s165 + $0x778] sm:$0xff]
      %v412 = vld [vmem:[%s165 + $0x780] sm:$0xff]
      %v413 = vld [vmem:[%s165 + $0x788] sm:$0xff]
      %v414 = vld [vmem:[%s165 + $0x790] sm:$0xff]
      %v415 = vld [vmem:[%s165 + $0x798] sm:$0xff]
      %v416 = vld [vmem:[%s165 + $0x7a0] sm:$0xff]
      %v417 = vld [vmem:[%s165 + $0x7a8] sm:$0xff]
      %v418 = vld [vmem:[%s165 + $0x7b0] sm:$0xff]
      %v419 = vld [vmem:[%s165 + $0x7b8] sm:$0xff]
      %v420 = vld [vmem:[%s165 + $0x7c0] sm:$0xff]
      %v421 = vld [vmem:[%s165 + $0x7c8] sm:$0xff]
      %v422 = vld [vmem:[%s165 + $0x7d0] sm:$0xff]
      %v423 = vld [vmem:[%s165 + $0x7d8] sm:$0xff]
      %v424 = vld [vmem:[%s165 + $0x7e0] sm:$0xff]
      %v425 = vld [vmem:[%s165 + $0x7e8] sm:$0xff]
      %v426 = vld [vmem:[%s165 + $0x7f0] sm:$0xff]
      %v427 = vld [vmem:[%s165 + $0x7f8] sm:$0xff]
      %vm428 = vcmask 130048
      %v429 = vsel %vm428, %v172, 0.0
      %430 = vadd.xlane.f32.xlu0 %v429
      %v431 = vpop.xlane.xlu0 %430
      %v432 = vsel %vm428, %v173, 0.0
      %433 = vadd.xlane.f32.xlu0 %v432
      %v434 = vpop.xlane.xlu0 %433
      %v435 = vsel %vm428, %v174, 0.0
      %436 = vadd.xlane.f32.xlu0 %v435
      %v437 = vpop.xlane.xlu0 %436
      %v438 = vsel %vm428, %v175, 0.0
      %439 = vadd.xlane.f32.xlu0 %v438
      %v440 = vpop.xlane.xlu0 %439
      %v441 = vsel %vm428, %v176, 0.0
      %442 = vadd.xlane.f32.xlu0 %v441
      %v443 = vpop.xlane.xlu0 %442
      %v444 = vsel %vm428, %v177, 0.0
      %445 = vadd.xlane.f32.xlu0 %v444
      %v446 = vpop.xlane.xlu0 %445
      %v447 = vsel %vm428, %v178, 0.0
      %448 = vadd.xlane.f32.xlu0 %v447
      %v449 = vpop.xlane.xlu0 %448
      %v450 = vsel %vm428, %v179, 0.0
      %451 = vadd.xlane.f32.xlu0 %v450
      %v452 = vpop.xlane.xlu0 %451
      %v453 = vsel %vm428, %v180, 0.0
      %454 = vadd.xlane.f32.xlu0 %v453
      %v455 = vpop.xlane.xlu0 %454
      %v456 = vsel %vm428, %v181, 0.0
      %457 = vadd.xlane.f32.xlu0 %v456
      %v458 = vpop.xlane.xlu0 %457
      %v459 = vsel %vm428, %v182, 0.0
      %460 = vadd.xlane.f32.xlu0 %v459
      %v461 = vpop.xlane.xlu0 %460
      %v462 = vsel %vm428, %v183, 0.0
      %463 = vadd.xlane.f32.xlu0 %v462
      %v464 = vpop.xlane.xlu0 %463
      %v465 = vsel %vm428, %v184, 0.0
      %466 = vadd.xlane.f32.xlu0 %v465
      %v467 = vpop.xlane.xlu0 %466
      %v468 = vsel %vm428, %v185, 0.0
      %469 = vadd.xlane.f32.xlu0 %v468
      %v470 = vpop.xlane.xlu0 %469
      %v471 = vsel %vm428, %v186, 0.0
      %472 = vadd.xlane.f32.xlu0 %v471
      %v473 = vpop.xlane.xlu0 %472
      %v474 = vsel %vm428, %v187, 0.0
      %475 = vadd.xlane.f32.xlu0 %v474
      %v476 = vpop.xlane.xlu0 %475
      %v477 = vsel %vm428, %v188, 0.0
      %478 = vadd.xlane.f32.xlu0 %v477
      %v479 = vpop.xlane.xlu0 %478
      %v480 = vsel %vm428, %v189, 0.0
      %481 = vadd.xlane.f32.xlu0 %v480
      %v482 = vpop.xlane.xlu0 %481
      %v483 = vsel %vm428, %v190, 0.0
      %484 = vadd.xlane.f32.xlu0 %v483
      %v485 = vpop.xlane.xlu0 %484
      %v486 = vsel %vm428, %v191, 0.0
      %487 = vadd.xlane.f32.xlu0 %v486
      %v488 = vpop.xlane.xlu0 %487
      %v489 = vsel %vm428, %v192, 0.0
      %490 = vadd.xlane.f32.xlu0 %v489
      %v491 = vpop.xlane.xlu0 %490
      %v492 = vsel %vm428, %v193, 0.0
      %493 = vadd.xlane.f32.xlu0 %v492
      %v494 = vpop.xlane.xlu0 %493
      %v495 = vsel %vm428, %v194, 0.0
      %496 = vadd.xlane.f32.xlu0 %v495
      %v497 = vpop.xlane.xlu0 %496
      %v498 = vsel %vm428, %v195, 0.0
      %499 = vadd.xlane.f32.xlu0 %v498
      %v500 = vpop.xlane.xlu0 %499
      %v501 = vsel %vm428, %v196, 0.0
      %502 = vadd.xlane.f32.xlu0 %v501
      %v503 = vpop.xlane.xlu0 %502
      %v504 = vsel %vm428, %v197, 0.0
      %505 = vadd.xlane.f32.xlu0 %v504
      %v506 = vpop.xlane.xlu0 %505
      %v507 = vsel %vm428, %v198, 0.0
      %508 = vadd.xlane.f32.xlu0 %v507
      %v509 = vpop.xlane.xlu0 %508
      %v510 = vsel %vm428, %v199, 0.0
      %511 = vadd.xlane.f32.xlu0 %v510
      %v512 = vpop.xlane.xlu0 %511
      %v513 = vsel %vm428, %v200, 0.0
      %514 = vadd.xlane.f32.xlu0 %v513
      %v515 = vpop.xlane.xlu0 %514
      %v516 = vsel %vm428, %v201, 0.0
      %517 = vadd.xlane.f32.xlu0 %v516
      %v518 = vpop.xlane.xlu0 %517
      %v519 = vsel %vm428, %v202, 0.0
      %520 = vadd.xlane.f32.xlu0 %v519
      %v521 = vpop.xlane.xlu0 %520
      %v522 = vsel %vm428, %v203, 0.0
      %523 = vadd.xlane.f32.xlu0 %v522
      %v524 = vpop.xlane.xlu0 %523
      %v525 = vsel %vm428, %v204, 0.0
      %526 = vadd.xlane.f32.xlu0 %v525
      %v527 = vpop.xlane.xlu0 %526
      %v528 = vsel %vm428, %v205, 0.0
      %529 = vadd.xlane.f32.xlu0 %v528
      %v530 = vpop.xlane.xlu0 %529
      %v531 = vsel %vm428, %v206, 0.0
      %532 = vadd.xlane.f32.xlu0 %v531
      %v533 = vpop.xlane.xlu0 %532
      %v534 = vsel %vm428, %v207, 0.0
      %535 = vadd.xlane.f32.xlu0 %v534
      %v536 = vpop.xlane.xlu0 %535
      %v537 = vsel %vm428, %v208, 0.0
      %538 = vadd.xlane.f32.xlu0 %v537
      %v539 = vpop.xlane.xlu0 %538
      %v540 = vsel %vm428, %v209, 0.0
      %541 = vadd.xlane.f32.xlu0 %v540
      %v542 = vpop.xlane.xlu0 %541
      %v543 = vsel %vm428, %v210, 0.0
      %544 = vadd.xlane.f32.xlu0 %v543
      %v545 = vpop.xlane.xlu0 %544
      %v546 = vsel %vm428, %v211, 0.0
      %547 = vadd.xlane.f32.xlu0 %v546
      %v548 = vpop.xlane.xlu0 %547
      %v549 = vsel %vm428, %v212, 0.0
      %550 = vadd.xlane.f32.xlu0 %v549
      %v551 = vpop.xlane.xlu0 %550
      %v552 = vsel %vm428, %v213, 0.0
      %553 = vadd.xlane.f32.xlu0 %v552
      %v554 = vpop.xlane.xlu0 %553
      %v555 = vsel %vm428, %v214, 0.0
      %556 = vadd.xlane.f32.xlu0 %v555
      %v557 = vpop.xlane.xlu0 %556
      %v558 = vsel %vm428, %v215, 0.0
      %559 = vadd.xlane.f32.xlu0 %v558
      %v560 = vpop.xlane.xlu0 %559
      %v561 = vsel %vm428, %v216, 0.0
      %562 = vadd.xlane.f32.xlu0 %v561
      %v563 = vpop.xlane.xlu0 %562
      %v564 = vsel %vm428, %v217, 0.0
      %565 = vadd.xlane.f32.xlu0 %v564
      %v566 = vpop.xlane.xlu0 %565
      %v567 = vsel %vm428, %v218, 0.0
      %568 = vadd.xlane.f32.xlu0 %v567
      %v569 = vpop.xlane.xlu0 %568
      %v570 = vsel %vm428, %v219, 0.0
      %571 = vadd.xlane.f32.xlu0 %v570
      %v572 = vpop.xlane.xlu0 %571
      %v573 = vsel %vm428, %v220, 0.0
      %574 = vadd.xlane.f32.xlu0 %v573
      %v575 = vpop.xlane.xlu0 %574
      %v576 = vsel %vm428, %v221, 0.0
      %577 = vadd.xlane.f32.xlu0 %v576
      %v578 = vpop.xlane.xlu0 %577
      %v579 = vsel %vm428, %v222, 0.0
      %580 = vadd.xlane.f32.xlu0 %v579
      %v581 = vpop.xlane.xlu0 %580
      %v582 = vsel %vm428, %v223, 0.0
      %583 = vadd.xlane.f32.xlu0 %v582
      %v584 = vpop.xlane.xlu0 %583
      %v585 = vsel %vm428, %v224, 0.0
      %586 = vadd.xlane.f32.xlu0 %v585
      %v587 = vpop.xlane.xlu0 %586
      %v588 = vsel %vm428, %v225, 0.0
      %589 = vadd.xlane.f32.xlu0 %v588
      %v590 = vpop.xlane.xlu0 %589
      %v591 = vsel %vm428, %v226, 0.0
      %592 = vadd.xlane.f32.xlu0 %v591
      %v593 = vpop.xlane.xlu0 %592
      %v594 = vsel %vm428, %v227, 0.0
      %595 = vadd.xlane.f32.xlu0 %v594
      %v596 = vpop.xlane.xlu0 %595
      %v597 = vsel %vm428, %v228, 0.0
      %598 = vadd.xlane.f32.xlu0 %v597
      %v599 = vpop.xlane.xlu0 %598
      %v600 = vsel %vm428, %v229, 0.0
      %601 = vadd.xlane.f32.xlu0 %v600
      %v602 = vpop.xlane.xlu0 %601
      %v603 = vsel %vm428, %v230, 0.0
      %604 = vadd.xlane.f32.xlu0 %v603
      %v605 = vpop.xlane.xlu0 %604
      %v606 = vsel %vm428, %v231, 0.0
      %607 = vadd.xlane.f32.xlu0 %v606
      %v608 = vpop.xlane.xlu0 %607
      %v609 = vsel %vm428, %v232, 0.0
      %610 = vadd.xlane.f32.xlu0 %v609
      %v611 = vpop.xlane.xlu0 %610
      %v612 = vsel %vm428, %v233, 0.0
      %613 = vadd.xlane.f32.xlu0 %v612
      %v614 = vpop.xlane.xlu0 %613
      %v615 = vsel %vm428, %v234, 0.0
      %616 = vadd.xlane.f32.xlu0 %v615
      %v617 = vpop.xlane.xlu0 %616
      %v618 = vsel %vm428, %v235, 0.0
      %619 = vadd.xlane.f32.xlu0 %v618
      %v620 = vpop.xlane.xlu0 %619
      %v621 = vsel %vm428, %v236, 0.0
      %622 = vadd.xlane.f32.xlu0 %v621
      %v623 = vpop.xlane.xlu0 %622
      %v624 = vsel %vm428, %v237, 0.0
      %625 = vadd.xlane.f32.xlu0 %v624
      %v626 = vpop.xlane.xlu0 %625
      %v627 = vsel %vm428, %v238, 0.0
      %628 = vadd.xlane.f32.xlu0 %v627
      %v629 = vpop.xlane.xlu0 %628
      %v630 = vsel %vm428, %v239, 0.0
      %631 = vadd.xlane.f32.xlu0 %v630
      %v632 = vpop.xlane.xlu0 %631
      %v633 = vsel %vm428, %v240, 0.0
      %634 = vadd.xlane.f32.xlu0 %v633
      %v635 = vpop.xlane.xlu0 %634
      %v636 = vsel %vm428, %v241, 0.0
      %637 = vadd.xlane.f32.xlu0 %v636
      %v638 = vpop.xlane.xlu0 %637
      %v639 = vsel %vm428, %v242, 0.0
      %640 = vadd.xlane.f32.xlu0 %v639
      %v641 = vpop.xlane.xlu0 %640
      %v642 = vsel %vm428, %v243, 0.0
      %643 = vadd.xlane.f32.xlu0 %v642
      %v644 = vpop.xlane.xlu0 %643
      %v645 = vsel %vm428, %v244, 0.0
      %646 = vadd.xlane.f32.xlu0 %v645
      %v647 = vpop.xlane.xlu0 %646
      %v648 = vsel %vm428, %v245, 0.0
      %649 = vadd.xlane.f32.xlu0 %v648
      %v650 = vpop.xlane.xlu0 %649
      %v651 = vsel %vm428, %v246, 0.0
      %652 = vadd.xlane.f32.xlu0 %v651
      %v653 = vpop.xlane.xlu0 %652
      %v654 = vsel %vm428, %v247, 0.0
      %655 = vadd.xlane.f32.xlu0 %v654
      %v656 = vpop.xlane.xlu0 %655
      %v657 = vsel %vm428, %v248, 0.0
      %658 = vadd.xlane.f32.xlu0 %v657
      %v659 = vpop.xlane.xlu0 %658
      %v660 = vsel %vm428, %v249, 0.0
      %661 = vadd.xlane.f32.xlu0 %v660
      %v662 = vpop.xlane.xlu0 %661
      %v663 = vsel %vm428, %v250, 0.0
      %664 = vadd.xlane.f32.xlu0 %v663
      %v665 = vpop.xlane.xlu0 %664
      %v666 = vsel %vm428, %v251, 0.0
      %667 = vadd.xlane.f32.xlu0 %v666
      %v668 = vpop.xlane.xlu0 %667
      %v669 = vsel %vm428, %v252, 0.0
      %670 = vadd.xlane.f32.xlu0 %v669
      %v671 = vpop.xlane.xlu0 %670
      %v672 = vsel %vm428, %v253, 0.0
      %673 = vadd.xlane.f32.xlu0 %v672
      %v674 = vpop.xlane.xlu0 %673
      %v675 = vsel %vm428, %v254, 0.0
      %676 = vadd.xlane.f32.xlu0 %v675
      %v677 = vpop.xlane.xlu0 %676
      %v678 = vsel %vm428, %v255, 0.0
      %679 = vadd.xlane.f32.xlu0 %v678
      %v680 = vpop.xlane.xlu0 %679
      %v681 = vsel %vm428, %v256, 0.0
      %682 = vadd.xlane.f32.xlu0 %v681
      %v683 = vpop.xlane.xlu0 %682
      %v684 = vsel %vm428, %v257, 0.0
      %685 = vadd.xlane.f32.xlu0 %v684
      %v686 = vpop.xlane.xlu0 %685
      %v687 = vsel %vm428, %v258, 0.0
      %688 = vadd.xlane.f32.xlu0 %v687
      %v689 = vpop.xlane.xlu0 %688
      %v690 = vsel %vm428, %v259, 0.0
      %691 = vadd.xlane.f32.xlu0 %v690
      %v692 = vpop.xlane.xlu0 %691
      %v693 = vsel %vm428, %v260, 0.0
      %694 = vadd.xlane.f32.xlu0 %v693
      %v695 = vpop.xlane.xlu0 %694
      %v696 = vsel %vm428, %v261, 0.0
      %697 = vadd.xlane.f32.xlu0 %v696
      %v698 = vpop.xlane.xlu0 %697
      %v699 = vsel %vm428, %v262, 0.0
      %700 = vadd.xlane.f32.xlu0 %v699
      %v701 = vpop.xlane.xlu0 %700
      %v702 = vsel %vm428, %v263, 0.0
      %703 = vadd.xlane.f32.xlu0 %v702
      %v704 = vpop.xlane.xlu0 %703
      %v705 = vsel %vm428, %v264, 0.0
      %706 = vadd.xlane.f32.xlu0 %v705
      %v707 = vpop.xlane.xlu0 %706
      %v708 = vsel %vm428, %v265, 0.0
      %709 = vadd.xlane.f32.xlu0 %v708
      %v710 = vpop.xlane.xlu0 %709
      %v711 = vsel %vm428, %v266, 0.0
      %712 = vadd.xlane.f32.xlu0 %v711
      %v713 = vpop.xlane.xlu0 %712
      %v714 = vsel %vm428, %v267, 0.0
      %715 = vadd.xlane.f32.xlu0 %v714
      %v716 = vpop.xlane.xlu0 %715
      %v717 = vsel %vm428, %v268, 0.0
      %718 = vadd.xlane.f32.xlu0 %v717
      %v719 = vpop.xlane.xlu0 %718
      %v720 = vsel %vm428, %v269, 0.0
      %721 = vadd.xlane.f32.xlu0 %v720
      %v722 = vpop.xlane.xlu0 %721
      %v723 = vsel %vm428, %v270, 0.0
      %724 = vadd.xlane.f32.xlu0 %v723
      %v725 = vpop.xlane.xlu0 %724
      %v726 = vsel %vm428, %v271, 0.0
      %727 = vadd.xlane.f32.xlu0 %v726
      %v728 = vpop.xlane.xlu0 %727
      %v729 = vsel %vm428, %v272, 0.0
      %730 = vadd.xlane.f32.xlu0 %v729
      %v731 = vpop.xlane.xlu0 %730
      %v732 = vsel %vm428, %v273, 0.0
      %733 = vadd.xlane.f32.xlu0 %v732
      %v734 = vpop.xlane.xlu0 %733
      %v735 = vsel %vm428, %v274, 0.0
      %736 = vadd.xlane.f32.xlu0 %v735
      %v737 = vpop.xlane.xlu0 %736
      %v738 = vsel %vm428, %v275, 0.0
      %739 = vadd.xlane.f32.xlu0 %v738
      %v740 = vpop.xlane.xlu0 %739
      %v741 = vsel %vm428, %v276, 0.0
      %742 = vadd.xlane.f32.xlu0 %v741
      %v743 = vpop.xlane.xlu0 %742
      %v744 = vsel %vm428, %v277, 0.0
      %745 = vadd.xlane.f32.xlu0 %v744
      %v746 = vpop.xlane.xlu0 %745
      %v747 = vsel %vm428, %v278, 0.0
      %748 = vadd.xlane.f32.xlu0 %v747
      %v749 = vpop.xlane.xlu0 %748
      %v750 = vsel %vm428, %v279, 0.0
      %751 = vadd.xlane.f32.xlu0 %v750
      %v752 = vpop.xlane.xlu0 %751
      %v753 = vsel %vm428, %v280, 0.0
      %754 = vadd.xlane.f32.xlu0 %v753
      %v755 = vpop.xlane.xlu0 %754
      %v756 = vsel %vm428, %v281, 0.0
      %757 = vadd.xlane.f32.xlu0 %v756
      %v758 = vpop.xlane.xlu0 %757
      %v759 = vsel %vm428, %v282, 0.0
      %760 = vadd.xlane.f32.xlu0 %v759
      %v761 = vpop.xlane.xlu0 %760
      %v762 = vsel %vm428, %v283, 0.0
      %763 = vadd.xlane.f32.xlu0 %v762
      %v764 = vpop.xlane.xlu0 %763
      %v765 = vsel %vm428, %v284, 0.0
      %766 = vadd.xlane.f32.xlu0 %v765
      %v767 = vpop.xlane.xlu0 %766
      %v768 = vsel %vm428, %v285, 0.0
      %769 = vadd.xlane.f32.xlu0 %v768
      %v770 = vpop.xlane.xlu0 %769
      %v771 = vsel %vm428, %v286, 0.0
      %772 = vadd.xlane.f32.xlu0 %v771
      %v773 = vpop.xlane.xlu0 %772
      %v774 = vsel %vm428, %v287, 0.0
      %775 = vadd.xlane.f32.xlu0 %v774
      %v776 = vpop.xlane.xlu0 %775
      %v777 = vsel %vm428, %v288, 0.0
      %778 = vadd.xlane.f32.xlu0 %v777
      %v779 = vpop.xlane.xlu0 %778
      %v780 = vsel %vm428, %v289, 0.0
      %781 = vadd.xlane.f32.xlu0 %v780
      %v782 = vpop.xlane.xlu0 %781
      %v783 = vsel %vm428, %v290, 0.0
      %784 = vadd.xlane.f32.xlu0 %v783
      %v785 = vpop.xlane.xlu0 %784
      %v786 = vsel %vm428, %v291, 0.0
      %787 = vadd.xlane.f32.xlu0 %v786
      %v788 = vpop.xlane.xlu0 %787
      %v789 = vsel %vm428, %v292, 0.0
      %790 = vadd.xlane.f32.xlu0 %v789
      %v791 = vpop.xlane.xlu0 %790
      %v792 = vsel %vm428, %v293, 0.0
      %793 = vadd.xlane.f32.xlu0 %v792
      %v794 = vpop.xlane.xlu0 %793
      %v795 = vsel %vm428, %v294, 0.0
      %796 = vadd.xlane.f32.xlu0 %v795
      %v797 = vpop.xlane.xlu0 %796
      %v798 = vsel %vm428, %v295, 0.0
      %799 = vadd.xlane.f32.xlu0 %v798
      %v800 = vpop.xlane.xlu0 %799
      %v801 = vsel %vm428, %v296, 0.0
      %802 = vadd.xlane.f32.xlu0 %v801
      %v803 = vpop.xlane.xlu0 %802
      %v804 = vsel %vm428, %v297, 0.0
      %805 = vadd.xlane.f32.xlu0 %v804
      %v806 = vpop.xlane.xlu0 %805
      %v807 = vsel %vm428, %v298, 0.0
      %808 = vadd.xlane.f32.xlu0 %v807
      %v809 = vpop.xlane.xlu0 %808
      %v810 = vsel %vm428, %v299, 0.0
      %811 = vadd.xlane.f32.xlu0 %v810
      %v812 = vpop.xlane.xlu0 %811
      %v813 = vsel %vm428, %v300, 0.0
      %814 = vadd.xlane.f32.xlu0 %v813
      %v815 = vpop.xlane.xlu0 %814
      %v816 = vsel %vm428, %v301, 0.0
      %817 = vadd.xlane.f32.xlu0 %v816
      %v818 = vpop.xlane.xlu0 %817
      %v819 = vsel %vm428, %v302, 0.0
      %820 = vadd.xlane.f32.xlu0 %v819
      %v821 = vpop.xlane.xlu0 %820
      %v822 = vsel %vm428, %v303, 0.0
      %823 = vadd.xlane.f32.xlu0 %v822
      %v824 = vpop.xlane.xlu0 %823
      %v825 = vsel %vm428, %v304, 0.0
      %826 = vadd.xlane.f32.xlu0 %v825
      %v827 = vpop.xlane.xlu0 %826
      %v828 = vsel %vm428, %v305, 0.0
      %829 = vadd.xlane.f32.xlu0 %v828
      %v830 = vpop.xlane.xlu0 %829
      %v831 = vsel %vm428, %v306, 0.0
      %832 = vadd.xlane.f32.xlu0 %v831
      %v833 = vpop.xlane.xlu0 %832
      %v834 = vsel %vm428, %v307, 0.0
      %835 = vadd.xlane.f32.xlu0 %v834
      %v836 = vpop.xlane.xlu0 %835
      %v837 = vsel %vm428, %v308, 0.0
      %838 = vadd.xlane.f32.xlu0 %v837
      %v839 = vpop.xlane.xlu0 %838
      %v840 = vsel %vm428, %v309, 0.0
      %841 = vadd.xlane.f32.xlu0 %v840
      %v842 = vpop.xlane.xlu0 %841
      %v843 = vsel %vm428, %v310, 0.0
      %844 = vadd.xlane.f32.xlu0 %v843
      %v845 = vpop.xlane.xlu0 %844
      %v846 = vsel %vm428, %v311, 0.0
      %847 = vadd.xlane.f32.xlu0 %v846
      %v848 = vpop.xlane.xlu0 %847
      %v849 = vsel %vm428, %v312, 0.0
      %850 = vadd.xlane.f32.xlu0 %v849
      %v851 = vpop.xlane.xlu0 %850
      %v852 = vsel %vm428, %v313, 0.0
      %853 = vadd.xlane.f32.xlu0 %v852
      %v854 = vpop.xlane.xlu0 %853
      %v855 = vsel %vm428, %v314, 0.0
      %856 = vadd.xlane.f32.xlu0 %v855
      %v857 = vpop.xlane.xlu0 %856
      %v858 = vsel %vm428, %v315, 0.0
      %859 = vadd.xlane.f32.xlu0 %v858
      %v860 = vpop.xlane.xlu0 %859
      %v861 = vsel %vm428, %v316, 0.0
      %862 = vadd.xlane.f32.xlu0 %v861
      %v863 = vpop.xlane.xlu0 %862
      %v864 = vsel %vm428, %v317, 0.0
      %865 = vadd.xlane.f32.xlu0 %v864
      %v866 = vpop.xlane.xlu0 %865
      %v867 = vsel %vm428, %v318, 0.0
      %868 = vadd.xlane.f32.xlu0 %v867
      %v869 = vpop.xlane.xlu0 %868
      %v870 = vsel %vm428, %v319, 0.0
      %871 = vadd.xlane.f32.xlu0 %v870
      %v872 = vpop.xlane.xlu0 %871
      %v873 = vsel %vm428, %v320, 0.0
      %874 = vadd.xlane.f32.xlu0 %v873
      %v875 = vpop.xlane.xlu0 %874
      %v876 = vsel %vm428, %v321, 0.0
      %877 = vadd.xlane.f32.xlu0 %v876
      %v878 = vpop.xlane.xlu0 %877
      %v879 = vsel %vm428, %v322, 0.0
      %880 = vadd.xlane.f32.xlu0 %v879
      %v881 = vpop.xlane.xlu0 %880
      %v882 = vsel %vm428, %v323, 0.0
      %883 = vadd.xlane.f32.xlu0 %v882
      %v884 = vpop.xlane.xlu0 %883
      %v885 = vsel %vm428, %v324, 0.0
      %886 = vadd.xlane.f32.xlu0 %v885
      %v887 = vpop.xlane.xlu0 %886
      %v888 = vsel %vm428, %v325, 0.0
      %889 = vadd.xlane.f32.xlu0 %v888
      %v890 = vpop.xlane.xlu0 %889
      %v891 = vsel %vm428, %v326, 0.0
      %892 = vadd.xlane.f32.xlu0 %v891
      %v893 = vpop.xlane.xlu0 %892
      %v894 = vsel %vm428, %v327, 0.0
      %895 = vadd.xlane.f32.xlu0 %v894
      %v896 = vpop.xlane.xlu0 %895
      %v897 = vsel %vm428, %v328, 0.0
      %898 = vadd.xlane.f32.xlu0 %v897
      %v899 = vpop.xlane.xlu0 %898
      %v900 = vsel %vm428, %v329, 0.0
      %901 = vadd.xlane.f32.xlu0 %v900
      %v902 = vpop.xlane.xlu0 %901
      %v903 = vsel %vm428, %v330, 0.0
      %904 = vadd.xlane.f32.xlu0 %v903
      %v905 = vpop.xlane.xlu0 %904
      %v906 = vsel %vm428, %v331, 0.0
      %907 = vadd.xlane.f32.xlu0 %v906
      %v908 = vpop.xlane.xlu0 %907
      %v909 = vsel %vm428, %v332, 0.0
      %910 = vadd.xlane.f32.xlu0 %v909
      %v911 = vpop.xlane.xlu0 %910
      %v912 = vsel %vm428, %v333, 0.0
      %913 = vadd.xlane.f32.xlu0 %v912
      %v914 = vpop.xlane.xlu0 %913
      %v915 = vsel %vm428, %v334, 0.0
      %916 = vadd.xlane.f32.xlu0 %v915
      %v917 = vpop.xlane.xlu0 %916
      %v918 = vsel %vm428, %v335, 0.0
      %919 = vadd.xlane.f32.xlu0 %v918
      %v920 = vpop.xlane.xlu0 %919
      %v921 = vsel %vm428, %v336, 0.0
      %922 = vadd.xlane.f32.xlu0 %v921
      %v923 = vpop.xlane.xlu0 %922
      %v924 = vsel %vm428, %v337, 0.0
      %925 = vadd.xlane.f32.xlu0 %v924
      %v926 = vpop.xlane.xlu0 %925
      %v927 = vsel %vm428, %v338, 0.0
      %928 = vadd.xlane.f32.xlu0 %v927
      %v929 = vpop.xlane.xlu0 %928
      %v930 = vsel %vm428, %v339, 0.0
      %931 = vadd.xlane.f32.xlu0 %v930
      %v932 = vpop.xlane.xlu0 %931
      %v933 = vsel %vm428, %v340, 0.0
      %934 = vadd.xlane.f32.xlu0 %v933
      %v935 = vpop.xlane.xlu0 %934
      %v936 = vsel %vm428, %v341, 0.0
      %937 = vadd.xlane.f32.xlu0 %v936
      %v938 = vpop.xlane.xlu0 %937
      %v939 = vsel %vm428, %v342, 0.0
      %940 = vadd.xlane.f32.xlu0 %v939
      %v941 = vpop.xlane.xlu0 %940
      %v942 = vsel %vm428, %v343, 0.0
      %943 = vadd.xlane.f32.xlu0 %v942
      %v944 = vpop.xlane.xlu0 %943
      %v945 = vsel %vm428, %v344, 0.0
      %946 = vadd.xlane.f32.xlu0 %v945
      %v947 = vpop.xlane.xlu0 %946
      %v948 = vsel %vm428, %v345, 0.0
      %949 = vadd.xlane.f32.xlu0 %v948
      %v950 = vpop.xlane.xlu0 %949
      %v951 = vsel %vm428, %v346, 0.0
      %952 = vadd.xlane.f32.xlu0 %v951
      %v953 = vpop.xlane.xlu0 %952
      %v954 = vsel %vm428, %v347, 0.0
      %955 = vadd.xlane.f32.xlu0 %v954
      %v956 = vpop.xlane.xlu0 %955
      %v957 = vsel %vm428, %v348, 0.0
      %958 = vadd.xlane.f32.xlu0 %v957
      %v959 = vpop.xlane.xlu0 %958
      %v960 = vsel %vm428, %v349, 0.0
      %961 = vadd.xlane.f32.xlu0 %v960
      %v962 = vpop.xlane.xlu0 %961
      %v963 = vsel %vm428, %v350, 0.0
      %964 = vadd.xlane.f32.xlu0 %v963
      %v965 = vpop.xlane.xlu0 %964
      %v966 = vsel %vm428, %v351, 0.0
      %967 = vadd.xlane.f32.xlu0 %v966
      %v968 = vpop.xlane.xlu0 %967
      %v969 = vsel %vm428, %v352, 0.0
      %970 = vadd.xlane.f32.xlu0 %v969
      %v971 = vpop.xlane.xlu0 %970
      %v972 = vsel %vm428, %v353, 0.0
      %973 = vadd.xlane.f32.xlu0 %v972
      %v974 = vpop.xlane.xlu0 %973
      %v975 = vsel %vm428, %v354, 0.0
      %976 = vadd.xlane.f32.xlu0 %v975
      %v977 = vpop.xlane.xlu0 %976
      %v978 = vsel %vm428, %v355, 0.0
      %979 = vadd.xlane.f32.xlu0 %v978
      %v980 = vpop.xlane.xlu0 %979
      %v981 = vsel %vm428, %v356, 0.0
      %982 = vadd.xlane.f32.xlu0 %v981
      %v983 = vpop.xlane.xlu0 %982
      %v984 = vsel %vm428, %v357, 0.0
      %985 = vadd.xlane.f32.xlu0 %v984
      %v986 = vpop.xlane.xlu0 %985
      %v987 = vsel %vm428, %v358, 0.0
      %988 = vadd.xlane.f32.xlu0 %v987
      %v989 = vpop.xlane.xlu0 %988
      %v990 = vsel %vm428, %v359, 0.0
      %991 = vadd.xlane.f32.xlu0 %v990
      %v992 = vpop.xlane.xlu0 %991
      %v993 = vsel %vm428, %v360, 0.0
      %994 = vadd.xlane.f32.xlu0 %v993
      %v995 = vpop.xlane.xlu0 %994
      %v996 = vsel %vm428, %v361, 0.0
      %997 = vadd.xlane.f32.xlu0 %v996
      %v998 = vpop.xlane.xlu0 %997
      %v999 = vsel %vm428, %v362, 0.0
      %1000 = vadd.xlane.f32.xlu0 %v999
      %v1001 = vpop.xlane.xlu0 %1000
      %v1002 = vsel %vm428, %v363, 0.0
      %1003 = vadd.xlane.f32.xlu0 %v1002
      %v1004 = vpop.xlane.xlu0 %1003
      %v1005 = vsel %vm428, %v364, 0.0
      %1006 = vadd.xlane.f32.xlu0 %v1005
      %v1007 = vpop.xlane.xlu0 %1006
      %v1008 = vsel %vm428, %v365, 0.0
      %1009 = vadd.xlane.f32.xlu0 %v1008
      %v1010 = vpop.xlane.xlu0 %1009
      %v1011 = vsel %vm428, %v366, 0.0
      %1012 = vadd.xlane.f32.xlu0 %v1011
      %v1013 = vpop.xlane.xlu0 %1012
      %v1014 = vsel %vm428, %v367, 0.0
      %1015 = vadd.xlane.f32.xlu0 %v1014
      %v1016 = vpop.xlane.xlu0 %1015
      %v1017 = vsel %vm428, %v368, 0.0
      %1018 = vadd.xlane.f32.xlu0 %v1017
      %v1019 = vpop.xlane.xlu0 %1018
      %v1020 = vsel %vm428, %v369, 0.0
      %1021 = vadd.xlane.f32.xlu0 %v1020
      %v1022 = vpop.xlane.xlu0 %1021
      %v1023 = vsel %vm428, %v370, 0.0
      %1024 = vadd.xlane.f32.xlu0 %v1023
      %v1025 = vpop.xlane.xlu0 %1024
      %v1026 = vsel %vm428, %v371, 0.0
      %1027 = vadd.xlane.f32.xlu0 %v1026
      %v1028 = vpop.xlane.xlu0 %1027
      %v1029 = vsel %vm428, %v372, 0.0
      %1030 = vadd.xlane.f32.xlu0 %v1029
      %v1031 = vpop.xlane.xlu0 %1030
      %v1032 = vsel %vm428, %v373, 0.0
      %1033 = vadd.xlane.f32.xlu0 %v1032
      %v1034 = vpop.xlane.xlu0 %1033
      %v1035 = vsel %vm428, %v374, 0.0
      %1036 = vadd.xlane.f32.xlu0 %v1035
      %v1037 = vpop.xlane.xlu0 %1036
      %v1038 = vsel %vm428, %v375, 0.0
      %1039 = vadd.xlane.f32.xlu0 %v1038
      %v1040 = vpop.xlane.xlu0 %1039
      %v1041 = vsel %vm428, %v376, 0.0
      %1042 = vadd.xlane.f32.xlu0 %v1041
      %v1043 = vpop.xlane.xlu0 %1042
      %v1044 = vsel %vm428, %v377, 0.0
      %1045 = vadd.xlane.f32.xlu0 %v1044
      %v1046 = vpop.xlane.xlu0 %1045
      %v1047 = vsel %vm428, %v378, 0.0
      %1048 = vadd.xlane.f32.xlu0 %v1047
      %v1049 = vpop.xlane.xlu0 %1048
      %v1050 = vsel %vm428, %v379, 0.0
      %1051 = vadd.xlane.f32.xlu0 %v1050
      %v1052 = vpop.xlane.xlu0 %1051
      %v1053 = vsel %vm428, %v380, 0.0
      %1054 = vadd.xlane.f32.xlu0 %v1053
      %v1055 = vpop.xlane.xlu0 %1054
      %v1056 = vsel %vm428, %v381, 0.0
      %1057 = vadd.xlane.f32.xlu0 %v1056
      %v1058 = vpop.xlane.xlu0 %1057
      %v1059 = vsel %vm428, %v382, 0.0
      %1060 = vadd.xlane.f32.xlu0 %v1059
      %v1061 = vpop.xlane.xlu0 %1060
      %v1062 = vsel %vm428, %v383, 0.0
      %1063 = vadd.xlane.f32.xlu0 %v1062
      %v1064 = vpop.xlane.xlu0 %1063
      %v1065 = vsel %vm428, %v384, 0.0
      %1066 = vadd.xlane.f32.xlu0 %v1065
      %v1067 = vpop.xlane.xlu0 %1066
      %v1068 = vsel %vm428, %v385, 0.0
      %1069 = vadd.xlane.f32.xlu0 %v1068
      %v1070 = vpop.xlane.xlu0 %1069
      %v1071 = vsel %vm428, %v386, 0.0
      %1072 = vadd.xlane.f32.xlu0 %v1071
      %v1073 = vpop.xlane.xlu0 %1072
      %v1074 = vsel %vm428, %v387, 0.0
      %1075 = vadd.xlane.f32.xlu0 %v1074
      %v1076 = vpop.xlane.xlu0 %1075
      %v1077 = vsel %vm428, %v388, 0.0
      %1078 = vadd.xlane.f32.xlu0 %v1077
      %v1079 = vpop.xlane.xlu0 %1078
      %v1080 = vsel %vm428, %v389, 0.0
      %1081 = vadd.xlane.f32.xlu0 %v1080
      %v1082 = vpop.xlane.xlu0 %1081
      %v1083 = vsel %vm428, %v390, 0.0
      %1084 = vadd.xlane.f32.xlu0 %v1083
      %v1085 = vpop.xlane.xlu0 %1084
      %v1086 = vsel %vm428, %v391, 0.0
      %1087 = vadd.xlane.f32.xlu0 %v1086
      %v1088 = vpop.xlane.xlu0 %1087
      %v1089 = vsel %vm428, %v392, 0.0
      %1090 = vadd.xlane.f32.xlu0 %v1089
      %v1091 = vpop.xlane.xlu0 %1090
      %v1092 = vsel %vm428, %v393, 0.0
      %1093 = vadd.xlane.f32.xlu0 %v1092
      %v1094 = vpop.xlane.xlu0 %1093
      %v1095 = vsel %vm428, %v394, 0.0
      %1096 = vadd.xlane.f32.xlu0 %v1095
      %v1097 = vpop.xlane.xlu0 %1096
      %v1098 = vsel %vm428, %v395, 0.0
      %1099 = vadd.xlane.f32.xlu0 %v1098
      %v1100 = vpop.xlane.xlu0 %1099
      %v1101 = vsel %vm428, %v396, 0.0
      %1102 = vadd.xlane.f32.xlu0 %v1101
      %v1103 = vpop.xlane.xlu0 %1102
      %v1104 = vsel %vm428, %v397, 0.0
      %1105 = vadd.xlane.f32.xlu0 %v1104
      %v1106 = vpop.xlane.xlu0 %1105
      %v1107 = vsel %vm428, %v398, 0.0
      %1108 = vadd.xlane.f32.xlu0 %v1107
      %v1109 = vpop.xlane.xlu0 %1108
      %v1110 = vsel %vm428, %v399, 0.0
      %1111 = vadd.xlane.f32.xlu0 %v1110
      %v1112 = vpop.xlane.xlu0 %1111
      %v1113 = vsel %vm428, %v400, 0.0
      %1114 = vadd.xlane.f32.xlu0 %v1113
      %v1115 = vpop.xlane.xlu0 %1114
      %v1116 = vsel %vm428, %v401, 0.0
      %1117 = vadd.xlane.f32.xlu0 %v1116
      %v1118 = vpop.xlane.xlu0 %1117
      %v1119 = vsel %vm428, %v402, 0.0
      %1120 = vadd.xlane.f32.xlu0 %v1119
      %v1121 = vpop.xlane.xlu0 %1120
      %v1122 = vsel %vm428, %v403, 0.0
      %1123 = vadd.xlane.f32.xlu0 %v1122
      %v1124 = vpop.xlane.xlu0 %1123
      %v1125 = vsel %vm428, %v404, 0.0
      %1126 = vadd.xlane.f32.xlu0 %v1125
      %v1127 = vpop.xlane.xlu0 %1126
      %v1128 = vsel %vm428, %v405, 0.0
      %1129 = vadd.xlane.f32.xlu0 %v1128
      %v1130 = vpop.xlane.xlu0 %1129
      %v1131 = vsel %vm428, %v406, 0.0
      %1132 = vadd.xlane.f32.xlu0 %v1131
      %v1133 = vpop.xlane.xlu0 %1132
      %v1134 = vsel %vm428, %v407, 0.0
      %1135 = vadd.xlane.f32.xlu0 %v1134
      %v1136 = vpop.xlane.xlu0 %1135
      %v1137 = vsel %vm428, %v408, 0.0
      %1138 = vadd.xlane.f32.xlu0 %v1137
      %v1139 = vpop.xlane.xlu0 %1138
      %v1140 = vsel %vm428, %v409, 0.0
      %1141 = vadd.xlane.f32.xlu0 %v1140
      %v1142 = vpop.xlane.xlu0 %1141
      %v1143 = vsel %vm428, %v410, 0.0
      %1144 = vadd.xlane.f32.xlu0 %v1143
      %v1145 = vpop.xlane.xlu0 %1144
      %v1146 = vsel %vm428, %v411, 0.0
      %1147 = vadd.xlane.f32.xlu0 %v1146
      %v1148 = vpop.xlane.xlu0 %1147
      %v1149 = vsel %vm428, %v412, 0.0
      %1150 = vadd.xlane.f32.xlu0 %v1149
      %v1151 = vpop.xlane.xlu0 %1150
      %v1152 = vsel %vm428, %v413, 0.0
      %1153 = vadd.xlane.f32.xlu0 %v1152
      %v1154 = vpop.xlane.xlu0 %1153
      %v1155 = vsel %vm428, %v414, 0.0
      %1156 = vadd.xlane.f32.xlu0 %v1155
      %v1157 = vpop.xlane.xlu0 %1156
      %v1158 = vsel %vm428, %v415, 0.0
      %1159 = vadd.xlane.f32.xlu0 %v1158
      %v1160 = vpop.xlane.xlu0 %1159
      %v1161 = vsel %vm428, %v416, 0.0
      %1162 = vadd.xlane.f32.xlu0 %v1161
      %v1163 = vpop.xlane.xlu0 %1162
      %v1164 = vsel %vm428, %v417, 0.0
      %1165 = vadd.xlane.f32.xlu0 %v1164
      %v1166 = vpop.xlane.xlu0 %1165
      %v1167 = vsel %vm428, %v418, 0.0
      %1168 = vadd.xlane.f32.xlu0 %v1167
      %v1169 = vpop.xlane.xlu0 %1168
      %v1170 = vsel %vm428, %v419, 0.0
      %1171 = vadd.xlane.f32.xlu0 %v1170
      %v1172 = vpop.xlane.xlu0 %1171
      %v1173 = vsel %vm428, %v420, 0.0
      %1174 = vadd.xlane.f32.xlu0 %v1173
      %v1175 = vpop.xlane.xlu0 %1174
      %v1176 = vsel %vm428, %v421, 0.0
      %1177 = vadd.xlane.f32.xlu0 %v1176
      %v1178 = vpop.xlane.xlu0 %1177
      %v1179 = vsel %vm428, %v422, 0.0
      %1180 = vadd.xlane.f32.xlu0 %v1179
      %v1181 = vpop.xlane.xlu0 %1180
      %v1182 = vsel %vm428, %v423, 0.0
      %1183 = vadd.xlane.f32.xlu0 %v1182
      %v1184 = vpop.xlane.xlu0 %1183
      %v1185 = vsel %vm428, %v424, 0.0
      %1186 = vadd.xlane.f32.xlu0 %v1185
      %v1187 = vpop.xlane.xlu0 %1186
      %v1188 = vsel %vm428, %v425, 0.0
      %1189 = vadd.xlane.f32.xlu0 %v1188
      %v1190 = vpop.xlane.xlu0 %1189
      %v1191 = vsel %vm428, %v426, 0.0
      %1192 = vadd.xlane.f32.xlu0 %v1191
      %v1193 = vpop.xlane.xlu0 %1192
      %v1194 = vsel %vm428, %v427, 0.0
      %1195 = vadd.xlane.f32.xlu0 %v1194
      %v1196 = vpop.xlane.xlu0 %1195
      %v1197 = vrcp.pop 16.0
      %v1198 = vmul.f32 %v431, %v1197
      %v1199 = vmul.f32 %v434, %v1197
      %v1200 = vmul.f32 %v437, %v1197
      %v1201 = vmul.f32 %v440, %v1197
      %v1202 = vmul.f32 %v443, %v1197
      %v1203 = vmul.f32 %v446, %v1197
      %v1204 = vmul.f32 %v449, %v1197
      %v1205 = vmul.f32 %v452, %v1197
      %v1206 = vmul.f32 %v455, %v1197
      %v1207 = vmul.f32 %v458, %v1197
      %v1208 = vmul.f32 %v461, %v1197
      %v1209 = vmul.f32 %v464, %v1197
      %v1210 = vmul.f32 %v467, %v1197
      %v1211 = vmul.f32 %v470, %v1197
      %v1212 = vmul.f32 %v473, %v1197
      %v1213 = vmul.f32 %v476, %v1197
      %v1214 = vmul.f32 %v479, %v1197
      %v1215 = vmul.f32 %v482, %v1197
      %v1216 = vmul.f32 %v485, %v1197
      %v1217 = vmul.f32 %v488, %v1197
      %v1218 = vmul.f32 %v491, %v1197
      %v1219 = vmul.f32 %v494, %v1197
      %v1220 = vmul.f32 %v497, %v1197
      %v1221 = vmul.f32 %v500, %v1197
      %v1222 = vmul.f32 %v503, %v1197
      %v1223 = vmul.f32 %v506, %v1197
      %v1224 = vmul.f32 %v509, %v1197
      %v1225 = vmul.f32 %v512, %v1197
      %v1226 = vmul.f32 %v515, %v1197
      %v1227 = vmul.f32 %v518, %v1197
      %v1228 = vmul.f32 %v521, %v1197
      %v1229 = vmul.f32 %v524, %v1197
      %v1230 = vmul.f32 %v527, %v1197
      %v1231 = vmul.f32 %v530, %v1197
      %v1232 = vmul.f32 %v533, %v1197
      %v1233 = vmul.f32 %v536, %v1197
      %v1234 = vmul.f32 %v539, %v1197
      %v1235 = vmul.f32 %v542, %v1197
      %v1236 = vmul.f32 %v545, %v1197
      %v1237 = vmul.f32 %v548, %v1197
      %v1238 = vmul.f32 %v551, %v1197
      %v1239 = vmul.f32 %v554, %v1197
      %v1240 = vmul.f32 %v557, %v1197
      %v1241 = vmul.f32 %v560, %v1197
      %v1242 = vmul.f32 %v563, %v1197
      %v1243 = vmul.f32 %v566, %v1197
      %v1244 = vmul.f32 %v569, %v1197
      %v1245 = vmul.f32 %v572, %v1197
      %v1246 = vmul.f32 %v575, %v1197
      %v1247 = vmul.f32 %v578, %v1197
      %v1248 = vmul.f32 %v581, %v1197
      %v1249 = vmul.f32 %v584, %v1197
      %v1250 = vmul.f32 %v587, %v1197
      %v1251 = vmul.f32 %v590, %v1197
      %v1252 = vmul.f32 %v593, %v1197
      %v1253 = vmul.f32 %v596, %v1197
      %v1254 = vmul.f32 %v599, %v1197
      %v1255 = vmul.f32 %v602, %v1197
      %v1256 = vmul.f32 %v605, %v1197
      %v1257 = vmul.f32 %v608, %v1197
      %v1258 = vmul.f32 %v611, %v1197
      %v1259 = vmul.f32 %v614, %v1197
      %v1260 = vmul.f32 %v617, %v1197
      %v1261 = vmul.f32 %v620, %v1197
      %v1262 = vmul.f32 %v623, %v1197
      %v1263 = vmul.f32 %v626, %v1197
      %v1264 = vmul.f32 %v629, %v1197
      %v1265 = vmul.f32 %v632, %v1197
      %v1266 = vmul.f32 %v635, %v1197
      %v1267 = vmul.f32 %v638, %v1197
      %v1268 = vmul.f32 %v641, %v1197
      %v1269 = vmul.f32 %v644, %v1197
      %v1270 = vmul.f32 %v647, %v1197
      %v1271 = vmul.f32 %v650, %v1197
      %v1272 = vmul.f32 %v653, %v1197
      %v1273 = vmul.f32 %v656, %v1197
      %v1274 = vmul.f32 %v659, %v1197
      %v1275 = vmul.f32 %v662, %v1197
      %v1276 = vmul.f32 %v665, %v1197
      %v1277 = vmul.f32 %v668, %v1197
      %v1278 = vmul.f32 %v671, %v1197
      %v1279 = vmul.f32 %v674, %v1197
      %v1280 = vmul.f32 %v677, %v1197
      %v1281 = vmul.f32 %v680, %v1197
      %v1282 = vmul.f32 %v683, %v1197
      %v1283 = vmul.f32 %v686, %v1197
      %v1284 = vmul.f32 %v689, %v1197
      %v1285 = vmul.f32 %v692, %v1197
      %v1286 = vmul.f32 %v695, %v1197
      %v1287 = vmul.f32 %v698, %v1197
      %v1288 = vmul.f32 %v701, %v1197
      %v1289 = vmul.f32 %v704, %v1197
      %v1290 = vmul.f32 %v707, %v1197
      %v1291 = vmul.f32 %v710, %v1197
      %v1292 = vmul.f32 %v713, %v1197
      %v1293 = vmul.f32 %v716, %v1197
      %v1294 = vmul.f32 %v719, %v1197
      %v1295 = vmul.f32 %v722, %v1197
      %v1296 = vmul.f32 %v725, %v1197
      %v1297 = vmul.f32 %v728, %v1197
      %v1298 = vmul.f32 %v731, %v1197
      %v1299 = vmul.f32 %v734, %v1197
      %v1300 = vmul.f32 %v737, %v1197
      %v1301 = vmul.f32 %v740, %v1197
      %v1302 = vmul.f32 %v743, %v1197
      %v1303 = vmul.f32 %v746, %v1197
      %v1304 = vmul.f32 %v749, %v1197
      %v1305 = vmul.f32 %v752, %v1197
      %v1306 = vmul.f32 %v755, %v1197
      %v1307 = vmul.f32 %v758, %v1197
      %v1308 = vmul.f32 %v761, %v1197
      %v1309 = vmul.f32 %v764, %v1197
      %v1310 = vmul.f32 %v767, %v1197
      %v1311 = vmul.f32 %v770, %v1197
      %v1312 = vmul.f32 %v773, %v1197
      %v1313 = vmul.f32 %v776, %v1197
      %v1314 = vmul.f32 %v779, %v1197
      %v1315 = vmul.f32 %v782, %v1197
      %v1316 = vmul.f32 %v785, %v1197
      %v1317 = vmul.f32 %v788, %v1197
      %v1318 = vmul.f32 %v791, %v1197
      %v1319 = vmul.f32 %v794, %v1197
      %v1320 = vmul.f32 %v797, %v1197
      %v1321 = vmul.f32 %v800, %v1197
      %v1322 = vmul.f32 %v803, %v1197
      %v1323 = vmul.f32 %v806, %v1197
      %v1324 = vmul.f32 %v809, %v1197
      %v1325 = vmul.f32 %v812, %v1197
      %v1326 = vmul.f32 %v815, %v1197
      %v1327 = vmul.f32 %v818, %v1197
      %v1328 = vmul.f32 %v821, %v1197
      %v1329 = vmul.f32 %v824, %v1197
      %v1330 = vmul.f32 %v827, %v1197
      %v1331 = vmul.f32 %v830, %v1197
      %v1332 = vmul.f32 %v833, %v1197
      %v1333 = vmul.f32 %v836, %v1197
      %v1334 = vmul.f32 %v839, %v1197
      %v1335 = vmul.f32 %v842, %v1197
      %v1336 = vmul.f32 %v845, %v1197
      %v1337 = vmul.f32 %v848, %v1197
      %v1338 = vmul.f32 %v851, %v1197
      %v1339 = vmul.f32 %v854, %v1197
      %v1340 = vmul.f32 %v857, %v1197
      %v1341 = vmul.f32 %v860, %v1197
      %v1342 = vmul.f32 %v863, %v1197
      %v1343 = vmul.f32 %v866, %v1197
      %v1344 = vmul.f32 %v869, %v1197
      %v1345 = vmul.f32 %v872, %v1197
      %v1346 = vmul.f32 %v875, %v1197
      %v1347 = vmul.f32 %v878, %v1197
      %v1348 = vmul.f32 %v881, %v1197
      %v1349 = vmul.f32 %v884, %v1197
      %v1350 = vmul.f32 %v887, %v1197
      %v1351 = vmul.f32 %v890, %v1197
      %v1352 = vmul.f32 %v893, %v1197
      %v1353 = vmul.f32 %v896, %v1197
      %v1354 = vmul.f32 %v899, %v1197
      %v1355 = vmul.f32 %v902, %v1197
      %v1356 = vmul.f32 %v905, %v1197
      %v1357 = vmul.f32 %v908, %v1197
      %v1358 = vmul.f32 %v911, %v1197
      %v1359 = vmul.f32 %v914, %v1197
      %v1360 = vmul.f32 %v917, %v1197
      %v1361 = vmul.f32 %v920, %v1197
      %v1362 = vmul.f32 %v923, %v1197
      %v1363 = vmul.f32 %v926, %v1197
      %v1364 = vmul.f32 %v929, %v1197
      %v1365 = vmul.f32 %v932, %v1197
      %v1366 = vmul.f32 %v935, %v1197
      %v1367 = vmul.f32 %v938, %v1197
      %v1368 = vmul.f32 %v941, %v1197
      %v1369 = vmul.f32 %v944, %v1197
      %v1370 = vmul.f32 %v947, %v1197
      %v1371 = vmul.f32 %v950, %v1197
      %v1372 = vmul.f32 %v953, %v1197
      %v1373 = vmul.f32 %v956, %v1197
      %v1374 = vmul.f32 %v959, %v1197
      %v1375 = vmul.f32 %v962, %v1197
      %v1376 = vmul.f32 %v965, %v1197
      %v1377 = vmul.f32 %v968, %v1197
      %v1378 = vmul.f32 %v971, %v1197
      %v1379 = vmul.f32 %v974, %v1197
      %v1380 = vmul.f32 %v977, %v1197
      %v1381 = vmul.f32 %v980, %v1197
      %v1382 = vmul.f32 %v983, %v1197
      %v1383 = vmul.f32 %v986, %v1197
      %v1384 = vmul.f32 %v989, %v1197
      %v1385 = vmul.f32 %v992, %v1197
      %v1386 = vmul.f32 %v995, %v1197
      %v1387 = vmul.f32 %v998, %v1197
      %v1388 = vmul.f32 %v1001, %v1197
      %v1389 = vmul.f32 %v1004, %v1197
      %v1390 = vmul.f32 %v1007, %v1197
      %v1391 = vmul.f32 %v1010, %v1197
      %v1392 = vmul.f32 %v1013, %v1197
      %v1393 = vmul.f32 %v1016, %v1197
      %v1394 = vmul.f32 %v1019, %v1197
      %v1395 = vmul.f32 %v1022, %v1197
      %v1396 = vmul.f32 %v1025, %v1197
      %v1397 = vmul.f32 %v1028, %v1197
      %v1398 = vmul.f32 %v1031, %v1197
      %v1399 = vmul.f32 %v1034, %v1197
      %v1400 = vmul.f32 %v1037, %v1197
      %v1401 = vmul.f32 %v1040, %v1197
      %v1402 = vmul.f32 %v1043, %v1197
      %v1403 = vmul.f32 %v1046, %v1197
      %v1404 = vmul.f32 %v1049, %v1197
      %v1405 = vmul.f32 %v1052, %v1197
      %v1406 = vmul.f32 %v1055, %v1197
      %v1407 = vmul.f32 %v1058, %v1197
      %v1408 = vmul.f32 %v1061, %v1197
      %v1409 = vmul.f32 %v1064, %v1197
      %v1410 = vmul.f32 %v1067, %v1197
      %v1411 = vmul.f32 %v1070, %v1197
      %v1412 = vmul.f32 %v1073, %v1197
      %v1413 = vmul.f32 %v1076, %v1197
      %v1414 = vmul.f32 %v1079, %v1197
      %v1415 = vmul.f32 %v1082, %v1197
      %v1416 = vmul.f32 %v1085, %v1197
      %v1417 = vmul.f32 %v1088, %v1197
      %v1418 = vmul.f32 %v1091, %v1197
      %v1419 = vmul.f32 %v1094, %v1197
      %v1420 = vmul.f32 %v1097, %v1197
      %v1421 = vmul.f32 %v1100, %v1197
      %v1422 = vmul.f32 %v1103, %v1197
      %v1423 = vmul.f32 %v1106, %v1197
      %v1424 = vmul.f32 %v1109, %v1197
      %v1425 = vmul.f32 %v1112, %v1197
      %v1426 = vmul.f32 %v1115, %v1197
      %v1427 = vmul.f32 %v1118, %v1197
      %v1428 = vmul.f32 %v1121, %v1197
      %v1429 = vmul.f32 %v1124, %v1197
      %v1430 = vmul.f32 %v1127, %v1197
      %v1431 = vmul.f32 %v1130, %v1197
      %v1432 = vmul.f32 %v1133, %v1197
      %v1433 = vmul.f32 %v1136, %v1197
      %v1434 = vmul.f32 %v1139, %v1197
      %v1435 = vmul.f32 %v1142, %v1197
      %v1436 = vmul.f32 %v1145, %v1197
      %v1437 = vmul.f32 %v1148, %v1197
      %v1438 = vmul.f32 %v1151, %v1197
      %v1439 = vmul.f32 %v1154, %v1197
      %v1440 = vmul.f32 %v1157, %v1197
      %v1441 = vmul.f32 %v1160, %v1197
      %v1442 = vmul.f32 %v1163, %v1197
      %v1443 = vmul.f32 %v1166, %v1197
      %v1444 = vmul.f32 %v1169, %v1197
      %v1445 = vmul.f32 %v1172, %v1197
      %v1446 = vmul.f32 %v1175, %v1197
      %v1447 = vmul.f32 %v1178, %v1197
      %v1448 = vmul.f32 %v1181, %v1197
      %v1449 = vmul.f32 %v1184, %v1197
      %v1450 = vmul.f32 %v1187, %v1197
      %v1451 = vmul.f32 %v1190, %v1197
      %v1452 = vmul.f32 %v1193, %v1197
      %v1453 = vmul.f32 %v1196, %v1197
      %v1454 = vld [vmem:[%s1] sm:$0xff]
      %v1455 = vld [vmem:[%s1 + $0x8] sm:$0xff]
      %v1456 = vld [vmem:[%s1 + $0x10] sm:$0xff]
      %v1457 = vld [vmem:[%s1 + $0x18] sm:$0xff]
      %v1458 = vld [vmem:[%s1 + $0x20] sm:$0xff]
      %v1459 = vld [vmem:[%s1 + $0x28] sm:$0xff]
      %v1460 = vld [vmem:[%s1 + $0x30] sm:$0xff]
      %v1461 = vld [vmem:[%s1 + $0x38] sm:$0xff]
      %v1462 = vld [vmem:[%s1 + $0x40] sm:$0xff]
      %v1463 = vld [vmem:[%s1 + $0x48] sm:$0xff]
      %v1464 = vld [vmem:[%s1 + $0x50] sm:$0xff]
      %v1465 = vld [vmem:[%s1 + $0x58] sm:$0xff]
      %v1466 = vld [vmem:[%s1 + $0x60] sm:$0xff]
      %v1467 = vld [vmem:[%s1 + $0x68] sm:$0xff]
      %v1468 = vld [vmem:[%s1 + $0x70] sm:$0xff]
      %v1469 = vld [vmem:[%s1 + $0x78] sm:$0xff]
      %v1470 = vld [vmem:[%s1 + $0x80] sm:$0xff]
      %v1471 = vld [vmem:[%s1 + $0x88] sm:$0xff]
      %v1472 = vld [vmem:[%s1 + $0x90] sm:$0xff]
      %v1473 = vld [vmem:[%s1 + $0x98] sm:$0xff]
      %v1474 = vld [vmem:[%s1 + $0xa0] sm:$0xff]
      %v1475 = vld [vmem:[%s1 + $0xa8] sm:$0xff]
      %v1476 = vld [vmem:[%s1 + $0xb0] sm:$0xff]
      %v1477 = vld [vmem:[%s1 + $0xb8] sm:$0xff]
      %v1478 = vld [vmem:[%s1 + $0xc0] sm:$0xff]
      %v1479 = vld [vmem:[%s1 + $0xc8] sm:$0xff]
      %v1480 = vld [vmem:[%s1 + $0xd0] sm:$0xff]
      %v1481 = vld [vmem:[%s1 + $0xd8] sm:$0xff]
      %v1482 = vld [vmem:[%s1 + $0xe0] sm:$0xff]
      %v1483 = vld [vmem:[%s1 + $0xe8] sm:$0xff]
      %v1484 = vld [vmem:[%s1 + $0xf0] sm:$0xff]
      %v1485 = vld [vmem:[%s1 + $0xf8] sm:$0xff]
      %v1486 = vpack.c.bf16 %v1199, %v1198
      %v1487 = vpack.c.bf16 %v1201, %v1200
      %v1488 = vpack.c.bf16 %v1203, %v1202
      %v1489 = vpack.c.bf16 %v1205, %v1204
      %v1490 = vpack.c.bf16 %v1207, %v1206
      %v1491 = vpack.c.bf16 %v1209, %v1208
      %v1492 = vpack.c.bf16 %v1211, %v1210
      %v1493 = vpack.c.bf16 %v1213, %v1212
      %v1494 = vpack.c.bf16 %v1215, %v1214
      %v1495 = vpack.c.bf16 %v1217, %v1216
      %v1496 = vpack.c.bf16 %v1219, %v1218
      %v1497 = vpack.c.bf16 %v1221, %v1220
      %v1498 = vpack.c.bf16 %v1223, %v1222
      %v1499 = vpack.c.bf16 %v1225, %v1224
      %v1500 = vpack.c.bf16 %v1227, %v1226
      %v1501 = vpack.c.bf16 %v1229, %v1228
      %v1502 = vpack.c.bf16 %v1231, %v1230
      %v1503 = vpack.c.bf16 %v1233, %v1232
      %v1504 = vpack.c.bf16 %v1235, %v1234
      %v1505 = vpack.c.bf16 %v1237, %v1236
      %v1506 = vpack.c.bf16 %v1239, %v1238
      %v1507 = vpack.c.bf16 %v1241, %v1240
      %v1508 = vpack.c.bf16 %v1243, %v1242
      %v1509 = vpack.c.bf16 %v1245, %v1244
      %v1510 = vpack.c.bf16 %v1247, %v1246
      %v1511 = vpack.c.bf16 %v1249, %v1248
      %v1512 = vpack.c.bf16 %v1251, %v1250
      %v1513 = vpack.c.bf16 %v1253, %v1252
      %v1514 = vpack.c.bf16 %v1255, %v1254
      %v1515 = vpack.c.bf16 %v1257, %v1256
      %v1516 = vpack.c.bf16 %v1259, %v1258
      %v1517 = vpack.c.bf16 %v1261, %v1260
      %v1518 = vpack.c.bf16 %v1263, %v1262
      %v1519 = vpack.c.bf16 %v1265, %v1264
      %v1520 = vpack.c.bf16 %v1267, %v1266
      %v1521 = vpack.c.bf16 %v1269, %v1268
      %v1522 = vpack.c.bf16 %v1271, %v1270
      %v1523 = vpack.c.bf16 %v1273, %v1272
      %v1524 = vpack.c.bf16 %v1275, %v1274
      %v1525 = vpack.c.bf16 %v1277, %v1276
      %v1526 = vpack.c.bf16 %v1279, %v1278
      %v1527 = vpack.c.bf16 %v1281, %v1280
      %v1528 = vpack.c.bf16 %v1283, %v1282
      %v1529 = vpack.c.bf16 %v1285, %v1284
      %v1530 = vpack.c.bf16 %v1287, %v1286
      %v1531 = vpack.c.bf16 %v1289, %v1288
      %v1532 = vpack.c.bf16 %v1291, %v1290
      %v1533 = vpack.c.bf16 %v1293, %v1292
      %v1534 = vpack.c.bf16 %v1295, %v1294
      %v1535 = vpack.c.bf16 %v1297, %v1296
      %v1536 = vpack.c.bf16 %v1299, %v1298
      %v1537 = vpack.c.bf16 %v1301, %v1300
      %v1538 = vpack.c.bf16 %v1303, %v1302
      %v1539 = vpack.c.bf16 %v1305, %v1304
      %v1540 = vpack.c.bf16 %v1307, %v1306
      %v1541 = vpack.c.bf16 %v1309, %v1308
      %v1542 = vpack.c.bf16 %v1311, %v1310
      %v1543 = vpack.c.bf16 %v1313, %v1312
      %v1544 = vpack.c.bf16 %v1315, %v1314
      %v1545 = vpack.c.bf16 %v1317, %v1316
      %v1546 = vpack.c.bf16 %v1319, %v1318
      %v1547 = vpack.c.bf16 %v1321, %v1320
      %v1548 = vpack.c.bf16 %v1323, %v1322
      %v1549 = vpack.c.bf16 %v1325, %v1324
      %v1550 = vpack.c.bf16 %v1327, %v1326
      %v1551 = vpack.c.bf16 %v1329, %v1328
      %v1552 = vpack.c.bf16 %v1331, %v1330
      %v1553 = vpack.c.bf16 %v1333, %v1332
      %v1554 = vpack.c.bf16 %v1335, %v1334
      %v1555 = vpack.c.bf16 %v1337, %v1336
      %v1556 = vpack.c.bf16 %v1339, %v1338
      %v1557 = vpack.c.bf16 %v1341, %v1340
      %v1558 = vpack.c.bf16 %v1343, %v1342
      %v1559 = vpack.c.bf16 %v1345, %v1344
      %v1560 = vpack.c.bf16 %v1347, %v1346
      %v1561 = vpack.c.bf16 %v1349, %v1348
      %v1562 = vpack.c.bf16 %v1351, %v1350
      %v1563 = vpack.c.bf16 %v1353, %v1352
      %v1564 = vpack.c.bf16 %v1355, %v1354
      %v1565 = vpack.c.bf16 %v1357, %v1356
      %v1566 = vpack.c.bf16 %v1359, %v1358
      %v1567 = vpack.c.bf16 %v1361, %v1360
      %v1568 = vpack.c.bf16 %v1363, %v1362
      %v1569 = vpack.c.bf16 %v1365, %v1364
      %v1570 = vpack.c.bf16 %v1367, %v1366
      %v1571 = vpack.c.bf16 %v1369, %v1368
      %v1572 = vpack.c.bf16 %v1371, %v1370
      %v1573 = vpack.c.bf16 %v1373, %v1372
      %v1574 = vpack.c.bf16 %v1375, %v1374
      %v1575 = vpack.c.bf16 %v1377, %v1376
      %v1576 = vpack.c.bf16 %v1379, %v1378
      %v1577 = vpack.c.bf16 %v1381, %v1380
      %v1578 = vpack.c.bf16 %v1383, %v1382
      %v1579 = vpack.c.bf16 %v1385, %v1384
      %v1580 = vpack.c.bf16 %v1387, %v1386
      %v1581 = vpack.c.bf16 %v1389, %v1388
      %v1582 = vpack.c.bf16 %v1391, %v1390
      %v1583 = vpack.c.bf16 %v1393, %v1392
      %v1584 = vpack.c.bf16 %v1395, %v1394
      %v1585 = vpack.c.bf16 %v1397, %v1396
      %v1586 = vpack.c.bf16 %v1399, %v1398
      %v1587 = vpack.c.bf16 %v1401, %v1400
      %v1588 = vpack.c.bf16 %v1403, %v1402
      %v1589 = vpack.c.bf16 %v1405, %v1404
      %v1590 = vpack.c.bf16 %v1407, %v1406
      %v1591 = vpack.c.bf16 %v1409, %v1408
      %v1592 = vpack.c.bf16 %v1411, %v1410
      %v1593 = vpack.c.bf16 %v1413, %v1412
      %v1594 = vpack.c.bf16 %v1415, %v1414
      %v1595 = vpack.c.bf16 %v1417, %v1416
      %v1596 = vpack.c.bf16 %v1419, %v1418
      %v1597 = vpack.c.bf16 %v1421, %v1420
      %v1598 = vpack.c.bf16 %v1423, %v1422
      %v1599 = vpack.c.bf16 %v1425, %v1424
      %v1600 = vpack.c.bf16 %v1427, %v1426
      %v1601 = vpack.c.bf16 %v1429, %v1428
      %v1602 = vpack.c.bf16 %v1431, %v1430
      %v1603 = vpack.c.bf16 %v1433, %v1432
      %v1604 = vpack.c.bf16 %v1435, %v1434
      %v1605 = vpack.c.bf16 %v1437, %v1436
      %v1606 = vpack.c.bf16 %v1439, %v1438
      %v1607 = vpack.c.bf16 %v1441, %v1440
      %v1608 = vpack.c.bf16 %v1443, %v1442
      %v1609 = vpack.c.bf16 %v1445, %v1444
      %v1610 = vpack.c.bf16 %v1447, %v1446
      %v1611 = vpack.c.bf16 %v1449, %v1448
      %v1612 = vpack.c.bf16 %v1451, %v1450
      %v1613 = vpack.c.bf16 %v1453, %v1452
      %v1614 = vld [vmem:[%s2] sm:$0xff]
      %v1615 = vld [vmem:[%s2 + $0x8] sm:$0xff]
      %v1616 = vld [vmem:[%s2 + $0x10] sm:$0xff]
      %v1617 = vld [vmem:[%s2 + $0x18] sm:$0xff]
      %v1650 = vunpack.c.l.b16 %v1454
      %v1651 = vunpack.c.h.b16 %v1454
      %v1652 = vunpack.c.l.b16 %v1455
      %v1653 = vunpack.c.h.b16 %v1455
      %v1654 = vunpack.c.l.b16 %v1456
      %v1655 = vunpack.c.h.b16 %v1456
      %v1656 = vunpack.c.l.b16 %v1457
      %v1657 = vunpack.c.h.b16 %v1457
      %v1658 = vunpack.c.l.b16 %v1458
      %v1659 = vunpack.c.h.b16 %v1458
      %v1660 = vunpack.c.l.b16 %v1459
      %v1661 = vunpack.c.h.b16 %v1459
      %v1662 = vunpack.c.l.b16 %v1460
      %v1663 = vunpack.c.h.b16 %v1460
      %v1664 = vunpack.c.l.b16 %v1461
      %v1665 = vunpack.c.h.b16 %v1461
      %v1666 = vunpack.c.l.b16 %v1462
      %v1667 = vunpack.c.h.b16 %v1462
      %v1668 = vunpack.c.l.b16 %v1463
      %v1669 = vunpack.c.h.b16 %v1463
      %v1670 = vunpack.c.l.b16 %v1464
      %v1671 = vunpack.c.h.b16 %v1464
      %v1672 = vunpack.c.l.b16 %v1465
      %v1673 = vunpack.c.h.b16 %v1465
      %v1674 = vunpack.c.l.b16 %v1466
      %v1675 = vunpack.c.h.b16 %v1466
      %v1676 = vunpack.c.l.b16 %v1467
      %v1677 = vunpack.c.h.b16 %v1467
      %v1678 = vunpack.c.l.b16 %v1468
      %v1679 = vunpack.c.h.b16 %v1468
      %v1680 = vunpack.c.l.b16 %v1469
      %v1681 = vunpack.c.h.b16 %v1469
      %v1682 = vunpack.c.l.b16 %v1470
      %v1683 = vunpack.c.h.b16 %v1470
      %v1684 = vunpack.c.l.b16 %v1471
      %v1685 = vunpack.c.h.b16 %v1471
      %v1686 = vunpack.c.l.b16 %v1472
      %v1687 = vunpack.c.h.b16 %v1472
      %v1688 = vunpack.c.l.b16 %v1473
      %v1689 = vunpack.c.h.b16 %v1473
      %v1690 = vunpack.c.l.b16 %v1474
      %v1691 = vunpack.c.h.b16 %v1474
      %v1692 = vunpack.c.l.b16 %v1475
      %v1693 = vunpack.c.h.b16 %v1475
      %v1694 = vunpack.c.l.b16 %v1476
      %v1695 = vunpack.c.h.b16 %v1476
      %v1696 = vunpack.c.l.b16 %v1477
      %v1697 = vunpack.c.h.b16 %v1477
      %v1698 = vunpack.c.l.b16 %v1478
      %v1699 = vunpack.c.h.b16 %v1478
      %v1700 = vunpack.c.l.b16 %v1479
      %v1701 = vunpack.c.h.b16 %v1479
      %v1702 = vunpack.c.l.b16 %v1480
      %v1703 = vunpack.c.h.b16 %v1480
      %v1704 = vunpack.c.l.b16 %v1481
      %v1705 = vunpack.c.h.b16 %v1481
      %v1706 = vunpack.c.l.b16 %v1482
      %v1707 = vunpack.c.h.b16 %v1482
      %v1708 = vunpack.c.l.b16 %v1483
      %v1709 = vunpack.c.h.b16 %v1483
      %v1710 = vunpack.c.l.b16 %v1484
      %v1711 = vunpack.c.h.b16 %v1484
      %v1712 = vunpack.c.l.b16 %v1485
      %v1713 = vunpack.c.h.b16 %v1485
      %v1714 = vpack.c.b16 %v1666, %v1650
      %v1715 = vpack.c.b16 %v1667, %v1651
      %v1716 = vpack.c.b16 %v1668, %v1652
      %v1717 = vpack.c.b16 %v1669, %v1653
      %v1718 = vpack.c.b16 %v1670, %v1654
      %v1719 = vpack.c.b16 %v1671, %v1655
      %v1720 = vpack.c.b16 %v1672, %v1656
      %v1721 = vpack.c.b16 %v1673, %v1657
      %v1722 = vpack.c.b16 %v1674, %v1658
      %v1723 = vpack.c.b16 %v1675, %v1659
      %v1724 = vpack.c.b16 %v1676, %v1660
      %v1725 = vpack.c.b16 %v1677, %v1661
      %v1726 = vpack.c.b16 %v1678, %v1662
      %v1727 = vpack.c.b16 %v1679, %v1663
      %v1728 = vpack.c.b16 %v1680, %v1664
      %v1729 = vpack.c.b16 %v1681, %v1665
      %v1730 = vpack.c.b16 %v1698, %v1682
      %v1731 = vpack.c.b16 %v1699, %v1683
      %v1732 = vpack.c.b16 %v1700, %v1684
      %v1733 = vpack.c.b16 %v1701, %v1685
      %v1734 = vpack.c.b16 %v1702, %v1686
      %v1735 = vpack.c.b16 %v1703, %v1687
      %v1736 = vpack.c.b16 %v1704, %v1688
      %v1737 = vpack.c.b16 %v1705, %v1689
      %v1738 = vpack.c.b16 %v1706, %v1690
      %v1739 = vpack.c.b16 %v1707, %v1691
      %v1740 = vpack.c.b16 %v1708, %v1692
      %v1741 = vpack.c.b16 %v1709, %v1693
      %v1742 = vpack.c.b16 %v1710, %v1694
      %v1743 = vpack.c.b16 %v1711, %v1695
      %v1744 = vpack.c.b16 %v1712, %v1696
      %v1745 = vpack.c.b16 %v1713, %v1697
      %1778 = vmatprep.subr.bf16.mxu0 0
      %1779 = vmatpush1.bf16.msra.mxu0 %v1486
      %1780 = vmatprep.subr.bf16.mxu0 0
      %1781 = vmatpush1.bf16.msra.mxu0 %v1487
      %1782 = vmatprep.subr.bf16.mxu0 0
      %1783 = vmatpush1.bf16.msra.mxu0 %v1488
      %1784 = vmatprep.subr.bf16.mxu0 0
      %1785 = vmatpush1.bf16.msra.mxu0 %v1489
      %1786 = vmatprep.subr.bf16.mxu0 0
      %1787 = vmatpush1.bf16.msra.mxu0 %v1490
      %1788 = vmatprep.subr.bf16.mxu0 0
      %1789 = vmatpush1.bf16.msra.mxu0 %v1491
      %1790 = vmatprep.subr.bf16.mxu0 0
      %1791 = vmatpush1.bf16.msra.mxu0 %v1492
      %1792 = vmatprep.subr.bf16.mxu0 0
      %1793 = vmatpush1.bf16.msra.mxu0 %v1493
      %1794 = vmatprep.subr.bf16.mxu0 0
      %1795 = vmatpush1.bf16.msra.mxu0 %v1494
      %1796 = vmatprep.subr.bf16.mxu0 0
      %1797 = vmatpush1.bf16.msra.mxu0 %v1495
      %1798 = vmatprep.subr.bf16.mxu0 0
      %1799 = vmatpush1.bf16.msra.mxu0 %v1496
      %1800 = vmatprep.subr.bf16.mxu0 0
      %1801 = vmatpush1.bf16.msra.mxu0 %v1497
      %1802 = vmatprep.subr.bf16.mxu0 0
      %1803 = vmatpush1.bf16.msra.mxu0 %v1498
      %1804 = vmatprep.subr.bf16.mxu0 0
      %1805 = vmatpush1.bf16.msra.mxu0 %v1499
      %1806 = vmatprep.subr.bf16.mxu0 0
      %1807 = vmatpush1.bf16.msra.mxu0 %v1500
      %1808 = vmatprep.subr.bf16.mxu0 0
      %1809 = vmatpush1.bf16.msra.mxu0 %v1501
      %1810 = vmatprep.mubr.bf16.mxu0 %v1715
      %1811 = vmatmul.mubr.bf16.gmra.mrb[0].mxu0 %v1714
      %v1812 = vpop.f32.mrb[0].mxu0
      %v1813 = vadd.f32 %v1614, %v1812
      %v1814 = vpop.f32.mrb[0].mxu0
      %v1815 = vpop.f32.mrb[0].mxu0
      %v1816 = vadd.f32 %v1615, %v1815
      %v1817 = vpop.f32.mrb[0].mxu0
      %1818 = vmatprep.mubr.bf16.mxu0 %v1731
      %1819 = vmatmul.mubr.bf16.gmra.mrb[0].mxu0 %v1730
      %v1820 = vpop.f32.mrb[0].mxu0
      %v1821 = vadd.f32 %v1616, %v1820
      %v1822 = vpop.f32.mrb[0].mxu0
      %v1823 = vpop.f32.mrb[0].mxu0
      %v1824 = vadd.f32 %v1617, %v1823
      %v1825 = vpop.f32.mrb[0].mxu0
      %1826 = vdwg.mxu0
      %1827 = vmatprep.subr.bf16.mxu0 0
      %1828 = vmatpush1.bf16.msra.mxu0 %v1502
      %1829 = vmatprep.subr.bf16.mxu0 0
      %1830 = vmatpush1.bf16.msra.mxu0 %v1503
      %1831 = vmatprep.subr.bf16.mxu0 0
      %1832 = vmatpush1.bf16.msra.mxu0 %v1504
      %1833 = vmatprep.subr.bf16.mxu0 0
      %1834 = vmatpush1.bf16.msra.mxu0 %v1505
      %1835 = vmatprep.subr.bf16.mxu0 0
      %1836 = vmatpush1.bf16.msra.mxu0 %v1506
      %1837 = vmatprep.subr.bf16.mxu0 0
      %1838 = vmatpush1.bf16.msra.mxu0 %v1507
      %1839 = vmatprep.subr.bf16.mxu0 0
      %1840 = vmatpush1.bf16.msra.mxu0 %v1508
      %1841 = vmatprep.subr.bf16.mxu0 0
      %1842 = vmatpush1.bf16.msra.mxu0 %v1509
      %1843 = vmatprep.subr.bf16.mxu0 0
      %1844 = vmatpush1.bf16.msra.mxu0 %v1510
      %1845 = vmatprep.subr.bf16.mxu0 0
      %1846 = vmatpush1.bf16.msra.mxu0 %v1511
      %1847 = vmatprep.subr.bf16.mxu0 0
      %1848 = vmatpush1.bf16.msra.mxu0 %v1512
      %1849 = vmatprep.subr.bf16.mxu0 0
      %1850 = vmatpush1.bf16.msra.mxu0 %v1513
      %1851 = vmatprep.subr.bf16.mxu0 0
      %1852 = vmatpush1.bf16.msra.mxu0 %v1514
      %1853 = vmatprep.subr.bf16.mxu0 0
      %1854 = vmatpush1.bf16.msra.mxu0 %v1515
      %1855 = vmatprep.subr.bf16.mxu0 0
      %1856 = vmatpush1.bf16.msra.mxu0 %v1516
      %1857 = vmatprep.subr.bf16.mxu0 0
      %1858 = vmatpush1.bf16.msra.mxu0 %v1517
      %1859 = vmatprep.mubr.bf16.mxu0 %v1717
      %1860 = vmatmul.mubr.bf16.gmra.mrb[0].mxu0 %v1716
      %v1861 = vpop.f32.mrb[0].mxu0
      %v1862 = vadd.f32 %v1813, %v1861
      %v1863 = vpop.f32.mrb[0].mxu0
      %v1864 = vpop.f32.mrb[0].mxu0
      %v1865 = vadd.f32 %v1816, %v1864
      %v1866 = vpop.f32.mrb[0].mxu0
      %1867 = vmatprep.mubr.bf16.mxu0 %v1733
      %1868 = vmatmul.mubr.bf16.gmra.mrb[0].mxu0 %v1732
      %v1869 = vpop.f32.mrb[0].mxu0
      %v1870 = vadd.f32 %v1821, %v1869
      %v1871 = vpop.f32.mrb[0].mxu0
      %v1872 = vpop.f32.mrb[0].mxu0
      %v1873 = vadd.f32 %v1824, %v1872
      %v1874 = vpop.f32.mrb[0].mxu0
      %1875 = vdwg.mxu0
      %1876 = vmatprep.subr.bf16.mxu0 0
      %1877 = vmatpush1.bf16.msra.mxu0 %v1518
      %1878 = vmatprep.subr.bf16.mxu0 0
      %1879 = vmatpush1.bf16.msra.mxu0 %v1519
      %1880 = vmatprep.subr.bf16.mxu0 0
      %1881 = vmatpush1.bf16.msra.mxu0 %v1520
      %1882 = vmatprep.subr.bf16.mxu0 0
      %1883 = vmatpush1.bf16.msra.mxu0 %v1521
      %1884 = vmatprep.subr.bf16.mxu0 0
      %1885 = vmatpush1.bf16.msra.mxu0 %v1522
      %1886 = vmatprep.subr.bf16.mxu0 0
      %1887 = vmatpush1.bf16.msra.mxu0 %v1523
      %1888 = vmatprep.subr.bf16.mxu0 0
      %1889 = vmatpush1.bf16.msra.mxu0 %v1524
      %1890 = vmatprep.subr.bf16.mxu0 0
      %1891 = vmatpush1.bf16.msra.mxu0 %v1525
      %1892 = vmatprep.subr.bf16.mxu0 0
      %1893 = vmatpush1.bf16.msra.mxu0 %v1526
      %1894 = vmatprep.subr.bf16.mxu0 0
      %1895 = vmatpush1.bf16.msra.mxu0 %v1527
      %1896 = vmatprep.subr.bf16.mxu0 0
      %1897 = vmatpush1.bf16.msra.mxu0 %v1528
      %1898 = vmatprep.subr.bf16.mxu0 0
      %1899 = vmatpush1.bf16.msra.mxu0 %v1529
      %1900 = vmatprep.subr.bf16.mxu0 0
      %1901 = vmatpush1.bf16.msra.mxu0 %v1530
      %1902 = vmatprep.subr.bf16.mxu0 0
      %1903 = vmatpush1.bf16.msra.mxu0 %v1531
      %1904 = vmatprep.subr.bf16.mxu0 0
      %1905 = vmatpush1.bf16.msra.mxu0 %v1532
      %1906 = vmatprep.subr.bf16.mxu0 0
      %1907 = vmatpush1.bf16.msra.mxu0 %v1533
      %1908 = vmatprep.mubr.bf16.mxu0 %v1719
      %1909 = vmatmul.mubr.bf16.gmra.mrb[0].mxu0 %v1718
      %v1910 = vpop.f32.mrb[0].mxu0
      %v1911 = vadd.f32 %v1862, %v1910
      %v1912 = vpop.f32.mrb[0].mxu0
      %v1913 = vpop.f32.mrb[0].mxu0
      %v1914 = vadd.f32 %v1865, %v1913
      %v1915 = vpop.f32.mrb[0].mxu0
      %1916 = vmatprep.mubr.bf16.mxu0 %v1735
      %1917 = vmatmul.mubr.bf16.gmra.mrb[0].mxu0 %v1734
      %v1918 = vpop.f32.mrb[0].mxu0
      %v1919 = vadd.f32 %v1870, %v1918
      %v1920 = vpop.f32.mrb[0].mxu0
      %v1921 = vpop.f32.mrb[0].mxu0
      %v1922 = vadd.f32 %v1873, %v1921
      %v1923 = vpop.f32.mrb[0].mxu0
      %1924 = vdwg.mxu0
      %1925 = vmatprep.subr.bf16.mxu0 0
      %1926 = vmatpush1.bf16.msra.mxu0 %v1534
      %1927 = vmatprep.subr.bf16.mxu0 0
      %1928 = vmatpush1.bf16.msra.mxu0 %v1535
      %1929 = vmatprep.subr.bf16.mxu0 0
      %1930 = vmatpush1.bf16.msra.mxu0 %v1536
      %1931 = vmatprep.subr.bf16.mxu0 0
      %1932 = vmatpush1.bf16.msra.mxu0 %v1537
      %1933 = vmatprep.subr.bf16.mxu0 0
      %1934 = vmatpush1.bf16.msra.mxu0 %v1538
      %1935 = vmatprep.subr.bf16.mxu0 0
      %1936 = vmatpush1.bf16.msra.mxu0 %v1539
      %1937 = vmatprep.subr.bf16.mxu0 0
      %1938 = vmatpush1.bf16.msra.mxu0 %v1540
      %1939 = vmatprep.subr.bf16.mxu0 0
      %1940 = vmatpush1.bf16.msra.mxu0 %v1541
      %1941 = vmatprep.subr.bf16.mxu0 0
      %1942 = vmatpush1.bf16.msra.mxu0 %v1542
      %1943 = vmatprep.subr.bf16.mxu0 0
      %1944 = vmatpush1.bf16.msra.mxu0 %v1543
      %1945 = vmatprep.subr.bf16.mxu0 0
      %1946 = vmatpush1.bf16.msra.mxu0 %v1544
      %1947 = vmatprep.subr.bf16.mxu0 0
      %1948 = vmatpush1.bf16.msra.mxu0 %v1545
      %1949 = vmatprep.subr.bf16.mxu0 0
      %1950 = vmatpush1.bf16.msra.mxu0 %v1546
      %1951 = vmatprep.subr.bf16.mxu0 0
      %1952 = vmatpush1.bf16.msra.mxu0 %v1547
      %1953 = vmatprep.subr.bf16.mxu0 0
      %1954 = vmatpush1.bf16.msra.mxu0 %v1548
      %1955 = vmatprep.subr.bf16.mxu0 0
      %1956 = vmatpush1.bf16.msra.mxu0 %v1549
      %1957 = vmatprep.mubr.bf16.mxu0 %v1721
      %1958 = vmatmul.mubr.bf16.gmra.mrb[0].mxu0 %v1720
      %v1959 = vpop.f32.mrb[0].mxu0
      %v1960 = vadd.f32 %v1911, %v1959
      %v1961 = vpop.f32.mrb[0].mxu0
      %v1962 = vpop.f32.mrb[0].mxu0
      %v1963 = vadd.f32 %v1914, %v1962
      %v1964 = vpop.f32.mrb[0].mxu0
      %1965 = vmatprep.mubr.bf16.mxu0 %v1737
      %1966 = vmatmul.mubr.bf16.gmra.mrb[0].mxu0 %v1736
      %v1967 = vpop.f32.mrb[0].mxu0
      %v1968 = vadd.f32 %v1919, %v1967
      %v1969 = vpop.f32.mrb[0].mxu0
      %v1970 = vpop.f32.mrb[0].mxu0
      %v1971 = vadd.f32 %v1922, %v1970
      %v1972 = vpop.f32.mrb[0].mxu0
      %1973 = vdwg.mxu0
      %1974 = vmatprep.subr.bf16.mxu0 0
      %1975 = vmatpush1.bf16.msra.mxu0 %v1550
      %1976 = vmatprep.subr.bf16.mxu0 0
      %1977 = vmatpush1.bf16.msra.mxu0 %v1551
      %1978 = vmatprep.subr.bf16.mxu0 0
      %1979 = vmatpush1.bf16.msra.mxu0 %v1552
      %1980 = vmatprep.subr.bf16.mxu0 0
      %1981 = vmatpush1.bf16.msra.mxu0 %v1553
      %1982 = vmatprep.subr.bf16.mxu0 0
      %1983 = vmatpush1.bf16.msra.mxu0 %v1554
      %1984 = vmatprep.subr.bf16.mxu0 0
      %1985 = vmatpush1.bf16.msra.mxu0 %v1555
      %1986 = vmatprep.subr.bf16.mxu0 0
      %1987 = vmatpush1.bf16.msra.mxu0 %v1556
      %1988 = vmatprep.subr.bf16.mxu0 0
      %1989 = vmatpush1.bf16.msra.mxu0 %v1557
      %1990 = vmatprep.subr.bf16.mxu0 0
      %1991 = vmatpush1.bf16.msra.mxu0 %v1558
      %1992 = vmatprep.subr.bf16.mxu0 0
      %1993 = vmatpush1.bf16.msra.mxu0 %v1559
      %1994 = vmatprep.subr.bf16.mxu0 0
      %1995 = vmatpush1.bf16.msra.mxu0 %v1560
      %1996 = vmatprep.subr.bf16.mxu0 0
      %1997 = vmatpush1.bf16.msra.mxu0 %v1561
      %1998 = vmatprep.subr.bf16.mxu0 0
      %1999 = vmatpush1.bf16.msra.mxu0 %v1562
      %2000 = vmatprep.subr.bf16.mxu0 0
      %2001 = vmatpush1.bf16.msra.mxu0 %v1563
      %2002 = vmatprep.subr.bf16.mxu0 0
      %2003 = vmatpush1.bf16.msra.mxu0 %v1564
      %2004 = vmatprep.subr.bf16.mxu0 0
      %2005 = vmatpush1.bf16.msra.mxu0 %v1565
      %2006 = vmatprep.mubr.bf16.mxu0 %v1723
      %2007 = vmatmul.mubr.bf16.gmra.mrb[0].mxu0 %v1722
      %v2008 = vpop.f32.mrb[0].mxu0
      %v2009 = vadd.f32 %v1960, %v2008
      %v2010 = vpop.f32.mrb[0].mxu0
      %v2011 = vpop.f32.mrb[0].mxu0
      %v2012 = vadd.f32 %v1963, %v2011
      %v2013 = vpop.f32.mrb[0].mxu0
      %2014 = vmatprep.mubr.bf16.mxu0 %v1739
      %2015 = vmatmul.mubr.bf16.gmra.mrb[0].mxu0 %v1738
      %v2016 = vpop.f32.mrb[0].mxu0
      %v2017 = vadd.f32 %v1968, %v2016
      %v2018 = vpop.f32.mrb[0].mxu0
      %v2019 = vpop.f32.mrb[0].mxu0
      %v2020 = vadd.f32 %v1971, %v2019
      %v2021 = vpop.f32.mrb[0].mxu0
      %2022 = vdwg.mxu0
      %2023 = vmatprep.subr.bf16.mxu0 0
      %2024 = vmatpush1.bf16.msra.mxu0 %v1566
      %2025 = vmatprep.subr.bf16.mxu0 0
      %2026 = vmatpush1.bf16.msra.mxu0 %v1567
      %2027 = vmatprep.subr.bf16.mxu0 0
      %2028 = vmatpush1.bf16.msra.mxu0 %v1568
      %2029 = vmatprep.subr.bf16.mxu0 0
      %2030 = vmatpush1.bf16.msra.mxu0 %v1569
      %2031 = vmatprep.subr.bf16.mxu0 0
      %2032 = vmatpush1.bf16.msra.mxu0 %v1570
      %2033 = vmatprep.subr.bf16.mxu0 0
      %2034 = vmatpush1.bf16.msra.mxu0 %v1571
      %2035 = vmatprep.subr.bf16.mxu0 0
      %2036 = vmatpush1.bf16.msra.mxu0 %v1572
      %2037 = vmatprep.subr.bf16.mxu0 0
      %2038 = vmatpush1.bf16.msra.mxu0 %v1573
      %2039 = vmatprep.subr.bf16.mxu0 0
      %2040 = vmatpush1.bf16.msra.mxu0 %v1574
      %2041 = vmatprep.subr.bf16.mxu0 0
      %2042 = vmatpush1.bf16.msra.mxu0 %v1575
      %2043 = vmatprep.subr.bf16.mxu0 0
      %2044 = vmatpush1.bf16.msra.mxu0 %v1576
      %2045 = vmatprep.subr.bf16.mxu0 0
      %2046 = vmatpush1.bf16.msra.mxu0 %v1577
      %2047 = vmatprep.subr.bf16.mxu0 0
      %2048 = vmatpush1.bf16.msra.mxu0 %v1578
      %2049 = vmatprep.subr.bf16.mxu0 0
      %2050 = vmatpush1.bf16.msra.mxu0 %v1579
      %2051 = vmatprep.subr.bf16.mxu0 0
      %2052 = vmatpush1.bf16.msra.mxu0 %v1580
      %2053 = vmatprep.subr.bf16.mxu0 0
      %2054 = vmatpush1.bf16.msra.mxu0 %v1581
      %2055 = vmatprep.mubr.bf16.mxu0 %v1725
      %2056 = vmatmul.mubr.bf16.gmra.mrb[0].mxu0 %v1724
      %v2057 = vpop.f32.mrb[0].mxu0
      %v2058 = vadd.f32 %v2009, %v2057
      %v2059 = vpop.f32.mrb[0].mxu0
      %v2060 = vpop.f32.mrb[0].mxu0
      %v2061 = vadd.f32 %v2012, %v2060
      %v2062 = vpop.f32.mrb[0].mxu0
      %2063 = vmatprep.mubr.bf16.mxu0 %v1741
      %2064 = vmatmul.mubr.bf16.gmra.mrb[0].mxu0 %v1740
      %v2065 = vpop.f32.mrb[0].mxu0
      %v2066 = vadd.f32 %v2017, %v2065
      %v2067 = vpop.f32.mrb[0].mxu0
      %v2068 = vpop.f32.mrb[0].mxu0
      %v2069 = vadd.f32 %v2020, %v2068
      %v2070 = vpop.f32.mrb[0].mxu0
      %2071 = vdwg.mxu0
      %2072 = vmatprep.subr.bf16.mxu0 0
      %2073 = vmatpush1.bf16.msra.mxu0 %v1582
      %2074 = vmatprep.subr.bf16.mxu0 0
      %2075 = vmatpush1.bf16.msra.mxu0 %v1583
      %2076 = vmatprep.subr.bf16.mxu0 0
      %2077 = vmatpush1.bf16.msra.mxu0 %v1584
      %2078 = vmatprep.subr.bf16.mxu0 0
      %2079 = vmatpush1.bf16.msra.mxu0 %v1585
      %2080 = vmatprep.subr.bf16.mxu0 0
      %2081 = vmatpush1.bf16.msra.mxu0 %v1586
      %2082 = vmatprep.subr.bf16.mxu0 0
      %2083 = vmatpush1.bf16.msra.mxu0 %v1587
      %2084 = vmatprep.subr.bf16.mxu0 0
      %2085 = vmatpush1.bf16.msra.mxu0 %v1588
      %2086 = vmatprep.subr.bf16.mxu0 0
      %2087 = vmatpush1.bf16.msra.mxu0 %v1589
      %2088 = vmatprep.subr.bf16.mxu0 0
      %2089 = vmatpush1.bf16.msra.mxu0 %v1590
      %2090 = vmatprep.subr.bf16.mxu0 0
      %2091 = vmatpush1.bf16.msra.mxu0 %v1591
      %2092 = vmatprep.subr.bf16.mxu0 0
      %2093 = vmatpush1.bf16.msra.mxu0 %v1592
      %2094 = vmatprep.subr.bf16.mxu0 0
      %2095 = vmatpush1.bf16.msra.mxu0 %v1593
      %2096 = vmatprep.subr.bf16.mxu0 0
      %2097 = vmatpush1.bf16.msra.mxu0 %v1594
      %2098 = vmatprep.subr.bf16.mxu0 0
      %2099 = vmatpush1.bf16.msra.mxu0 %v1595
      %2100 = vmatprep.subr.bf16.mxu0 0
      %2101 = vmatpush1.bf16.msra.mxu0 %v1596
      %2102 = vmatprep.subr.bf16.mxu0 0
      %2103 = vmatpush1.bf16.msra.mxu0 %v1597
      %2104 = vmatprep.mubr.bf16.mxu0 %v1727
      %2105 = vmatmul.mubr.bf16.gmra.mrb[0].mxu0 %v1726
      %v2106 = vpop.f32.mrb[0].mxu0
      %v2107 = vadd.f32 %v2058, %v2106
      %v2108 = vpop.f32.mrb[0].mxu0
      %v2109 = vpop.f32.mrb[0].mxu0
      %v2110 = vadd.f32 %v2061, %v2109
      %v2111 = vpop.f32.mrb[0].mxu0
      %2112 = vmatprep.mubr.bf16.mxu0 %v1743
      %2113 = vmatmul.mubr.bf16.gmra.mrb[0].mxu0 %v1742
      %v2114 = vpop.f32.mrb[0].mxu0
      %v2115 = vadd.f32 %v2066, %v2114
      %v2116 = vpop.f32.mrb[0].mxu0
      %v2117 = vpop.f32.mrb[0].mxu0
      %v2118 = vadd.f32 %v2069, %v2117
      %v2119 = vpop.f32.mrb[0].mxu0
      %2120 = vdwg.mxu0
      %2121 = vmatprep.subr.bf16.mxu0 0
      %2122 = vmatpush1.bf16.msra.mxu0 %v1598
      %2123 = vmatprep.subr.bf16.mxu0 0
      %2124 = vmatpush1.bf16.msra.mxu0 %v1599
      %2125 = vmatprep.subr.bf16.mxu0 0
      %2126 = vmatpush1.bf16.msra.mxu0 %v1600
      %2127 = vmatprep.subr.bf16.mxu0 0
      %2128 = vmatpush1.bf16.msra.mxu0 %v1601
      %2129 = vmatprep.subr.bf16.mxu0 0
      %2130 = vmatpush1.bf16.msra.mxu0 %v1602
      %2131 = vmatprep.subr.bf16.mxu0 0
      %2132 = vmatpush1.bf16.msra.mxu0 %v1603
      %2133 = vmatprep.subr.bf16.mxu0 0
      %2134 = vmatpush1.bf16.msra.mxu0 %v1604
      %2135 = vmatprep.subr.bf16.mxu0 0
      %2136 = vmatpush1.bf16.msra.mxu0 %v1605
      %2137 = vmatprep.subr.bf16.mxu0 0
      %2138 = vmatpush1.bf16.msra.mxu0 %v1606
      %2139 = vmatprep.subr.bf16.mxu0 0
      %2140 = vmatpush1.bf16.msra.mxu0 %v1607
      %2141 = vmatprep.subr.bf16.mxu0 0
      %2142 = vmatpush1.bf16.msra.mxu0 %v1608
      %2143 = vmatprep.subr.bf16.mxu0 0
      %2144 = vmatpush1.bf16.msra.mxu0 %v1609
      %2145 = vmatprep.subr.bf16.mxu0 0
      %2146 = vmatpush1.bf16.msra.mxu0 %v1610
      %2147 = vmatprep.subr.bf16.mxu0 0
      %2148 = vmatpush1.bf16.msra.mxu0 %v1611
      %2149 = vmatprep.subr.bf16.mxu0 0
      %2150 = vmatpush1.bf16.msra.mxu0 %v1612
      %2151 = vmatprep.subr.bf16.mxu0 0
      %2152 = vmatpush1.bf16.msra.mxu0 %v1613
      %2153 = vmatprep.mubr.bf16.mxu0 %v1729
      %2154 = vmatmul.mubr.bf16.gmra.mrb[0].mxu0 %v1728
      %v2155 = vpop.f32.mrb[0].mxu0
      %v2156 = vadd.f32 %v2107, %v2155
      %v2157 = vpop.f32.mrb[0].mxu0
      %v2158 = vpop.f32.mrb[0].mxu0
      %v2159 = vadd.f32 %v2110, %v2158
      %v2160 = vpop.f32.mrb[0].mxu0
      %2161 = vmatprep.mubr.bf16.mxu0 %v1745
      %2162 = vmatmul.mubr.bf16.gmra.mrb[0].mxu0 %v1744
      %v2163 = vpop.f32.mrb[0].mxu0
      %v2164 = vadd.f32 %v2115, %v2163
      %v2165 = vpop.f32.mrb[0].mxu0
      %v2166 = vpop.f32.mrb[0].mxu0
      %v2167 = vadd.f32 %v2118, %v2166
      %v2168 = vpop.f32.mrb[0].mxu0
      %2169 = vdwg.mxu0
      %vm2170 = vcmask 7168
      %2171 = vst.msk [vmem:[%s170] sm:$0xff] %vm2170, %v2156
      %2172 = vst.msk [vmem:[%s170 + $0x8] sm:$0xff] %vm2170, %v2159
      %2173 = vst.msk [vmem:[%s170 + $0x10] sm:$0xff] %vm2170, %v2164
      %2174 = vst.msk [vmem:[%s170 + $0x18] sm:$0xff] %vm2170, %v2167
      %p2175 = scmp.lt.s32.totalorder %s14, 1
      %s2176 = scalar_select %p2175, %s14, 1
      %s2177 = smul.addr %s2176, 4
      %s2178 = smul.addr %s2177, 8
      %s2179 = scalar_lea.vmem %s3, %s2178
      // Predicated region
      $region33: #{graph_captioning_forward.4} parent=31 // pred_check
        %p2180 = pneg %p100
      $region34: #{graph_captioning_forward.4} parent=31 // pred_check_branch
        %2182 = sbr.rel (%p2180) target = $region36
      $region35: #{graph_captioning_forward.4} parent=31 // pred_region
        _
      $region36: #{graph_captioning_forward.4} parent=31 // pred_fallthru
        _
    $region32: #{graph_captioning_forward.4} parent=5 // pred_fallthru
      _
    %p2183 = scmp.le.s32.totalorder 2, %s9
    // Predicated region
    $region37: #{graph_captioning_forward.4} parent=5 // pred_check
      %p2184 = pneg %p2183
    $region38: #{graph_captioning_forward.4} parent=5 // pred_check_branch
      %2186 = sbr.rel (%p2184) target = $region40
    $region39: #{graph_captioning_forward.4} parent=5 // pred_region
      %s2187 = ssub.s32 %s9, 2
      // Predicated region
      $region41: #{graph_captioning_forward.4} parent=39 // pred_check
        %p2188 = pneg %p106
      $region42: #{graph_captioning_forward.4} parent=39 // pred_check_branch
        %2190 = sbr.rel (%p2188) target = $region44
      $region43: #{graph_captioning_forward.4} parent=39 // pred_region
        %p2191 = scmp.lt.s32.totalorder %s15, 1
        %s2192 = scalar_select %p2191, %s15, 1
        %s2193 = smul.addr %s2192, 4
        %s2194 = smul.addr %s2193, 8
        %s2195 = scalar_lea.vmem %s3, %s2194
      $region44: #{graph_captioning_forward.4} parent=39 // pred_fallthru
        _
    $region40: #{graph_captioning_forward.4} parent=5 // pred_fallthru
      _
  $region6: #{graph_captioning_forward.4} parent=0 // loop_footer
    %s13 = sadd.s32 1, %s9
  $region7: #{graph_captioning_forward.4} parent=0 // loop_footer_branch
    %8 = sbr.rel target = $region3
  $region8: #{graph_captioning_forward.4} parent=0 // loop_exit
    _

// kernel: graph_captioning_forward.7
$region0: #{graph_captioning_forward.7}
  #allocation0 [shape = 'u32[]', space=smem, size = 0x4, offset = 0x4, fixed_abs, tag = 'smem constant byte address 0x4 - core index']
  #allocation1 [shape = 'u32[144,128]{1,0:T(1,128)}', space=vmem, size = 0x12000, scoped, tag = 'internal scratch']
  %s0 = inlined_call_operand.vmem [shape: bf16[16,32], index: 0, kind: input, shape index: {}]
  %s1 = inlined_call_operand.vmem [shape: bf16[32,24], index: 1, kind: input, shape index: {}]
  %s2 = inlined_call_operand.vmem [shape: f32[1,24], index: 2, kind: input, shape index: {}]
  %s3 = inlined_call_operand.hbm [shape: f32[16,24], index: 3, kind: output, shape index: {}]
  %s4 = sld [smem:[#allocation0]]
  $region22: #{graph_captioning_forward.7} parent=0
    _
  %s6 = ssub.s32 1, %s4
  %s7 = scalar_select 0, %s6, %s4
  $region1: #{graph_captioning_forward.7} parent=0
    #allocation2 [shape = 'u8[8192]{0}', space=vmem, size = 0x2000, scoped, tag = 'output window, operand 0, single buffered']
    #allocation3 [shape = 's32[1]{0}', space=sflag, size = 0x4, scoped, tag = 'scoped memory for graph_captioning_forward.7']
    %8 = vsyncpa [#allocation3], 0
    // Predicated region
    $region2: #{graph_captioning_forward.7} parent=1 // pred_check
      _
    $region3: #{graph_captioning_forward.7} parent=1 // pred_check_branch
      %10 = sbr.rel (0) target = $region5
    $region4: #{graph_captioning_forward.7} parent=1 // pred_region
      _
    $region5: #{graph_captioning_forward.7} parent=1 // pred_fallthru
      _
    // Predicated region
    $region6: #{graph_captioning_forward.7} parent=1 // pred_check
      _
    $region7: #{graph_captioning_forward.7} parent=1 // pred_check_branch
      %12 = sbr.rel (0) target = $region9
    $region8: #{graph_captioning_forward.7} parent=1 // pred_region
      _
    $region9: #{graph_captioning_forward.7} parent=1 // pred_fallthru
      _
    // Predicated region
    $region10: #{graph_captioning_forward.7} parent=1 // pred_check
      _
    $region11: #{graph_captioning_forward.7} parent=1 // pred_check_branch
      %14 = sbr.rel (0) target = $region13
    $region12: #{graph_captioning_forward.7} parent=1 // pred_region
      _
    $region13: #{graph_captioning_forward.7} parent=1 // pred_fallthru
      _
    %v16 = vld [vmem:[%s0] sm:$0xf]
    %v17 = vld [vmem:[%s0 + $0x4] sm:$0xf]
    %v18 = vld [vmem:[%s1] sm:$0xf]
    %v19 = vld [vmem:[%s1 + $0x4] sm:$0xf]
    %v20 = vld [vmem:[%s1 + $0x8] sm:$0xf]
    %v21 = vld [vmem:[%s1 + $0xc] sm:$0xf]
    %v22 = vld [vmem:[%s2] sm:$0x1]
    %v24 = vlaneseq
    %v25 = vshrl.u32 %v24, 7
    %v26 = vsub.s32 0, %v25
    %v27 = vrot.slane %v22, %v26
    %v31 = vunpack.c.l.b16 %v16
    %v32 = vunpack.c.l.b16 %v17
    %v33 = vpack.c.b16 %v32, %v31
    %v38 = vunpack.c.l.b16 %v18
    %v39 = vunpack.c.l.b16 %v19
    %v40 = vunpack.c.l.b16 %v20
    %v41 = vunpack.c.l.b16 %v21
    %v42 = vpack.c.b16 %v39, %v38
    %v43 = vpack.c.b16 %v41, %v40
    %vm46 = vcmask 261120
    %v48 = vsel %vm46, %v33, 0
    %50 = vmatprep.subr.bf16.mxu0 0
    %51 = vmatpush1.bf16.msra.mxu0 %v42
    %52 = vmatprep.subr.bf16.mxu0 0
    %53 = vmatpush1.bf16.msra.mxu0 %v43
    %54 = vmatprep.subr.bf16.mxu0 0
    %55 = vmatpush1.bf16.msra.mxu0 0
    %56 = vmatprep.subr.bf16.mxu0 0
    %57 = vmatpush1.bf16.msra.mxu0 0
    %58 = vmatprep.subr.bf16.mxu0 0
    %59 = vmatpush1.bf16.msra.mxu0 0
    %60 = vmatprep.subr.bf16.mxu0 0
    %61 = vmatpush1.bf16.msra.mxu0 0
    %62 = vmatprep.subr.bf16.mxu0 0
    %63 = vmatpush1.bf16.msra.mxu0 0
    %64 = vmatprep.subr.bf16.mxu0 0
    %65 = vmatpush1.bf16.msra.mxu0 0
    %66 = vmatprep.subr.bf16.mxu0 0
    %67 = vmatpush1.bf16.msra.mxu0 0
    %68 = vmatprep.subr.bf16.mxu0 0
    %69 = vmatpush1.bf16.msra.mxu0 0
    %70 = vmatprep.subr.bf16.mxu0 0
    %71 = vmatpush1.bf16.msra.mxu0 0
    %72 = vmatprep.subr.bf16.mxu0 0
    %73 = vmatpush1.bf16.msra.mxu0 0
    %74 = vmatprep.subr.bf16.mxu0 0
    %75 = vmatpush1.bf16.msra.mxu0 0
    %76 = vmatprep.subr.bf16.mxu0 0
    %77 = vmatpush1.bf16.msra.mxu0 0
    %78 = vmatprep.subr.bf16.mxu0 0
    %79 = vmatpush1.bf16.msra.mxu0 0
    %80 = vmatprep.subr.bf16.mxu0 0
    %81 = vmatpush1.bf16.msra.mxu0 0
    %82 = vmatprep.mubr.bf16.mxu0 0
    %83 = vmatmul.mubr.bf16.gmra.mrb[0].mxu0 %v48
    %v84 = vpop.f32.mrb[0].mxu0
    %v85 = vadd.f32 %v27, %v84
    %v86 = vpop.f32.mrb[0].mxu0
    %v87 = vpop.f32.mrb[0].mxu0
    %v88 = vadd.f32 %v27, %v87
    %v89 = vpop.f32.mrb[0].mxu0
    %90 = vdwg.mxu0
    %vm91 = vcmask 195584
    %92 = vst.msk [vmem:[#allocation2] sm:$0xff] %vm91, %v85
    %93 = vst.msk [vmem:[#allocation2 + $0x8] sm:$0xff] %vm91, %v88
    // Predicated region
    $region14: #{graph_captioning_forward.7} parent=1 // pred_check
      _
    $region15: #{graph_captioning_forward.7} parent=1 // pred_check_branch
      %95 = sbr.rel (0) target = $region17
    $region16: #{graph_captioning_forward.7} parent=1 // pred_region
      %s97 = ssub.s32 256, 256
      %98 = vsyncadd [#allocation3], %s97
      %s99 = sshll.u32 [#allocation2], 4
      %s100 = int_to_ptr.vmem [resolvable:$true] %s99
      %105 = dma.vmem_to_hbm [thread:$0]  %s100, 256, %s3, [#allocation3], 128, 128, 8
    $region17: #{graph_captioning_forward.7} parent=1 // pred_fallthru
      _
    // Predicated region
    $region18: #{graph_captioning_forward.7} parent=1 // pred_check
      _
    $region19: #{graph_captioning_forward.7} parent=1 // pred_check_branch
      %107 = sbr.rel (0) target = $region21
    $region20: #{graph_captioning_forward.7} parent=1 // pred_region
      %108 = dma.done [#allocation3], 256
    $region21: #{graph_captioning_forward.7} parent=1 // pred_fallthru
      _
    %109 = vsyncpa [#allocation3], 1

// kernel: graph_captioning_forward.5
$region0: #{graph_captioning_forward.5}
  #allocation0 [shape = 'u32[]', space=smem, size = 0x4, offset = 0x4, fixed_abs, tag = 'smem constant byte address 0x4 - core index']
  #allocation1 [shape = 'u32[144,128]{1,0:T(1,128)}', space=vmem, size = 0x12000, scoped, tag = 'internal scratch']
  %s0 = inlined_call_operand.vmem [shape: f32[2,8,32], index: 0, kind: input, shape index: {}]
  %s1 = inlined_call_operand.vmem [shape: f32[2,1,32], index: 1, kind: input, shape index: {}]
  %s2 = inlined_call_operand.vmem [shape: bf16[8,32,12], index: 2, kind: input, shape index: {}]
  %s3 = inlined_call_operand.vmem [shape: f32[8,1,12], index: 3, kind: input, shape index: {}]
  %s4 = inlined_call_operand.vmem [shape: bf16[8,4,32], index: 4, kind: input, shape index: {}]
  %s5 = inlined_call_operand.vmem [shape: f32[1,32], index: 5, kind: input, shape index: {}]
  %s6 = inlined_call_operand.vmem [shape: f32[1,32], index: 6, kind: input, shape index: {}]
  %s7 = inlined_call_operand.vmem [shape: f32[1,32], index: 7, kind: input, shape index: {}]
  %s8 = inlined_call_operand.vmem [shape: bf16[32,32], index: 8, kind: input, shape index: {}]
  %s9 = inlined_call_operand.vmem [shape: f32[1,32], index: 9, kind: input, shape index: {}]
  %s10 = inlined_call_operand.vmem [shape: bf16[32,32], index: 10, kind: input, shape index: {}]
  %s11 = inlined_call_operand.vmem [shape: f32[1,32], index: 11, kind: input, shape index: {}]
  %s12 = inlined_call_operand.vmem [shape: f32[1,32], index: 12, kind: input, shape index: {}]
  %s13 = inlined_call_operand.vmem [shape: f32[1,32], index: 13, kind: input, shape index: {}]
  %s14 = inlined_call_operand.vmem [shape: bf16[32,2048], index: 14, kind: input, shape index: {}]
  %s15 = inlined_call_operand.vmem [shape: f32[1,2048], index: 15, kind: input, shape index: {}]
  %s16 = inlined_call_operand.vmem [shape: bf16[2048,32], index: 16, kind: input, shape index: {}]
  %s17 = inlined_call_operand.vmem [shape: f32[1,32], index: 17, kind: input, shape index: {}]
  %s18 = inlined_call_operand.vmem [shape: f32[1,32], index: 18, kind: input, shape index: {}]
  %s19 = inlined_call_operand.vmem [shape: f32[1,32], index: 19, kind: input, shape index: {}]
  %s20 = inlined_call_operand.vmem [shape: f32[2,8,32], index: 20, kind: output, shape index: {}]
  %s21 = sld [smem:[#allocation0]]
  $region113: #{graph_captioning_forward.5} parent=0
    _
  %s23 = ssub.s32 1, %s21
  %s24 = scalar_select 0, %s23, %s21
  loop: start=0, step=1, limit=4
  $region2: #{graph_captioning_forward.5} parent=0 // loop_pre_header
    _
  $region3: #{graph_captioning_forward.5} parent=0 // loop_header
    %s26 = sphi 0, %s30
    %p27 = scmp.ge.s32.totalorder %s26, 4
    %s36 = sphi 0, %s38
    %s39 = sphi 0, %s36
    %s40 = sphi 0, %s39
    %s56 = sphi 0, %s40
    %s62 = sphi 0, %s64
    %s65 = sphi 0, %s62
    %s66 = sphi 0, %s65
    %s82 = sphi 0, %s66
    %s86 = sphi 0, %s86
    %s88 = sphi 0, %s86
    %s89 = sphi 0, %s88
    %s103 = sphi 0, %s89
    %s107 = sphi 0, %s107
    %s109 = sphi 0, %s107
    %s110 = sphi 0, %s109
    %s124 = sphi 0, %s110
    %s128 = sphi 0, %s128
    %s130 = sphi 0, %s128
    %s131 = sphi 0, %s130
    %s145 = sphi 0, %s131
    %s149 = sphi 0, %s149
    %s151 = sphi 0, %s149
    %s152 = sphi 0, %s151
    %s166 = sphi 0, %s152
    %s170 = sphi 0, %s170
    %s172 = sphi 0, %s170
    %s173 = sphi 0, %s172
    %s187 = sphi 0, %s173
    %s191 = sphi 0, %s191
    %s193 = sphi 0, %s191
    %s194 = sphi 0, %s193
    %s208 = sphi 0, %s194
    %s212 = sphi 0, %s212
    %s214 = sphi 0, %s212
    %s215 = sphi 0, %s214
    %s229 = sphi 0, %s215
    %s233 = sphi 0, %s233
    %s235 = sphi 0, %s233
    %s236 = sphi 0, %s235
    %s250 = sphi 0, %s236
    %s254 = sphi 0, %s254
    %s256 = sphi 0, %s254
    %s257 = sphi 0, %s256
    %s271 = sphi 0, %s257
    %s275 = sphi 0, %s275
    %s277 = sphi 0, %s275
    %s278 = sphi 0, %s277
    %s292 = sphi 0, %s278
    %s296 = sphi 0, %s296
    %s298 = sphi 0, %s296
    %s299 = sphi 0, %s298
    %s313 = sphi 0, %s299
    %s317 = sphi 0, %s317
    %s319 = sphi 0, %s317
    %s320 = sphi 0, %s319
    %s334 = sphi 0, %s320
    %s338 = sphi 0, %s338
    %s340 = sphi 0, %s338
    %s341 = sphi 0, %s340
    %s355 = sphi 0, %s341
    %s359 = sphi 0, %s359
    %s361 = sphi 0, %s359
    %s362 = sphi 0, %s361
    %s376 = sphi 0, %s362
    %s380 = sphi 0, %s380
    %s382 = sphi 0, %s380
    %s383 = sphi 0, %s382
    %s397 = sphi 0, %s383
    %s401 = sphi 0, %s401
    %s403 = sphi 0, %s401
    %s404 = sphi 0, %s403
    %s418 = sphi 0, %s404
    %s422 = sphi 0, %s422
    %s424 = sphi 0, %s422
    %s425 = sphi 0, %s424
    %s439 = sphi 0, %s425
    %s443 = sphi 0, %s443
    %s445 = sphi 0, %s443
    %s446 = sphi 0, %s445
    %s460 = sphi 0, %s446
    %s466 = sphi 0, %s468
    %s469 = sphi 0, %s466
    %s470 = sphi 0, %s469
    %s486 = sphi 0, %s470
  $region4: #{graph_captioning_forward.5} parent=0 // loop_header_branch
    %29 = sbr.rel (%p27) target = $region8
  $region5: #{graph_captioning_forward.5} parent=0 // loop_body
    %s31 = ssub.s32 %s26, 1
    %s32 = ssub.s32 %s26, 2
    %s33 = sadd.s32 %s26, 1
    %s34 = ssub.s32 %s26, %s33
    %p35 = scmp.eq.s32.totalorder %s34, 0
    %s37 = sadd.s32 %s36, 1
    %s38 = scalar_select %p35, %s36, %s37
    %p41 = pneg %p35
    %p42 = scmp.eq.s32.totalorder %s26, 1
    %p43 = por %p41, %p42
    %p44 = scmp.ne.s32.totalorder %s36, %s39
    %p45 = scmp.eq.s32.totalorder %s26, 0
    %p46 = por %p44, %p45
    %p47 = scmp.ne.s32.totalorder %s36, %s39
    %p48 = scmp.eq.s32.totalorder %s31, 1
    %p49 = por %p47, %p48
    %p50 = scmp.ne.s32.totalorder %s39, %s40
    %p51 = scmp.eq.s32.totalorder %s31, 0
    %p52 = por %p50, %p51
    %p53 = scmp.ne.s32.totalorder %s39, %s40
    %p54 = scmp.eq.s32.totalorder %s32, 1
    %p55 = por %p53, %p54
    %p57 = scmp.ne.s32.totalorder %s40, %s56
    %p58 = scmp.eq.s32.totalorder %s32, 0
    %p59 = por %p57, %p58
    %s60 = ssub.s32 %s26, %s33
    %p61 = scmp.eq.s32.totalorder %s60, 0
    %s63 = sadd.s32 %s62, 1
    %s64 = scalar_select %p61, %s62, %s63
    %p67 = pneg %p61
    %p68 = scmp.eq.s32.totalorder %s26, 1
    %p69 = por %p67, %p68
    %p70 = scmp.ne.s32.totalorder %s62, %s65
    %p71 = scmp.eq.s32.totalorder %s26, 0
    %p72 = por %p70, %p71
    %p73 = scmp.ne.s32.totalorder %s62, %s65
    %p74 = scmp.eq.s32.totalorder %s31, 1
    %p75 = por %p73, %p74
    %p76 = scmp.ne.s32.totalorder %s65, %s66
    %p77 = scmp.eq.s32.totalorder %s31, 0
    %p78 = por %p76, %p77
    %p79 = scmp.ne.s32.totalorder %s65, %s66
    %p80 = scmp.eq.s32.totalorder %s32, 1
    %p81 = por %p79, %p80
    %p83 = scmp.ne.s32.totalorder %s66, %s82
    %p84 = scmp.eq.s32.totalorder %s32, 0
    %p85 = por %p83, %p84
    %s87 = sadd.s32 %s86, 1
    %p90 = scmp.eq.s32.totalorder %s26, 1
    %p91 = scmp.ne.s32.totalorder %s86, %s88
    %p92 = scmp.eq.s32.totalorder %s26, 0
    %p93 = por %p91, %p92
    %p94 = scmp.ne.s32.totalorder %s86, %s88
    %p95 = scmp.eq.s32.totalorder %s31, 1
    %p96 = por %p94, %p95
    %p97 = scmp.ne.s32.totalorder %s88, %s89
    %p98 = scmp.eq.s32.totalorder %s31, 0
    %p99 = por %p97, %p98
    %p100 = scmp.ne.s32.totalorder %s88, %s89
    %p101 = scmp.eq.s32.totalorder %s32, 1
    %p102 = por %p100, %p101
    %p104 = scmp.ne.s32.totalorder %s89, %s103
    %p105 = scmp.eq.s32.totalorder %s32, 0
    %p106 = por %p104, %p105
    %s108 = sadd.s32 %s107, 1
    %p111 = scmp.eq.s32.totalorder %s26, 1
    %p112 = scmp.ne.s32.totalorder %s107, %s109
    %p113 = scmp.eq.s32.totalorder %s26, 0
    %p114 = por %p112, %p113
    %p115 = scmp.ne.s32.totalorder %s107, %s109
    %p116 = scmp.eq.s32.totalorder %s31, 1
    %p117 = por %p115, %p116
    %p118 = scmp.ne.s32.totalorder %s109, %s110
    %p119 = scmp.eq.s32.totalorder %s31, 0
    %p120 = por %p118, %p119
    %p121 = scmp.ne.s32.totalorder %s109, %s110
    %p122 = scmp.eq.s32.totalorder %s32, 1
    %p123 = por %p121, %p122
    %p125 = scmp.ne.s32.totalorder %s110, %s124
    %p126 = scmp.eq.s32.totalorder %s32, 0
    %p127 = por %p125, %p126
    %s129 = sadd.s32 %s128, 1
    %p132 = scmp.eq.s32.totalorder %s26, 1
    %p133 = scmp.ne.s32.totalorder %s128, %s130
    %p134 = scmp.eq.s32.totalorder %s26, 0
    %p135 = por %p133, %p134
    %p136 = scmp.ne.s32.totalorder %s128, %s130
    %p137 = scmp.eq.s32.totalorder %s31, 1
    %p138 = por %p136, %p137
    %p139 = scmp.ne.s32.totalorder %s130, %s131
    %p140 = scmp.eq.s32.totalorder %s31, 0
    %p141 = por %p139, %p140
    %p142 = scmp.ne.s32.totalorder %s130, %s131
    %p143 = scmp.eq.s32.totalorder %s32, 1
    %p144 = por %p142, %p143
    %p146 = scmp.ne.s32.totalorder %s131, %s145
    %p147 = scmp.eq.s32.totalorder %s32, 0
    %p148 = por %p146, %p147
    %s150 = sadd.s32 %s149, 1
    %p153 = scmp.eq.s32.totalorder %s26, 1
    %p154 = scmp.ne.s32.totalorder %s149, %s151
    %p155 = scmp.eq.s32.totalorder %s26, 0
    %p156 = por %p154, %p155
    %p157 = scmp.ne.s32.totalorder %s149, %s151
    %p158 = scmp.eq.s32.totalorder %s31, 1
    %p159 = por %p157, %p158
    %p160 = scmp.ne.s32.totalorder %s151, %s152
    %p161 = scmp.eq.s32.totalorder %s31, 0
    %p162 = por %p160, %p161
    %p163 = scmp.ne.s32.totalorder %s151, %s152
    %p164 = scmp.eq.s32.totalorder %s32, 1
    %p165 = por %p163, %p164
    %p167 = scmp.ne.s32.totalorder %s152, %s166
    %p168 = scmp.eq.s32.totalorder %s32, 0
    %p169 = por %p167, %p168
    %s171 = sadd.s32 %s170, 1
    %p174 = scmp.eq.s32.totalorder %s26, 1
    %p175 = scmp.ne.s32.totalorder %s170, %s172
    %p176 = scmp.eq.s32.totalorder %s26, 0
    %p177 = por %p175, %p176
    %p178 = scmp.ne.s32.totalorder %s170, %s172
    %p179 = scmp.eq.s32.totalorder %s31, 1
    %p180 = por %p178, %p179
    %p181 = scmp.ne.s32.totalorder %s172, %s173
    %p182 = scmp.eq.s32.totalorder %s31, 0
    %p183 = por %p181, %p182
    %p184 = scmp.ne.s32.totalorder %s172, %s173
    %p185 = scmp.eq.s32.totalorder %s32, 1
    %p186 = por %p184, %p185
    %p188 = scmp.ne.s32.totalorder %s173, %s187
    %p189 = scmp.eq.s32.totalorder %s32, 0
    %p190 = por %p188, %p189
    %s192 = sadd.s32 %s191, 1
    %p195 = scmp.eq.s32.totalorder %s26, 1
    %p196 = scmp.ne.s32.totalorder %s191, %s193
    %p197 = scmp.eq.s32.totalorder %s26, 0
    %p198 = por %p196, %p197
    %p199 = scmp.ne.s32.totalorder %s191, %s193
    %p200 = scmp.eq.s32.totalorder %s31, 1
    %p201 = por %p199, %p200
    %p202 = scmp.ne.s32.totalorder %s193, %s194
    %p203 = scmp.eq.s32.totalorder %s31, 0
    %p204 = por %p202, %p203
    %p205 = scmp.ne.s32.totalorder %s193, %s194
    %p206 = scmp.eq.s32.totalorder %s32, 1
    %p207 = por %p205, %p206
    %p209 = scmp.ne.s32.totalorder %s194, %s208
    %p210 = scmp.eq.s32.totalorder %s32, 0
    %p211 = por %p209, %p210
    %s213 = sadd.s32 %s212, 1
    %p216 = scmp.eq.s32.totalorder %s26, 1
    %p217 = scmp.ne.s32.totalorder %s212, %s214
    %p218 = scmp.eq.s32.totalorder %s26, 0
    %p219 = por %p217, %p218
    %p220 = scmp.ne.s32.totalorder %s212, %s214
    %p221 = scmp.eq.s32.totalorder %s31, 1
    %p222 = por %p220, %p221
    %p223 = scmp.ne.s32.totalorder %s214, %s215
    %p224 = scmp.eq.s32.totalorder %s31, 0
    %p225 = por %p223, %p224
    %p226 = scmp.ne.s32.totalorder %s214, %s215
    %p227 = scmp.eq.s32.totalorder %s32, 1
    %p228 = por %p226, %p227
    %p230 = scmp.ne.s32.totalorder %s215, %s229
    %p231 = scmp.eq.s32.totalorder %s32, 0
    %p232 = por %p230, %p231
    %s234 = sadd.s32 %s233, 1
    %p237 = scmp.eq.s32.totalorder %s26, 1
    %p238 = scmp.ne.s32.totalorder %s233, %s235
    %p239 = scmp.eq.s32.totalorder %s26, 0
    %p240 = por %p238, %p239
    %p241 = scmp.ne.s32.totalorder %s233, %s235
    %p242 = scmp.eq.s32.totalorder %s31, 1
    %p243 = por %p241, %p242
    %p244 = scmp.ne.s32.totalorder %s235, %s236
    %p245 = scmp.eq.s32.totalorder %s31, 0
    %p246 = por %p244, %p245
    %p247 = scmp.ne.s32.totalorder %s235, %s236
    %p248 = scmp.eq.s32.totalorder %s32, 1
    %p249 = por %p247, %p248
    %p251 = scmp.ne.s32.totalorder %s236, %s250
    %p252 = scmp.eq.s32.totalorder %s32, 0
    %p253 = por %p251, %p252
    %s255 = sadd.s32 %s254, 1
    %p258 = scmp.eq.s32.totalorder %s26, 1
    %p259 = scmp.ne.s32.totalorder %s254, %s256
    %p260 = scmp.eq.s32.totalorder %s26, 0
    %p261 = por %p259, %p260
    %p262 = scmp.ne.s32.totalorder %s254, %s256
    %p263 = scmp.eq.s32.totalorder %s31, 1
    %p264 = por %p262, %p263
    %p265 = scmp.ne.s32.totalorder %s256, %s257
    %p266 = scmp.eq.s32.totalorder %s31, 0
    %p267 = por %p265, %p266
    %p268 = scmp.ne.s32.totalorder %s256, %s257
    %p269 = scmp.eq.s32.totalorder %s32, 1
    %p270 = por %p268, %p269
    %p272 = scmp.ne.s32.totalorder %s257, %s271
    %p273 = scmp.eq.s32.totalorder %s32, 0
    %p274 = por %p272, %p273
    %s276 = sadd.s32 %s275, 1
    %p279 = scmp.eq.s32.totalorder %s26, 1
    %p280 = scmp.ne.s32.totalorder %s275, %s277
    %p281 = scmp.eq.s32.totalorder %s26, 0
    %p282 = por %p280, %p281
    %p283 = scmp.ne.s32.totalorder %s275, %s277
    %p284 = scmp.eq.s32.totalorder %s31, 1
    %p285 = por %p283, %p284
    %p286 = scmp.ne.s32.totalorder %s277, %s278
    %p287 = scmp.eq.s32.totalorder %s31, 0
    %p288 = por %p286, %p287
    %p289 = scmp.ne.s32.totalorder %s277, %s278
    %p290 = scmp.eq.s32.totalorder %s32, 1
    %p291 = por %p289, %p290
    %p293 = scmp.ne.s32.totalorder %s278, %s292
    %p294 = scmp.eq.s32.totalorder %s32, 0
    %p295 = por %p293, %p294
    %s297 = sadd.s32 %s296, 1
    %p300 = scmp.eq.s32.totalorder %s26, 1
    %p301 = scmp.ne.s32.totalorder %s296, %s298
    %p302 = scmp.eq.s32.totalorder %s26, 0
    %p303 = por %p301, %p302
    %p304 = scmp.ne.s32.totalorder %s296, %s298
    %p305 = scmp.eq.s32.totalorder %s31, 1
    %p306 = por %p304, %p305
    %p307 = scmp.ne.s32.totalorder %s298, %s299
    %p308 = scmp.eq.s32.totalorder %s31, 0
    %p309 = por %p307, %p308
    %p310 = scmp.ne.s32.totalorder %s298, %s299
    %p311 = scmp.eq.s32.totalorder %s32, 1
    %p312 = por %p310, %p311
    %p314 = scmp.ne.s32.totalorder %s299, %s313
    %p315 = scmp.eq.s32.totalorder %s32, 0
    %p316 = por %p314, %p315
    %s318 = sadd.s32 %s317, 1
    %p321 = scmp.eq.s32.totalorder %s26, 1
    %p322 = scmp.ne.s32.totalorder %s317, %s319
    %p323 = scmp.eq.s32.totalorder %s26, 0
    %p324 = por %p322, %p323
    %p325 = scmp.ne.s32.totalorder %s317, %s319
    %p326 = scmp.eq.s32.totalorder %s31, 1
    %p327 = por %p325, %p326
    %p328 = scmp.ne.s32.totalorder %s319, %s320
    %p329 = scmp.eq.s32.totalorder %s31, 0
    %p330 = por %p328, %p329
    %p331 = scmp.ne.s32.totalorder %s319, %s320
    %p332 = scmp.eq.s32.totalorder %s32, 1
    %p333 = por %p331, %p332
    %p335 = scmp.ne.s32.totalorder %s320, %s334
    %p336 = scmp.eq.s32.totalorder %s32, 0
    %p337 = por %p335, %p336
    %s339 = sadd.s32 %s338, 1
    %p342 = scmp.eq.s32.totalorder %s26, 1
    %p343 = scmp.ne.s32.totalorder %s338, %s340
    %p344 = scmp.eq.s32.totalorder %s26, 0
    %p345 = por %p343, %p344
    %p346 = scmp.ne.s32.totalorder %s338, %s340
    %p347 = scmp.eq.s32.totalorder %s31, 1
    %p348 = por %p346, %p347
    %p349 = scmp.ne.s32.totalorder %s340, %s341
    %p350 = scmp.eq.s32.totalorder %s31, 0
    %p351 = por %p349, %p350
    %p352 = scmp.ne.s32.totalorder %s340, %s341
    %p353 = scmp.eq.s32.totalorder %s32, 1
    %p354 = por %p352, %p353
    %p356 = scmp.ne.s32.totalorder %s341, %s355
    %p357 = scmp.eq.s32.totalorder %s32, 0
    %p358 = por %p356, %p357
    %s360 = sadd.s32 %s359, 1
    %p363 = scmp.eq.s32.totalorder %s26, 1
    %p364 = scmp.ne.s32.totalorder %s359, %s361
    %p365 = scmp.eq.s32.totalorder %s26, 0
    %p366 = por %p364, %p365
    %p367 = scmp.ne.s32.totalorder %s359, %s361
    %p368 = scmp.eq.s32.totalorder %s31, 1
    %p369 = por %p367, %p368
    %p370 = scmp.ne.s32.totalorder %s361, %s362
    %p371 = scmp.eq.s32.totalorder %s31, 0
    %p372 = por %p370, %p371
    %p373 = scmp.ne.s32.totalorder %s361, %s362
    %p374 = scmp.eq.s32.totalorder %s32, 1
    %p375 = por %p373, %p374
    %p377 = scmp.ne.s32.totalorder %s362, %s376
    %p378 = scmp.eq.s32.totalorder %s32, 0
    %p379 = por %p377, %p378
    %s381 = sadd.s32 %s380, 1
    %p384 = scmp.eq.s32.totalorder %s26, 1
    %p385 = scmp.ne.s32.totalorder %s380, %s382
    %p386 = scmp.eq.s32.totalorder %s26, 0
    %p387 = por %p385, %p386
    %p388 = scmp.ne.s32.totalorder %s380, %s382
    %p389 = scmp.eq.s32.totalorder %s31, 1
    %p390 = por %p388, %p389
    %p391 = scmp.ne.s32.totalorder %s382, %s383
    %p392 = scmp.eq.s32.totalorder %s31, 0
    %p393 = por %p391, %p392
    %p394 = scmp.ne.s32.totalorder %s382, %s383
    %p395 = scmp.eq.s32.totalorder %s32, 1
    %p396 = por %p394, %p395
    %p398 = scmp.ne.s32.totalorder %s383, %s397
    %p399 = scmp.eq.s32.totalorder %s32, 0
    %p400 = por %p398, %p399
    %s402 = sadd.s32 %s401, 1
    %p405 = scmp.eq.s32.totalorder %s26, 1
    %p406 = scmp.ne.s32.totalorder %s401, %s403
    %p407 = scmp.eq.s32.totalorder %s26, 0
    %p408 = por %p406, %p407
    %p409 = scmp.ne.s32.totalorder %s401, %s403
    %p410 = scmp.eq.s32.totalorder %s31, 1
    %p411 = por %p409, %p410
    %p412 = scmp.ne.s32.totalorder %s403, %s404
    %p413 = scmp.eq.s32.totalorder %s31, 0
    %p414 = por %p412, %p413
    %p415 = scmp.ne.s32.totalorder %s403, %s404
    %p416 = scmp.eq.s32.totalorder %s32, 1
    %p417 = por %p415, %p416
    %p419 = scmp.ne.s32.totalorder %s404, %s418
    %p420 = scmp.eq.s32.totalorder %s32, 0
    %p421 = por %p419, %p420
    %s423 = sadd.s32 %s422, 1
    %p426 = scmp.eq.s32.totalorder %s26, 1
    %p427 = scmp.ne.s32.totalorder %s422, %s424
    %p428 = scmp.eq.s32.totalorder %s26, 0
    %p429 = por %p427, %p428
    %p430 = scmp.ne.s32.totalorder %s422, %s424
    %p431 = scmp.eq.s32.totalorder %s31, 1
    %p432 = por %p430, %p431
    %p433 = scmp.ne.s32.totalorder %s424, %s425
    %p434 = scmp.eq.s32.totalorder %s31, 0
    %p435 = por %p433, %p434
    %p436 = scmp.ne.s32.totalorder %s424, %s425
    %p437 = scmp.eq.s32.totalorder %s32, 1
    %p438 = por %p436, %p437
    %p440 = scmp.ne.s32.totalorder %s425, %s439
    %p441 = scmp.eq.s32.totalorder %s32, 0
    %p442 = por %p440, %p441
    %s444 = sadd.s32 %s443, 1
    %p447 = scmp.eq.s32.totalorder %s26, 1
    %p448 = scmp.ne.s32.totalorder %s443, %s445
    %p449 = scmp.eq.s32.totalorder %s26, 0
    %p450 = por %p448, %p449
    %p451 = scmp.ne.s32.totalorder %s443, %s445
    %p452 = scmp.eq.s32.totalorder %s31, 1
    %p453 = por %p451, %p452
    %p454 = scmp.ne.s32.totalorder %s445, %s446
    %p455 = scmp.eq.s32.totalorder %s31, 0
    %p456 = por %p454, %p455
    %p457 = scmp.ne.s32.totalorder %s445, %s446
    %p458 = scmp.eq.s32.totalorder %s32, 1
    %p459 = por %p457, %p458
    %p461 = scmp.ne.s32.totalorder %s446, %s460
    %p462 = scmp.eq.s32.totalorder %s32, 0
    %p463 = por %p461, %p462
    %s464 = ssub.s32 %s26, %s33
    %p465 = scmp.eq.s32.totalorder %s464, 0
    %s467 = sadd.s32 %s466, 1
    %s468 = scalar_select %p465, %s466, %s467
    %p471 = pneg %p465
    %p472 = scmp.eq.s32.totalorder %s26, 1
    %p473 = por %p471, %p472
    %p474 = scmp.ne.s32.totalorder %s466, %s469
    %p475 = scmp.eq.s32.totalorder %s26, 0
    %p476 = por %p474, %p475
    %p477 = scmp.ne.s32.totalorder %s466, %s469
    %p478 = scmp.eq.s32.totalorder %s31, 1
    %p479 = por %p477, %p478
    %p480 = scmp.ne.s32.totalorder %s469, %s470
    %p481 = scmp.eq.s32.totalorder %s31, 0
    %p482 = por %p480, %p481
    %p483 = scmp.ne.s32.totalorder %s469, %s470
    %p484 = scmp.eq.s32.totalorder %s32, 1
    %p485 = por %p483, %p484
    %p487 = scmp.ne.s32.totalorder %s470, %s486
    %p488 = scmp.eq.s32.totalorder %s32, 0
    %p489 = por %p487, %p488
    %p490 = scmp.le.s32.totalorder 1, %s26
    %p491 = scmp.lt.s32.totalorder %s26, 3
    %p492 = pnand %p490, %p491
    %p493 = pneg %p492
    // Predicated region
    $region9: #{graph_captioning_forward.5} parent=5 // pred_check
      _
    $region10: #{graph_captioning_forward.5} parent=5 // pred_check_branch
      %495 = sbr.rel (%p492) target = $region12
    $region11: #{graph_captioning_forward.5} parent=5 // pred_region
      %s496 = ssub.s32 %s26, 1
      // Predicated region
      $region13: #{graph_captioning_forward.5} parent=11 // pred_check
        %p497 = pneg %p99
      $region14: #{graph_captioning_forward.5} parent=11 // pred_check_branch
        %499 = sbr.rel (%p497) target = $region16
      $region15: #{graph_captioning_forward.5} parent=11 // pred_region
        _
      $region16: #{graph_captioning_forward.5} parent=11 // pred_fallthru
        _
      // Predicated region
      $region17: #{graph_captioning_forward.5} parent=11 // pred_check
        %p500 = pneg %p120
      $region18: #{graph_captioning_forward.5} parent=11 // pred_check_branch
        %502 = sbr.rel (%p500) target = $region20
      $region19: #{graph_captioning_forward.5} parent=11 // pred_region
        _
      $region20: #{graph_captioning_forward.5} parent=11 // pred_fallthru
        _
      // Predicated region
      $region21: #{graph_captioning_forward.5} parent=11 // pred_check
        %p503 = pneg %p141
      $region22: #{graph_captioning_forward.5} parent=11 // pred_check_branch
        %505 = sbr.rel (%p503) target = $region24
      $region23: #{graph_captioning_forward.5} parent=11 // pred_region
        _
      $region24: #{graph_captioning_forward.5} parent=11 // pred_fallthru
        _
      // Predicated region
      $region25: #{graph_captioning_forward.5} parent=11 // pred_check
        %p506 = pneg %p162
      $region26: #{graph_captioning_forward.5} parent=11 // pred_check_branch
        %508 = sbr.rel (%p506) target = $region28
      $region27: #{graph_captioning_forward.5} parent=11 // pred_region
        _
      $region28: #{graph_captioning_forward.5} parent=11 // pred_fallthru
        _
      // Predicated region
      $region29: #{graph_captioning_forward.5} parent=11 // pred_check
        %p509 = pneg %p183
      $region30: #{graph_captioning_forward.5} parent=11 // pred_check_branch
        %511 = sbr.rel (%p509) target = $region32
      $region31: #{graph_captioning_forward.5} parent=11 // pred_region
        _
      $region32: #{graph_captioning_forward.5} parent=11 // pred_fallthru
        _
      // Predicated region
      $region33: #{graph_captioning_forward.5} parent=11 // pred_check
        %p512 = pneg %p204
      $region34: #{graph_captioning_forward.5} parent=11 // pred_check_branch
        %514 = sbr.rel (%p512) target = $region36
      $region35: #{graph_captioning_forward.5} parent=11 // pred_region
        _
      $region36: #{graph_captioning_forward.5} parent=11 // pred_fallthru
        _
      // Predicated region
      $region37: #{graph_captioning_forward.5} parent=11 // pred_check
        %p515 = pneg %p225
      $region38: #{graph_captioning_forward.5} parent=11 // pred_check_branch
        %517 = sbr.rel (%p515) target = $region40
      $region39: #{graph_captioning_forward.5} parent=11 // pred_region
        _
      $region40: #{graph_captioning_forward.5} parent=11 // pred_fallthru
        _
      // Predicated region
      $region41: #{graph_captioning_forward.5} parent=11 // pred_check
        %p518 = pneg %p246
      $region42: #{graph_captioning_forward.5} parent=11 // pred_check_branch
        %520 = sbr.rel (%p518) target = $region44
      $region43: #{graph_captioning_forward.5} parent=11 // pred_region
        _
      $region44: #{graph_captioning_forward.5} parent=11 // pred_fallthru
        _
      // Predicated region
      $region45: #{graph_captioning_forward.5} parent=11 // pred_check
        %p521 = pneg %p267
      $region46: #{graph_captioning_forward.5} parent=11 // pred_check_branch
        %523 = sbr.rel (%p521) target = $region48
      $region47: #{graph_captioning_forward.5} parent=11 // pred_region
        _
      $region48: #{graph_captioning_forward.5} parent=11 // pred_fallthru
        _
      // Predicated region
      $region49: #{graph_captioning_forward.5} parent=11 // pred_check
        %p524 = pneg %p288
      $region50: #{graph_captioning_forward.5} parent=11 // pred_check_branch
        %526 = sbr.rel (%p524) target = $region52
      $region51: #{graph_captioning_forward.5} parent=11 // pred_region
        _
      $region52: #{graph_captioning_forward.5} parent=11 // pred_fallthru
        _
      // Predicated region
      $region53: #{graph_captioning_forward.5} parent=11 // pred_check
        %p527 = pneg %p309
      $region54: #{graph_captioning_forward.5} parent=11 // pred_check_branch
        %529 = sbr.rel (%p527) target = $region56
      $region55: #{graph_captioning_forward.5} parent=11 // pred_region
        _
      $region56: #{graph_captioning_forward.5} parent=11 // pred_fallthru
        _
      // Predicated region
      $region57: #{graph_captioning_forward.5} parent=11 // pred_check
        %p530 = pneg %p330
      $region58: #{graph_captioning_forward.5} parent=11 // pred_check_branch
        %532 = sbr.rel (%p530) target = $region60
      $region59: #{graph_captioning_forward.5} parent=11 // pred_region
        _
      $region60: #{graph_captioning_forward.5} parent=11 // pred_fallthru
        _
      // Predicated region
      $region61: #{graph_captioning_forward.5} parent=11 // pred_check
        %p533 = pneg %p351
      $region62: #{graph_captioning_forward.5} parent=11 // pred_check_branch
        %535 = sbr.rel (%p533) target = $region64
      $region63: #{graph_captioning_forward.5} parent=11 // pred_region
        _
      $region64: #{graph_captioning_forward.5} parent=11 // pred_fallthru
        _
      // Predicated region
      $region65: #{graph_captioning_forward.5} parent=11 // pred_check
        %p536 = pneg %p372
      $region66: #{graph_captioning_forward.5} parent=11 // pred_check_branch
        %538 = sbr.rel (%p536) target = $region68
      $region67: #{graph_captioning_forward.5} parent=11 // pred_region
        _
      $region68: #{graph_captioning_forward.5} parent=11 // pred_fallthru
        _
      // Predicated region
      $region69: #{graph_captioning_forward.5} parent=11 // pred_check
        %p539 = pneg %p393
      $region70: #{graph_captioning_forward.5} parent=11 // pred_check_branch
        %541 = sbr.rel (%p539) target = $region72
      $region71: #{graph_captioning_forward.5} parent=11 // pred_region
        _
      $region72: #{graph_captioning_forward.5} parent=11 // pred_fallthru
        _
      // Predicated region
      $region73: #{graph_captioning_forward.5} parent=11 // pred_check
        %p542 = pneg %p414
      $region74: #{graph_captioning_forward.5} parent=11 // pred_check_branch
        %544 = sbr.rel (%p542) target = $region76
      $region75: #{graph_captioning_forward.5} parent=11 // pred_region
        _
      $region76: #{graph_captioning_forward.5} parent=11 // pred_fallthru
        _
      // Predicated region
      $region77: #{graph_captioning_forward.5} parent=11 // pred_check
        %p545 = pneg %p435
      $region78: #{graph_captioning_forward.5} parent=11 // pred_check_branch
        %547 = sbr.rel (%p545) target = $region80
      $region79: #{graph_captioning_forward.5} parent=11 // pred_region
        _
      $region80: #{graph_captioning_forward.5} parent=11 // pred_fallthru
        _
      // Predicated region
      $region81: #{graph_captioning_forward.5} parent=11 // pred_check
        %p548 = pneg %p456
      $region82: #{graph_captioning_forward.5} parent=11 // pred_check_branch
        %550 = sbr.rel (%p548) target = $region84
      $region83: #{graph_captioning_forward.5} parent=11 // pred_region
        _
      $region84: #{graph_captioning_forward.5} parent=11 // pred_fallthru
        _
    $region12: #{graph_captioning_forward.5} parent=5 // pred_fallthru
      _
    %p551 = scmp.lt.s32.totalorder %s26, 2
    // Predicated region
    $region85: #{graph_captioning_forward.5} parent=5 // pred_check
      %p552 = pneg %p551
    $region86: #{graph_captioning_forward.5} parent=5 // pred_check_branch
      %554 = sbr.rel (%p552) target = $region88
    $region87: #{graph_captioning_forward.5} parent=5 // pred_region
      // Predicated region
      $region89: #{graph_captioning_forward.5} parent=87 // pred_check
        %p555 = pneg %p46
      $region90: #{graph_captioning_forward.5} parent=87 // pred_check_branch
        %557 = sbr.rel (%p555) target = $region92
      $region91: #{graph_captioning_forward.5} parent=87 // pred_region
        %p558 = scmp.lt.s32.totalorder %s26, 1
        %s559 = scalar_select %p558, %s26, 1
        %s560 = smul.addr %s559, 8
        %s561 = scalar_lea.vmem %s0, %s560
      $region92: #{graph_captioning_forward.5} parent=87 // pred_fallthru
        _
      // Predicated region
      $region93: #{graph_captioning_forward.5} parent=87 // pred_check
        %p562 = pneg %p72
      $region94: #{graph_captioning_forward.5} parent=87 // pred_check_branch
        %564 = sbr.rel (%p562) target = $region96
      $region95: #{graph_captioning_forward.5} parent=87 // pred_region
        %p565 = scmp.lt.s32.totalorder %s26, 1
        %s566 = scalar_select %p565, %s26, 1
        %s567 = scalar_lea.vmem %s1, %s566
      $region96: #{graph_captioning_forward.5} parent=87 // pred_fallthru
        _
    $region88: #{graph_captioning_forward.5} parent=5 // pred_fallthru
      _
    %p568 = scmp.le.s32.totalorder 1, %s26
    %p569 = scmp.lt.s32.totalorder %s26, 3
    %p570 = pnand %p568, %p569
    %p571 = pneg %p570
    // Predicated region
    $region97: #{graph_captioning_forward.5} parent=5 // pred_check
      _
    $region98: #{graph_captioning_forward.5} parent=5 // pred_check_branch
      %573 = sbr.rel (%p570) target = $region100
    $region99: #{graph_captioning_forward.5} parent=5 // pred_region
      %s574 = ssub.s32 %s26, 1
      %p575 = scmp.lt.s32.totalorder %s31, 1
      %s576 = scalar_select %p575, %s31, 1
      %s577 = smul.addr %s576, 8
      %s578 = scalar_lea.vmem %s0, %s577
      %p579 = pneg %p52
      %p580 = pneg %p49
      %p581 = scmp.lt.s32.totalorder %s31, 1
      %s582 = scalar_select %p581, %s31, 1
      %s583 = scalar_lea.vmem %s1, %s582
      %p584 = pneg %p78
      %p585 = pneg %p75
      %p586 = pneg %p99
      %p587 = pneg %p96
      %p588 = pneg %p120
      %p589 = pneg %p117
      %p590 = pneg %p141
      %p591 = pneg %p138
      %p592 = pneg %p162
      %p593 = pneg %p159
      %p594 = pneg %p183
      %p595 = pneg %p180
      %p596 = pneg %p204
      %p597 = pneg %p201
      %p598 = pneg %p225
      %p599 = pneg %p222
      %p600 = pneg %p246
      %p601 = pneg %p243
      %p602 = pneg %p267
      %p603 = pneg %p264
      %p604 = pneg %p288
      %p605 = pneg %p285
      %p606 = pneg %p309
      %p607 = pneg %p306
      %p608 = pneg %p330
      %p609 = pneg %p327
      %p610 = pneg %p351
      %p611 = pneg %p348
      %p612 = pneg %p372
      %p613 = pneg %p369
      %p614 = pneg %p393
      %p615 = pneg %p390
      %p616 = pneg %p414
      %p617 = pneg %p411
      %p618 = pneg %p435
      %p619 = pneg %p432
      %p620 = pneg %p456
      %p621 = pneg %p453
      %p622 = pneg %p482
      %p623 = pneg %p479
      %p624 = scmp.lt.s32.totalorder %s31, 1
      %s625 = scalar_select %p624, %s31, 1
      %s626 = smul.addr %s625, 8
      %s627 = scalar_lea.vmem %s20, %s626
      %p628 = scmp.lt.s32.totalorder %s31, 1
      %s629 = scalar_select %p628, %s31, 1
      %s630 = smul.addr %s629, 8
      %s631 = scalar_lea.vmem %s0, %s630
      %p632 = scmp.lt.s32.totalorder %s31, 1
      %s633 = scalar_select %p632, %s31, 1
      %s634 = scalar_lea.vmem %s1, %s633
      %p635 = scmp.lt.s32.totalorder %s31, 1
      %s636 = scalar_select %p635, %s31, 1
      %s637 = smul.addr %s636, 8
      %s638 = scalar_lea.vmem %s20, %s637
      %v640 = vld [vmem:[%s631] sm:$0xff]
      %v641 = vld [vmem:[%s634] sm:$0x1]
      %v642 = vld [vmem:[%s2] sm:$0xf]
      %v643 = vld [vmem:[%s2 + $0x4] sm:$0xf]
      %v644 = vld [vmem:[%s2 + $0x8] sm:$0xf]
      %v645 = vld [vmem:[%s2 + $0xc] sm:$0xf]
      %v646 = vld [vmem:[%s2 + $0x10] sm:$0xf]
      %v647 = vld [vmem:[%s2 + $0x14] sm:$0xf]
      %v648 = vld [vmem:[%s2 + $0x18] sm:$0xf]
      %v649 = vld [vmem:[%s2 + $0x1c] sm:$0xf]
      %v650 = vld [vmem:[%s2 + $0x20] sm:$0xf]
      %v651 = vld [vmem:[%s2 + $0x24] sm:$0xf]
      %v652 = vld [vmem:[%s2 + $0x28] sm:$0xf]
      %v653 = vld [vmem:[%s2 + $0x2c] sm:$0xf]
      %v654 = vld [vmem:[%s2 + $0x30] sm:$0xf]
      %v655 = vld [vmem:[%s2 + $0x34] sm:$0xf]
      %v656 = vld [vmem:[%s2 + $0x38] sm:$0xf]
      %v657 = vld [vmem:[%s2 + $0x3c] sm:$0xf]
      %v658 = vld [vmem:[%s2 + $0x40] sm:$0xf]
      %v659 = vld [vmem:[%s2 + $0x44] sm:$0xf]
      %v660 = vld [vmem:[%s2 + $0x48] sm:$0xf]
      %v661 = vld [vmem:[%s2 + $0x4c] sm:$0xf]
      %v662 = vld [vmem:[%s2 + $0x50] sm:$0xf]
      %v663 = vld [vmem:[%s2 + $0x54] sm:$0xf]
      %v664 = vld [vmem:[%s2 + $0x58] sm:$0xf]
      %v665 = vld [vmem:[%s2 + $0x5c] sm:$0xf]
      %v666 = vld [vmem:[%s2 + $0x60] sm:$0xf]
      %v667 = vld [vmem:[%s2 + $0x64] sm:$0xf]
      %v668 = vld [vmem:[%s2 + $0x68] sm:$0xf]
      %v669 = vld [vmem:[%s2 + $0x6c] sm:$0xf]
      %v670 = vld [vmem:[%s2 + $0x70] sm:$0xf]
      %v671 = vld [vmem:[%s2 + $0x74] sm:$0xf]
      %v672 = vld [vmem:[%s2 + $0x78] sm:$0xf]
      %v673 = vld [vmem:[%s2 + $0x7c] sm:$0xf]
      %v674 = vld [vmem:[%s3] sm:$0x1]
      %v675 = vld [vmem:[%s3 + $0x1] sm:$0x1]
      %v676 = vld [vmem:[%s3 + $0x2] sm:$0x1]
      %v677 = vld [vmem:[%s3 + $0x3] sm:$0x1]
      %v678 = vld [vmem:[%s3 + $0x4] sm:$0x1]
      %v679 = vld [vmem:[%s3 + $0x5] sm:$0x1]
      %v680 = vld [vmem:[%s3 + $0x6] sm:$0x1]
      %v681 = vld [vmem:[%s3 + $0x7] sm:$0x1]
      %v682 = vld [vmem:[%s4] sm:$0x3]
      %v683 = vld [vmem:[%s4 + $0x2] sm:$0x3]
      %v684 = vld [vmem:[%s4 + $0x4] sm:$0x3]
      %v685 = vld [vmem:[%s4 + $0x6] sm:$0x3]
      %v686 = vld [vmem:[%s4 + $0x8] sm:$0x3]
      %v687 = vld [vmem:[%s4 + $0xa] sm:$0x3]
      %v688 = vld [vmem:[%s4 + $0xc] sm:$0x3]
      %v689 = vld [vmem:[%s4 + $0xe] sm:$0x3]
      %v690 = vld [vmem:[%s5] sm:$0x1]
      %v691 = vpack.c.bf16 %v640, %v640
      %v700 = vlaneseq
      %v701 = vshrl.u32 %v700, 7
      %v702 = vsub.s32 0, %v701
      %v703 = vrot.slane %v674, %v702
      %v704 = vlaneseq
      %v705 = vshrl.u32 %v704, 7
      %v706 = vsub.s32 0, %v705
      %v707 = vrot.slane %v675, %v706
      %v708 = vlaneseq
      %v709 = vshrl.u32 %v708, 7
      %v710 = vsub.s32 0, %v709
      %v711 = vrot.slane %v676, %v710
      %v712 = vlaneseq
      %v713 = vshrl.u32 %v712, 7
      %v714 = vsub.s32 0, %v713
      %v715 = vrot.slane %v677, %v714
      %v716 = vlaneseq
      %v717 = vshrl.u32 %v716, 7
      %v718 = vsub.s32 0, %v717
      %v719 = vrot.slane %v678, %v718
      %v720 = vlaneseq
      %v721 = vshrl.u32 %v720, 7
      %v722 = vsub.s32 0, %v721
      %v723 = vrot.slane %v679, %v722
      %v724 = vlaneseq
      %v725 = vshrl.u32 %v724, 7
      %v726 = vsub.s32 0, %v725
      %v727 = vrot.slane %v680, %v726
      %v728 = vlaneseq
      %v729 = vshrl.u32 %v728, 7
      %v730 = vsub.s32 0, %v729
      %v731 = vrot.slane %v681, %v730
      %v744 = vunpack.c.l.b16 %v642
      %v745 = vunpack.c.l.b16 %v643
      %v746 = vunpack.c.l.b16 %v644
      %v747 = vunpack.c.l.b16 %v645
      %v748 = vpack.c.b16 %v745, %v744
      %v749 = vpack.c.b16 %v747, %v746
      %vm752 = vcmask 261120
      %v754 = vsel %vm752, %v691, 0
      %756 = vmatprep.subr.bf16.mxu0 0
      %757 = vmatpush1.bf16.msra.mxu0 %v748
      %758 = vmatprep.subr.bf16.mxu0 0
      %759 = vmatpush1.bf16.msra.mxu0 %v749
      %760 = vmatprep.subr.bf16.mxu0 0
      %761 = vmatpush1.bf16.msra.mxu0 0
      %762 = vmatprep.subr.bf16.mxu0 0
      %763 = vmatpush1.bf16.msra.mxu0 0
      %764 = vmatprep.subr.bf16.mxu0 0
      %765 = vmatpush1.bf16.msra.mxu0 0
      %766 = vmatprep.subr.bf16.mxu0 0
      %767 = vmatpush1.bf16.msra.mxu0 0
      %768 = vmatprep.subr.bf16.mxu0 0
      %769 = vmatpush1.bf16.msra.mxu0 0
      %770 = vmatprep.subr.bf16.mxu0 0
      %771 = vmatpush1.bf16.msra.mxu0 0
      %772 = vmatprep.subr.bf16.mxu0 0
      %773 = vmatpush1.bf16.msra.mxu0 0
      %774 = vmatprep.subr.bf16.mxu0 0
      %775 = vmatpush1.bf16.msra.mxu0 0
      %776 = vmatprep.subr.bf16.mxu0 0
      %777 = vmatpush1.bf16.msra.mxu0 0
      %778 = vmatprep.subr.bf16.mxu0 0
      %779 = vmatpush1.bf16.msra.mxu0 0
      %780 = vmatprep.subr.bf16.mxu0 0
      %781 = vmatpush1.bf16.msra.mxu0 0
      %782 = vmatprep.subr.bf16.mxu0 0
      %783 = vmatpush1.bf16.msra.mxu0 0
      %784 = vmatprep.subr.bf16.mxu0 0
      %785 = vmatpush1.bf16.msra.mxu0 0
      %786 = vmatprep.subr.bf16.mxu0 0
      %787 = vmatpush1.bf16.msra.mxu0 0
      %788 = vmatprep.mubr.bf16.mxu0 0
      %789 = vmatmul.mubr.bf16.gmra.mrb[0].mxu0 %v754
      %v790 = vpop.f32.mrb[0].mxu0
      %v791 = vadd.f32 %v703, %v790
      %v792 = vpop.f32.mrb[0].mxu0
      %v793 = vpop.f32.mrb[0].mxu0
      %v794 = vpop.f32.mrb[0].mxu0
      %795 = vdwg.mxu0
      %v800 = vunpack.c.l.b16 %v646
      %v801 = vunpack.c.l.b16 %v647
      %v802 = vunpack.c.l.b16 %v648
      %v803 = vunpack.c.l.b16 %v649
      %v804 = vpack.c.b16 %v801, %v800
      %v805 = vpack.c.b16 %v803, %v802
      %808 = vmatprep.subr.bf16.mxu0 0
      %809 = vmatpush1.bf16.msra.mxu0 %v804
      %810 = vmatprep.subr.bf16.mxu0 0
      %811 = vmatpush1.bf16.msra.mxu0 %v805
      %812 = vmatprep.subr.bf16.mxu0 0
      %813 = vmatpush1.bf16.msra.mxu0 0
      %814 = vmatprep.subr.bf16.mxu0 0
      %815 = vmatpush1.bf16.msra.mxu0 0
      %816 = vmatprep.subr.bf16.mxu0 0
      %817 = vmatpush1.bf16.msra.mxu0 0
      %818 = vmatprep.subr.bf16.mxu0 0
      %819 = vmatpush1.bf16.msra.mxu0 0
      %820 = vmatprep.subr.bf16.mxu0 0
      %821 = vmatpush1.bf16.msra.mxu0 0
      %822 = vmatprep.subr.bf16.mxu0 0
      %823 = vmatpush1.bf16.msra.mxu0 0
      %824 = vmatprep.subr.bf16.mxu0 0
      %825 = vmatpush1.bf16.msra.mxu0 0
      %826 = vmatprep.subr.bf16.mxu0 0
      %827 = vmatpush1.bf16.msra.mxu0 0
      %828 = vmatprep.subr.bf16.mxu0 0
      %829 = vmatpush1.bf16.msra.mxu0 0
      %830 = vmatprep.subr.bf16.mxu0 0
      %831 = vmatpush1.bf16.msra.mxu0 0
      %832 = vmatprep.subr.bf16.mxu0 0
      %833 = vmatpush1.bf16.msra.mxu0 0
      %834 = vmatprep.subr.bf16.mxu0 0
      %835 = vmatpush1.bf16.msra.mxu0 0
      %836 = vmatprep.subr.bf16.mxu0 0
      %837 = vmatpush1.bf16.msra.mxu0 0
      %838 = vmatprep.subr.bf16.mxu0 0
      %839 = vmatpush1.bf16.msra.mxu0 0
      %840 = vmatprep.mubr.bf16.mxu0 0
      %841 = vmatmul.mubr.bf16.gmra.mrb[0].mxu0 %v754
      %v842 = vpop.f32.mrb[0].mxu0
      %v843 = vadd.f32 %v707, %v842
      %v844 = vpop.f32.mrb[0].mxu0
      %v845 = vpop.f32.mrb[0].mxu0
      %v846 = vpop.f32.mrb[0].mxu0
      %847 = vdwg.mxu0
      %v852 = vunpack.c.l.b16 %v650
      %v853 = vunpack.c.l.b16 %v651
      %v854 = vunpack.c.l.b16 %v652
      %v855 = vunpack.c.l.b16 %v653
      %v856 = vpack.c.b16 %v853, %v852
      %v857 = vpack.c.b16 %v855, %v854
      %860 = vmatprep.subr.bf16.mxu0 0
      %861 = vmatpush1.bf16.msra.mxu0 %v856
      %862 = vmatprep.subr.bf16.mxu0 0
      %863 = vmatpush1.bf16.msra.mxu0 %v857
      %864 = vmatprep.subr.bf16.mxu0 0
      %865 = vmatpush1.bf16.msra.mxu0 0
      %866 = vmatprep.subr.bf16.mxu0 0
      %867 = vmatpush1.bf16.msra.mxu0 0
      %868 = vmatprep.subr.bf16.mxu0 0
      %869 = vmatpush1.bf16.msra.mxu0 0
      %870 = vmatprep.subr.bf16.mxu0 0
      %871 = vmatpush1.bf16.msra.mxu0 0
      %872 = vmatprep.subr.bf16.mxu0 0
      %873 = vmatpush1.bf16.msra.mxu0 0
      %874 = vmatprep.subr.bf16.mxu0 0
      %875 = vmatpush1.bf16.msra.mxu0 0
      %876 = vmatprep.subr.bf16.mxu0 0
      %877 = vmatpush1.bf16.msra.mxu0 0
      %878 = vmatprep.subr.bf16.mxu0 0
      %879 = vmatpush1.bf16.msra.mxu0 0
      %880 = vmatprep.subr.bf16.mxu0 0
      %881 = vmatpush1.bf16.msra.mxu0 0
      %882 = vmatprep.subr.bf16.mxu0 0
      %883 = vmatpush1.bf16.msra.mxu0 0
      %884 = vmatprep.subr.bf16.mxu0 0
      %885 = vmatpush1.bf16.msra.mxu0 0
      %886 = vmatprep.subr.bf16.mxu0 0
      %887 = vmatpush1.bf16.msra.mxu0 0
      %888 = vmatprep.subr.bf16.mxu0 0
      %889 = vmatpush1.bf16.msra.mxu0 0
      %890 = vmatprep.subr.bf16.mxu0 0
      %891 = vmatpush1.bf16.msra.mxu0 0
      %892 = vmatprep.mubr.bf16.mxu0 0
      %893 = vmatmul.mubr.bf16.gmra.mrb[0].mxu0 %v754
      %v894 = vpop.f32.mrb[0].mxu0
      %v895 = vadd.f32 %v711, %v894
      %v896 = vpop.f32.mrb[0].mxu0
      %v897 = vpop.f32.mrb[0].mxu0
      %v898 = vpop.f32.mrb[0].mxu0
      %899 = vdwg.mxu0
      %v904 = vunpack.c.l.b16 %v654
      %v905 = vunpack.c.l.b16 %v655
      %v906 = vunpack.c.l.b16 %v656
      %v907 = vunpack.c.l.b16 %v657
      %v908 = vpack.c.b16 %v905, %v904
      %v909 = vpack.c.b16 %v907, %v906
      %912 = vmatprep.subr.bf16.mxu0 0
      %913 = vmatpush1.bf16.msra.mxu0 %v908
      %914 = vmatprep.subr.bf16.mxu0 0
      %915 = vmatpush1.bf16.msra.mxu0 %v909
      %916 = vmatprep.subr.bf16.mxu0 0
      %917 = vmatpush1.bf16.msra.mxu0 0
      %918 = vmatprep.subr.bf16.mxu0 0
      %919 = vmatpush1.bf16.msra.mxu0 0
      %920 = vmatprep.subr.bf16.mxu0 0
      %921 = vmatpush1.bf16.msra.mxu0 0
      %922 = vmatprep.subr.bf16.mxu0 0
      %923 = vmatpush1.bf16.msra.mxu0 0
      %924 = vmatprep.subr.bf16.mxu0 0
      %925 = vmatpush1.bf16.msra.mxu0 0
      %926 = vmatprep.subr.bf16.mxu0 0
      %927 = vmatpush1.bf16.msra.mxu0 0
      %928 = vmatprep.subr.bf16.mxu0 0
      %929 = vmatpush1.bf16.msra.mxu0 0
      %930 = vmatprep.subr.bf16.mxu0 0
      %931 = vmatpush1.bf16.msra.mxu0 0
      %932 = vmatprep.subr.bf16.mxu0 0
      %933 = vmatpush1.bf16.msra.mxu0 0
      %934 = vmatprep.subr.bf16.mxu0 0
      %935 = vmatpush1.bf16.msra.mxu0 0
      %936 = vmatprep.subr.bf16.mxu0 0
      %937 = vmatpush1.bf16.msra.mxu0 0
      %938 = vmatprep.subr.bf16.mxu0 0
      %939 = vmatpush1.bf16.msra.mxu0 0
      %940 = vmatprep.subr.bf16.mxu0 0
      %941 = vmatpush1.bf16.msra.mxu0 0
      %942 = vmatprep.subr.bf16.mxu0 0
      %943 = vmatpush1.bf16.msra.mxu0 0
      %944 = vmatprep.mubr.bf16.mxu0 0
      %945 = vmatmul.mubr.bf16.gmra.mrb[0].mxu0 %v754
      %v946 = vpop.f32.mrb[0].mxu0
      %v947 = vadd.f32 %v715, %v946
      %v948 = vpop.f32.mrb[0].mxu0
      %v949 = vpop.f32.mrb[0].mxu0
      %v950 = vpop.f32.mrb[0].mxu0
      %951 = vdwg.mxu0
      %v956 = vunpack.c.l.b16 %v658
      %v957 = vunpack.c.l.b16 %v659
      %v958 = vunpack.c.l.b16 %v660
      %v959 = vunpack.c.l.b16 %v661
      %v960 = vpack.c.b16 %v957, %v956
      %v961 = vpack.c.b16 %v959, %v958
      %964 = vmatprep.subr.bf16.mxu0 0
      %965 = vmatpush1.bf16.msra.mxu0 %v960
      %966 = vmatprep.subr.bf16.mxu0 0
      %967 = vmatpush1.bf16.msra.mxu0 %v961
      %968 = vmatprep.subr.bf16.mxu0 0
      %969 = vmatpush1.bf16.msra.mxu0 0
      %970 = vmatprep.subr.bf16.mxu0 0
      %971 = vmatpush1.bf16.msra.mxu0 0
      %972 = vmatprep.subr.bf16.mxu0 0
      %973 = vmatpush1.bf16.msra.mxu0 0
      %974 = vmatprep.subr.bf16.mxu0 0
      %975 = vmatpush1.bf16.msra.mxu0 0
      %976 = vmatprep.subr.bf16.mxu0 0
      %977 = vmatpush1.bf16.msra.mxu0 0
      %978 = vmatprep.subr.bf16.mxu0 0
      %979 = vmatpush1.bf16.msra.mxu0 0
      %980 = vmatprep.subr.bf16.mxu0 0
      %981 = vmatpush1.bf16.msra.mxu0 0
      %982 = vmatprep.subr.bf16.mxu0 0
      %983 = vmatpush1.bf16.msra.mxu0 0
      %984 = vmatprep.subr.bf16.mxu0 0
      %985 = vmatpush1.bf16.msra.mxu0 0
      %986 = vmatprep.subr.bf16.mxu0 0
      %987 = vmatpush1.bf16.msra.mxu0 0
      %988 = vmatprep.subr.bf16.mxu0 0
      %989 = vmatpush1.bf16.msra.mxu0 0
      %990 = vmatprep.subr.bf16.mxu0 0
      %991 = vmatpush1.bf16.msra.mxu0 0
      %992 = vmatprep.subr.bf16.mxu0 0
      %993 = vmatpush1.bf16.msra.mxu0 0
      %994 = vmatprep.subr.bf16.mxu0 0
      %995 = vmatpush1.bf16.msra.mxu0 0
      %996 = vmatprep.mubr.bf16.mxu0 0
      %997 = vmatmul.mubr.bf16.gmra.mrb[0].mxu0 %v754
      %v998 = vpop.f32.mrb[0].mxu0
      %v999 = vadd.f32 %v719, %v998
      %v1000 = vpop.f32.mrb[0].mxu0
      %v1001 = vpop.f32.mrb[0].mxu0
      %v1002 = vpop.f32.mrb[0].mxu0
      %1003 = vdwg.mxu0
      %v1008 = vunpack.c.l.b16 %v662
      %v1009 = vunpack.c.l.b16 %v663
      %v1010 = vunpack.c.l.b16 %v664
      %v1011 = vunpack.c.l.b16 %v665
      %v1012 = vpack.c.b16 %v1009, %v1008
      %v1013 = vpack.c.b16 %v1011, %v1010
      %1016 = vmatprep.subr.bf16.mxu0 0
      %1017 = vmatpush1.bf16.msra.mxu0 %v1012
      %1018 = vmatprep.subr.bf16.mxu0 0
      %1019 = vmatpush1.bf16.msra.mxu0 %v1013
      %1020 = vmatprep.subr.bf16.mxu0 0
      %1021 = vmatpush1.bf16.msra.mxu0 0
      %1022 = vmatprep.subr.bf16.mxu0 0
      %1023 = vmatpush1.bf16.msra.mxu0 0
      %1024 = vmatprep.subr.bf16.mxu0 0
      %1025 = vmatpush1.bf16.msra.mxu0 0
      %1026 = vmatprep.subr.bf16.mxu0 0
      %1027 = vmatpush1.bf16.msra.mxu0 0
      %1028 = vmatprep.subr.bf16.mxu0 0
      %1029 = vmatpush1.bf16.msra.mxu0 0
      %1030 = vmatprep.subr.bf16.mxu0 0
      %1031 = vmatpush1.bf16.msra.mxu0 0
      %1032 = vmatprep.subr.bf16.mxu0 0
      %1033 = vmatpush1.bf16.msra.mxu0 0
      %1034 = vmatprep.subr.bf16.mxu0 0
      %1035 = vmatpush1.bf16.msra.mxu0 0
      %1036 = vmatprep.subr.bf16.mxu0 0
      %1037 = vmatpush1.bf16.msra.mxu0 0
      %1038 = vmatprep.subr.bf16.mxu0 0
      %1039 = vmatpush1.bf16.msra.mxu0 0
      %1040 = vmatprep.subr.bf16.mxu0 0
      %1041 = vmatpush1.bf16.msra.mxu0 0
      %1042 = vmatprep.subr.bf16.mxu0 0
      %1043 = vmatpush1.bf16.msra.mxu0 0
      %1044 = vmatprep.subr.bf16.mxu0 0
      %1045 = vmatpush1.bf16.msra.mxu0 0
      %1046 = vmatprep.subr.bf16.mxu0 0
      %1047 = vmatpush1.bf16.msra.mxu0 0
      %1048 = vmatprep.mubr.bf16.mxu0 0
      %1049 = vmatmul.mubr.bf16.gmra.mrb[0].mxu0 %v754
      %v1050 = vpop.f32.mrb[0].mxu0
      %v1051 = vadd.f32 %v723, %v1050
      %v1052 = vpop.f32.mrb[0].mxu0
      %v1053 = vpop.f32.mrb[0].mxu0
      %v1054 = vpop.f32.mrb[0].mxu0
      %1055 = vdwg.mxu0
      %v1060 = vunpack.c.l.b16 %v666
      %v1061 = vunpack.c.l.b16 %v667
      %v1062 = vunpack.c.l.b16 %v668
      %v1063 = vunpack.c.l.b16 %v669
      %v1064 = vpack.c.b16 %v1061, %v1060
      %v1065 = vpack.c.b16 %v1063, %v1062
      %1068 = vmatprep.subr.bf16.mxu0 0
      %1069 = vmatpush1.bf16.msra.mxu0 %v1064
      %1070 = vmatprep.subr.bf16.mxu0 0
      %1071 = vmatpush1.bf16.msra.mxu0 %v1065
      %1072 = vmatprep.subr.bf16.mxu0 0
      %1073 = vmatpush1.bf16.msra.mxu0 0
      %1074 = vmatprep.subr.bf16.mxu0 0
      %1075 = vmatpush1.bf16.msra.mxu0 0
      %1076 = vmatprep.subr.bf16.mxu0 0
      %1077 = vmatpush1.bf16.msra.mxu0 0
      %1078 = vmatprep.subr.bf16.mxu0 0
      %1079 = vmatpush1.bf16.msra.mxu0 0
      %1080 = vmatprep.subr.bf16.mxu0 0
      %1081 = vmatpush1.bf16.msra.mxu0 0
      %1082 = vmatprep.subr.bf16.mxu0 0
      %1083 = vmatpush1.bf16.msra.mxu0 0
      %1084 = vmatprep.subr.bf16.mxu0 0
      %1085 = vmatpush1.bf16.msra.mxu0 0
      %1086 = vmatprep.subr.bf16.mxu0 0
      %1087 = vmatpush1.bf16.msra.mxu0 0
      %1088 = vmatprep.subr.bf16.mxu0 0
      %1089 = vmatpush1.bf16.msra.mxu0 0
      %1090 = vmatprep.subr.bf16.mxu0 0
      %1091 = vmatpush1.bf16.msra.mxu0 0
      %1092 = vmatprep.subr.bf16.mxu0 0
      %1093 = vmatpush1.bf16.msra.mxu0 0
      %1094 = vmatprep.subr.bf16.mxu0 0
      %1095 = vmatpush1.bf16.msra.mxu0 0
      %1096 = vmatprep.subr.bf16.mxu0 0
      %1097 = vmatpush1.bf16.msra.mxu0 0
      %1098 = vmatprep.subr.bf16.mxu0 0
      %1099 = vmatpush1.bf16.msra.mxu0 0
      %1100 = vmatprep.mubr.bf16.mxu0 0
      %1101 = vmatmul.mubr.bf16.gmra.mrb[0].mxu0 %v754
      %v1102 = vpop.f32.mrb[0].mxu0
      %v1103 = vadd.f32 %v727, %v1102
      %v1104 = vpop.f32.mrb[0].mxu0
      %v1105 = vpop.f32.mrb[0].mxu0
      %v1106 = vpop.f32.mrb[0].mxu0
      %1107 = vdwg.mxu0
      %v1112 = vunpack.c.l.b16 %v670
      %v1113 = vunpack.c.l.b16 %v671
      %v1114 = vunpack.c.l.b16 %v672
      %v1115 = vunpack.c.l.b16 %v673
      %v1116 = vpack.c.b16 %v1113, %v1112
      %v1117 = vpack.c.b16 %v1115, %v1114
      %1120 = vmatprep.subr.bf16.mxu0 0
      %1121 = vmatpush1.bf16.msra.mxu0 %v1116
      %1122 = vmatprep.subr.bf16.mxu0 0
      %1123 = vmatpush1.bf16.msra.mxu0 %v1117
      %1124 = vmatprep.subr.bf16.mxu0 0
      %1125 = vmatpush1.bf16.msra.mxu0 0
      %1126 = vmatprep.subr.bf16.mxu0 0
      %1127 = vmatpush1.bf16.msra.mxu0 0
      %1128 = vmatprep.subr.bf16.mxu0 0
      %1129 = vmatpush1.bf16.msra.mxu0 0
      %1130 = vmatprep.subr.bf16.mxu0 0
      %1131 = vmatpush1.bf16.msra.mxu0 0
      %1132 = vmatprep.subr.bf16.mxu0 0
      %1133 = vmatpush1.bf16.msra.mxu0 0
      %1134 = vmatprep.subr.bf16.mxu0 0
      %1135 = vmatpush1.bf16.msra.mxu0 0
      %1136 = vmatprep.subr.bf16.mxu0 0
      %1137 = vmatpush1.bf16.msra.mxu0 0
      %1138 = vmatprep.subr.bf16.mxu0 0
      %1139 = vmatpush1.bf16.msra.mxu0 0
      %1140 = vmatprep.subr.bf16.mxu0 0
      %1141 = vmatpush1.bf16.msra.mxu0 0
      %1142 = vmatprep.subr.bf16.mxu0 0
      %1143 = vmatpush1.bf16.msra.mxu0 0
      %1144 = vmatprep.subr.bf16.mxu0 0
      %1145 = vmatpush1.bf16.msra.mxu0 0
      %1146 = vmatprep.subr.bf16.mxu0 0
      %1147 = vmatpush1.bf16.msra.mxu0 0
      %1148 = vmatprep.subr.bf16.mxu0 0
      %1149 = vmatpush1.bf16.msra.mxu0 0
      %1150 = vmatprep.subr.bf16.mxu0 0
      %1151 = vmatpush1.bf16.msra.mxu0 0
      %1152 = vmatprep.mubr.bf16.mxu0 0
      %1153 = vmatmul.mubr.bf16.gmra.mrb[0].mxu0 %v754
      %v1154 = vpop.f32.mrb[0].mxu0
      %v1155 = vadd.f32 %v731, %v1154
      %v1156 = vpop.f32.mrb[0].mxu0
      %v1157 = vpop.f32.mrb[0].mxu0
      %v1158 = vpop.f32.mrb[0].mxu0
      %1159 = vdwg.mxu0
      %v1160 = vpack.c.bf16 %v791, %v791
      %v1161 = vpack.c.bf16 %v843, %v843
      %v1162 = vpack.c.bf16 %v895, %v895
      %v1163 = vpack.c.bf16 %v947, %v947
      %v1164 = vpack.c.bf16 %v999, %v999
      %v1165 = vpack.c.bf16 %v1051, %v1051
      %v1166 = vpack.c.bf16 %v1103, %v1103
      %v1167 = vpack.c.bf16 %v1155, %v1155
      %1169 = vrot.lane.b32.xlu0 %v1160, 124
      %v1170 = vpop.permute.xlu0 %1169
      %vm1171 = vcmask 31744
      %v1173 = vsel %vm1171, %v1160, 0
      %v1176 = vsel %vm1171, %v1170, 0
      %1178 = vmatprep.subr.bf16.mxu0 0
      %1179 = vmatpush1.bf16.xpose.msra.mxu0 %v1176
      %1180 = vmatprep.subr.bf16.mxu0 0
      %1181 = vmatpush1.bf16.xpose.msra.mxu0 0
      %1182 = vmatprep.subr.bf16.mxu0 0
      %1183 = vmatpush1.bf16.xpose.msra.mxu0 0
      %1184 = vmatprep.subr.bf16.mxu0 0
      %1185 = vmatpush1.bf16.xpose.msra.mxu0 0
      %1186 = vmatprep.subr.bf16.mxu0 0
      %1187 = vmatpush1.bf16.xpose.msra.mxu0 0
      %1188 = vmatprep.subr.bf16.mxu0 0
      %1189 = vmatpush1.bf16.xpose.msra.mxu0 0
      %1190 = vmatprep.subr.bf16.mxu0 0
      %1191 = vmatpush1.bf16.xpose.msra.mxu0 0
      %1192 = vmatprep.subr.bf16.mxu0 0
      %1193 = vmatpush1.bf16.xpose.msra.mxu0 0
      %1194 = vmatprep.subr.bf16.mxu0 0
      %1195 = vmatpush1.bf16.xpose.msra.mxu0 0
      %1196 = vmatprep.subr.bf16.mxu0 0
      %1197 = vmatpush1.bf16.xpose.msra.mxu0 0
      %1198 = vmatprep.subr.bf16.mxu0 0
      %1199 = vmatpush1.bf16.xpose.msra.mxu0 0
      %1200 = vmatprep.subr.bf16.mxu0 0
      %1201 = vmatpush1.bf16.xpose.msra.mxu0 0
      %1202 = vmatprep.subr.bf16.mxu0 0
      %1203 = vmatpush1.bf16.xpose.msra.mxu0 0
      %1204 = vmatprep.subr.bf16.mxu0 0
      %1205 = vmatpush1.bf16.xpose.msra.mxu0 0
      %1206 = vmatprep.subr.bf16.mxu0 0
      %1207 = vmatpush1.bf16.xpose.msra.mxu0 0
      %1208 = vmatprep.subr.bf16.mxu0 0
      %1209 = vmatpush1.bf16.xpose.msra.mxu0 0
      %1210 = vmatprep.mubr.bf16.mxu0 0
      %1211 = vmatmul.mubr.bf16.gmra.mrb[0].mxu0 %v1173
      %v1212 = vpop.f32.mrb[0].mxu0
      %v1213 = vadd.f32 0.0, %v1212
      %v1214 = vpop.f32.mrb[0].mxu0
      %v1215 = vpop.f32.mrb[0].mxu0
      %v1216 = vpop.f32.mrb[0].mxu0
      %1217 = vdwg.mxu0
      %1219 = vrot.lane.b32.xlu0 %v1161, 124
      %v1220 = vpop.permute.xlu0 %1219
      %v1222 = vsel %vm1171, %v1161, 0
      %v1225 = vsel %vm1171, %v1220, 0
      %1227 = vmatprep.subr.bf16.mxu0 0
      %1228 = vmatpush1.bf16.xpose.msra.mxu0 %v1225
      %1229 = vmatprep.subr.bf16.mxu0 0
      %1230 = vmatpush1.bf16.xpose.msra.mxu0 0
      %1231 = vmatprep.subr.bf16.mxu0 0
      %1232 = vmatpush1.bf16.xpose.msra.mxu0 0
      %1233 = vmatprep.subr.bf16.mxu0 0
      %1234 = vmatpush1.bf16.xpose.msra.mxu0 0
      %1235 = vmatprep.subr.bf16.mxu0 0
      %1236 = vmatpush1.bf16.xpose.msra.mxu0 0
      %1237 = vmatprep.subr.bf16.mxu0 0
      %1238 = vmatpush1.bf16.xpose.msra.mxu0 0
      %1239 = vmatprep.subr.bf16.mxu0 0
      %1240 = vmatpush1.bf16.xpose.msra.mxu0 0
      %1241 = vmatprep.subr.bf16.mxu0 0
      %1242 = vmatpush1.bf16.xpose.msra.mxu0 0
      %1243 = vmatprep.subr.bf16.mxu0 0
      %1244 = vmatpush1.bf16.xpose.msra.mxu0 0
      %1245 = vmatprep.subr.bf16.mxu0 0
      %1246 = vmatpush1.bf16.xpose.msra.mxu0 0
      %1247 = vmatprep.subr.bf16.mxu0 0
      %1248 = vmatpush1.bf16.xpose.msra.mxu0 0
      %1249 = vmatprep.subr.bf16.mxu0 0
      %1250 = vmatpush1.bf16.xpose.msra.mxu0 0
      %1251 = vmatprep.subr.bf16.mxu0 0
      %1252 = vmatpush1.bf16.xpose.msra.mxu0 0
      %1253 = vmatprep.subr.bf16.mxu0 0
      %1254 = vmatpush1.bf16.xpose.msra.mxu0 0
      %1255 = vmatprep.subr.bf16.mxu0 0
      %1256 = vmatpush1.bf16.xpose.msra.mxu0 0
      %1257 = vmatprep.subr.bf16.mxu0 0
      %1258 = vmatpush1.bf16.xpose.msra.mxu0 0
      %1259 = vmatprep.mubr.bf16.mxu0 0
      %1260 = vmatmul.mubr.bf16.gmra.mrb[0].mxu0 %v1222
      %v1261 = vpop.f32.mrb[0].mxu0
      %v1262 = vadd.f32 0.0, %v1261
      %v1263 = vpop.f32.mrb[0].mxu0
      %v1264 = vpop.f32.mrb[0].mxu0
      %v1265 = vpop.f32.mrb[0].mxu0
      %1266 = vdwg.mxu0
      %1268 = vrot.lane.b32.xlu0 %v1162, 124
      %v1269 = vpop.permute.xlu0 %1268
      %v1271 = vsel %vm1171, %v1162, 0
      %v1274 = vsel %vm1171, %v1269, 0
      %1276 = vmatprep.subr.bf16.mxu0 0
      %1277 = vmatpush1.bf16.xpose.msra.mxu0 %v1274
      %1278 = vmatprep.subr.bf16.mxu0 0
      %1279 = vmatpush1.bf16.xpose.msra.mxu0 0
      %1280 = vmatprep.subr.bf16.mxu0 0
      %1281 = vmatpush1.bf16.xpose.msra.mxu0 0
      %1282 = vmatprep.subr.bf16.mxu0 0
      %1283 = vmatpush1.bf16.xpose.msra.mxu0 0
      %1284 = vmatprep.subr.bf16.mxu0 0
      %1285 = vmatpush1.bf16.xpose.msra.mxu0 0
      %1286 = vmatprep.subr.bf16.mxu0 0
      %1287 = vmatpush1.bf16.xpose.msra.mxu0 0
      %1288 = vmatprep.subr.bf16.mxu0 0
      %1289 = vmatpush1.bf16.xpose.msra.mxu0 0
      %1290 = vmatprep.subr.bf16.mxu0 0
      %1291 = vmatpush1.bf16.xpose.msra.mxu0 0
      %1292 = vmatprep.subr.bf16.mxu0 0
      %1293 = vmatpush1.bf16.xpose.msra.mxu0 0
      %1294 = vmatprep.subr.bf16.mxu0 0
      %1295 = vmatpush1.bf16.xpose.msra.mxu0 0
      %1296 = vmatprep.subr.bf16.mxu0 0
      %1297 = vmatpush1.bf16.xpose.msra.mxu0 0
      %1298 = vmatprep.subr.bf16.mxu0 0
      %1299 = vmatpush1.bf16.xpose.msra.mxu0 0
      %1300 = vmatprep.subr.bf16.mxu0 0
      %1301 = vmatpush1.bf16.xpose.msra.mxu0 0
      %1302 = vmatprep.subr.bf16.mxu0 0
      %1303 = vmatpush1.bf16.xpose.msra.mxu0 0
      %1304 = vmatprep.subr.bf16.mxu0 0
      %1305 = vmatpush1.bf16.xpose.msra.mxu0 0
      %1306 = vmatprep.subr.bf16.mxu0 0
      %1307 = vmatpush1.bf16.xpose.msra.mxu0 0
      %1308 = vmatprep.mubr.bf16.mxu0 0
      %1309 = vmatmul.mubr.bf16.gmra.mrb[0].mxu0 %v1271
      %v1310 = vpop.f32.mrb[0].mxu0
      %v1311 = vadd.f32 0.0, %v1310
      %v1312 = vpop.f32.mrb[0].mxu0
      %v1313 = vpop.f32.mrb[0].mxu0
      %v1314 = vpop.f32.mrb[0].mxu0
      %1315 = vdwg.mxu0
      %1317 = vrot.lane.b32.xlu0 %v1163, 124
      %v1318 = vpop.permute.xlu0 %1317
      %v1320 = vsel %vm1171, %v1163, 0
      %v1323 = vsel %vm1171, %v1318, 0
      %1325 = vmatprep.subr.bf16.mxu0 0
      %1326 = vmatpush1.bf16.xpose.msra.mxu0 %v1323
      %1327 = vmatprep.subr.bf16.mxu0 0
      %1328 = vmatpush1.bf16.xpose.msra.mxu0 0
      %1329 = vmatprep.subr.bf16.mxu0 0
      %1330 = vmatpush1.bf16.xpose.msra.mxu0 0
      %1331 = vmatprep.subr.bf16.mxu0 0
      %1332 = vmatpush1.bf16.xpose.msra.mxu0 0
      %1333 = vmatprep.subr.bf16.mxu0 0
      %1334 = vmatpush1.bf16.xpose.msra.mxu0 0
      %1335 = vmatprep.subr.bf16.mxu0 0
      %1336 = vmatpush1.bf16.xpose.msra.mxu0 0
      %1337 = vmatprep.subr.bf16.mxu0 0
      %1338 = vmatpush1.bf16.xpose.msra.mxu0 0
      %1339 = vmatprep.subr.bf16.mxu0 0
      %1340 = vmatpush1.bf16.xpose.msra.mxu0 0
      %1341 = vmatprep.subr.bf16.mxu0 0
      %1342 = vmatpush1.bf16.xpose.msra.mxu0 0
      %1343 = vmatprep.subr.bf16.mxu0 0
      %1344 = vmatpush1.bf16.xpose.msra.mxu0 0
      %1345 = vmatprep.subr.bf16.mxu0 0
      %1346 = vmatpush1.bf16.xpose.msra.mxu0 0
      %1347 = vmatprep.subr.bf16.mxu0 0
      %1348 = vmatpush1.bf16.xpose.msra.mxu0 0
      %1349 = vmatprep.subr.bf16.mxu0 0
      %1350 = vmatpush1.bf16.xpose.msra.mxu0 0
      %1351 = vmatprep.subr.bf16.mxu0 0
      %1352 = vmatpush1.bf16.xpose.msra.mxu0 0
      %1353 = vmatprep.subr.bf16.mxu0 0
      %1354 = vmatpush1.bf16.xpose.msra.mxu0 0
      %1355 = vmatprep.subr.bf16.mxu0 0
      %1356 = vmatpush1.bf16.xpose.msra.mxu0 0
      %1357 = vmatprep.mubr.bf16.mxu0 0
      %1358 = vmatmul.mubr.bf16.gmra.mrb[0].mxu0 %v1320
      %v1359 = vpop.f32.mrb[0].mxu0
      %v1360 = vadd.f32 0.0, %v1359
      %v1361 = vpop.f32.mrb[0].mxu0
      %v1362 = vpop.f32.mrb[0].mxu0
      %v1363 = vpop.f32.mrb[0].mxu0
      %1364 = vdwg.mxu0
      %1366 = vrot.lane.b32.xlu0 %v1164, 124
      %v1367 = vpop.permute.xlu0 %1366
      %v1369 = vsel %vm1171, %v1164, 0
      %v1372 = vsel %vm1171, %v1367, 0
      %1374 = vmatprep.subr.bf16.mxu0 0
      %1375 = vmatpush1.bf16.xpose.msra.mxu0 %v1372
      %1376 = vmatprep.subr.bf16.mxu0 0
      %1377 = vmatpush1.bf16.xpose.msra.mxu0 0
      %1378 = vmatprep.subr.bf16.mxu0 0
      %1379 = vmatpush1.bf16.xpose.msra.mxu0 0
      %1380 = vmatprep.subr.bf16.mxu0 0
      %1381 = vmatpush1.bf16.xpose.msra.mxu0 0
      %1382 = vmatprep.subr.bf16.mxu0 0
      %1383 = vmatpush1.bf16.xpose.msra.mxu0 0
      %1384 = vmatprep.subr.bf16.mxu0 0
      %1385 = vmatpush1.bf16.xpose.msra.mxu0 0
      %1386 = vmatprep.subr.bf16.mxu0 0
      %1387 = vmatpush1.bf16.xpose.msra.mxu0 0
      %1388 = vmatprep.subr.bf16.mxu0 0
      %1389 = vmatpush1.bf16.xpose.msra.mxu0 0
      %1390 = vmatprep.subr.bf16.mxu0 0
      %1391 = vmatpush1.bf16.xpose.msra.mxu0 0
      %1392 = vmatprep.subr.bf16.mxu0 0
      %1393 = vmatpush1.bf16.xpose.msra.mxu0 0
      %1394 = vmatprep.subr.bf16.mxu0 0
      %1395 = vmatpush1.bf16.xpose.msra.mxu0 0
      %1396 = vmatprep.subr.bf16.mxu0 0
      %1397 = vmatpush1.bf16.xpose.msra.mxu0 0
      %1398 = vmatprep.subr.bf16.mxu0 0
      %1399 = vmatpush1.bf16.xpose.msra.mxu0 0
      %1400 = vmatprep.subr.bf16.mxu0 0
      %1401 = vmatpush1.bf16.xpose.msra.mxu0 0
      %1402 = vmatprep.subr.bf16.mxu0 0
      %1403 = vmatpush1.bf16.xpose.msra.mxu0 0
      %1404 = vmatprep.subr.bf16.mxu0 0
      %1405 = vmatpush1.bf16.xpose.msra.mxu0 0
      %1406 = vmatprep.mubr.bf16.mxu0 0
      %1407 = vmatmul.mubr.bf16.gmra.mrb[0].mxu0 %v1369
      %v1408 = vpop.f32.mrb[0].mxu0
      %v1409 = vadd.f32 0.0, %v1408
      %v1410 = vpop.f32.mrb[0].mxu0
      %v1411 = vpop.f32.mrb[0].mxu0
      %v1412 = vpop.f32.mrb[0].mxu0
      %1413 = vdwg.mxu0
      %1415 = vrot.lane.b32.xlu0 %v1165, 124
      %v1416 = vpop.permute.xlu0 %1415
      %v1418 = vsel %vm1171, %v1165, 0
      %v1421 = vsel %vm1171, %v1416, 0
      %1423 = vmatprep.subr.bf16.mxu0 0
      %1424 = vmatpush1.bf16.xpose.msra.mxu0 %v1421
      %1425 = vmatprep.subr.bf16.mxu0 0
      %1426 = vmatpush1.bf16.xpose.msra.mxu0 0
      %1427 = vmatprep.subr.bf16.mxu0 0
      %1428 = vmatpush1.bf16.xpose.msra.mxu0 0
      %1429 = vmatprep.subr.bf16.mxu0 0
      %1430 = vmatpush1.bf16.xpose.msra.mxu0 0
      %1431 = vmatprep.subr.bf16.mxu0 0
      %1432 = vmatpush1.bf16.xpose.msra.mxu0 0
      %1433 = vmatprep.subr.bf16.mxu0 0
      %1434 = vmatpush1.bf16.xpose.msra.mxu0 0
      %1435 = vmatprep.subr.bf16.mxu0 0
      %1436 = vmatpush1.bf16.xpose.msra.mxu0 0
      %1437 = vmatprep.subr.bf16.mxu0 0
      %1438 = vmatpush1.bf16.xpose.msra.mxu0 0
      %1439 = vmatprep.subr.bf16.mxu0 0
      %1440 = vmatpush1.bf16.xpose.msra.mxu0 0
      %1441 = vmatprep.subr.bf16.mxu0 0
      %1442 = vmatpush1.bf16.xpose.msra.mxu0 0
      %1443 = vmatprep.subr.bf16.mxu0 0
      %1444 = vmatpush1.bf16.xpose.msra.mxu0 0
      %1445 = vmatprep.subr.bf16.mxu0 0
      %1446 = vmatpush1.bf16.xpose.msra.mxu0 0
      %1447 = vmatprep.subr.bf16.mxu0 0
      %1448 = vmatpush1.bf16.xpose.msra.mxu0 0
      %1449 = vmatprep.subr.bf16.mxu0 0
      %1450 = vmatpush1.bf16.xpose.msra.mxu0 0
      %1451 = vmatprep.subr.bf16.mxu0 0
      %1452 = vmatpush1.bf16.xpose.msra.mxu0 0
      %1453 = vmatprep.subr.bf16.mxu0 0
      %1454 = vmatpush1.bf16.xpose.msra.mxu0 0
      %1455 = vmatprep.mubr.bf16.mxu0 0
      %1456 = vmatmul.mubr.bf16.gmra.mrb[0].mxu0 %v1418
      %v1457 = vpop.f32.mrb[0].mxu0
      %v1458 = vadd.f32 0.0, %v1457
      %v1459 = vpop.f32.mrb[0].mxu0
      %v1460 = vpop.f32.mrb[0].mxu0
      %v1461 = vpop.f32.mrb[0].mxu0
      %1462 = vdwg.mxu0
      %1464 = vrot.lane.b32.xlu0 %v1166, 124
      %v1465 = vpop.permute.xlu0 %1464
      %v1467 = vsel %vm1171, %v1166, 0
      %v1470 = vsel %vm1171, %v1465, 0
      %1472 = vmatprep.subr.bf16.mxu0 0
      %1473 = vmatpush1.bf16.xpose.msra.mxu0 %v1470
      %1474 = vmatprep.subr.bf16.mxu0 0
      %1475 = vmatpush1.bf16.xpose.msra.mxu0 0
      %1476 = vmatprep.subr.bf16.mxu0 0
      %1477 = vmatpush1.bf16.xpose.msra.mxu0 0
      %1478 = vmatprep.subr.bf16.mxu0 0
      %1479 = vmatpush1.bf16.xpose.msra.mxu0 0
      %1480 = vmatprep.subr.bf16.mxu0 0
      %1481 = vmatpush1.bf16.xpose.msra.mxu0 0
      %1482 = vmatprep.subr.bf16.mxu0 0
      %1483 = vmatpush1.bf16.xpose.msra.mxu0 0
      %1484 = vmatprep.subr.bf16.mxu0 0
      %1485 = vmatpush1.bf16.xpose.msra.mxu0 0
      %1486 = vmatprep.subr.bf16.mxu0 0
      %1487 = vmatpush1.bf16.xpose.msra.mxu0 0
      %1488 = vmatprep.subr.bf16.mxu0 0
      %1489 = vmatpush1.bf16.xpose.msra.mxu0 0
      %1490 = vmatprep.subr.bf16.mxu0 0
      %1491 = vmatpush1.bf16.xpose.msra.mxu0 0
      %1492 = vmatprep.subr.bf16.mxu0 0
      %1493 = vmatpush1.bf16.xpose.msra.mxu0 0
      %1494 = vmatprep.subr.bf16.mxu0 0
      %1495 = vmatpush1.bf16.xpose.msra.mxu0 0
      %1496 = vmatprep.subr.bf16.mxu0 0
      %1497 = vmatpush1.bf16.xpose.msra.mxu0 0
      %1498 = vmatprep.subr.bf16.mxu0 0
      %1499 = vmatpush1.bf16.xpose.msra.mxu0 0
      %1500 = vmatprep.subr.bf16.mxu0 0
      %1501 = vmatpush1.bf16.xpose.msra.mxu0 0
      %1502 = vmatprep.subr.bf16.mxu0 0
      %1503 = vmatpush1.bf16.xpose.msra.mxu0 0
      %1504 = vmatprep.mubr.bf16.mxu0 0
      %1505 = vmatmul.mubr.bf16.gmra.mrb[0].mxu0 %v1467
      %v1506 = vpop.f32.mrb[0].mxu0
      %v1507 = vadd.f32 0.0, %v1506
      %v1508 = vpop.f32.mrb[0].mxu0
      %v1509 = vpop.f32.mrb[0].mxu0
      %v1510 = vpop.f32.mrb[0].mxu0
      %1511 = vdwg.mxu0
      %1513 = vrot.lane.b32.xlu0 %v1167, 124
      %v1514 = vpop.permute.xlu0 %1513
      %v1516 = vsel %vm1171, %v1167, 0
      %v1519 = vsel %vm1171, %v1514, 0
      %1521 = vmatprep.subr.bf16.mxu0 0
      %1522 = vmatpush1.bf16.xpose.msra.mxu0 %v1519
      %1523 = vmatprep.subr.bf16.mxu0 0
      %1524 = vmatpush1.bf16.xpose.msra.mxu0 0
      %1525 = vmatprep.subr.bf16.mxu0 0
      %1526 = vmatpush1.bf16.xpose.msra.mxu0 0
      %1527 = vmatprep.subr.bf16.mxu0 0
      %1528 = vmatpush1.bf16.xpose.msra.mxu0 0
      %1529 = vmatprep.subr.bf16.mxu0 0
      %1530 = vmatpush1.bf16.xpose.msra.mxu0 0
      %1531 = vmatprep.subr.bf16.mxu0 0
      %1532 = vmatpush1.bf16.xpose.msra.mxu0 0
      %1533 = vmatprep.subr.bf16.mxu0 0
      %1534 = vmatpush1.bf16.xpose.msra.mxu0 0
      %1535 = vmatprep.subr.bf16.mxu0 0
      %1536 = vmatpush1.bf16.xpose.msra.mxu0 0
      %1537 = vmatprep.subr.bf16.mxu0 0
      %1538 = vmatpush1.bf16.xpose.msra.mxu0 0
      %1539 = vmatprep.subr.bf16.mxu0 0
      %1540 = vmatpush1.bf16.xpose.msra.mxu0 0
      %1541 = vmatprep.subr.bf16.mxu0 0
      %1542 = vmatpush1.bf16.xpose.msra.mxu0 0
      %1543 = vmatprep.subr.bf16.mxu0 0
      %1544 = vmatpush1.bf16.xpose.msra.mxu0 0
      %1545 = vmatprep.subr.bf16.mxu0 0
      %1546 = vmatpush1.bf16.xpose.msra.mxu0 0
      %1547 = vmatprep.subr.bf16.mxu0 0
      %1548 = vmatpush1.bf16.xpose.msra.mxu0 0
      %1549 = vmatprep.subr.bf16.mxu0 0
      %1550 = vmatpush1.bf16.xpose.msra.mxu0 0
      %1551 = vmatprep.subr.bf16.mxu0 0
      %1552 = vmatpush1.bf16.xpose.msra.mxu0 0
      %1553 = vmatprep.mubr.bf16.mxu0 0
      %1554 = vmatmul.mubr.bf16.gmra.mrb[0].mxu0 %v1516
      %v1555 = vpop.f32.mrb[0].mxu0
      %v1556 = vadd.f32 0.0, %v1555
      %v1557 = vpop.f32.mrb[0].mxu0
      %v1558 = vpop.f32.mrb[0].mxu0
      %v1559 = vpop.f32.mrb[0].mxu0
      %1560 = vdwg.mxu0
      %v1561 = vmul.f32 %v1213, 0.5
      %v1562 = vmul.f32 %v1262, 0.5
      %v1563 = vmul.f32 %v1311, 0.5
      %v1564 = vmul.f32 %v1360, 0.5
      %v1565 = vmul.f32 %v1409, 0.5
      %v1566 = vmul.f32 %v1458, 0.5
      %v1567 = vmul.f32 %v1507, 0.5
      %v1568 = vmul.f32 %v1556, 0.5
      %v1569 = vlaneseq
      %v1570 = vshrl.u32 %v1569, 7
      %v1571 = vlaneseq
      %v1572 = vand.u32 %v1571, 127
      %vm1573 = vcmp.le.s32.totalorder %v1572, %v1570
      %v1574 = vsel %vm1573, 1, 0
      %vm1575 = vcmp.eq.s32.totalorder %v1574, 1
      %v1576 = vsel %vm1575, %v1561, -1e+30
      %v1577 = vsel %vm1575, %v1562, -1e+30
      %v1578 = vsel %vm1575, %v1563, -1e+30
      %v1579 = vsel %vm1575, %v1564, -1e+30
      %v1580 = vsel %vm1575, %v1565, -1e+30
      %v1581 = vsel %vm1575, %v1566, -1e+30
      %v1582 = vsel %vm1575, %v1567, -1e+30
      %v1583 = vsel %vm1575, %v1568, -1e+30
      %vm1584 = vcmask 64512
      %v1585 = vsel %vm1584, %v1576, -inf
      %1586 = vmax.xlane.f32.xlu0 %v1585
      %v1587 = vpop.xlane.xlu0 %1586
      %v1588 = vsel %vm1584, %v1577, -inf
      %1589 = vmax.xlane.f32.xlu0 %v1588
      %v1590 = vpop.xlane.xlu0 %1589
      %v1591 = vsel %vm1584, %v1578, -inf
      %1592 = vmax.xlane.f32.xlu0 %v1591
      %v1593 = vpop.xlane.xlu0 %1592
      %v1594 = vsel %vm1584, %v1579, -inf
      %1595 = vmax.xlane.f32.xlu0 %v1594
      %v1596 = vpop.xlane.xlu0 %1595
      %v1597 = vsel %vm1584, %v1580, -inf
      %1598 = vmax.xlane.f32.xlu0 %v1597
      %v1599 = vpop.xlane.xlu0 %1598
      %v1600 = vsel %vm1584, %v1581, -inf
      %1601 = vmax.xlane.f32.xlu0 %v1600
      %v1602 = vpop.xlane.xlu0 %1601
      %v1603 = vsel %vm1584, %v1582, -inf
      %1604 = vmax.xlane.f32.xlu0 %v1603
      %v1605 = vpop.xlane.xlu0 %1604
      %v1606 = vsel %vm1584, %v1583, -inf
      %1607 = vmax.xlane.f32.xlu0 %v1606
      %v1608 = vpop.xlane.xlu0 %1607
      %v1609 = vsub.f32 %v1576, %v1587
      %v1610 = vsub.f32 %v1577, %v1590
      %v1611 = vsub.f32 %v1578, %v1593
      %v1612 = vsub.f32 %v1579, %v1596
      %v1613 = vsub.f32 %v1580, %v1599
      %v1614 = vsub.f32 %v1581, %v1602
      %v1615 = vsub.f32 %v1582, %v1605
      %v1616 = vsub.f32 %v1583, %v1608
      %v1617 = vmul.f32 %v1609, 1.442695
      %v1618 = vpow.pop %v1617
      %v1619 = vmul.f32 %v1610, 1.442695
      %v1620 = vpow.pop %v1619
      %v1621 = vmul.f32 %v1611, 1.442695
      %v1622 = vpow.pop %v1621
      %v1623 = vmul.f32 %v1612, 1.442695
      %v1624 = vpow.pop %v1623
      %v1625 = vmul.f32 %v1613, 1.442695
      %v1626 = vpow.pop %v1625
      %v1627 = vmul.f32 %v1614, 1.442695
      %v1628 = vpow.pop %v1627
      %v1629 = vmul.f32 %v1615, 1.442695
      %v1630 = vpow.pop %v1629
      %v1631 = vmul.f32 %v1616, 1.442695
      %v1632 = vpow.pop %v1631
      %v1633 = vsel %vm1584, %v1618, 0.0
      %1634 = vadd.xlane.f32.xlu0 %v1633
      %v1635 = vpop.xlane.xlu0 %1634
      %v1636 = vsel %vm1584, %v1620, 0.0
      %1637 = vadd.xlane.f32.xlu0 %v1636
      %v1638 = vpop.xlane.xlu0 %1637
      %v1639 = vsel %vm1584, %v1622, 0.0
      %1640 = vadd.xlane.f32.xlu0 %v1639
      %v1641 = vpop.xlane.xlu0 %1640
      %v1642 = vsel %vm1584, %v1624, 0.0
      %1643 = vadd.xlane.f32.xlu0 %v1642
      %v1644 = vpop.xlane.xlu0 %1643
      %v1645 = vsel %vm1584, %v1626, 0.0
      %1646 = vadd.xlane.f32.xlu0 %v1645
      %v1647 = vpop.xlane.xlu0 %1646
      %v1648 = vsel %vm1584, %v1628, 0.0
      %1649 = vadd.xlane.f32.xlu0 %v1648
      %v1650 = vpop.xlane.xlu0 %1649
      %v1651 = vsel %vm1584, %v1630, 0.0
      %1652 = vadd.xlane.f32.xlu0 %v1651
      %v1653 = vpop.xlane.xlu0 %1652
      %v1654 = vsel %vm1584, %v1632, 0.0
      %1655 = vadd.xlane.f32.xlu0 %v1654
      %v1656 = vpop.xlane.xlu0 %1655
      %v1657 = vrcp.pop %v1635
      %v1658 = vrcp.pop %v1638
      %v1659 = vrcp.pop %v1641
      %v1660 = vrcp.pop %v1644
      %v1661 = vrcp.pop %v1647
      %v1662 = vrcp.pop %v1650
      %v1663 = vrcp.pop %v1653
      %v1664 = vrcp.pop %v1656
      %v1665 = vmul.f32 %v1618, %v1657
      %v1666 = vmul.f32 %v1620, %v1658
      %v1667 = vmul.f32 %v1622, %v1659
      %v1668 = vmul.f32 %v1624, %v1660
      %v1669 = vmul.f32 %v1626, %v1661
      %v1670 = vmul.f32 %v1628, %v1662
      %v1671 = vmul.f32 %v1630, %v1663
      %v1672 = vmul.f32 %v1632, %v1664
      %v1673 = vpack.c.bf16 %v1665, %v1665
      %v1674 = vpack.c.bf16 %v1666, %v1666
      %v1675 = vpack.c.bf16 %v1667, %v1667
      %v1676 = vpack.c.bf16 %v1668, %v1668
      %v1677 = vpack.c.bf16 %v1669, %v1669
      %v1678 = vpack.c.bf16 %v1670, %v1670
      %v1679 = vpack.c.bf16 %v1671, %v1671
      %v1680 = vpack.c.bf16 %v1672, %v1672
      %1681 = vrot.lane.b32.xlu0 %v1160, 120
      %v1682 = vpop.permute.xlu0 %1681
      %v1684 = vsel %vm1584, %v1673, 0
      %vm1686 = vcmask 1043456
      %v1688 = vsel %vm1686, %v1682, 0
      %1690 = vmatprep.subr.bf16.mxu0 0
      %1691 = vmatpush1.bf16.msra.mxu0 %v1688
      %1692 = vmatprep.subr.bf16.mxu0 0
      %1693 = vmatpush1.bf16.msra.mxu0 0
      %1694 = vmatprep.subr.bf16.mxu0 0
      %1695 = vmatpush1.bf16.msra.mxu0 0
      %1696 = vmatprep.subr.bf16.mxu0 0
      %1697 = vmatpush1.bf16.msra.mxu0 0
      %1698 = vmatprep.subr.bf16.mxu0 0
      %1699 = vmatpush1.bf16.msra.mxu0 0
      %1700 = vmatprep.subr.bf16.mxu0 0
      %1701 = vmatpush1.bf16.msra.mxu0 0
      %1702 = vmatprep.subr.bf16.mxu0 0
      %1703 = vmatpush1.bf16.msra.mxu0 0
      %1704 = vmatprep.subr.bf16.mxu0 0
      %1705 = vmatpush1.bf16.msra.mxu0 0
      %1706 = vmatprep.subr.bf16.mxu0 0
      %1707 = vmatpush1.bf16.msra.mxu0 0
      %1708 = vmatprep.subr.bf16.mxu0 0
      %1709 = vmatpush1.bf16.msra.mxu0 0
      %1710 = vmatprep.subr.bf16.mxu0 0
      %1711 = vmatpush1.bf16.msra.mxu0 0
      %1712 = vmatprep.subr.bf16.mxu0 0
      %1713 = vmatpush1.bf16.msra.mxu0 0
      %1714 = vmatprep.subr.bf16.mxu0 0
      %1715 = vmatpush1.bf16.msra.mxu0 0
      %1716 = vmatprep.subr.bf16.mxu0 0
      %1717 = vmatpush1.bf16.msra.mxu0 0
      %1718 = vmatprep.subr.bf16.mxu0 0
      %1719 = vmatpush1.bf16.msra.mxu0 0
      %1720 = vmatprep.subr.bf16.mxu0 0
      %1721 = vmatpush1.bf16.msra.mxu0 0
      %1722 = vmatprep.mubr.bf16.mxu0 0
      %1723 = vmatmul.mubr.bf16.gmra.mrb[0].mxu0 %v1684
      %v1724 = vpop.f32.mrb[0].mxu0
      %v1725 = vadd.f32 0.0, %v1724
      %v1726 = vpop.f32.mrb[0].mxu0
      %v1727 = vpop.f32.mrb[0].mxu0
      %v1728 = vpop.f32.mrb[0].mxu0
      %1729 = vdwg.mxu0
      %1730 = vrot.lane.b32.xlu0 %v1161, 120
      %v1731 = vpop.permute.xlu0 %1730
      %v1733 = vsel %vm1584, %v1674, 0
      %v1736 = vsel %vm1686, %v1731, 0
      %1738 = vmatprep.subr.bf16.mxu0 0
      %1739 = vmatpush1.bf16.msra.mxu0 %v1736
      %1740 = vmatprep.subr.bf16.mxu0 0
      %1741 = vmatpush1.bf16.msra.mxu0 0
      %1742 = vmatprep.subr.bf16.mxu0 0
      %1743 = vmatpush1.bf16.msra.mxu0 0
      %1744 = vmatprep.subr.bf16.mxu0 0
      %1745 = vmatpush1.bf16.msra.mxu0 0
      %1746 = vmatprep.subr.bf16.mxu0 0
      %1747 = vmatpush1.bf16.msra.mxu0 0
      %1748 = vmatprep.subr.bf16.mxu0 0
      %1749 = vmatpush1.bf16.msra.mxu0 0
      %1750 = vmatprep.subr.bf16.mxu0 0
      %1751 = vmatpush1.bf16.msra.mxu0 0
      %1752 = vmatprep.subr.bf16.mxu0 0
      %1753 = vmatpush1.bf16.msra.mxu0 0
      %1754 = vmatprep.subr.bf16.mxu0 0
      %1755 = vmatpush1.bf16.msra.mxu0 0
      %1756 = vmatprep.subr.bf16.mxu0 0
      %1757 = vmatpush1.bf16.msra.mxu0 0
      %1758 = vmatprep.subr.bf16.mxu0 0
      %1759 = vmatpush1.bf16.msra.mxu0 0
      %1760 = vmatprep.subr.bf16.mxu0 0
      %1761 = vmatpush1.bf16.msra.mxu0 0
      %1762 = vmatprep.subr.bf16.mxu0 0
      %1763 = vmatpush1.bf16.msra.mxu0 0
      %1764 = vmatprep.subr.bf16.mxu0 0
      %1765 = vmatpush1.bf16.msra.mxu0 0
      %1766 = vmatprep.subr.bf16.mxu0 0
      %1767 = vmatpush1.bf16.msra.mxu0 0
      %1768 = vmatprep.subr.bf16.mxu0 0
      %1769 = vmatpush1.bf16.msra.mxu0 0
      %1770 = vmatprep.mubr.bf16.mxu0 0
      %1771 = vmatmul.mubr.bf16.gmra.mrb[0].mxu0 %v1733
      %v1772 = vpop.f32.mrb[0].mxu0
      %v1773 = vadd.f32 0.0, %v1772
      %v1774 = vpop.f32.mrb[0].mxu0
      %v1775 = vpop.f32.mrb[0].mxu0
      %v1776 = vpop.f32.mrb[0].mxu0
      %1777 = vdwg.mxu0
      %1778 = vrot.lane.b32.xlu0 %v1162, 120
      %v1779 = vpop.permute.xlu0 %1778
      %v1781 = vsel %vm1584, %v1675, 0
      %v1784 = vsel %vm1686, %v1779, 0
      %1786 = vmatprep.subr.bf16.mxu0 0
      %1787 = vmatpush1.bf16.msra.mxu0 %v1784
      %1788 = vmatprep.subr.bf16.mxu0 0
      %1789 = vmatpush1.bf16.msra.mxu0 0
      %1790 = vmatprep.subr.bf16.mxu0 0
      %1791 = vmatpush1.bf16.msra.mxu0 0
      %1792 = vmatprep.subr.bf16.mxu0 0
      %1793 = vmatpush1.bf16.msra.mxu0 0
      %1794 = vmatprep.subr.bf16.mxu0 0
      %1795 = vmatpush1.bf16.msra.mxu0 0
      %1796 = vmatprep.subr.bf16.mxu0 0
      %1797 = vmatpush1.bf16.msra.mxu0 0
      %1798 = vmatprep.subr.bf16.mxu0 0
      %1799 = vmatpush1.bf16.msra.mxu0 0
      %1800 = vmatprep.subr.bf16.mxu0 0
      %1801 = vmatpush1.bf16.msra.mxu0 0
      %1802 = vmatprep.subr.bf16.mxu0 0
      %1803 = vmatpush1.bf16.msra.mxu0 0
      %1804 = vmatprep.subr.bf16.mxu0 0
      %1805 = vmatpush1.bf16.msra.mxu0 0
      %1806 = vmatprep.subr.bf16.mxu0 0
      %1807 = vmatpush1.bf16.msra.mxu0 0
      %1808 = vmatprep.subr.bf16.mxu0 0
      %1809 = vmatpush1.bf16.msra.mxu0 0
      %1810 = vmatprep.subr.bf16.mxu0 0
      %1811 = vmatpush1.bf16.msra.mxu0 0
      %1812 = vmatprep.subr.bf16.mxu0 0
      %1813 = vmatpush1.bf16.msra.mxu0 0
      %1814 = vmatprep.subr.bf16.mxu0 0
      %1815 = vmatpush1.bf16.msra.mxu0 0
      %1816 = vmatprep.subr.bf16.mxu0 0
      %1817 = vmatpush1.bf16.msra.mxu0 0
      %1818 = vmatprep.mubr.bf16.mxu0 0
      %1819 = vmatmul.mubr.bf16.gmra.mrb[0].mxu0 %v1781
      %v1820 = vpop.f32.mrb[0].mxu0
      %v1821 = vadd.f32 0.0, %v1820
      %v1822 = vpop.f32.mrb[0].mxu0
      %v1823 = vpop.f32.mrb[0].mxu0
      %v1824 = vpop.f32.mrb[0].mxu0
      %1825 = vdwg.mxu0
      %1826 = vrot.lane.b32.xlu0 %v1163, 120
      %v1827 = vpop.permute.xlu0 %1826
      %v1829 = vsel %vm1584, %v1676, 0
      %v1832 = vsel %vm1686, %v1827, 0
      %1834 = vmatprep.subr.bf16.mxu0 0
      %1835 = vmatpush1.bf16.msra.mxu0 %v1832
      %1836 = vmatprep.subr.bf16.mxu0 0
      %1837 = vmatpush1.bf16.msra.mxu0 0
      %1838 = vmatprep.subr.bf16.mxu0 0
      %1839 = vmatpush1.bf16.msra.mxu0 0
      %1840 = vmatprep.subr.bf16.mxu0 0
      %1841 = vmatpush1.bf16.msra.mxu0 0
      %1842 = vmatprep.subr.bf16.mxu0 0
      %1843 = vmatpush1.bf16.msra.mxu0 0
      %1844 = vmatprep.subr.bf16.mxu0 0
      %1845 = vmatpush1.bf16.msra.mxu0 0
      %1846 = vmatprep.subr.bf16.mxu0 0
      %1847 = vmatpush1.bf16.msra.mxu0 0
      %1848 = vmatprep.subr.bf16.mxu0 0
      %1849 = vmatpush1.bf16.msra.mxu0 0
      %1850 = vmatprep.subr.bf16.mxu0 0
      %1851 = vmatpush1.bf16.msra.mxu0 0
      %1852 = vmatprep.subr.bf16.mxu0 0
      %1853 = vmatpush1.bf16.msra.mxu0 0
      %1854 = vmatprep.subr.bf16.mxu0 0
      %1855 = vmatpush1.bf16.msra.mxu0 0
      %1856 = vmatprep.subr.bf16.mxu0 0
      %1857 = vmatpush1.bf16.msra.mxu0 0
      %1858 = vmatprep.subr.bf16.mxu0 0
      %1859 = vmatpush1.bf16.msra.mxu0 0
      %1860 = vmatprep.subr.bf16.mxu0 0
      %1861 = vmatpush1.bf16.msra.mxu0 0
      %1862 = vmatprep.subr.bf16.mxu0 0
      %1863 = vmatpush1.bf16.msra.mxu0 0
      %1864 = vmatprep.subr.bf16.mxu0 0
      %1865 = vmatpush1.bf16.msra.mxu0 0
      %1866 = vmatprep.mubr.bf16.mxu0 0
      %1867 = vmatmul.mubr.bf16.gmra.mrb[0].mxu0 %v1829
      %v1868 = vpop.f32.mrb[0].mxu0
      %v1869 = vadd.f32 0.0, %v1868
      %v1870 = vpop.f32.mrb[0].mxu0
      %v1871 = vpop.f32.mrb[0].mxu0
      %v1872 = vpop.f32.mrb[0].mxu0
      %1873 = vdwg.mxu0
      %1874 = vrot.lane.b32.xlu0 %v1164, 120
      %v1875 = vpop.permute.xlu0 %1874
      %v1877 = vsel %vm1584, %v1677, 0
      %v1880 = vsel %vm1686, %v1875, 0
      %1882 = vmatprep.subr.bf16.mxu0 0
      %1883 = vmatpush1.bf16.msra.mxu0 %v1880
      %1884 = vmatprep.subr.bf16.mxu0 0
      %1885 = vmatpush1.bf16.msra.mxu0 0
      %1886 = vmatprep.subr.bf16.mxu0 0
      %1887 = vmatpush1.bf16.msra.mxu0 0
      %1888 = vmatprep.subr.bf16.mxu0 0
      %1889 = vmatpush1.bf16.msra.mxu0 0
      %1890 = vmatprep.subr.bf16.mxu0 0
      %1891 = vmatpush1.bf16.msra.mxu0 0
      %1892 = vmatprep.subr.bf16.mxu0 0
      %1893 = vmatpush1.bf16.msra.mxu0 0
      %1894 = vmatprep.subr.bf16.mxu0 0
      %1895 = vmatpush1.bf16.msra.mxu0 0
      %1896 = vmatprep.subr.bf16.mxu0 0
      %1897 = vmatpush1.bf16.msra.mxu0 0
      %1898 = vmatprep.subr.bf16.mxu0 0
      %1899 = vmatpush1.bf16.msra.mxu0 0
      %1900 = vmatprep.subr.bf16.mxu0 0
      %1901 = vmatpush1.bf16.msra.mxu0 0
      %1902 = vmatprep.subr.bf16.mxu0 0
      %1903 = vmatpush1.bf16.msra.mxu0 0
      %1904 = vmatprep.subr.bf16.mxu0 0
      %1905 = vmatpush1.bf16.msra.mxu0 0
      %1906 = vmatprep.subr.bf16.mxu0 0
      %1907 = vmatpush1.bf16.msra.mxu0 0
      %1908 = vmatprep.subr.bf16.mxu0 0
      %1909 = vmatpush1.bf16.msra.mxu0 0
      %1910 = vmatprep.subr.bf16.mxu0 0
      %1911 = vmatpush1.bf16.msra.mxu0 0
      %1912 = vmatprep.subr.bf16.mxu0 0
      %1913 = vmatpush1.bf16.msra.mxu0 0
      %1914 = vmatprep.mubr.bf16.mxu0 0
      %1915 = vmatmul.mubr.bf16.gmra.mrb[0].mxu0 %v1877
      %v1916 = vpop.f32.mrb[0].mxu0
      %v1917 = vadd.f32 0.0, %v1916
      %v1918 = vpop.f32.mrb[0].mxu0
      %v1919 = vpop.f32.mrb[0].mxu0
      %v1920 = vpop.f32.mrb[0].mxu0
      %1921 = vdwg.mxu0
      %1922 = vrot.lane.b32.xlu0 %v1165, 120
      %v1923 = vpop.permute.xlu0 %1922
      %v1925 = vsel %vm1584, %v1678, 0
      %v1928 = vsel %vm1686, %v1923, 0
      %1930 = vmatprep.subr.bf16.mxu0 0
      %1931 = vmatpush1.bf16.msra.mxu0 %v1928
      %1932 = vmatprep.subr.bf16.mxu0 0
      %1933 = vmatpush1.bf16.msra.mxu0 0
      %1934 = vmatprep.subr.bf16.mxu0 0
      %1935 = vmatpush1.bf16.msra.mxu0 0
      %1936 = vmatprep.subr.bf16.mxu0 0
      %1937 = vmatpush1.bf16.msra.mxu0 0
      %1938 = vmatprep.subr.bf16.mxu0 0
      %1939 = vmatpush1.bf16.msra.mxu0 0
      %1940 = vmatprep.subr.bf16.mxu0 0
      %1941 = vmatpush1.bf16.msra.mxu0 0
      %1942 = vmatprep.subr.bf16.mxu0 0
      %1943 = vmatpush1.bf16.msra.mxu0 0
      %1944 = vmatprep.subr.bf16.mxu0 0
      %1945 = vmatpush1.bf16.msra.mxu0 0
      %1946 = vmatprep.subr.bf16.mxu0 0
      %1947 = vmatpush1.bf16.msra.mxu0 0
      %1948 = vmatprep.subr.bf16.mxu0 0
      %1949 = vmatpush1.bf16.msra.mxu0 0
      %1950 = vmatprep.subr.bf16.mxu0 0
      %1951 = vmatpush1.bf16.msra.mxu0 0
      %1952 = vmatprep.subr.bf16.mxu0 0
      %1953 = vmatpush1.bf16.msra.mxu0 0
      %1954 = vmatprep.subr.bf16.mxu0 0
      %1955 = vmatpush1.bf16.msra.mxu0 0
      %1956 = vmatprep.subr.bf16.mxu0 0
      %1957 = vmatpush1.bf16.msra.mxu0 0
      %1958 = vmatprep.subr.bf16.mxu0 0
      %1959 = vmatpush1.bf16.msra.mxu0 0
      %1960 = vmatprep.subr.bf16.mxu0 0
      %1961 = vmatpush1.bf16.msra.mxu0 0
      %1962 = vmatprep.mubr.bf16.mxu0 0
      %1963 = vmatmul.mubr.bf16.gmra.mrb[0].mxu0 %v1925
      %v1964 = vpop.f32.mrb[0].mxu0
      %v1965 = vadd.f32 0.0, %v1964
      %v1966 = vpop.f32.mrb[0].mxu0
      %v1967 = vpop.f32.mrb[0].mxu0
      %v1968 = vpop.f32.mrb[0].mxu0
      %1969 = vdwg.mxu0
      %1970 = vrot.lane.b32.xlu0 %v1166, 120
      %v1971 = vpop.permute.xlu0 %1970
      %v1973 = vsel %vm1584, %v1679, 0
      %v1976 = vsel %vm1686, %v1971, 0
      %1978 = vmatprep.subr.bf16.mxu0 0
      %1979 = vmatpush1.bf16.msra.mxu0 %v1976
      %1980 = vmatprep.subr.bf16.mxu0 0
      %1981 = vmatpush1.bf16.msra.mxu0 0
      %1982 = vmatprep.subr.bf16.mxu0 0
      %1983 = vmatpush1.bf16.msra.mxu0 0
      %1984 = vmatprep.subr.bf16.mxu0 0
      %1985 = vmatpush1.bf16.msra.mxu0 0
      %1986 = vmatprep.subr.bf16.mxu0 0
      %1987 = vmatpush1.bf16.msra.mxu0 0
      %1988 = vmatprep.subr.bf16.mxu0 0
      %1989 = vmatpush1.bf16.msra.mxu0 0
      %1990 = vmatprep.subr.bf16.mxu0 0
      %1991 = vmatpush1.bf16.msra.mxu0 0
      %1992 = vmatprep.subr.bf16.mxu0 0
      %1993 = vmatpush1.bf16.msra.mxu0 0
      %1994 = vmatprep.subr.bf16.mxu0 0
      %1995 = vmatpush1.bf16.msra.mxu0 0
      %1996 = vmatprep.subr.bf16.mxu0 0
      %1997 = vmatpush1.bf16.msra.mxu0 0
      %1998 = vmatprep.subr.bf16.mxu0 0
      %1999 = vmatpush1.bf16.msra.mxu0 0
      %2000 = vmatprep.subr.bf16.mxu0 0
      %2001 = vmatpush1.bf16.msra.mxu0 0
      %2002 = vmatprep.subr.bf16.mxu0 0
      %2003 = vmatpush1.bf16.msra.mxu0 0
      %2004 = vmatprep.subr.bf16.mxu0 0
      %2005 = vmatpush1.bf16.msra.mxu0 0
      %2006 = vmatprep.subr.bf16.mxu0 0
      %2007 = vmatpush1.bf16.msra.mxu0 0
      %2008 = vmatprep.subr.bf16.mxu0 0
      %2009 = vmatpush1.bf16.msra.mxu0 0
      %2010 = vmatprep.mubr.bf16.mxu0 0
      %2011 = vmatmul.mubr.bf16.gmra.mrb[0].mxu0 %v1973
      %v2012 = vpop.f32.mrb[0].mxu0
      %v2013 = vadd.f32 0.0, %v2012
      %v2014 = vpop.f32.mrb[0].mxu0
      %v2015 = vpop.f32.mrb[0].mxu0
      %v2016 = vpop.f32.mrb[0].mxu0
      %2017 = vdwg.mxu0
      %2018 = vrot.lane.b32.xlu0 %v1167, 120
      %v2019 = vpop.permute.xlu0 %2018
      %v2021 = vsel %vm1584, %v1680, 0
      %v2024 = vsel %vm1686, %v2019, 0
      %2026 = vmatprep.subr.bf16.mxu0 0
      %2027 = vmatpush1.bf16.msra.mxu0 %v2024
      %2028 = vmatprep.subr.bf16.mxu0 0
      %2029 = vmatpush1.bf16.msra.mxu0 0
      %2030 = vmatprep.subr.bf16.mxu0 0
      %2031 = vmatpush1.bf16.msra.mxu0 0
      %2032 = vmatprep.subr.bf16.mxu0 0
      %2033 = vmatpush1.bf16.msra.mxu0 0
      %2034 = vmatprep.subr.bf16.mxu0 0
      %2035 = vmatpush1.bf16.msra.mxu0 0
      %2036 = vmatprep.subr.bf16.mxu0 0
      %2037 = vmatpush1.bf16.msra.mxu0 0
      %2038 = vmatprep.subr.bf16.mxu0 0
      %2039 = vmatpush1.bf16.msra.mxu0 0
      %2040 = vmatprep.subr.bf16.mxu0 0
      %2041 = vmatpush1.bf16.msra.mxu0 0
      %2042 = vmatprep.subr.bf16.mxu0 0
      %2043 = vmatpush1.bf16.msra.mxu0 0
      %2044 = vmatprep.subr.bf16.mxu0 0
      %2045 = vmatpush1.bf16.msra.mxu0 0
      %2046 = vmatprep.subr.bf16.mxu0 0
      %2047 = vmatpush1.bf16.msra.mxu0 0
      %2048 = vmatprep.subr.bf16.mxu0 0
      %2049 = vmatpush1.bf16.msra.mxu0 0
      %2050 = vmatprep.subr.bf16.mxu0 0
      %2051 = vmatpush1.bf16.msra.mxu0 0
      %2052 = vmatprep.subr.bf16.mxu0 0
      %2053 = vmatpush1.bf16.msra.mxu0 0
      %2054 = vmatprep.subr.bf16.mxu0 0
      %2055 = vmatpush1.bf16.msra.mxu0 0
      %2056 = vmatprep.subr.bf16.mxu0 0
      %2057 = vmatpush1.bf16.msra.mxu0 0
      %2058 = vmatprep.mubr.bf16.mxu0 0
      %2059 = vmatmul.mubr.bf16.gmra.mrb[0].mxu0 %v2021
      %v2060 = vpop.f32.mrb[0].mxu0
      %v2061 = vadd.f32 0.0, %v2060
      %v2062 = vpop.f32.mrb[0].mxu0
      %v2063 = vpop.f32.mrb[0].mxu0
      %v2064 = vpop.f32.mrb[0].mxu0
      %2065 = vdwg.mxu0
      %v2066 = vpack.c.bf16 %v1725, %v1725
      %v2067 = vpack.c.bf16 %v1773, %v1773
      %v2068 = vpack.c.bf16 %v1821, %v1821
      %v2069 = vpack.c.bf16 %v1869, %v1869
      %v2070 = vpack.c.bf16 %v1917, %v1917
      %v2071 = vpack.c.bf16 %v1965, %v1965
      %v2072 = vpack.c.bf16 %v2013, %v2013
      %v2073 = vpack.c.bf16 %v2061, %v2061
      %v2075 = vsel %vm1171, %v2066, 0
      %vm2077 = vcmask 1041408
      %v2079 = vsel %vm2077, %v682, 0
      %2081 = vmatprep.subr.bf16.mxu0 0
      %2082 = vmatpush1.bf16.msra.mxu0 %v2079
      %2083 = vmatprep.subr.bf16.mxu0 0
      %2084 = vmatpush1.bf16.msra.mxu0 0
      %2085 = vmatprep.subr.bf16.mxu0 0
      %2086 = vmatpush1.bf16.msra.mxu0 0
      %2087 = vmatprep.subr.bf16.mxu0 0
      %2088 = vmatpush1.bf16.msra.mxu0 0
      %2089 = vmatprep.subr.bf16.mxu0 0
      %2090 = vmatpush1.bf16.msra.mxu0 0
      %2091 = vmatprep.subr.bf16.mxu0 0
      %2092 = vmatpush1.bf16.msra.mxu0 0
      %2093 = vmatprep.subr.bf16.mxu0 0
      %2094 = vmatpush1.bf16.msra.mxu0 0
      %2095 = vmatprep.subr.bf16.mxu0 0
      %2096 = vmatpush1.bf16.msra.mxu0 0
      %2097 = vmatprep.subr.bf16.mxu0 0
      %2098 = vmatpush1.bf16.msra.mxu0 0
      %2099 = vmatprep.subr.bf16.mxu0 0
      %2100 = vmatpush1.bf16.msra.mxu0 0
      %2101 = vmatprep.subr.bf16.mxu0 0
      %2102 = vmatpush1.bf16.msra.mxu0 0
      %2103 = vmatprep.subr.bf16.mxu0 0
      %2104 = vmatpush1.bf16.msra.mxu0 0
      %2105 = vmatprep.subr.bf16.mxu0 0
      %2106 = vmatpush1.bf16.msra.mxu0 0
      %2107 = vmatprep.subr.bf16.mxu0 0
      %2108 = vmatpush1.bf16.msra.mxu0 0
      %2109 = vmatprep.subr.bf16.mxu0 0
      %2110 = vmatpush1.bf16.msra.mxu0 0
      %2111 = vmatprep.subr.bf16.mxu0 0
      %2112 = vmatpush1.bf16.msra.mxu0 0
      %2113 = vmatprep.mubr.bf16.mxu0 0
      %2114 = vmatmul.mubr.bf16.gmra.mrb[0].mxu0 %v2075
      %v2115 = vpop.f32.mrb[0].mxu0
      %v2116 = vadd.f32 0.0, %v2115
      %v2117 = vpop.f32.mrb[0].mxu0
      %v2118 = vpop.f32.mrb[0].mxu0
      %v2119 = vpop.f32.mrb[0].mxu0
      %2120 = vdwg.mxu0
      %v2122 = vsel %vm1171, %v2067, 0
      %v2125 = vsel %vm2077, %v683, 0
      %2127 = vmatprep.subr.bf16.mxu0 0
      %2128 = vmatpush1.bf16.msra.mxu0 %v2125
      %2129 = vmatprep.subr.bf16.mxu0 0
      %2130 = vmatpush1.bf16.msra.mxu0 0
      %2131 = vmatprep.subr.bf16.mxu0 0
      %2132 = vmatpush1.bf16.msra.mxu0 0
      %2133 = vmatprep.subr.bf16.mxu0 0
      %2134 = vmatpush1.bf16.msra.mxu0 0
      %2135 = vmatprep.subr.bf16.mxu0 0
      %2136 = vmatpush1.bf16.msra.mxu0 0
      %2137 = vmatprep.subr.bf16.mxu0 0
      %2138 = vmatpush1.bf16.msra.mxu0 0
      %2139 = vmatprep.subr.bf16.mxu0 0
      %2140 = vmatpush1.bf16.msra.mxu0 0
      %2141 = vmatprep.subr.bf16.mxu0 0
      %2142 = vmatpush1.bf16.msra.mxu0 0
      %2143 = vmatprep.subr.bf16.mxu0 0
      %2144 = vmatpush1.bf16.msra.mxu0 0
      %2145 = vmatprep.subr.bf16.mxu0 0
      %2146 = vmatpush1.bf16.msra.mxu0 0
      %2147 = vmatprep.subr.bf16.mxu0 0
      %2148 = vmatpush1.bf16.msra.mxu0 0
      %2149 = vmatprep.subr.bf16.mxu0 0
      %2150 = vmatpush1.bf16.msra.mxu0 0
      %2151 = vmatprep.subr.bf16.mxu0 0
      %2152 = vmatpush1.bf16.msra.mxu0 0
      %2153 = vmatprep.subr.bf16.mxu0 0
      %2154 = vmatpush1.bf16.msra.mxu0 0
      %2155 = vmatprep.subr.bf16.mxu0 0
      %2156 = vmatpush1.bf16.msra.mxu0 0
      %2157 = vmatprep.subr.bf16.mxu0 0
      %2158 = vmatpush1.bf16.msra.mxu0 0
      %2159 = vmatprep.mubr.bf16.mxu0 0
      %2160 = vmatmul.mubr.bf16.gmra.mrb[0].mxu0 %v2122
      %v2161 = vpop.f32.mrb[0].mxu0
      %v2162 = vadd.f32 0.0, %v2161
      %v2163 = vpop.f32.mrb[0].mxu0
      %v2164 = vpop.f32.mrb[0].mxu0
      %v2165 = vpop.f32.mrb[0].mxu0
      %2166 = vdwg.mxu0
      %v2168 = vsel %vm1171, %v2068, 0
      %v2171 = vsel %vm2077, %v684, 0
      %2173 = vmatprep.subr.bf16.mxu0 0
      %2174 = vmatpush1.bf16.msra.mxu0 %v2171
      %2175 = vmatprep.subr.bf16.mxu0 0
      %2176 = vmatpush1.bf16.msra.mxu0 0
      %2177 = vmatprep.subr.bf16.mxu0 0
      %2178 = vmatpush1.bf16.msra.mxu0 0
      %2179 = vmatprep.subr.bf16.mxu0 0
      %2180 = vmatpush1.bf16.msra.mxu0 0
      %2181 = vmatprep.subr.bf16.mxu0 0
      %2182 = vmatpush1.bf16.msra.mxu0 0
      %2183 = vmatprep.subr.bf16.mxu0 0
      %2184 = vmatpush1.bf16.msra.mxu0 0
      %2185 = vmatprep.subr.bf16.mxu0 0
      %2186 = vmatpush1.bf16.msra.mxu0 0
      %2187 = vmatprep.subr.bf16.mxu0 0
      %2188 = vmatpush1.bf16.msra.mxu0 0
      %2189 = vmatprep.subr.bf16.mxu0 0
      %2190 = vmatpush1.bf16.msra.mxu0 0
      %2191 = vmatprep.subr.bf16.mxu0 0
      %2192 = vmatpush1.bf16.msra.mxu0 0
      %2193 = vmatprep.subr.bf16.mxu0 0
      %2194 = vmatpush1.bf16.msra.mxu0 0
      %2195 = vmatprep.subr.bf16.mxu0 0
      %2196 = vmatpush1.bf16.msra.mxu0 0
      %2197 = vmatprep.subr.bf16.mxu0 0
      %2198 = vmatpush1.bf16.msra.mxu0 0
      %2199 = vmatprep.subr.bf16.mxu0 0
      %2200 = vmatpush1.bf16.msra.mxu0 0
      %2201 = vmatprep.subr.bf16.mxu0 0
      %2202 = vmatpush1.bf16.msra.mxu0 0
      %2203 = vmatprep.subr.bf16.mxu0 0
      %2204 = vmatpush1.bf16.msra.mxu0 0
      %2205 = vmatprep.mubr.bf16.mxu0 0
      %2206 = vmatmul.mubr.bf16.gmra.mrb[0].mxu0 %v2168
      %v2207 = vpop.f32.mrb[0].mxu0
      %v2208 = vadd.f32 0.0, %v2207
      %v2209 = vpop.f32.mrb[0].mxu0
      %v2210 = vpop.f32.mrb[0].mxu0
      %v2211 = vpop.f32.mrb[0].mxu0
      %2212 = vdwg.mxu0
      %v2214 = vsel %vm1171, %v2069, 0
      %v2217 = vsel %vm2077, %v685, 0
      %2219 = vmatprep.subr.bf16.mxu0 0
      %2220 = vmatpush1.bf16.msra.mxu0 %v2217
      %2221 = vmatprep.subr.bf16.mxu0 0
      %2222 = vmatpush1.bf16.msra.mxu0 0
      %2223 = vmatprep.subr.bf16.mxu0 0
      %2224 = vmatpush1.bf16.msra.mxu0 0
      %2225 = vmatprep.subr.bf16.mxu0 0
      %2226 = vmatpush1.bf16.msra.mxu0 0
      %2227 = vmatprep.subr.bf16.mxu0 0
      %2228 = vmatpush1.bf16.msra.mxu0 0
      %2229 = vmatprep.subr.bf16.mxu0 0
      %2230 = vmatpush1.bf16.msra.mxu0 0
      %2231 = vmatprep.subr.bf16.mxu0 0
      %2232 = vmatpush1.bf16.msra.mxu0 0
      %2233 = vmatprep.subr.bf16.mxu0 0
      %2234 = vmatpush1.bf16.msra.mxu0 0
      %2235 = vmatprep.subr.bf16.mxu0 0
      %2236 = vmatpush1.bf16.msra.mxu0 0
      %2237 = vmatprep.subr.bf16.mxu0 0
      %2238 = vmatpush1.bf16.msra.mxu0 0
      %2239 = vmatprep.subr.bf16.mxu0 0
      %2240 = vmatpush1.bf16.msra.mxu0 0
      %2241 = vmatprep.subr.bf16.mxu0 0
      %2242 = vmatpush1.bf16.msra.mxu0 0
      %2243 = vmatprep.subr.bf16.mxu0 0
      %2244 = vmatpush1.bf16.msra.mxu0 0
      %2245 = vmatprep.subr.bf16.mxu0 0
      %2246 = vmatpush1.bf16.msra.mxu0 0
      %2247 = vmatprep.subr.bf16.mxu0 0
      %2248 = vmatpush1.bf16.msra.mxu0 0
      %2249 = vmatprep.subr.bf16.mxu0 0
      %2250 = vmatpush1.bf16.msra.mxu0 0
      %2251 = vmatprep.mubr.bf16.mxu0 0
      %2252 = vmatmul.mubr.bf16.gmra.mrb[0].mxu0 %v2214
      %v2253 = vpop.f32.mrb[0].mxu0
      %v2254 = vadd.f32 0.0, %v2253
      %v2255 = vpop.f32.mrb[0].mxu0
      %v2256 = vpop.f32.mrb[0].mxu0
      %v2257 = vpop.f32.mrb[0].mxu0
      %2258 = vdwg.mxu0
      %v2260 = vsel %vm1171, %v2070, 0
      %v2263 = vsel %vm2077, %v686, 0
      %2265 = vmatprep.subr.bf16.mxu0 0
      %2266 = vmatpush1.bf16.msra.mxu0 %v2263
      %2267 = vmatprep.subr.bf16.mxu0 0
      %2268 = vmatpush1.bf16.msra.mxu0 0
      %2269 = vmatprep.subr.bf16.mxu0 0
      %2270 = vmatpush1.bf16.msra.mxu0 0
      %2271 = vmatprep.subr.bf16.mxu0 0
      %2272 = vmatpush1.bf16.msra.mxu0 0
      %2273 = vmatprep.subr.bf16.mxu0 0
      %2274 = vmatpush1.bf16.msra.mxu0 0
      %2275 = vmatprep.subr.bf16.mxu0 0
      %2276 = vmatpush1.bf16.msra.mxu0 0
      %2277 = vmatprep.subr.bf16.mxu0 0
      %2278 = vmatpush1.bf16.msra.mxu0 0
      %2279 = vmatprep.subr.bf16.mxu0 0
      %2280 = vmatpush1.bf16.msra.mxu0 0
      %2281 = vmatprep.subr.bf16.mxu0 0
      %2282 = vmatpush1.bf16.msra.mxu0 0
      %2283 = vmatprep.subr.bf16.mxu0 0
      %2284 = vmatpush1.bf16.msra.mxu0 0
      %2285 = vmatprep.subr.bf16.mxu0 0
      %2286 = vmatpush1.bf16.msra.mxu0 0
      %2287 = vmatprep.subr.bf16.mxu0 0
      %2288 = vmatpush1.bf16.msra.mxu0 0
      %2289 = vmatprep.subr.bf16.mxu0 0
      %2290 = vmatpush1.bf16.msra.mxu0 0
      %2291 = vmatprep.subr.bf16.mxu0 0
      %2292 = vmatpush1.bf16.msra.mxu0 0
      %2293 = vmatprep.subr.bf16.mxu0 0
      %2294 = vmatpush1.bf16.msra.mxu0 0
      %2295 = vmatprep.subr.bf16.mxu0 0
      %2296 = vmatpush1.bf16.msra.mxu0 0
      %2297 = vmatprep.mubr.bf16.mxu0 0
      %2298 = vmatmul.mubr.bf16.gmra.mrb[0].mxu0 %v2260
      %v2299 = vpop.f32.mrb[0].mxu0
      %v2300 = vadd.f32 0.0, %v2299
      %v2301 = vpop.f32.mrb[0].mxu0
      %v2302 = vpop.f32.mrb[0].mxu0
      %v2303 = vpop.f32.mrb[0].mxu0
      %2304 = vdwg.mxu0
      %v2306 = vsel %vm1171, %v2071, 0
      %v2309 = vsel %vm2077, %v687, 0
      %2311 = vmatprep.subr.bf16.mxu0 0
      %2312 = vmatpush1.bf16.msra.mxu0 %v2309
      %2313 = vmatprep.subr.bf16.mxu0 0
      %2314 = vmatpush1.bf16.msra.mxu0 0
      %2315 = vmatprep.subr.bf16.mxu0 0
      %2316 = vmatpush1.bf16.msra.mxu0 0
      %2317 = vmatprep.subr.bf16.mxu0 0
      %2318 = vmatpush1.bf16.msra.mxu0 0
      %2319 = vmatprep.subr.bf16.mxu0 0
      %2320 = vmatpush1.bf16.msra.mxu0 0
      %2321 = vmatprep.subr.bf16.mxu0 0
      %2322 = vmatpush1.bf16.msra.mxu0 0
      %2323 = vmatprep.subr.bf16.mxu0 0
      %2324 = vmatpush1.bf16.msra.mxu0 0
      %2325 = vmatprep.subr.bf16.mxu0 0
      %2326 = vmatpush1.bf16.msra.mxu0 0
      %2327 = vmatprep.subr.bf16.mxu0 0
      %2328 = vmatpush1.bf16.msra.mxu0 0
      %2329 = vmatprep.subr.bf16.mxu0 0
      %2330 = vmatpush1.bf16.msra.mxu0 0
      %2331 = vmatprep.subr.bf16.mxu0 0
      %2332 = vmatpush1.bf16.msra.mxu0 0
      %2333 = vmatprep.subr.bf16.mxu0 0
      %2334 = vmatpush1.bf16.msra.mxu0 0
      %2335 = vmatprep.subr.bf16.mxu0 0
      %2336 = vmatpush1.bf16.msra.mxu0 0
      %2337 = vmatprep.subr.bf16.mxu0 0
      %2338 = vmatpush1.bf16.msra.mxu0 0
      %2339 = vmatprep.subr.bf16.mxu0 0
      %2340 = vmatpush1.bf16.msra.mxu0 0
      %2341 = vmatprep.subr.bf16.mxu0 0
      %2342 = vmatpush1.bf16.msra.mxu0 0
      %2343 = vmatprep.mubr.bf16.mxu0 0
      %2344 = vmatmul.mubr.bf16.gmra.mrb[0].mxu0 %v2306
      %v2345 = vpop.f32.mrb[0].mxu0
      %v2346 = vadd.f32 0.0, %v2345
      %v2347 = vpop.f32.mrb[0].mxu0
      %v2348 = vpop.f32.mrb[0].mxu0
      %v2349 = vpop.f32.mrb[0].mxu0
      %2350 = vdwg.mxu0
      %v2352 = vsel %vm1171, %v2072, 0
      %v2355 = vsel %vm2077, %v688, 0
      %2357 = vmatprep.subr.bf16.mxu0 0
      %2358 = vmatpush1.bf16.msra.mxu0 %v2355
      %2359 = vmatprep.subr.bf16.mxu0 0
      %2360 = vmatpush1.bf16.msra.mxu0 0
      %2361 = vmatprep.subr.bf16.mxu0 0
      %2362 = vmatpush1.bf16.msra.mxu0 0
      %2363 = vmatprep.subr.bf16.mxu0 0
      %2364 = vmatpush1.bf16.msra.mxu0 0
      %2365 = vmatprep.subr.bf16.mxu0 0
      %2366 = vmatpush1.bf16.msra.mxu0 0
      %2367 = vmatprep.subr.bf16.mxu0 0
      %2368 = vmatpush1.bf16.msra.mxu0 0
      %2369 = vmatprep.subr.bf16.mxu0 0
      %2370 = vmatpush1.bf16.msra.mxu0 0
      %2371 = vmatprep.subr.bf16.mxu0 0
      %2372 = vmatpush1.bf16.msra.mxu0 0
      %2373 = vmatprep.subr.bf16.mxu0 0
      %2374 = vmatpush1.bf16.msra.mxu0 0
      %2375 = vmatprep.subr.bf16.mxu0 0
      %2376 = vmatpush1.bf16.msra.mxu0 0
      %2377 = vmatprep.subr.bf16.mxu0 0
      %2378 = vmatpush1.bf16.msra.mxu0 0
      %2379 = vmatprep.subr.bf16.mxu0 0
      %2380 = vmatpush1.bf16.msra.mxu0 0
      %2381 = vmatprep.subr.bf16.mxu0 0
      %2382 = vmatpush1.bf16.msra.mxu0 0
      %2383 = vmatprep.subr.bf16.mxu0 0
      %2384 = vmatpush1.bf16.msra.mxu0 0
      %2385 = vmatprep.subr.bf16.mxu0 0
      %2386 = vmatpush1.bf16.msra.mxu0 0
      %2387 = vmatprep.subr.bf16.mxu0 0
      %2388 = vmatpush1.bf16.msra.mxu0 0
      %2389 = vmatprep.mubr.bf16.mxu0 0
      %2390 = vmatmul.mubr.bf16.gmra.mrb[0].mxu0 %v2352
      %v2391 = vpop.f32.mrb[0].mxu0
      %v2392 = vadd.f32 0.0, %v2391
      %v2393 = vpop.f32.mrb[0].mxu0
      %v2394 = vpop.f32.mrb[0].mxu0
      %v2395 = vpop.f32.mrb[0].mxu0
      %2396 = vdwg.mxu0
      %v2398 = vsel %vm1171, %v2073, 0
      %v2401 = vsel %vm2077, %v689, 0
      %2403 = vmatprep.subr.bf16.mxu0 0
      %2404 = vmatpush1.bf16.msra.mxu0 %v2401
      %2405 = vmatprep.subr.bf16.mxu0 0
      %2406 = vmatpush1.bf16.msra.mxu0 0
      %2407 = vmatprep.subr.bf16.mxu0 0
      %2408 = vmatpush1.bf16.msra.mxu0 0
      %2409 = vmatprep.subr.bf16.mxu0 0
      %2410 = vmatpush1.bf16.msra.mxu0 0
      %2411 = vmatprep.subr.bf16.mxu0 0
      %2412 = vmatpush1.bf16.msra.mxu0 0
      %2413 = vmatprep.subr.bf16.mxu0 0
      %2414 = vmatpush1.bf16.msra.mxu0 0
      %2415 = vmatprep.subr.bf16.mxu0 0
      %2416 = vmatpush1.bf16.msra.mxu0 0
      %2417 = vmatprep.subr.bf16.mxu0 0
      %2418 = vmatpush1.bf16.msra.mxu0 0
      %2419 = vmatprep.subr.bf16.mxu0 0
      %2420 = vmatpush1.bf16.msra.mxu0 0
      %2421 = vmatprep.subr.bf16.mxu0 0
      %2422 = vmatpush1.bf16.msra.mxu0 0
      %2423 = vmatprep.subr.bf16.mxu0 0
      %2424 = vmatpush1.bf16.msra.mxu0 0
      %2425 = vmatprep.subr.bf16.mxu0 0
      %2426 = vmatpush1.bf16.msra.mxu0 0
      %2427 = vmatprep.subr.bf16.mxu0 0
      %2428 = vmatpush1.bf16.msra.mxu0 0
      %2429 = vmatprep.subr.bf16.mxu0 0
      %2430 = vmatpush1.bf16.msra.mxu0 0
      %2431 = vmatprep.subr.bf16.mxu0 0
      %2432 = vmatpush1.bf16.msra.mxu0 0
      %2433 = vmatprep.subr.bf16.mxu0 0
      %2434 = vmatpush1.bf16.msra.mxu0 0
      %2435 = vmatprep.mubr.bf16.mxu0 0
      %2436 = vmatmul.mubr.bf16.gmra.mrb[0].mxu0 %v2398
      %v2437 = vpop.f32.mrb[0].mxu0
      %v2438 = vadd.f32 0.0, %v2437
      %v2439 = vpop.f32.mrb[0].mxu0
      %v2440 = vpop.f32.mrb[0].mxu0
      %v2441 = vpop.f32.mrb[0].mxu0
      %2442 = vdwg.mxu0
      %v2443 = vsel %vm752, %v2116, 0.0
      %v2444 = vsel %vm752, %v2162, 0.0
      %v2445 = vadd.f32 %v2443, %v2444
      %v2446 = vsel %vm752, %v2208, 0.0
      %v2447 = vadd.f32 %v2445, %v2446
      %v2448 = vsel %vm752, %v2254, 0.0
      %v2449 = vadd.f32 %v2447, %v2448
      %v2450 = vsel %vm752, %v2300, 0.0
      %v2451 = vadd.f32 %v2449, %v2450
      %v2452 = vsel %vm752, %v2346, 0.0
      %v2453 = vadd.f32 %v2451, %v2452
      %v2454 = vsel %vm752, %v2392, 0.0
      %v2455 = vadd.f32 %v2453, %v2454
      %v2456 = vsel %vm752, %v2438, 0.0
      %v2457 = vadd.f32 %v2455, %v2456
      %v2459 = vlaneseq
      %v2460 = vshrl.u32 %v2459, 7
      %v2461 = vsub.s32 0, %v2460
      %v2462 = vrot.slane %v690, %v2461
      %v2464 = vadd.f32 %v2457, %v2462
      %v2465 = vld [vmem:[%s6] sm:$0x1]
      %v2466 = vld [vmem:[%s7] sm:$0x1]
      %v2467 = vadd.f32 %v640, %v2464
      %v2468 = vsel %vm752, %v2467, 0.0
      %2469 = vadd.xlane.f32.xlu0 %v2468
      %v2470 = vpop.xlane.xlu0 %2469
      %v2471 = vrcp.pop 32.0
      %v2472 = vmul.f32 %v2470, %v2471
      %v2473 = vsub.f32 %v2467, %v2472
      %v2474 = vmul.f32 %v2473, %v2473
      %v2475 = vsel %vm752, %v2474, 0.0
      %2476 = vadd.xlane.f32.xlu0 %v2475
      %v2477 = vpop.xlane.xlu0 %2476
      %v2478 = vmul.f32 %v2477, %v2471
      %v2479 = vadd.f32 %v2478, 1e-05
      %v2480 = vrsqrt.pop %v2479
      %v2481 = vmul.f32 %v2473, %v2480
      %v2483 = vlaneseq
      %v2484 = vshrl.u32 %v2483, 7
      %v2485 = vsub.s32 0, %v2484
      %v2486 = vrot.slane %v2465, %v2485
      %v2488 = vmul.f32 %v2481, %v2486
      %v2490 = vlaneseq
      %v2491 = vshrl.u32 %v2490, 7
      %v2492 = vsub.s32 0, %v2491
      %v2493 = vrot.slane %v2466, %v2492
      %v2495 = vadd.f32 %v2488, %v2493
      %v2496 = vpack.c.bf16 %v641, %v641
      %v2497 = vld [vmem:[%s8] sm:$0xf]
      %v2498 = vld [vmem:[%s8 + $0x4] sm:$0xf]
      %v2499 = vld [vmem:[%s8 + $0x8] sm:$0xf]
      %v2500 = vld [vmem:[%s8 + $0xc] sm:$0xf]
      %v2501 = vld [vmem:[%s9] sm:$0x1]
      %v2506 = vunpack.c.l.b16 %v2497
      %v2507 = vunpack.c.l.b16 %v2498
      %v2508 = vunpack.c.l.b16 %v2499
      %v2509 = vunpack.c.l.b16 %v2500
      %v2510 = vpack.c.b16 %v2507, %v2506
      %v2511 = vpack.c.b16 %v2509, %v2508
      %v2515 = vsel %vm752, %v2496, 0
      %2517 = vmatprep.subr.bf16.mxu0 0
      %2518 = vmatpush1.bf16.msra.mxu0 %v2510
      %2519 = vmatprep.subr.bf16.mxu0 0
      %2520 = vmatpush1.bf16.msra.mxu0 %v2511
      %2521 = vmatprep.subr.bf16.mxu0 0
      %2522 = vmatpush1.bf16.msra.mxu0 0
      %2523 = vmatprep.subr.bf16.mxu0 0
      %2524 = vmatpush1.bf16.msra.mxu0 0
      %2525 = vmatprep.subr.bf16.mxu0 0
      %2526 = vmatpush1.bf16.msra.mxu0 0
      %2527 = vmatprep.subr.bf16.mxu0 0
      %2528 = vmatpush1.bf16.msra.mxu0 0
      %2529 = vmatprep.subr.bf16.mxu0 0
      %2530 = vmatpush1.bf16.msra.mxu0 0
      %2531 = vmatprep.subr.bf16.mxu0 0
      %2532 = vmatpush1.bf16.msra.mxu0 0
      %2533 = vmatprep.subr.bf16.mxu0 0
      %2534 = vmatpush1.bf16.msra.mxu0 0
      %2535 = vmatprep.subr.bf16.mxu0 0
      %2536 = vmatpush1.bf16.msra.mxu0 0
      %2537 = vmatprep.subr.bf16.mxu0 0
      %2538 = vmatpush1.bf16.msra.mxu0 0
      %2539 = vmatprep.subr.bf16.mxu0 0
      %2540 = vmatpush1.bf16.msra.mxu0 0
      %2541 = vmatprep.subr.bf16.mxu0 0
      %2542 = vmatpush1.bf16.msra.mxu0 0
      %2543 = vmatprep.subr.bf16.mxu0 0
      %2544 = vmatpush1.bf16.msra.mxu0 0
      %2545 = vmatprep.subr.bf16.mxu0 0
      %2546 = vmatpush1.bf16.msra.mxu0 0
      %2547 = vmatprep.subr.bf16.mxu0 0
      %2548 = vmatpush1.bf16.msra.mxu0 0
      %2549 = vmatprep.mubr.bf16.mxu0 0
      %2550 = vmatmul.mubr.bf16.gmra.mrb[0].mxu0 %v2515
      %v2551 = vpop.f32.mrb[0].mxu0
      %v2552 = vadd.f32 %v2501, %v2551
      %v2553 = vpop.f32.mrb[0].mxu0
      %v2554 = vpop.f32.mrb[0].mxu0
      %v2555 = vpop.f32.mrb[0].mxu0
      %2556 = vdwg.mxu0
      %v2557 = vpack.c.bf16 %v2552, %v2552
      %v2558 = vld [vmem:[%s10] sm:$0xf]
      %v2559 = vld [vmem:[%s10 + $0x4] sm:$0xf]
      %v2560 = vld [vmem:[%s10 + $0x8] sm:$0xf]
      %v2561 = vld [vmem:[%s10 + $0xc] sm:$0xf]
      %v2562 = vld [vmem:[%s11] sm:$0x1]
      %v2567 = vunpack.c.l.b16 %v2558
      %v2568 = vunpack.c.l.b16 %v2559
      %v2569 = vunpack.c.l.b16 %v2560
      %v2570 = vunpack.c.l.b16 %v2561
      %v2571 = vpack.c.b16 %v2568, %v2567
      %v2572 = vpack.c.b16 %v2570, %v2569
      %v2576 = vsel %vm752, %v2557, 0
      %2578 = vmatprep.subr.bf16.mxu0 0
      %2579 = vmatpush1.bf16.msra.mxu0 %v2571
      %2580 = vmatprep.subr.bf16.mxu0 0
      %2581 = vmatpush1.bf16.msra.mxu0 %v2572
      %2582 = vmatprep.subr.bf16.mxu0 0
      %2583 = vmatpush1.bf16.msra.mxu0 0
      %2584 = vmatprep.subr.bf16.mxu0 0
      %2585 = vmatpush1.bf16.msra.mxu0 0
      %2586 = vmatprep.subr.bf16.mxu0 0
      %2587 = vmatpush1.bf16.msra.mxu0 0
      %2588 = vmatprep.subr.bf16.mxu0 0
      %2589 = vmatpush1.bf16.msra.mxu0 0
      %2590 = vmatprep.subr.bf16.mxu0 0
      %2591 = vmatpush1.bf16.msra.mxu0 0
      %2592 = vmatprep.subr.bf16.mxu0 0
      %2593 = vmatpush1.bf16.msra.mxu0 0
      %2594 = vmatprep.subr.bf16.mxu0 0
      %2595 = vmatpush1.bf16.msra.mxu0 0
      %2596 = vmatprep.subr.bf16.mxu0 0
      %2597 = vmatpush1.bf16.msra.mxu0 0
      %2598 = vmatprep.subr.bf16.mxu0 0
      %2599 = vmatpush1.bf16.msra.mxu0 0
      %2600 = vmatprep.subr.bf16.mxu0 0
      %2601 = vmatpush1.bf16.msra.mxu0 0
      %2602 = vmatprep.subr.bf16.mxu0 0
      %2603 = vmatpush1.bf16.msra.mxu0 0
      %2604 = vmatprep.subr.bf16.mxu0 0
      %2605 = vmatpush1.bf16.msra.mxu0 0
      %2606 = vmatprep.subr.bf16.mxu0 0
      %2607 = vmatpush1.bf16.msra.mxu0 0
      %2608 = vmatprep.subr.bf16.mxu0 0
      %2609 = vmatpush1.bf16.msra.mxu0 0
      %2610 = vmatprep.mubr.bf16.mxu0 0
      %2611 = vmatmul.mubr.bf16.gmra.mrb[0].mxu0 %v2576
      %v2612 = vpop.f32.mrb[0].mxu0
      %v2613 = vadd.f32 %v2562, %v2612
      %v2614 = vpop.f32.mrb[0].mxu0
      %v2615 = vpop.f32.mrb[0].mxu0
      %v2616 = vpop.f32.mrb[0].mxu0
      %2617 = vdwg.mxu0
      %v2618 = vld [vmem:[%s12] sm:$0x1]
      %v2619 = vld [vmem:[%s13] sm:$0x1]
      %v2620 = vlaneseq
      %v2621 = vshrl.u32 %v2620, 7
      %v2622 = vsub.s32 0, %v2621
      %v2623 = vrot.slane %v2613, %v2622
      %v2624 = vadd.f32 %v2495, %v2623
      %v2625 = vsel %vm752, %v2624, 0.0
      %2626 = vadd.xlane.f32.xlu0 %v2625
      %v2627 = vpop.xlane.xlu0 %2626
      %v2628 = vmul.f32 %v2627, %v2471
      %v2629 = vsub.f32 %v2624, %v2628
      %v2630 = vmul.f32 %v2629, %v2629
      %v2631 = vsel %vm752, %v2630, 0.0
      %2632 = vadd.xlane.f32.xlu0 %v2631
      %v2633 = vpop.xlane.xlu0 %2632
      %v2634 = vmul.f32 %v2633, %v2471
      %v2635 = vadd.f32 %v2634, 1e-05
      %v2636 = vrsqrt.pop %v2635
      %v2637 = vmul.f32 %v2629, %v2636
      %v2639 = vlaneseq
      %v2640 = vshrl.u32 %v2639, 7
      %v2641 = vsub.s32 0, %v2640
      %v2642 = vrot.slane %v2618, %v2641
      %v2644 = vmul.f32 %v2637, %v2642
      %v2646 = vlaneseq
      %v2647 = vshrl.u32 %v2646, 7
      %v2648 = vsub.s32 0, %v2647
      %v2649 = vrot.slane %v2619, %v2648
      %v2651 = vadd.f32 %v2644, %v2649
      %v2652 = vpack.c.bf16 %v2651, %v2651
      %v2653 = vld [vmem:[%s14] sm:$0xff]
      %v2654 = vld [vmem:[%s14 + $0x8] sm:$0xff]
      %v2655 = vld [vmem:[%s14 + $0x10] sm:$0xff]
      %v2656 = vld [vmem:[%s14 + $0x18] sm:$0xff]
      %v2657 = vld [vmem:[%s14 + $0x20] sm:$0xff]
      %v2658 = vld [vmem:[%s14 + $0x28] sm:$0xff]
      %v2659 = vld [vmem:[%s14 + $0x30] sm:$0xff]
      %v2660 = vld [vmem:[%s14 + $0x38] sm:$0xff]
      %v2661 = vld [vmem:[%s14 + $0x40] sm:$0xff]
      %v2662 = vld [vmem:[%s14 + $0x48] sm:$0xff]
      %v2663 = vld [vmem:[%s14 + $0x50] sm:$0xff]
      %v2664 = vld [vmem:[%s14 + $0x58] sm:$0xff]
      %v2665 = vld [vmem:[%s14 + $0x60] sm:$0xff]
      %v2666 = vld [vmem:[%s14 + $0x68] sm:$0xff]
      %v2667 = vld [vmem:[%s14 + $0x70] sm:$0xff]
      %v2668 = vld [vmem:[%s14 + $0x78] sm:$0xff]
      %v2669 = vld [vmem:[%s14 + $0x80] sm:$0xff]
      %v2670 = vld [vmem:[%s14 + $0x88] sm:$0xff]
      %v2671 = vld [vmem:[%s14 + $0x90] sm:$0xff]
      %v2672 = vld [vmem:[%s14 + $0x98] sm:$0xff]
      %v2673 = vld [vmem:[%s14 + $0xa0] sm:$0xff]
      %v2674 = vld [vmem:[%s14 + $0xa8] sm:$0xff]
      %v2675 = vld [vmem:[%s14 + $0xb0] sm:$0xff]
      %v2676 = vld [vmem:[%s14 + $0xb8] sm:$0xff]
      %v2677 = vld [vmem:[%s14 + $0xc0] sm:$0xff]
      %v2678 = vld [vmem:[%s14 + $0xc8] sm:$0xff]
      %v2679 = vld [vmem:[%s14 + $0xd0] sm:$0xff]
      %v2680 = vld [vmem:[%s14 + $0xd8] sm:$0xff]
      %v2681 = vld [vmem:[%s14 + $0xe0] sm:$0xff]
      %v2682 = vld [vmem:[%s14 + $0xe8] sm:$0xff]
      %v2683 = vld [vmem:[%s14 + $0xf0] sm:$0xff]
      %v2684 = vld [vmem:[%s14 + $0xf8] sm:$0xff]
      %v2685 = vld [vmem:[%s15] sm:$0xff]
      %v2686 = vld [vmem:[%s15 + $0x8] sm:$0xff]
      %v2689 = vlaneseq
      %v2690 = vshrl.u32 %v2689, 7
      %v2691 = vsub.s32 0, %v2690
      %v2692 = vrot.slane %v2685, %v2691
      %v2693 = vlaneseq
      %v2694 = vshrl.u32 %v2693, 7
      %v2695 = vsub.s32 1, %v2694
      %v2696 = vrot.slane %v2685, %v2695
      %v2697 = vlaneseq
      %v2698 = vshrl.u32 %v2697, 7
      %v2699 = vsub.s32 2, %v2698
      %v2700 = vrot.slane %v2685, %v2699
      %v2701 = vlaneseq
      %v2702 = vshrl.u32 %v2701, 7
      %v2703 = vsub.s32 3, %v2702
      %v2704 = vrot.slane %v2685, %v2703
      %v2705 = vlaneseq
      %v2706 = vshrl.u32 %v2705, 7
      %v2707 = vsub.s32 4, %v2706
      %v2708 = vrot.slane %v2685, %v2707
      %v2709 = vlaneseq
      %v2710 = vshrl.u32 %v2709, 7
      %v2711 = vsub.s32 5, %v2710
      %v2712 = vrot.slane %v2685, %v2711
      %v2713 = vlaneseq
      %v2714 = vshrl.u32 %v2713, 7
      %v2715 = vsub.s32 6, %v2714
      %v2716 = vrot.slane %v2685, %v2715
      %v2717 = vlaneseq
      %v2718 = vshrl.u32 %v2717, 7
      %v2719 = vsub.s32 7, %v2718
      %v2720 = vrot.slane %v2685, %v2719
      %v2721 = vlaneseq
      %v2722 = vshrl.u32 %v2721, 7
      %v2723 = vsub.s32 0, %v2722
      %v2724 = vrot.slane %v2686, %v2723
      %v2725 = vlaneseq
      %v2726 = vshrl.u32 %v2725, 7
      %v2727 = vsub.s32 1, %v2726
      %v2728 = vrot.slane %v2686, %v2727
      %v2729 = vlaneseq
      %v2730 = vshrl.u32 %v2729, 7
      %v2731 = vsub.s32 2, %v2730
      %v2732 = vrot.slane %v2686, %v2731
      %v2733 = vlaneseq
      %v2734 = vshrl.u32 %v2733, 7
      %v2735 = vsub.s32 3, %v2734
      %v2736 = vrot.slane %v2686, %v2735
      %v2737 = vlaneseq
      %v2738 = vshrl.u32 %v2737, 7
      %v2739 = vsub.s32 4, %v2738
      %v2740 = vrot.slane %v2686, %v2739
      %v2741 = vlaneseq
      %v2742 = vshrl.u32 %v2741, 7
      %v2743 = vsub.s32 5, %v2742
      %v2744 = vrot.slane %v2686, %v2743
      %v2745 = vlaneseq
      %v2746 = vshrl.u32 %v2745, 7
      %v2747 = vsub.s32 6, %v2746
      %v2748 = vrot.slane %v2686, %v2747
      %v2749 = vlaneseq
      %v2750 = vshrl.u32 %v2749, 7
      %v2751 = vsub.s32 7, %v2750
      %v2752 = vrot.slane %v2686, %v2751
      %v2801 = vunpack.c.l.b16 %v2653
      %v2802 = vunpack.c.h.b16 %v2653
      %v2803 = vunpack.c.l.b16 %v2654
      %v2804 = vunpack.c.h.b16 %v2654
      %v2805 = vunpack.c.l.b16 %v2655
      %v2806 = vunpack.c.h.b16 %v2655
      %v2807 = vunpack.c.l.b16 %v2656
      %v2808 = vunpack.c.h.b16 %v2656
      %v2809 = vunpack.c.l.b16 %v2657
      %v2810 = vunpack.c.h.b16 %v2657
      %v2811 = vunpack.c.l.b16 %v2658
      %v2812 = vunpack.c.h.b16 %v2658
      %v2813 = vunpack.c.l.b16 %v2659
      %v2814 = vunpack.c.h.b16 %v2659
      %v2815 = vunpack.c.l.b16 %v2660
      %v2816 = vunpack.c.h.b16 %v2660
      %v2817 = vunpack.c.l.b16 %v2661
      %v2818 = vunpack.c.h.b16 %v2661
      %v2819 = vunpack.c.l.b16 %v2662
      %v2820 = vunpack.c.h.b16 %v2662
      %v2821 = vunpack.c.l.b16 %v2663
      %v2822 = vunpack.c.h.b16 %v2663
      %v2823 = vunpack.c.l.b16 %v2664
      %v2824 = vunpack.c.h.b16 %v2664
      %v2825 = vunpack.c.l.b16 %v2665
      %v2826 = vunpack.c.h.b16 %v2665
      %v2827 = vunpack.c.l.b16 %v2666
      %v2828 = vunpack.c.h.b16 %v2666
      %v2829 = vunpack.c.l.b16 %v2667
      %v2830 = vunpack.c.h.b16 %v2667
      %v2831 = vunpack.c.l.b16 %v2668
      %v2832 = vunpack.c.h.b16 %v2668
      %v2833 = vunpack.c.l.b16 %v2669
      %v2834 = vunpack.c.h.b16 %v2669
      %v2835 = vunpack.c.l.b16 %v2670
      %v2836 = vunpack.c.h.b16 %v2670
      %v2837 = vunpack.c.l.b16 %v2671
      %v2838 = vunpack.c.h.b16 %v2671
      %v2839 = vunpack.c.l.b16 %v2672
      %v2840 = vunpack.c.h.b16 %v2672
      %v2841 = vunpack.c.l.b16 %v2673
      %v2842 = vunpack.c.h.b16 %v2673
      %v2843 = vunpack.c.l.b16 %v2674
      %v2844 = vunpack.c.h.b16 %v2674
      %v2845 = vunpack.c.l.b16 %v2675
      %v2846 = vunpack.c.h.b16 %v2675
      %v2847 = vunpack.c.l.b16 %v2676
      %v2848 = vunpack.c.h.b16 %v2676
      %v2849 = vunpack.c.l.b16 %v2677
      %v2850 = vunpack.c.h.b16 %v2677
      %v2851 = vunpack.c.l.b16 %v2678
      %v2852 = vunpack.c.h.b16 %v2678
      %v2853 = vunpack.c.l.b16 %v2679
      %v2854 = vunpack.c.h.b16 %v2679
      %v2855 = vunpack.c.l.b16 %v2680
      %v2856 = vunpack.c.h.b16 %v2680
      %v2857 = vunpack.c.l.b16 %v2681
      %v2858 = vunpack.c.h.b16 %v2681
      %v2859 = vunpack.c.l.b16 %v2682
      %v2860 = vunpack.c.h.b16 %v2682
      %v2861 = vunpack.c.l.b16 %v2683
      %v2862 = vunpack.c.h.b16 %v2683
      %v2863 = vunpack.c.l.b16 %v2684
      %v2864 = vunpack.c.h.b16 %v2684
      %v2865 = vpack.c.b16 %v2817, %v2801
      %v2866 = vpack.c.b16 %v2818, %v2802
      %v2867 = vpack.c.b16 %v2819, %v2803
      %v2868 = vpack.c.b16 %v2820, %v2804
      %v2869 = vpack.c.b16 %v2821, %v2805
      %v2870 = vpack.c.b16 %v2822, %v2806
      %v2871 = vpack.c.b16 %v2823, %v2807
      %v2872 = vpack.c.b16 %v2824, %v2808
      %v2873 = vpack.c.b16 %v2825, %v2809
      %v2874 = vpack.c.b16 %v2826, %v2810
      %v2875 = vpack.c.b16 %v2827, %v2811
      %v2876 = vpack.c.b16 %v2828, %v2812
      %v2877 = vpack.c.b16 %v2829, %v2813
      %v2878 = vpack.c.b16 %v2830, %v2814
      %v2879 = vpack.c.b16 %v2831, %v2815
      %v2880 = vpack.c.b16 %v2832, %v2816
      %v2881 = vpack.c.b16 %v2849, %v2833
      %v2882 = vpack.c.b16 %v2850, %v2834
      %v2883 = vpack.c.b16 %v2851, %v2835
      %v2884 = vpack.c.b16 %v2852, %v2836
      %v2885 = vpack.c.b16 %v2853, %v2837
      %v2886 = vpack.c.b16 %v2854, %v2838
      %v2887 = vpack.c.b16 %v2855, %v2839
      %v2888 = vpack.c.b16 %v2856, %v2840
      %v2889 = vpack.c.b16 %v2857, %v2841
      %v2890 = vpack.c.b16 %v2858, %v2842
      %v2891 = vpack.c.b16 %v2859, %v2843
      %v2892 = vpack.c.b16 %v2860, %v2844
      %v2893 = vpack.c.b16 %v2861, %v2845
      %v2894 = vpack.c.b16 %v2862, %v2846
      %v2895 = vpack.c.b16 %v2863, %v2847
      %v2896 = vpack.c.b16 %v2864, %v2848
      %v2930 = vsel %vm752, %v2652, 0
      %2932 = vmatprep.subr.bf16.mxu0 %v2866
      %2933 = vmatpush1.bf16.msra.mxu0 %v2865
      %2934 = vmatprep.subr.bf16.mxu0 %v2882
      %2935 = vmatpush1.bf16.msra.mxu0 %v2881
      %2936 = vmatprep.subr.bf16.mxu0 0
      %2937 = vmatpush1.bf16.msra.mxu0 0
      %2938 = vmatprep.subr.bf16.mxu0 0
      %2939 = vmatpush1.bf16.msra.mxu0 0
      %2940 = vmatprep.subr.bf16.mxu0 0
      %2941 = vmatpush1.bf16.msra.mxu0 0
      %2942 = vmatprep.subr.bf16.mxu0 0
      %2943 = vmatpush1.bf16.msra.mxu0 0
      %2944 = vmatprep.subr.bf16.mxu0 0
      %2945 = vmatpush1.bf16.msra.mxu0 0
      %2946 = vmatprep.subr.bf16.mxu0 0
      %2947 = vmatpush1.bf16.msra.mxu0 0
      %2948 = vmatprep.subr.bf16.mxu0 0
      %2949 = vmatpush1.bf16.msra.mxu0 0
      %2950 = vmatprep.subr.bf16.mxu0 0
      %2951 = vmatpush1.bf16.msra.mxu0 0
      %2952 = vmatprep.subr.bf16.mxu0 0
      %2953 = vmatpush1.bf16.msra.mxu0 0
      %2954 = vmatprep.subr.bf16.mxu0 0
      %2955 = vmatpush1.bf16.msra.mxu0 0
      %2956 = vmatprep.subr.bf16.mxu0 0
      %2957 = vmatpush1.bf16.msra.mxu0 0
      %2958 = vmatprep.subr.bf16.mxu0 0
      %2959 = vmatpush1.bf16.msra.mxu0 0
      %2960 = vmatprep.subr.bf16.mxu0 0
      %2961 = vmatpush1.bf16.msra.mxu0 0
      %2962 = vmatprep.subr.bf16.mxu0 0
      %2963 = vmatpush1.bf16.msra.mxu0 0
      %2964 = vmatprep.mubr.bf16.mxu0 0
      %2965 = vmatmul.mubr.bf16.gmra.mrb[0].mxu0 %v2930
      %v2966 = vpop.f32.mrb[0].mxu0
      %v2967 = vadd.f32 %v2692, %v2966
      %v2968 = vpop.f32.mrb[0].mxu0
      %v2969 = vadd.f32 %v2696, %v2968
      %v2970 = vpop.f32.mrb[0].mxu0
      %v2971 = vpop.f32.mrb[0].mxu0
      %2972 = vdwg.mxu0
      %2973 = vmatprep.subr.bf16.mxu0 %v2868
      %2974 = vmatpush1.bf16.msra.mxu0 %v2867
      %2975 = vmatprep.subr.bf16.mxu0 %v2884
      %2976 = vmatpush1.bf16.msra.mxu0 %v2883
      %2977 = vmatprep.subr.bf16.mxu0 0
      %2978 = vmatpush1.bf16.msra.mxu0 0
      %2979 = vmatprep.subr.bf16.mxu0 0
      %2980 = vmatpush1.bf16.msra.mxu0 0
      %2981 = vmatprep.subr.bf16.mxu0 0
      %2982 = vmatpush1.bf16.msra.mxu0 0
      %2983 = vmatprep.subr.bf16.mxu0 0
      %2984 = vmatpush1.bf16.msra.mxu0 0
      %2985 = vmatprep.subr.bf16.mxu0 0
      %2986 = vmatpush1.bf16.msra.mxu0 0
      %2987 = vmatprep.subr.bf16.mxu0 0
      %2988 = vmatpush1.bf16.msra.mxu0 0
      %2989 = vmatprep.subr.bf16.mxu0 0
      %2990 = vmatpush1.bf16.msra.mxu0 0
      %2991 = vmatprep.subr.bf16.mxu0 0
      %2992 = vmatpush1.bf16.msra.mxu0 0
      %2993 = vmatprep.subr.bf16.mxu0 0
      %2994 = vmatpush1.bf16.msra.mxu0 0
      %2995 = vmatprep.subr.bf16.mxu0 0
      %2996 = vmatpush1.bf16.msra.mxu0 0
      %2997 = vmatprep.subr.bf16.mxu0 0
      %2998 = vmatpush1.bf16.msra.mxu0 0
      %2999 = vmatprep.subr.bf16.mxu0 0
      %3000 = vmatpush1.bf16.msra.mxu0 0
      %3001 = vmatprep.subr.bf16.mxu0 0
      %3002 = vmatpush1.bf16.msra.mxu0 0
      %3003 = vmatprep.subr.bf16.mxu0 0
      %3004 = vmatpush1.bf16.msra.mxu0 0
      %3005 = vmatprep.mubr.bf16.mxu0 0
      %3006 = vmatmul.mubr.bf16.gmra.mrb[0].mxu0 %v2930
      %v3007 = vpop.f32.mrb[0].mxu0
      %v3008 = vadd.f32 %v2700, %v3007
      %v3009 = vpop.f32.mrb[0].mxu0
      %v3010 = vadd.f32 %v2704, %v3009
      %v3011 = vpop.f32.mrb[0].mxu0
      %v3012 = vpop.f32.mrb[0].mxu0
      %3013 = vdwg.mxu0
      %3014 = vmatprep.subr.bf16.mxu0 %v2870
      %3015 = vmatpush1.bf16.msra.mxu0 %v2869
      %3016 = vmatprep.subr.bf16.mxu0 %v2886
      %3017 = vmatpush1.bf16.msra.mxu0 %v2885
      %3018 = vmatprep.subr.bf16.mxu0 0
      %3019 = vmatpush1.bf16.msra.mxu0 0
      %3020 = vmatprep.subr.bf16.mxu0 0
      %3021 = vmatpush1.bf16.msra.mxu0 0
      %3022 = vmatprep.subr.bf16.mxu0 0
      %3023 = vmatpush1.bf16.msra.mxu0 0
      %3024 = vmatprep.subr.bf16.mxu0 0
      %3025 = vmatpush1.bf16.msra.mxu0 0
      %3026 = vmatprep.subr.bf16.mxu0 0
      %3027 = vmatpush1.bf16.msra.mxu0 0
      %3028 = vmatprep.subr.bf16.mxu0 0
      %3029 = vmatpush1.bf16.msra.mxu0 0
      %3030 = vmatprep.subr.bf16.mxu0 0
      %3031 = vmatpush1.bf16.msra.mxu0 0
      %3032 = vmatprep.subr.bf16.mxu0 0
      %3033 = vmatpush1.bf16.msra.mxu0 0
      %3034 = vmatprep.subr.bf16.mxu0 0
      %3035 = vmatpush1.bf16.msra.mxu0 0
      %3036 = vmatprep.subr.bf16.mxu0 0
      %3037 = vmatpush1.bf16.msra.mxu0 0
      %3038 = vmatprep.subr.bf16.mxu0 0
      %3039 = vmatpush1.bf16.msra.mxu0 0
      %3040 = vmatprep.subr.bf16.mxu0 0
      %3041 = vmatpush1.bf16.msra.mxu0 0
      %3042 = vmatprep.subr.bf16.mxu0 0
      %3043 = vmatpush1.bf16.msra.mxu0 0
      %3044 = vmatprep.subr.bf16.mxu0 0
      %3045 = vmatpush1.bf16.msra.mxu0 0
      %3046 = vmatprep.mubr.bf16.mxu0 0
      %3047 = vmatmul.mubr.bf16.gmra.mrb[0].mxu0 %v2930
      %v3048 = vpop.f32.mrb[0].mxu0
      %v3049 = vadd.f32 %v2708, %v3048
      %v3050 = vpop.f32.mrb[0].mxu0
      %v3051 = vadd.f32 %v2712, %v3050
      %v3052 = vpop.f32.mrb[0].mxu0
      %v3053 = vpop.f32.mrb[0].mxu0
      %3054 = vdwg.mxu0
      %3055 = vmatprep.subr.bf16.mxu0 %v2872
      %3056 = vmatpush1.bf16.msra.mxu0 %v2871
      %3057 = vmatprep.subr.bf16.mxu0 %v2888
      %3058 = vmatpush1.bf16.msra.mxu0 %v2887
      %3059 = vmatprep.subr.bf16.mxu0 0
      %3060 = vmatpush1.bf16.msra.mxu0 0
      %3061 = vmatprep.subr.bf16.mxu0 0
      %3062 = vmatpush1.bf16.msra.mxu0 0
      %3063 = vmatprep.subr.bf16.mxu0 0
      %3064 = vmatpush1.bf16.msra.mxu0 0
      %3065 = vmatprep.subr.bf16.mxu0 0
      %3066 = vmatpush1.bf16.msra.mxu0 0
      %3067 = vmatprep.subr.bf16.mxu0 0
      %3068 = vmatpush1.bf16.msra.mxu0 0
      %3069 = vmatprep.subr.bf16.mxu0 0
      %3070 = vmatpush1.bf16.msra.mxu0 0
      %3071 = vmatprep.subr.bf16.mxu0 0
      %3072 = vmatpush1.bf16.msra.mxu0 0
      %3073 = vmatprep.subr.bf16.mxu0 0
      %3074 = vmatpush1.bf16.msra.mxu0 0
      %3075 = vmatprep.subr.bf16.mxu0 0
      %3076 = vmatpush1.bf16.msra.mxu0 0
      %3077 = vmatprep.subr.bf16.mxu0 0
      %3078 = vmatpush1.bf16.msra.mxu0 0
      %3079 = vmatprep.subr.bf16.mxu0 0
      %3080 = vmatpush1.bf16.msra.mxu0 0
      %3081 = vmatprep.subr.bf16.mxu0 0
      %3082 = vmatpush1.bf16.msra.mxu0 0
      %3083 = vmatprep.subr.bf16.mxu0 0
      %3084 = vmatpush1.bf16.msra.mxu0 0
      %3085 = vmatprep.subr.bf16.mxu0 0
      %3086 = vmatpush1.bf16.msra.mxu0 0
      %3087 = vmatprep.mubr.bf16.mxu0 0
      %3088 = vmatmul.mubr.bf16.gmra.mrb[0].mxu0 %v2930
      %v3089 = vpop.f32.mrb[0].mxu0
      %v3090 = vadd.f32 %v2716, %v3089
      %v3091 = vpop.f32.mrb[0].mxu0
      %v3092 = vadd.f32 %v2720, %v3091
      %v3093 = vpop.f32.mrb[0].mxu0
      %v3094 = vpop.f32.mrb[0].mxu0
      %3095 = vdwg.mxu0
      %3096 = vmatprep.subr.bf16.mxu0 %v2874
      %3097 = vmatpush1.bf16.msra.mxu0 %v2873
      %3098 = vmatprep.subr.bf16.mxu0 %v2890
      %3099 = vmatpush1.bf16.msra.mxu0 %v2889
      %3100 = vmatprep.subr.bf16.mxu0 0
      %3101 = vmatpush1.bf16.msra.mxu0 0
      %3102 = vmatprep.subr.bf16.mxu0 0
      %3103 = vmatpush1.bf16.msra.mxu0 0
      %3104 = vmatprep.subr.bf16.mxu0 0
      %3105 = vmatpush1.bf16.msra.mxu0 0
      %3106 = vmatprep.subr.bf16.mxu0 0
      %3107 = vmatpush1.bf16.msra.mxu0 0
      %3108 = vmatprep.subr.bf16.mxu0 0
      %3109 = vmatpush1.bf16.msra.mxu0 0
      %3110 = vmatprep.subr.bf16.mxu0 0
      %3111 = vmatpush1.bf16.msra.mxu0 0
      %3112 = vmatprep.subr.bf16.mxu0 0
      %3113 = vmatpush1.bf16.msra.mxu0 0
      %3114 = vmatprep.subr.bf16.mxu0 0
      %3115 = vmatpush1.bf16.msra.mxu0 0
      %3116 = vmatprep.subr.bf16.mxu0 0
      %3117 = vmatpush1.bf16.msra.mxu0 0
      %3118 = vmatprep.subr.bf16.mxu0 0
      %3119 = vmatpush1.bf16.msra.mxu0 0
      %3120 = vmatprep.subr.bf16.mxu0 0
      %3121 = vmatpush1.bf16.msra.mxu0 0
      %3122 = vmatprep.subr.bf16.mxu0 0
      %3123 = vmatpush1.bf16.msra.mxu0 0
      %3124 = vmatprep.subr.bf16.mxu0 0
      %3125 = vmatpush1.bf16.msra.mxu0 0
      %3126 = vmatprep.subr.bf16.mxu0 0
      %3127 = vmatpush1.bf16.msra.mxu0 0
      %3128 = vmatprep.mubr.bf16.mxu0 0
      %3129 = vmatmul.mubr.bf16.gmra.mrb[0].mxu0 %v2930
      %v3130 = vpop.f32.mrb[0].mxu0
      %v3131 = vadd.f32 %v2724, %v3130
      %v3132 = vpop.f32.mrb[0].mxu0
      %v3133 = vadd.f32 %v2728, %v3132
      %v3134 = vpop.f32.mrb[0].mxu0
      %v3135 = vpop.f32.mrb[0].mxu0
      %3136 = vdwg.mxu0
      %3137 = vmatprep.subr.bf16.mxu0 %v2876
      %3138 = vmatpush1.bf16.msra.mxu0 %v2875
      %3139 = vmatprep.subr.bf16.mxu0 %v2892
      %3140 = vmatpush1.bf16.msra.mxu0 %v2891
      %3141 = vmatprep.subr.bf16.mxu0 0
      %3142 = vmatpush1.bf16.msra.mxu0 0
      %3143 = vmatprep.subr.bf16.mxu0 0
      %3144 = vmatpush1.bf16.msra.mxu0 0
      %3145 = vmatprep.subr.bf16.mxu0 0
      %3146 = vmatpush1.bf16.msra.mxu0 0
      %3147 = vmatprep.subr.bf16.mxu0 0
      %3148 = vmatpush1.bf16.msra.mxu0 0
      %3149 = vmatprep.subr.bf16.mxu0 0
      %3150 = vmatpush1.bf16.msra.mxu0 0
      %3151 = vmatprep.subr.bf16.mxu0 0
      %3152 = vmatpush1.bf16.msra.mxu0 0
      %3153 = vmatprep.subr.bf16.mxu0 0
      %3154 = vmatpush1.bf16.msra.mxu0 0
      %3155 = vmatprep.subr.bf16.mxu0 0
      %3156 = vmatpush1.bf16.msra.mxu0 0
      %3157 = vmatprep.subr.bf16.mxu0 0
      %3158 = vmatpush1.bf16.msra.mxu0 0
      %3159 = vmatprep.subr.bf16.mxu0 0
      %3160 = vmatpush1.bf16.msra.mxu0 0
      %3161 = vmatprep.subr.bf16.mxu0 0
      %3162 = vmatpush1.bf16.msra.mxu0 0
      %3163 = vmatprep.subr.bf16.mxu0 0
      %3164 = vmatpush1.bf16.msra.mxu0 0
      %3165 = vmatprep.subr.bf16.mxu0 0
      %3166 = vmatpush1.bf16.msra.mxu0 0
      %3167 = vmatprep.subr.bf16.mxu0 0
      %3168 = vmatpush1.bf16.msra.mxu0 0
      %3169 = vmatprep.mubr.bf16.mxu0 0
      %3170 = vmatmul.mubr.bf16.gmra.mrb[0].mxu0 %v2930
      %v3171 = vpop.f32.mrb[0].mxu0
      %v3172 = vadd.f32 %v2732, %v3171
      %v3173 = vpop.f32.mrb[0].mxu0
      %v3174 = vadd.f32 %v2736, %v3173
      %v3175 = vpop.f32.mrb[0].mxu0
      %v3176 = vpop.f32.mrb[0].mxu0
      %3177 = vdwg.mxu0
      %3178 = vmatprep.subr.bf16.mxu0 %v2878
      %3179 = vmatpush1.bf16.msra.mxu0 %v2877
      %3180 = vmatprep.subr.bf16.mxu0 %v2894
      %3181 = vmatpush1.bf16.msra.mxu0 %v2893
      %3182 = vmatprep.subr.bf16.mxu0 0
      %3183 = vmatpush1.bf16.msra.mxu0 0
      %3184 = vmatprep.subr.bf16.mxu0 0
      %3185 = vmatpush1.bf16.msra.mxu0 0
      %3186 = vmatprep.subr.bf16.mxu0 0
      %3187 = vmatpush1.bf16.msra.mxu0 0
      %3188 = vmatprep.subr.bf16.mxu0 0
      %3189 = vmatpush1.bf16.msra.mxu0 0
      %3190 = vmatprep.subr.bf16.mxu0 0
      %3191 = vmatpush1.bf16.msra.mxu0 0
      %3192 = vmatprep.subr.bf16.mxu0 0
      %3193 = vmatpush1.bf16.msra.mxu0 0
      %3194 = vmatprep.subr.bf16.mxu0 0
      %3195 = vmatpush1.bf16.msra.mxu0 0
      %3196 = vmatprep.subr.bf16.mxu0 0
      %3197 = vmatpush1.bf16.msra.mxu0 0
      %3198 = vmatprep.subr.bf16.mxu0 0
      %3199 = vmatpush1.bf16.msra.mxu0 0
      %3200 = vmatprep.subr.bf16.mxu0 0
      %3201 = vmatpush1.bf16.msra.mxu0 0
      %3202 = vmatprep.subr.bf16.mxu0 0
      %3203 = vmatpush1.bf16.msra.mxu0 0
      %3204 = vmatprep.subr.bf16.mxu0 0
      %3205 = vmatpush1.bf16.msra.mxu0 0
      %3206 = vmatprep.subr.bf16.mxu0 0
      %3207 = vmatpush1.bf16.msra.mxu0 0
      %3208 = vmatprep.subr.bf16.mxu0 0
      %3209 = vmatpush1.bf16.msra.mxu0 0
      %3210 = vmatprep.mubr.bf16.mxu0 0
      %3211 = vmatmul.mubr.bf16.gmra.mrb[0].mxu0 %v2930
      %v3212 = vpop.f32.mrb[0].mxu0
      %v3213 = vadd.f32 %v2740, %v3212
      %v3214 = vpop.f32.mrb[0].mxu0
      %v3215 = vadd.f32 %v2744, %v3214
      %v3216 = vpop.f32.mrb[0].mxu0
      %v3217 = vpop.f32.mrb[0].mxu0
      %3218 = vdwg.mxu0
      %3219 = vmatprep.subr.bf16.mxu0 %v2880
      %3220 = vmatpush1.bf16.msra.mxu0 %v2879
      %3221 = vmatprep.subr.bf16.mxu0 %v2896
      %3222 = vmatpush1.bf16.msra.mxu0 %v2895
      %3223 = vmatprep.subr.bf16.mxu0 0
      %3224 = vmatpush1.bf16.msra.mxu0 0
      %3225 = vmatprep.subr.bf16.mxu0 0
      %3226 = vmatpush1.bf16.msra.mxu0 0
      %3227 = vmatprep.subr.bf16.mxu0 0
      %3228 = vmatpush1.bf16.msra.mxu0 0
      %3229 = vmatprep.subr.bf16.mxu0 0
      %3230 = vmatpush1.bf16.msra.mxu0 0
      %3231 = vmatprep.subr.bf16.mxu0 0
      %3232 = vmatpush1.bf16.msra.mxu0 0
      %3233 = vmatprep.subr.bf16.mxu0 0
      %3234 = vmatpush1.bf16.msra.mxu0 0
      %3235 = vmatprep.subr.bf16.mxu0 0
      %3236 = vmatpush1.bf16.msra.mxu0 0
      %3237 = vmatprep.subr.bf16.mxu0 0
      %3238 = vmatpush1.bf16.msra.mxu0 0
      %3239 = vmatprep.subr.bf16.mxu0 0
      %3240 = vmatpush1.bf16.msra.mxu0 0
      %3241 = vmatprep.subr.bf16.mxu0 0
      %3242 = vmatpush1.bf16.msra.mxu0 0
      %3243 = vmatprep.subr.bf16.mxu0 0
      %3244 = vmatpush1.bf16.msra.mxu0 0
      %3245 = vmatprep.subr.bf16.mxu0 0
      %3246 = vmatpush1.bf16.msra.mxu0 0
      %3247 = vmatprep.subr.bf16.mxu0 0
      %3248 = vmatpush1.bf16.msra.mxu0 0
      %3249 = vmatprep.subr.bf16.mxu0 0
      %3250 = vmatpush1.bf16.msra.mxu0 0
      %3251 = vmatprep.mubr.bf16.mxu0 0
      %3252 = vmatmul.mubr.bf16.gmra.mrb[0].mxu0 %v2930
      %v3253 = vpop.f32.mrb[0].mxu0
      %v3254 = vadd.f32 %v2748, %v3253
      %v3255 = vpop.f32.mrb[0].mxu0
      %v3256 = vadd.f32 %v2752, %v3255
      %v3257 = vpop.f32.mrb[0].mxu0
      %v3258 = vpop.f32.mrb[0].mxu0
      %3259 = vdwg.mxu0
      %v3260 = vmax.f32 %v2967, 0.0
      %v3261 = vmax.f32 %v2969, 0.0
      %v3262 = vmax.f32 %v3008, 0.0
      %v3263 = vmax.f32 %v3010, 0.0
      %v3264 = vmax.f32 %v3049, 0.0
      %v3265 = vmax.f32 %v3051, 0.0
      %v3266 = vmax.f32 %v3090, 0.0
      %v3267 = vmax.f32 %v3092, 0.0
      %v3268 = vmax.f32 %v3131, 0.0
      %v3269 = vmax.f32 %v3133, 0.0
      %v3270 = vmax.f32 %v3172, 0.0
      %v3271 = vmax.f32 %v3174, 0.0
      %v3272 = vmax.f32 %v3213, 0.0
      %v3273 = vmax.f32 %v3215, 0.0
      %v3274 = vmax.f32 %v3254, 0.0
      %v3275 = vmax.f32 %v3256, 0.0
      %v3276 = vpack.c.bf16 %v3260, %v3260
      %v3277 = vpack.c.bf16 %v3261, %v3261
      %v3278 = vpack.c.bf16 %v3262, %v3262
      %v3279 = vpack.c.bf16 %v3263, %v3263
      %v3280 = vpack.c.bf16 %v3264, %v3264
      %v3281 = vpack.c.bf16 %v3265, %v3265
      %v3282 = vpack.c.bf16 %v3266, %v3266
      %v3283 = vpack.c.bf16 %v3267, %v3267
      %v3284 = vpack.c.bf16 %v3268, %v3268
      %v3285 = vpack.c.bf16 %v3269, %v3269
      %v3286 = vpack.c.bf16 %v3270, %v3270
      %v3287 = vpack.c.bf16 %v3271, %v3271
      %v3288 = vpack.c.bf16 %v3272, %v3272
      %v3289 = vpack.c.bf16 %v3273, %v3273
      %v3290 = vpack.c.bf16 %v3274, %v3274
      %v3291 = vpack.c.bf16 %v3275, %v3275
      %v3292 = vld [vmem:[%s16] sm:$0xf]
      %v3293 = vld [vmem:[%s16 + $0x4] sm:$0xf]
      %v3294 = vld [vmem:[%s16 + $0x8] sm:$0xf]
      %v3295 = vld [vmem:[%s16 + $0xc] sm:$0xf]
      %v3296 = vld [vmem:[%s16 + $0x10] sm:$0xf]
      %v3297 = vld [vmem:[%s16 + $0x14] sm:$0xf]
      %v3298 = vld [vmem:[%s16 + $0x18] sm:$0xf]
      %v3299 = vld [vmem:[%s16 + $0x1c] sm:$0xf]
      %v3300 = vld [vmem:[%s16 + $0x20] sm:$0xf]
      %v3301 = vld [vmem:[%s16 + $0x24] sm:$0xf]
      %v3302 = vld [vmem:[%s16 + $0x28] sm:$0xf]
      %v3303 = vld [vmem:[%s16 + $0x2c] sm:$0xf]
      %v3304 = vld [vmem:[%s16 + $0x30] sm:$0xf]
      %v3305 = vld [vmem:[%s16 + $0x34] sm:$0xf]
      %v3306 = vld [vmem:[%s16 + $0x38] sm:$0xf]
      %v3307 = vld [vmem:[%s16 + $0x3c] sm:$0xf]
      %v3308 = vld [vmem:[%s16 + $0x40] sm:$0xf]
      %v3309 = vld [vmem:[%s16 + $0x44] sm:$0xf]
      %v3310 = vld [vmem:[%s16 + $0x48] sm:$0xf]
      %v3311 = vld [vmem:[%s16 + $0x4c] sm:$0xf]
      %v3312 = vld [vmem:[%s16 + $0x50] sm:$0xf]
      %v3313 = vld [vmem:[%s16 + $0x54] sm:$0xf]
      %v3314 = vld [vmem:[%s16 + $0x58] sm:$0xf]
      %v3315 = vld [vmem:[%s16 + $0x5c] sm:$0xf]
      %v3316 = vld [vmem:[%s16 + $0x60] sm:$0xf]
      %v3317 = vld [vmem:[%s16 + $0x64] sm:$0xf]
      %v3318 = vld [vmem:[%s16 + $0x68] sm:$0xf]
      %v3319 = vld [vmem:[%s16 + $0x6c] sm:$0xf]
      %v3320 = vld [vmem:[%s16 + $0x70] sm:$0xf]
      %v3321 = vld [vmem:[%s16 + $0x74] sm:$0xf]
      %v3322 = vld [vmem:[%s16 + $0x78] sm:$0xf]
      %v3323 = vld [vmem:[%s16 + $0x7c] sm:$0xf]
      %v3324 = vld [vmem:[%s16 + $0x80] sm:$0xf]
      %v3325 = vld [vmem:[%s16 + $0x84] sm:$0xf]
      %v3326 = vld [vmem:[%s16 + $0x88] sm:$0xf]
      %v3327 = vld [vmem:[%s16 + $0x8c] sm:$0xf]
      %v3328 = vld [vmem:[%s16 + $0x90] sm:$0xf]
      %v3329 = vld [vmem:[%s16 + $0x94] sm:$0xf]
      %v3330 = vld [vmem:[%s16 + $0x98] sm:$0xf]
      %v3331 = vld [vmem:[%s16 + $0x9c] sm:$0xf]
      %v3332 = vld [vmem:[%s16 + $0xa0] sm:$0xf]
      %v3333 = vld [vmem:[%s16 + $0xa4] sm:$0xf]
      %v3334 = vld [vmem:[%s16 + $0xa8] sm:$0xf]
      %v3335 = vld [vmem:[%s16 + $0xac] sm:$0xf]
      %v3336 = vld [vmem:[%s16 + $0xb0] sm:$0xf]
      %v3337 = vld [vmem:[%s16 + $0xb4] sm:$0xf]
      %v3338 = vld [vmem:[%s16 + $0xb8] sm:$0xf]
      %v3339 = vld [vmem:[%s16 + $0xbc] sm:$0xf]
      %v3340 = vld [vmem:[%s16 + $0xc0] sm:$0xf]
      %v3341 = vld [vmem:[%s16 + $0xc4] sm:$0xf]
      %v3342 = vld [vmem:[%s16 + $0xc8] sm:$0xf]
      %v3343 = vld [vmem:[%s16 + $0xcc] sm:$0xf]
      %v3344 = vld [vmem:[%s16 + $0xd0] sm:$0xf]
      %v3345 = vld [vmem:[%s16 + $0xd4] sm:$0xf]
      %v3346 = vld [vmem:[%s16 + $0xd8] sm:$0xf]
      %v3347 = vld [vmem:[%s16 + $0xdc] sm:$0xf]
      %v3348 = vld [vmem:[%s16 + $0xe0] sm:$0xf]
      %v3349 = vld [vmem:[%s16 + $0xe4] sm:$0xf]
      %v3350 = vld [vmem:[%s16 + $0xe8] sm:$0xf]
      %v3351 = vld [vmem:[%s16 + $0xec] sm:$0xf]
      %v3352 = vld [vmem:[%s16 + $0xf0] sm:$0xf]
      %v3353 = vld [vmem:[%s16 + $0xf4] sm:$0xf]
      %v3354 = vld [vmem:[%s16 + $0xf8] sm:$0xf]
      %v3355 = vld [vmem:[%s16 + $0xfc] sm:$0xf]
      %v3356 = vld [vmem:[%s16 + $0x100] sm:$0xf]
      %v3357 = vld [vmem:[%s16 + $0x104] sm:$0xf]
      %v3358 = vld [vmem:[%s16 + $0x108] sm:$0xf]
      %v3359 = vld [vmem:[%s16 + $0x10c] sm:$0xf]
      %v3360 = vld [vmem:[%s16 + $0x110] sm:$0xf]
      %v3361 = vld [vmem:[%s16 + $0x114] sm:$0xf]
      %v3362 = vld [vmem:[%s16 + $0x118] sm:$0xf]
      %v3363 = vld [vmem:[%s16 + $0x11c] sm:$0xf]
      %v3364 = vld [vmem:[%s16 + $0x120] sm:$0xf]
      %v3365 = vld [vmem:[%s16 + $0x124] sm:$0xf]
      %v3366 = vld [vmem:[%s16 + $0x128] sm:$0xf]
      %v3367 = vld [vmem:[%s16 + $0x12c] sm:$0xf]
      %v3368 = vld [vmem:[%s16 + $0x130] sm:$0xf]
      %v3369 = vld [vmem:[%s16 + $0x134] sm:$0xf]
      %v3370 = vld [vmem:[%s16 + $0x138] sm:$0xf]
      %v3371 = vld [vmem:[%s16 + $0x13c] sm:$0xf]
      %v3372 = vld [vmem:[%s16 + $0x140] sm:$0xf]
      %v3373 = vld [vmem:[%s16 + $0x144] sm:$0xf]
      %v3374 = vld [vmem:[%s16 + $0x148] sm:$0xf]
      %v3375 = vld [vmem:[%s16 + $0x14c] sm:$0xf]
      %v3376 = vld [vmem:[%s16 + $0x150] sm:$0xf]
      %v3377 = vld [vmem:[%s16 + $0x154] sm:$0xf]
      %v3378 = vld [vmem:[%s16 + $0x158] sm:$0xf]
      %v3379 = vld [vmem:[%s16 + $0x15c] sm:$0xf]
      %v3380 = vld [vmem:[%s16 + $0x160] sm:$0xf]
      %v3381 = vld [vmem:[%s16 + $0x164] sm:$0xf]
      %v3382 = vld [vmem:[%s16 + $0x168] sm:$0xf]
      %v3383 = vld [vmem:[%s16 + $0x16c] sm:$0xf]
      %v3384 = vld [vmem:[%s16 + $0x170] sm:$0xf]
      %v3385 = vld [vmem:[%s16 + $0x174] sm:$0xf]
      %v3386 = vld [vmem:[%s16 + $0x178] sm:$0xf]
      %v3387 = vld [vmem:[%s16 + $0x17c] sm:$0xf]
      %v3388 = vld [vmem:[%s16 + $0x180] sm:$0xf]
      %v3389 = vld [vmem:[%s16 + $0x184] sm:$0xf]
      %v3390 = vld [vmem:[%s16 + $0x188] sm:$0xf]
      %v3391 = vld [vmem:[%s16 + $0x18c] sm:$0xf]
      %v3392 = vld [vmem:[%s16 + $0x190] sm:$0xf]
      %v3393 = vld [vmem:[%s16 + $0x194] sm:$0xf]
      %v3394 = vld [vmem:[%s16 + $0x198] sm:$0xf]
      %v3395 = vld [vmem:[%s16 + $0x19c] sm:$0xf]
      %v3396 = vld [vmem:[%s16 + $0x1a0] sm:$0xf]
      %v3397 = vld [vmem:[%s16 + $0x1a4] sm:$0xf]
      %v3398 = vld [vmem:[%s16 + $0x1a8] sm:$0xf]
      %v3399 = vld [vmem:[%s16 + $0x1ac] sm:$0xf]
      %v3400 = vld [vmem:[%s16 + $0x1b0] sm:$0xf]
      %v3401 = vld [vmem:[%s16 + $0x1b4] sm:$0xf]
      %v3402 = vld [vmem:[%s16 + $0x1b8] sm:$0xf]
      %v3403 = vld [vmem:[%s16 + $0x1bc] sm:$0xf]
      %v3404 = vld [vmem:[%s16 + $0x1c0] sm:$0xf]
      %v3405 = vld [vmem:[%s16 + $0x1c4] sm:$0xf]
      %v3406 = vld [vmem:[%s16 + $0x1c8] sm:$0xf]
      %v3407 = vld [vmem:[%s16 + $0x1cc] sm:$0xf]
      %v3408 = vld [vmem:[%s16 + $0x1d0] sm:$0xf]
      %v3409 = vld [vmem:[%s16 + $0x1d4] sm:$0xf]
      %v3410 = vld [vmem:[%s16 + $0x1d8] sm:$0xf]
      %v3411 = vld [vmem:[%s16 + $0x1dc] sm:$0xf]
      %v3412 = vld [vmem:[%s16 + $0x1e0] sm:$0xf]
      %v3413 = vld [vmem:[%s16 + $0x1e4] sm:$0xf]
      %v3414 = vld [vmem:[%s16 + $0x1e8] sm:$0xf]
      %v3415 = vld [vmem:[%s16 + $0x1ec] sm:$0xf]
      %v3416 = vld [vmem:[%s16 + $0x1f0] sm:$0xf]
      %v3417 = vld [vmem:[%s16 + $0x1f4] sm:$0xf]
      %v3418 = vld [vmem:[%s16 + $0x1f8] sm:$0xf]
      %v3419 = vld [vmem:[%s16 + $0x1fc] sm:$0xf]
      %v3420 = vld [vmem:[%s16 + $0x200] sm:$0xf]
      %v3421 = vld [vmem:[%s16 + $0x204] sm:$0xf]
      %v3422 = vld [vmem:[%s16 + $0x208] sm:$0xf]
      %v3423 = vld [vmem:[%s16 + $0x20c] sm:$0xf]
      %v3424 = vld [vmem:[%s16 + $0x210] sm:$0xf]
      %v3425 = vld [vmem:[%s16 + $0x214] sm:$0xf]
      %v3426 = vld [vmem:[%s16 + $0x218] sm:$0xf]
      %v3427 = vld [vmem:[%s16 + $0x21c] sm:$0xf]
      %v3428 = vld [vmem:[%s16 + $0x220] sm:$0xf]
      %v3429 = vld [vmem:[%s16 + $0x224] sm:$0xf]
      %v3430 = vld [vmem:[%s16 + $0x228] sm:$0xf]
      %v3431 = vld [vmem:[%s16 + $0x22c] sm:$0xf]
      %v3432 = vld [vmem:[%s16 + $0x230] sm:$0xf]
      %v3433 = vld [vmem:[%s16 + $0x234] sm:$0xf]
      %v3434 = vld [vmem:[%s16 + $0x238] sm:$0xf]
      %v3435 = vld [vmem:[%s16 + $0x23c] sm:$0xf]
      %v3436 = vld [vmem:[%s16 + $0x240] sm:$0xf]
      %v3437 = vld [vmem:[%s16 + $0x244] sm:$0xf]
      %v3438 = vld [vmem:[%s16 + $0x248] sm:$0xf]
      %v3439 = vld [vmem:[%s16 + $0x24c] sm:$0xf]
      %v3440 = vld [vmem:[%s16 + $0x250] sm:$0xf]
      %v3441 = vld [vmem:[%s16 + $0x254] sm:$0xf]
      %v3442 = vld [vmem:[%s16 + $0x258] sm:$0xf]
      %v3443 = vld [vmem:[%s16 + $0x25c] sm:$0xf]
      %v3444 = vld [vmem:[%s16 + $0x260] sm:$0xf]
      %v3445 = vld [vmem:[%s16 + $0x264] sm:$0xf]
      %v3446 = vld [vmem:[%s16 + $0x268] sm:$0xf]
      %v3447 = vld [vmem:[%s16 + $0x26c] sm:$0xf]
      %v3448 = vld [vmem:[%s16 + $0x270] sm:$0xf]
      %v3449 = vld [vmem:[%s16 + $0x274] sm:$0xf]
      %v3450 = vld [vmem:[%s16 + $0x278] sm:$0xf]
      %v3451 = vld [vmem:[%s16 + $0x27c] sm:$0xf]
      %v3452 = vld [vmem:[%s16 + $0x280] sm:$0xf]
      %v3453 = vld [vmem:[%s16 + $0x284] sm:$0xf]
      %v3454 = vld [vmem:[%s16 + $0x288] sm:$0xf]
      %v3455 = vld [vmem:[%s16 + $0x28c] sm:$0xf]
      %v3456 = vld [vmem:[%s16 + $0x290] sm:$0xf]
      %v3457 = vld [vmem:[%s16 + $0x294] sm:$0xf]
      %v3458 = vld [vmem:[%s16 + $0x298] sm:$0xf]
      %v3459 = vld [vmem:[%s16 + $0x29c] sm:$0xf]
      %v3460 = vld [vmem:[%s16 + $0x2a0] sm:$0xf]
      %v3461 = vld [vmem:[%s16 + $0x2a4] sm:$0xf]
      %v3462 = vld [vmem:[%s16 + $0x2a8] sm:$0xf]
      %v3463 = vld [vmem:[%s16 + $0x2ac] sm:$0xf]
      %v3464 = vld [vmem:[%s16 + $0x2b0] sm:$0xf]
      %v3465 = vld [vmem:[%s16 + $0x2b4] sm:$0xf]
      %v3466 = vld [vmem:[%s16 + $0x2b8] sm:$0xf]
      %v3467 = vld [vmem:[%s16 + $0x2bc] sm:$0xf]
      %v3468 = vld [vmem:[%s16 + $0x2c0] sm:$0xf]
      %v3469 = vld [vmem:[%s16 + $0x2c4] sm:$0xf]
      %v3470 = vld [vmem:[%s16 + $0x2c8] sm:$0xf]
      %v3471 = vld [vmem:[%s16 + $0x2cc] sm:$0xf]
      %v3472 = vld [vmem:[%s16 + $0x2d0] sm:$0xf]
      %v3473 = vld [vmem:[%s16 + $0x2d4] sm:$0xf]
      %v3474 = vld [vmem:[%s16 + $0x2d8] sm:$0xf]
      %v3475 = vld [vmem:[%s16 + $0x2dc] sm:$0xf]
      %v3476 = vld [vmem:[%s16 + $0x2e0] sm:$0xf]
      %v3477 = vld [vmem:[%s16 + $0x2e4] sm:$0xf]
      %v3478 = vld [vmem:[%s16 + $0x2e8] sm:$0xf]
      %v3479 = vld [vmem:[%s16 + $0x2ec] sm:$0xf]
      %v3480 = vld [vmem:[%s16 + $0x2f0] sm:$0xf]
      %v3481 = vld [vmem:[%s16 + $0x2f4] sm:$0xf]
      %v3482 = vld [vmem:[%s16 + $0x2f8] sm:$0xf]
      %v3483 = vld [vmem:[%s16 + $0x2fc] sm:$0xf]
      %v3484 = vld [vmem:[%s16 + $0x300] sm:$0xf]
      %v3485 = vld [vmem:[%s16 + $0x304] sm:$0xf]
      %v3486 = vld [vmem:[%s16 + $0x308] sm:$0xf]
      %v3487 = vld [vmem:[%s16 + $0x30c] sm:$0xf]
      %v3488 = vld [vmem:[%s16 + $0x310] sm:$0xf]
      %v3489 = vld [vmem:[%s16 + $0x314] sm:$0xf]
      %v3490 = vld [vmem:[%s16 + $0x318] sm:$0xf]
      %v3491 = vld [vmem:[%s16 + $0x31c] sm:$0xf]
      %v3492 = vld [vmem:[%s16 + $0x320] sm:$0xf]
      %v3493 = vld [vmem:[%s16 + $0x324] sm:$0xf]
      %v3494 = vld [vmem:[%s16 + $0x328] sm:$0xf]
      %v3495 = vld [vmem:[%s16 + $0x32c] sm:$0xf]
      %v3496 = vld [vmem:[%s16 + $0x330] sm:$0xf]
      %v3497 = vld [vmem:[%s16 + $0x334] sm:$0xf]
      %v3498 = vld [vmem:[%s16 + $0x338] sm:$0xf]
      %v3499 = vld [vmem:[%s16 + $0x33c] sm:$0xf]
      %v3500 = vld [vmem:[%s16 + $0x340] sm:$0xf]
      %v3501 = vld [vmem:[%s16 + $0x344] sm:$0xf]
      %v3502 = vld [vmem:[%s16 + $0x348] sm:$0xf]
      %v3503 = vld [vmem:[%s16 + $0x34c] sm:$0xf]
      %v3504 = vld [vmem:[%s16 + $0x350] sm:$0xf]
      %v3505 = vld [vmem:[%s16 + $0x354] sm:$0xf]
      %v3506 = vld [vmem:[%s16 + $0x358] sm:$0xf]
      %v3507 = vld [vmem:[%s16 + $0x35c] sm:$0xf]
      %v3508 = vld [vmem:[%s16 + $0x360] sm:$0xf]
      %v3509 = vld [vmem:[%s16 + $0x364] sm:$0xf]
      %v3510 = vld [vmem:[%s16 + $0x368] sm:$0xf]
      %v3511 = vld [vmem:[%s16 + $0x36c] sm:$0xf]
      %v3512 = vld [vmem:[%s16 + $0x370] sm:$0xf]
      %v3513 = vld [vmem:[%s16 + $0x374] sm:$0xf]
      %v3514 = vld [vmem:[%s16 + $0x378] sm:$0xf]
      %v3515 = vld [vmem:[%s16 + $0x37c] sm:$0xf]
      %v3516 = vld [vmem:[%s16 + $0x380] sm:$0xf]
      %v3517 = vld [vmem:[%s16 + $0x384] sm:$0xf]
      %v3518 = vld [vmem:[%s16 + $0x388] sm:$0xf]
      %v3519 = vld [vmem:[%s16 + $0x38c] sm:$0xf]
      %v3520 = vld [vmem:[%s16 + $0x390] sm:$0xf]
      %v3521 = vld [vmem:[%s16 + $0x394] sm:$0xf]
      %v3522 = vld [vmem:[%s16 + $0x398] sm:$0xf]
      %v3523 = vld [vmem:[%s16 + $0x39c] sm:$0xf]
      %v3524 = vld [vmem:[%s16 + $0x3a0] sm:$0xf]
      %v3525 = vld [vmem:[%s16 + $0x3a4] sm:$0xf]
      %v3526 = vld [vmem:[%s16 + $0x3a8] sm:$0xf]
      %v3527 = vld [vmem:[%s16 + $0x3ac] sm:$0xf]
      %v3528 = vld [vmem:[%s16 + $0x3b0] sm:$0xf]
      %v3529 = vld [vmem:[%s16 + $0x3b4] sm:$0xf]
      %v3530 = vld [vmem:[%s16 + $0x3b8] sm:$0xf]
      %v3531 = vld [vmem:[%s16 + $0x3bc] sm:$0xf]
      %v3532 = vld [vmem:[%s16 + $0x3c0] sm:$0xf]
      %v3533 = vld [vmem:[%s16 + $0x3c4] sm:$0xf]
      %v3534 = vld [vmem:[%s16 + $0x3c8] sm:$0xf]
      %v3535 = vld [vmem:[%s16 + $0x3cc] sm:$0xf]
      %v3536 = vld [vmem:[%s16 + $0x3d0] sm:$0xf]
      %v3537 = vld [vmem:[%s16 + $0x3d4] sm:$0xf]
      %v3538 = vld [vmem:[%s16 + $0x3d8] sm:$0xf]
      %v3539 = vld [vmem:[%s16 + $0x3dc] sm:$0xf]
      %v3540 = vld [vmem:[%s16 + $0x3e0] sm:$0xf]
      %v3541 = vld [vmem:[%s16 + $0x3e4] sm:$0xf]
      %v3542 = vld [vmem:[%s16 + $0x3e8] sm:$0xf]
      %v3543 = vld [vmem:[%s16 + $0x3ec] sm:$0xf]
      %v3544 = vld [vmem:[%s16 + $0x3f0] sm:$0xf]
      %v3545 = vld [vmem:[%s16 + $0x3f4] sm:$0xf]
      %v3546 = vld [vmem:[%s16 + $0x3f8] sm:$0xf]
      %v3547 = vld [vmem:[%s16 + $0x3fc] sm:$0xf]
      %v3548 = vld [vmem:[%s17] sm:$0x1]
      %v3550 = vlaneseq
      %v3551 = vshrl.u32 %v3550, 7
      %v3552 = vsub.s32 0, %v3551
      %v3553 = vrot.slane %v3548, %v3552
      %v3811 = vunpack.c.l.b16 %v3292
      %v3812 = vunpack.c.l.b16 %v3293
      %v3813 = vunpack.c.l.b16 %v3294
      %v3814 = vunpack.c.l.b16 %v3295
      %v3815 = vunpack.c.l.b16 %v3296
      %v3816 = vunpack.c.l.b16 %v3297
      %v3817 = vunpack.c.l.b16 %v3298
      %v3818 = vunpack.c.l.b16 %v3299
      %v3819 = vunpack.c.l.b16 %v3300
      %v3820 = vunpack.c.l.b16 %v3301
      %v3821 = vunpack.c.l.b16 %v3302
      %v3822 = vunpack.c.l.b16 %v3303
      %v3823 = vunpack.c.l.b16 %v3304
      %v3824 = vunpack.c.l.b16 %v3305
      %v3825 = vunpack.c.l.b16 %v3306
      %v3826 = vunpack.c.l.b16 %v3307
      %v3827 = vunpack.c.l.b16 %v3308
      %v3828 = vunpack.c.l.b16 %v3309
      %v3829 = vunpack.c.l.b16 %v3310
      %v3830 = vunpack.c.l.b16 %v3311
      %v3831 = vunpack.c.l.b16 %v3312
      %v3832 = vunpack.c.l.b16 %v3313
      %v3833 = vunpack.c.l.b16 %v3314
      %v3834 = vunpack.c.l.b16 %v3315
      %v3835 = vunpack.c.l.b16 %v3316
      %v3836 = vunpack.c.l.b16 %v3317
      %v3837 = vunpack.c.l.b16 %v3318
      %v3838 = vunpack.c.l.b16 %v3319
      %v3839 = vunpack.c.l.b16 %v3320
      %v3840 = vunpack.c.l.b16 %v3321
      %v3841 = vunpack.c.l.b16 %v3322
      %v3842 = vunpack.c.l.b16 %v3323
      %v3843 = vunpack.c.l.b16 %v3324
      %v3844 = vunpack.c.l.b16 %v3325
      %v3845 = vunpack.c.l.b16 %v3326
      %v3846 = vunpack.c.l.b16 %v3327
      %v3847 = vunpack.c.l.b16 %v3328
      %v3848 = vunpack.c.l.b16 %v3329
      %v3849 = vunpack.c.l.b16 %v3330
      %v3850 = vunpack.c.l.b16 %v3331
      %v3851 = vunpack.c.l.b16 %v3332
      %v3852 = vunpack.c.l.b16 %v3333
      %v3853 = vunpack.c.l.b16 %v3334
      %v3854 = vunpack.c.l.b16 %v3335
      %v3855 = vunpack.c.l.b16 %v3336
      %v3856 = vunpack.c.l.b16 %v3337
      %v3857 = vunpack.c.l.b16 %v3338
      %v3858 = vunpack.c.l.b16 %v3339
      %v3859 = vunpack.c.l.b16 %v3340
      %v3860 = vunpack.c.l.b16 %v3341
      %v3861 = vunpack.c.l.b16 %v3342
      %v3862 = vunpack.c.l.b16 %v3343
      %v3863 = vunpack.c.l.b16 %v3344
      %v3864 = vunpack.c.l.b16 %v3345
      %v3865 = vunpack.c.l.b16 %v3346
      %v3866 = vunpack.c.l.b16 %v3347
      %v3867 = vunpack.c.l.b16 %v3348
      %v3868 = vunpack.c.l.b16 %v3349
      %v3869 = vunpack.c.l.b16 %v3350
      %v3870 = vunpack.c.l.b16 %v3351
      %v3871 = vunpack.c.l.b16 %v3352
      %v3872 = vunpack.c.l.b16 %v3353
      %v3873 = vunpack.c.l.b16 %v3354
      %v3874 = vunpack.c.l.b16 %v3355
      %v3875 = vunpack.c.l.b16 %v3356
      %v3876 = vunpack.c.l.b16 %v3357
      %v3877 = vunpack.c.l.b16 %v3358
      %v3878 = vunpack.c.l.b16 %v3359
      %v3879 = vunpack.c.l.b16 %v3360
      %v3880 = vunpack.c.l.b16 %v3361
      %v3881 = vunpack.c.l.b16 %v3362
      %v3882 = vunpack.c.l.b16 %v3363
      %v3883 = vunpack.c.l.b16 %v3364
      %v3884 = vunpack.c.l.b16 %v3365
      %v3885 = vunpack.c.l.b16 %v3366
      %v3886 = vunpack.c.l.b16 %v3367
      %v3887 = vunpack.c.l.b16 %v3368
      %v3888 = vunpack.c.l.b16 %v3369
      %v3889 = vunpack.c.l.b16 %v3370
      %v3890 = vunpack.c.l.b16 %v3371
      %v3891 = vunpack.c.l.b16 %v3372
      %v3892 = vunpack.c.l.b16 %v3373
      %v3893 = vunpack.c.l.b16 %v3374
      %v3894 = vunpack.c.l.b16 %v3375
      %v3895 = vunpack.c.l.b16 %v3376
      %v3896 = vunpack.c.l.b16 %v3377
      %v3897 = vunpack.c.l.b16 %v3378
      %v3898 = vunpack.c.l.b16 %v3379
      %v3899 = vunpack.c.l.b16 %v3380
      %v3900 = vunpack.c.l.b16 %v3381
      %v3901 = vunpack.c.l.b16 %v3382
      %v3902 = vunpack.c.l.b16 %v3383
      %v3903 = vunpack.c.l.b16 %v3384
      %v3904 = vunpack.c.l.b16 %v3385
      %v3905 = vunpack.c.l.b16 %v3386
      %v3906 = vunpack.c.l.b16 %v3387
      %v3907 = vunpack.c.l.b16 %v3388
      %v3908 = vunpack.c.l.b16 %v3389
      %v3909 = vunpack.c.l.b16 %v3390
      %v3910 = vunpack.c.l.b16 %v3391
      %v3911 = vunpack.c.l.b16 %v3392
      %v3912 = vunpack.c.l.b16 %v3393
      %v3913 = vunpack.c.l.b16 %v3394
      %v3914 = vunpack.c.l.b16 %v3395
      %v3915 = vunpack.c.l.b16 %v3396
      %v3916 = vunpack.c.l.b16 %v3397
      %v3917 = vunpack.c.l.b16 %v3398
      %v3918 = vunpack.c.l.b16 %v3399
      %v3919 = vunpack.c.l.b16 %v3400
      %v3920 = vunpack.c.l.b16 %v3401
      %v3921 = vunpack.c.l.b16 %v3402
      %v3922 = vunpack.c.l.b16 %v3403
      %v3923 = vunpack.c.l.b16 %v3404
      %v3924 = vunpack.c.l.b16 %v3405
      %v3925 = vunpack.c.l.b16 %v3406
      %v3926 = vunpack.c.l.b16 %v3407
      %v3927 = vunpack.c.l.b16 %v3408
      %v3928 = vunpack.c.l.b16 %v3409
      %v3929 = vunpack.c.l.b16 %v3410
      %v3930 = vunpack.c.l.b16 %v3411
      %v3931 = vunpack.c.l.b16 %v3412
      %v3932 = vunpack.c.l.b16 %v3413
      %v3933 = vunpack.c.l.b16 %v3414
      %v3934 = vunpack.c.l.b16 %v3415
      %v3935 = vunpack.c.l.b16 %v3416
      %v3936 = vunpack.c.l.b16 %v3417
      %v3937 = vunpack.c.l.b16 %v3418
      %v3938 = vunpack.c.l.b16 %v3419
      %v3939 = vunpack.c.l.b16 %v3420
      %v3940 = vunpack.c.l.b16 %v3421
      %v3941 = vunpack.c.l.b16 %v3422
      %v3942 = vunpack.c.l.b16 %v3423
      %v3943 = vunpack.c.l.b16 %v3424
      %v3944 = vunpack.c.l.b16 %v3425
      %v3945 = vunpack.c.l.b16 %v3426
      %v3946 = vunpack.c.l.b16 %v3427
      %v3947 = vunpack.c.l.b16 %v3428
      %v3948 = vunpack.c.l.b16 %v3429
      %v3949 = vunpack.c.l.b16 %v3430
      %v3950 = vunpack.c.l.b16 %v3431
      %v3951 = vunpack.c.l.b16 %v3432
      %v3952 = vunpack.c.l.b16 %v3433
      %v3953 = vunpack.c.l.b16 %v3434
      %v3954 = vunpack.c.l.b16 %v3435
      %v3955 = vunpack.c.l.b16 %v3436
      %v3956 = vunpack.c.l.b16 %v3437
      %v3957 = vunpack.c.l.b16 %v3438
      %v3958 = vunpack.c.l.b16 %v3439
      %v3959 = vunpack.c.l.b16 %v3440
      %v3960 = vunpack.c.l.b16 %v3441
      %v3961 = vunpack.c.l.b16 %v3442
      %v3962 = vunpack.c.l.b16 %v3443
      %v3963 = vunpack.c.l.b16 %v3444
      %v3964 = vunpack.c.l.b16 %v3445
      %v3965 = vunpack.c.l.b16 %v3446
      %v3966 = vunpack.c.l.b16 %v3447
      %v3967 = vunpack.c.l.b16 %v3448
      %v3968 = vunpack.c.l.b16 %v3449
      %v3969 = vunpack.c.l.b16 %v3450
      %v3970 = vunpack.c.l.b16 %v3451
      %v3971 = vunpack.c.l.b16 %v3452
      %v3972 = vunpack.c.l.b16 %v3453
      %v3973 = vunpack.c.l.b16 %v3454
      %v3974 = vunpack.c.l.b16 %v3455
      %v3975 = vunpack.c.l.b16 %v3456
      %v3976 = vunpack.c.l.b16 %v3457
      %v3977 = vunpack.c.l.b16 %v3458
      %v3978 = vunpack.c.l.b16 %v3459
      %v3979 = vunpack.c.l.b16 %v3460
      %v3980 = vunpack.c.l.b16 %v3461
      %v3981 = vunpack.c.l.b16 %v3462
      %v3982 = vunpack.c.l.b16 %v3463
      %v3983 = vunpack.c.l.b16 %v3464
      %v3984 = vunpack.c.l.b16 %v3465
      %v3985 = vunpack.c.l.b16 %v3466
      %v3986 = vunpack.c.l.b16 %v3467
      %v3987 = vunpack.c.l.b16 %v3468
      %v3988 = vunpack.c.l.b16 %v3469
      %v3989 = vunpack.c.l.b16 %v3470
      %v3990 = vunpack.c.l.b16 %v3471
      %v3991 = vunpack.c.l.b16 %v3472
      %v3992 = vunpack.c.l.b16 %v3473
      %v3993 = vunpack.c.l.b16 %v3474
      %v3994 = vunpack.c.l.b16 %v3475
      %v3995 = vunpack.c.l.b16 %v3476
      %v3996 = vunpack.c.l.b16 %v3477
      %v3997 = vunpack.c.l.b16 %v3478
      %v3998 = vunpack.c.l.b16 %v3479
      %v3999 = vunpack.c.l.b16 %v3480
      %v4000 = vunpack.c.l.b16 %v3481
      %v4001 = vunpack.c.l.b16 %v3482
      %v4002 = vunpack.c.l.b16 %v3483
      %v4003 = vunpack.c.l.b16 %v3484
      %v4004 = vunpack.c.l.b16 %v3485
      %v4005 = vunpack.c.l.b16 %v3486
      %v4006 = vunpack.c.l.b16 %v3487
      %v4007 = vunpack.c.l.b16 %v3488
      %v4008 = vunpack.c.l.b16 %v3489
      %v4009 = vunpack.c.l.b16 %v3490
      %v4010 = vunpack.c.l.b16 %v3491
      %v4011 = vunpack.c.l.b16 %v3492
      %v4012 = vunpack.c.l.b16 %v3493
      %v4013 = vunpack.c.l.b16 %v3494
      %v4014 = vunpack.c.l.b16 %v3495
      %v4015 = vunpack.c.l.b16 %v3496
      %v4016 = vunpack.c.l.b16 %v3497
      %v4017 = vunpack.c.l.b16 %v3498
      %v4018 = vunpack.c.l.b16 %v3499
      %v4019 = vunpack.c.l.b16 %v3500
      %v4020 = vunpack.c.l.b16 %v3501
      %v4021 = vunpack.c.l.b16 %v3502
      %v4022 = vunpack.c.l.b16 %v3503
      %v4023 = vunpack.c.l.b16 %v3504
      %v4024 = vunpack.c.l.b16 %v3505
      %v4025 = vunpack.c.l.b16 %v3506
      %v4026 = vunpack.c.l.b16 %v3507
      %v4027 = vunpack.c.l.b16 %v3508
      %v4028 = vunpack.c.l.b16 %v3509
      %v4029 = vunpack.c.l.b16 %v3510
      %v4030 = vunpack.c.l.b16 %v3511
      %v4031 = vunpack.c.l.b16 %v3512
      %v4032 = vunpack.c.l.b16 %v3513
      %v4033 = vunpack.c.l.b16 %v3514
      %v4034 = vunpack.c.l.b16 %v3515
      %v4035 = vunpack.c.l.b16 %v3516
      %v4036 = vunpack.c.l.b16 %v3517
      %v4037 = vunpack.c.l.b16 %v3518
      %v4038 = vunpack.c.l.b16 %v3519
      %v4039 = vunpack.c.l.b16 %v3520
      %v4040 = vunpack.c.l.b16 %v3521
      %v4041 = vunpack.c.l.b16 %v3522
      %v4042 = vunpack.c.l.b16 %v3523
      %v4043 = vunpack.c.l.b16 %v3524
      %v4044 = vunpack.c.l.b16 %v3525
      %v4045 = vunpack.c.l.b16 %v3526
      %v4046 = vunpack.c.l.b16 %v3527
      %v4047 = vunpack.c.l.b16 %v3528
      %v4048 = vunpack.c.l.b16 %v3529
      %v4049 = vunpack.c.l.b16 %v3530
      %v4050 = vunpack.c.l.b16 %v3531
      %v4051 = vunpack.c.l.b16 %v3532
      %v4052 = vunpack.c.l.b16 %v3533
      %v4053 = vunpack.c.l.b16 %v3534
      %v4054 = vunpack.c.l.b16 %v3535
      %v4055 = vunpack.c.l.b16 %v3536
      %v4056 = vunpack.c.l.b16 %v3537
      %v4057 = vunpack.c.l.b16 %v3538
      %v4058 = vunpack.c.l.b16 %v3539
      %v4059 = vunpack.c.l.b16 %v3540
      %v4060 = vunpack.c.l.b16 %v3541
      %v4061 = vunpack.c.l.b16 %v3542
      %v4062 = vunpack.c.l.b16 %v3543
      %v4063 = vunpack.c.l.b16 %v3544
      %v4064 = vunpack.c.l.b16 %v3545
      %v4065 = vunpack.c.l.b16 %v3546
      %v4066 = vunpack.c.l.b16 %v3547
      %v4067 = vpack.c.b16 %v3812, %v3811
      %v4068 = vpack.c.b16 %v3814, %v3813
      %v4069 = vpack.c.b16 %v3816, %v3815
      %v4070 = vpack.c.b16 %v3818, %v3817
      %v4071 = vpack.c.b16 %v3820, %v3819
      %v4072 = vpack.c.b16 %v3822, %v3821
      %v4073 = vpack.c.b16 %v3824, %v3823
      %v4074 = vpack.c.b16 %v3826, %v3825
      %v4075 = vpack.c.b16 %v3828, %v3827
      %v4076 = vpack.c.b16 %v3830, %v3829
      %v4077 = vpack.c.b16 %v3832, %v3831
      %v4078 = vpack.c.b16 %v3834, %v3833
      %v4079 = vpack.c.b16 %v3836, %v3835
      %v4080 = vpack.c.b16 %v3838, %v3837
      %v4081 = vpack.c.b16 %v3840, %v3839
      %v4082 = vpack.c.b16 %v3842, %v3841
      %v4083 = vpack.c.b16 %v3844, %v3843
      %v4084 = vpack.c.b16 %v3846, %v3845
      %v4085 = vpack.c.b16 %v3848, %v3847
      %v4086 = vpack.c.b16 %v3850, %v3849
      %v4087 = vpack.c.b16 %v3852, %v3851
      %v4088 = vpack.c.b16 %v3854, %v3853
      %v4089 = vpack.c.b16 %v3856, %v3855
      %v4090 = vpack.c.b16 %v3858, %v3857
      %v4091 = vpack.c.b16 %v3860, %v3859
      %v4092 = vpack.c.b16 %v3862, %v3861
      %v4093 = vpack.c.b16 %v3864, %v3863
      %v4094 = vpack.c.b16 %v3866, %v3865
      %v4095 = vpack.c.b16 %v3868, %v3867
      %v4096 = vpack.c.b16 %v3870, %v3869
      %v4097 = vpack.c.b16 %v3872, %v3871
      %v4098 = vpack.c.b16 %v3874, %v3873
      %v4099 = vpack.c.b16 %v3876, %v3875
      %v4100 = vpack.c.b16 %v3878, %v3877
      %v4101 = vpack.c.b16 %v3880, %v3879
      %v4102 = vpack.c.b16 %v3882, %v3881
      %v4103 = vpack.c.b16 %v3884, %v3883
      %v4104 = vpack.c.b16 %v3886, %v3885
      %v4105 = vpack.c.b16 %v3888, %v3887
      %v4106 = vpack.c.b16 %v3890, %v3889
      %v4107 = vpack.c.b16 %v3892, %v3891
      %v4108 = vpack.c.b16 %v3894, %v3893
      %v4109 = vpack.c.b16 %v3896, %v3895
      %v4110 = vpack.c.b16 %v3898, %v3897
      %v4111 = vpack.c.b16 %v3900, %v3899
      %v4112 = vpack.c.b16 %v3902, %v3901
      %v4113 = vpack.c.b16 %v3904, %v3903
      %v4114 = vpack.c.b16 %v3906, %v3905
      %v4115 = vpack.c.b16 %v3908, %v3907
      %v4116 = vpack.c.b16 %v3910, %v3909
      %v4117 = vpack.c.b16 %v3912, %v3911
      %v4118 = vpack.c.b16 %v3914, %v3913
      %v4119 = vpack.c.b16 %v3916, %v3915
      %v4120 = vpack.c.b16 %v3918, %v3917
      %v4121 = vpack.c.b16 %v3920, %v3919
      %v4122 = vpack.c.b16 %v3922, %v3921
      %v4123 = vpack.c.b16 %v3924, %v3923
      %v4124 = vpack.c.b16 %v3926, %v3925
      %v4125 = vpack.c.b16 %v3928, %v3927
      %v4126 = vpack.c.b16 %v3930, %v3929
      %v4127 = vpack.c.b16 %v3932, %v3931
      %v4128 = vpack.c.b16 %v3934, %v3933
      %v4129 = vpack.c.b16 %v3936, %v3935
      %v4130 = vpack.c.b16 %v3938, %v3937
      %v4131 = vpack.c.b16 %v3940, %v3939
      %v4132 = vpack.c.b16 %v3942, %v3941
      %v4133 = vpack.c.b16 %v3944, %v3943
      %v4134 = vpack.c.b16 %v3946, %v3945
      %v4135 = vpack.c.b16 %v3948, %v3947
      %v4136 = vpack.c.b16 %v3950, %v3949
      %v4137 = vpack.c.b16 %v3952, %v3951
      %v4138 = vpack.c.b16 %v3954, %v3953
      %v4139 = vpack.c.b16 %v3956, %v3955
      %v4140 = vpack.c.b16 %v3958, %v3957
      %v4141 = vpack.c.b16 %v3960, %v3959
      %v4142 = vpack.c.b16 %v3962, %v3961
      %v4143 = vpack.c.b16 %v3964, %v3963
      %v4144 = vpack.c.b16 %v3966, %v3965
      %v4145 = vpack.c.b16 %v3968, %v3967
      %v4146 = vpack.c.b16 %v3970, %v3969
      %v4147 = vpack.c.b16 %v3972, %v3971
      %v4148 = vpack.c.b16 %v3974, %v3973
      %v4149 = vpack.c.b16 %v3976, %v3975
      %v4150 = vpack.c.b16 %v3978, %v3977
      %v4151 = vpack.c.b16 %v3980, %v3979
      %v4152 = vpack.c.b16 %v3982, %v3981
      %v4153 = vpack.c.b16 %v3984, %v3983
      %v4154 = vpack.c.b16 %v3986, %v3985
      %v4155 = vpack.c.b16 %v3988, %v3987
      %v4156 = vpack.c.b16 %v3990, %v3989
      %v4157 = vpack.c.b16 %v3992, %v3991
      %v4158 = vpack.c.b16 %v3994, %v3993
      %v4159 = vpack.c.b16 %v3996, %v3995
      %v4160 = vpack.c.b16 %v3998, %v3997
      %v4161 = vpack.c.b16 %v4000, %v3999
      %v4162 = vpack.c.b16 %v4002, %v4001
      %v4163 = vpack.c.b16 %v4004, %v4003
      %v4164 = vpack.c.b16 %v4006, %v4005
      %v4165 = vpack.c.b16 %v4008, %v4007
      %v4166 = vpack.c.b16 %v4010, %v4009
      %v4167 = vpack.c.b16 %v4012, %v4011
      %v4168 = vpack.c.b16 %v4014, %v4013
      %v4169 = vpack.c.b16 %v4016, %v4015
      %v4170 = vpack.c.b16 %v4018, %v4017
      %v4171 = vpack.c.b16 %v4020, %v4019
      %v4172 = vpack.c.b16 %v4022, %v4021
      %v4173 = vpack.c.b16 %v4024, %v4023
      %v4174 = vpack.c.b16 %v4026, %v4025
      %v4175 = vpack.c.b16 %v4028, %v4027
      %v4176 = vpack.c.b16 %v4030, %v4029
      %v4177 = vpack.c.b16 %v4032, %v4031
      %v4178 = vpack.c.b16 %v4034, %v4033
      %v4179 = vpack.c.b16 %v4036, %v4035
      %v4180 = vpack.c.b16 %v4038, %v4037
      %v4181 = vpack.c.b16 %v4040, %v4039
      %v4182 = vpack.c.b16 %v4042, %v4041
      %v4183 = vpack.c.b16 %v4044, %v4043
      %v4184 = vpack.c.b16 %v4046, %v4045
      %v4185 = vpack.c.b16 %v4048, %v4047
      %v4186 = vpack.c.b16 %v4050, %v4049
      %v4187 = vpack.c.b16 %v4052, %v4051
      %v4188 = vpack.c.b16 %v4054, %v4053
      %v4189 = vpack.c.b16 %v4056, %v4055
      %v4190 = vpack.c.b16 %v4058, %v4057
      %v4191 = vpack.c.b16 %v4060, %v4059
      %v4192 = vpack.c.b16 %v4062, %v4061
      %v4193 = vpack.c.b16 %v4064, %v4063
      %v4194 = vpack.c.b16 %v4066, %v4065
      %4323 = vmatprep.subr.bf16.mxu0 0
      %4324 = vmatpush1.bf16.msra.mxu0 %v4067
      %4325 = vmatprep.subr.bf16.mxu0 0
      %4326 = vmatpush1.bf16.msra.mxu0 %v4068
      %4327 = vmatprep.subr.bf16.mxu0 0
      %4328 = vmatpush1.bf16.msra.mxu0 %v4069
      %4329 = vmatprep.subr.bf16.mxu0 0
      %4330 = vmatpush1.bf16.msra.mxu0 %v4070
      %4331 = vmatprep.subr.bf16.mxu0 0
      %4332 = vmatpush1.bf16.msra.mxu0 %v4071
      %4333 = vmatprep.subr.bf16.mxu0 0
      %4334 = vmatpush1.bf16.msra.mxu0 %v4072
      %4335 = vmatprep.subr.bf16.mxu0 0
      %4336 = vmatpush1.bf16.msra.mxu0 %v4073
      %4337 = vmatprep.subr.bf16.mxu0 0
      %4338 = vmatpush1.bf16.msra.mxu0 %v4074
      %4339 = vmatprep.subr.bf16.mxu0 0
      %4340 = vmatpush1.bf16.msra.mxu0 %v4075
      %4341 = vmatprep.subr.bf16.mxu0 0
      %4342 = vmatpush1.bf16.msra.mxu0 %v4076
      %4343 = vmatprep.subr.bf16.mxu0 0
      %4344 = vmatpush1.bf16.msra.mxu0 %v4077
      %4345 = vmatprep.subr.bf16.mxu0 0
      %4346 = vmatpush1.bf16.msra.mxu0 %v4078
      %4347 = vmatprep.subr.bf16.mxu0 0
      %4348 = vmatpush1.bf16.msra.mxu0 %v4079
      %4349 = vmatprep.subr.bf16.mxu0 0
      %4350 = vmatpush1.bf16.msra.mxu0 %v4080
      %4351 = vmatprep.subr.bf16.mxu0 0
      %4352 = vmatpush1.bf16.msra.mxu0 %v4081
      %4353 = vmatprep.subr.bf16.mxu0 0
      %4354 = vmatpush1.bf16.msra.mxu0 %v4082
      %4355 = vmatprep.mubr.bf16.mxu0 %v3277
      %4356 = vmatmul.mubr.bf16.gmra.mrb[0].mxu0 %v3276
      %v4357 = vpop.f32.mrb[0].mxu0
      %v4358 = vadd.f32 %v3553, %v4357
      %v4359 = vpop.f32.mrb[0].mxu0
      %v4360 = vpop.f32.mrb[0].mxu0
      %v4361 = vpop.f32.mrb[0].mxu0
      %4362 = vdwg.mxu0
      %4363 = vmatprep.subr.bf16.mxu0 0
      %4364 = vmatpush1.bf16.msra.mxu0 %v4083
      %4365 = vmatprep.subr.bf16.mxu0 0
      %4366 = vmatpush1.bf16.msra.mxu0 %v4084
      %4367 = vmatprep.subr.bf16.mxu0 0
      %4368 = vmatpush1.bf16.msra.mxu0 %v4085
      %4369 = vmatprep.subr.bf16.mxu0 0
      %4370 = vmatpush1.bf16.msra.mxu0 %v4086
      %4371 = vmatprep.subr.bf16.mxu0 0
      %4372 = vmatpush1.bf16.msra.mxu0 %v4087
      %4373 = vmatprep.subr.bf16.mxu0 0
      %4374 = vmatpush1.bf16.msra.mxu0 %v4088
      %4375 = vmatprep.subr.bf16.mxu0 0
      %4376 = vmatpush1.bf16.msra.mxu0 %v4089
      %4377 = vmatprep.subr.bf16.mxu0 0
      %4378 = vmatpush1.bf16.msra.mxu0 %v4090
      %4379 = vmatprep.subr.bf16.mxu0 0
      %4380 = vmatpush1.bf16.msra.mxu0 %v4091
      %4381 = vmatprep.subr.bf16.mxu0 0
      %4382 = vmatpush1.bf16.msra.mxu0 %v4092
      %4383 = vmatprep.subr.bf16.mxu0 0
      %4384 = vmatpush1.bf16.msra.mxu0 %v4093
      %4385 = vmatprep.subr.bf16.mxu0 0
      %4386 = vmatpush1.bf16.msra.mxu0 %v4094
      %4387 = vmatprep.subr.bf16.mxu0 0
      %4388 = vmatpush1.bf16.msra.mxu0 %v4095
      %4389 = vmatprep.subr.bf16.mxu0 0
      %4390 = vmatpush1.bf16.msra.mxu0 %v4096
      %4391 = vmatprep.subr.bf16.mxu0 0
      %4392 = vmatpush1.bf16.msra.mxu0 %v4097
      %4393 = vmatprep.subr.bf16.mxu0 0
      %4394 = vmatpush1.bf16.msra.mxu0 %v4098
      %4395 = vmatprep.mubr.bf16.mxu0 %v3279
      %4396 = vmatmul.mubr.bf16.gmra.mrb[0].mxu0 %v3278
      %v4397 = vpop.f32.mrb[0].mxu0
      %v4398 = vadd.f32 %v4358, %v4397
      %v4399 = vpop.f32.mrb[0].mxu0
      %v4400 = vpop.f32.mrb[0].mxu0
      %v4401 = vpop.f32.mrb[0].mxu0
      %4402 = vdwg.mxu0
      %4403 = vmatprep.subr.bf16.mxu0 0
      %4404 = vmatpush1.bf16.msra.mxu0 %v4099
      %4405 = vmatprep.subr.bf16.mxu0 0
      %4406 = vmatpush1.bf16.msra.mxu0 %v4100
      %4407 = vmatprep.subr.bf16.mxu0 0
      %4408 = vmatpush1.bf16.msra.mxu0 %v4101
      %4409 = vmatprep.subr.bf16.mxu0 0
      %4410 = vmatpush1.bf16.msra.mxu0 %v4102
      %4411 = vmatprep.subr.bf16.mxu0 0
      %4412 = vmatpush1.bf16.msra.mxu0 %v4103
      %4413 = vmatprep.subr.bf16.mxu0 0
      %4414 = vmatpush1.bf16.msra.mxu0 %v4104
      %4415 = vmatprep.subr.bf16.mxu0 0
      %4416 = vmatpush1.bf16.msra.mxu0 %v4105
      %4417 = vmatprep.subr.bf16.mxu0 0
      %4418 = vmatpush1.bf16.msra.mxu0 %v4106
      %4419 = vmatprep.subr.bf16.mxu0 0
      %4420 = vmatpush1.bf16.msra.mxu0 %v4107
      %4421 = vmatprep.subr.bf16.mxu0 0
      %4422 = vmatpush1.bf16.msra.mxu0 %v4108
      %4423 = vmatprep.subr.bf16.mxu0 0
      %4424 = vmatpush1.bf16.msra.mxu0 %v4109
      %4425 = vmatprep.subr.bf16.mxu0 0
      %4426 = vmatpush1.bf16.msra.mxu0 %v4110
      %4427 = vmatprep.subr.bf16.mxu0 0
      %4428 = vmatpush1.bf16.msra.mxu0 %v4111
      %4429 = vmatprep.subr.bf16.mxu0 0
      %4430 = vmatpush1.bf16.msra.mxu0 %v4112
      %4431 = vmatprep.subr.bf16.mxu0 0
      %4432 = vmatpush1.bf16.msra.mxu0 %v4113
      %4433 = vmatprep.subr.bf16.mxu0 0
      %4434 = vmatpush1.bf16.msra.mxu0 %v4114
      %4435 = vmatprep.mubr.bf16.mxu0 %v3281
      %4436 = vmatmul.mubr.bf16.gmra.mrb[0].mxu0 %v3280
      %v4437 = vpop.f32.mrb[0].mxu0
      %v4438 = vadd.f32 %v4398, %v4437
      %v4439 = vpop.f32.mrb[0].mxu0
      %v4440 = vpop.f32.mrb[0].mxu0
      %v4441 = vpop.f32.mrb[0].mxu0
      %4442 = vdwg.mxu0
      %4443 = vmatprep.subr.bf16.mxu0 0
      %4444 = vmatpush1.bf16.msra.mxu0 %v4115
      %4445 = vmatprep.subr.bf16.mxu0 0
      %4446 = vmatpush1.bf16.msra.mxu0 %v4116
      %4447 = vmatprep.subr.bf16.mxu0 0
      %4448 = vmatpush1.bf16.msra.mxu0 %v4117
      %4449 = vmatprep.subr.bf16.mxu0 0
      %4450 = vmatpush1.bf16.msra.mxu0 %v4118
      %4451 = vmatprep.subr.bf16.mxu0 0
      %4452 = vmatpush1.bf16.msra.mxu0 %v4119
      %4453 = vmatprep.subr.bf16.mxu0 0
      %4454 = vmatpush1.bf16.msra.mxu0 %v4120
      %4455 = vmatprep.subr.bf16.mxu0 0
      %4456 = vmatpush1.bf16.msra.mxu0 %v4121
      %4457 = vmatprep.subr.bf16.mxu0 0
      %4458 = vmatpush1.bf16.msra.mxu0 %v4122
      %4459 = vmatprep.subr.bf16.mxu0 0
      %4460 = vmatpush1.bf16.msra.mxu0 %v4123
      %4461 = vmatprep.subr.bf16.mxu0 0
      %4462 = vmatpush1.bf16.msra.mxu0 %v4124
      %4463 = vmatprep.subr.bf16.mxu0 0
      %4464 = vmatpush1.bf16.msra.mxu0 %v4125
      %4465 = vmatprep.subr.bf16.mxu0 0
      %4466 = vmatpush1.bf16.msra.mxu0 %v4126
      %4467 = vmatprep.subr.bf16.mxu0 0
      %4468 = vmatpush1.bf16.msra.mxu0 %v4127
      %4469 = vmatprep.subr.bf16.mxu0 0
      %4470 = vmatpush1.bf16.msra.mxu0 %v4128
      %4471 = vmatprep.subr.bf16.mxu0 0
      %4472 = vmatpush1.bf16.msra.mxu0 %v4129
      %4473 = vmatprep.subr.bf16.mxu0 0
      %4474 = vmatpush1.bf16.msra.mxu0 %v4130
      %4475 = vmatprep.mubr.bf16.mxu0 %v3283
      %4476 = vmatmul.mubr.bf16.gmra.mrb[0].mxu0 %v3282
      %v4477 = vpop.f32.mrb[0].mxu0
      %v4478 = vadd.f32 %v4438, %v4477
      %v4479 = vpop.f32.mrb[0].mxu0
      %v4480 = vpop.f32.mrb[0].mxu0
      %v4481 = vpop.f32.mrb[0].mxu0
      %4482 = vdwg.mxu0
      %4483 = vmatprep.subr.bf16.mxu0 0
      %4484 = vmatpush1.bf16.msra.mxu0 %v4131
      %4485 = vmatprep.subr.bf16.mxu0 0
      %4486 = vmatpush1.bf16.msra.mxu0 %v4132
      %4487 = vmatprep.subr.bf16.mxu0 0
      %4488 = vmatpush1.bf16.msra.mxu0 %v4133
      %4489 = vmatprep.subr.bf16.mxu0 0
      %4490 = vmatpush1.bf16.msra.mxu0 %v4134
      %4491 = vmatprep.subr.bf16.mxu0 0
      %4492 = vmatpush1.bf16.msra.mxu0 %v4135
      %4493 = vmatprep.subr.bf16.mxu0 0
      %4494 = vmatpush1.bf16.msra.mxu0 %v4136
      %4495 = vmatprep.subr.bf16.mxu0 0
      %4496 = vmatpush1.bf16.msra.mxu0 %v4137
      %4497 = vmatprep.subr.bf16.mxu0 0
      %4498 = vmatpush1.bf16.msra.mxu0 %v4138
      %4499 = vmatprep.subr.bf16.mxu0 0
      %4500 = vmatpush1.bf16.msra.mxu0 %v4139
      %4501 = vmatprep.subr.bf16.mxu0 0
      %4502 = vmatpush1.bf16.msra.mxu0 %v4140
      %4503 = vmatprep.subr.bf16.mxu0 0
      %4504 = vmatpush1.bf16.msra.mxu0 %v4141
      %4505 = vmatprep.subr.bf16.mxu0 0
      %4506 = vmatpush1.bf16.msra.mxu0 %v4142
      %4507 = vmatprep.subr.bf16.mxu0 0
      %4508 = vmatpush1.bf16.msra.mxu0 %v4143
      %4509 = vmatprep.subr.bf16.mxu0 0
      %4510 = vmatpush1.bf16.msra.mxu0 %v4144
      %4511 = vmatprep.subr.bf16.mxu0 0
      %4512 = vmatpush1.bf16.msra.mxu0 %v4145
      %4513 = vmatprep.subr.bf16.mxu0 0
      %4514 = vmatpush1.bf16.msra.mxu0 %v4146
      %4515 = vmatprep.mubr.bf16.mxu0 %v3285
      %4516 = vmatmul.mubr.bf16.gmra.mrb[0].mxu0 %v3284
      %v4517 = vpop.f32.mrb[0].mxu0
      %v4518 = vadd.f32 %v4478, %v4517
      %v4519 = vpop.f32.mrb[0].mxu0
      %v4520 = vpop.f32.mrb[0].mxu0
      %v4521 = vpop.f32.mrb[0].mxu0
      %4522 = vdwg.mxu0
      %4523 = vmatprep.subr.bf16.mxu0 0
      %4524 = vmatpush1.bf16.msra.mxu0 %v4147
      %4525 = vmatprep.subr.bf16.mxu0 0
      %4526 = vmatpush1.bf16.msra.mxu0 %v4148
      %4527 = vmatprep.subr.bf16.mxu0 0
      %4528 = vmatpush1.bf16.msra.mxu0 %v4149
      %4529 = vmatprep.subr.bf16.mxu0 0
      %4530 = vmatpush1.bf16.msra.mxu0 %v4150
      %4531 = vmatprep.subr.bf16.mxu0 0
      %4532 = vmatpush1.bf16.msra.mxu0 %v4151
      %4533 = vmatprep.subr.bf16.mxu0 0
      %4534 = vmatpush1.bf16.msra.mxu0 %v4152
      %4535 = vmatprep.subr.bf16.mxu0 0
      %4536 = vmatpush1.bf16.msra.mxu0 %v4153
      %4537 = vmatprep.subr.bf16.mxu0 0
      %4538 = vmatpush1.bf16.msra.mxu0 %v4154
      %4539 = vmatprep.subr.bf16.mxu0 0
      %4540 = vmatpush1.bf16.msra.mxu0 %v4155
      %4541 = vmatprep.subr.bf16.mxu0 0
      %4542 = vmatpush1.bf16.msra.mxu0 %v4156
      %4543 = vmatprep.subr.bf16.mxu0 0
      %4544 = vmatpush1.bf16.msra.mxu0 %v4157
      %4545 = vmatprep.subr.bf16.mxu0 0
      %4546 = vmatpush1.bf16.msra.mxu0 %v4158
      %4547 = vmatprep.subr.bf16.mxu0 0
      %4548 = vmatpush1.bf16.msra.mxu0 %v4159
      %4549 = vmatprep.subr.bf16.mxu0 0
      %4550 = vmatpush1.bf16.msra.mxu0 %v4160
      %4551 = vmatprep.subr.bf16.mxu0 0
      %4552 = vmatpush1.bf16.msra.mxu0 %v4161
      %4553 = vmatprep.subr.bf16.mxu0 0
      %4554 = vmatpush1.bf16.msra.mxu0 %v4162
      %4555 = vmatprep.mubr.bf16.mxu0 %v3287
      %4556 = vmatmul.mubr.bf16.gmra.mrb[0].mxu0 %v3286
      %v4557 = vpop.f32.mrb[0].mxu0
      %v4558 = vadd.f32 %v4518, %v4557
      %v4559 = vpop.f32.mrb[0].mxu0
      %v4560 = vpop.f32.mrb[0].mxu0
      %v4561 = vpop.f32.mrb[0].mxu0
      %4562 = vdwg.mxu0
      %4563 = vmatprep.subr.bf16.mxu0 0
      %4564 = vmatpush1.bf16.msra.mxu0 %v4163
      %4565 = vmatprep.subr.bf16.mxu0 0
      %4566 = vmatpush1.bf16.msra.mxu0 %v4164
      %4567 = vmatprep.subr.bf16.mxu0 0
      %4568 = vmatpush1.bf16.msra.mxu0 %v4165
      %4569 = vmatprep.subr.bf16.mxu0 0
      %4570 = vmatpush1.bf16.msra.mxu0 %v4166
      %4571 = vmatprep.subr.bf16.mxu0 0
      %4572 = vmatpush1.bf16.msra.mxu0 %v4167
      %4573 = vmatprep.subr.bf16.mxu0 0
      %4574 = vmatpush1.bf16.msra.mxu0 %v4168
      %4575 = vmatprep.subr.bf16.mxu0 0
      %4576 = vmatpush1.bf16.msra.mxu0 %v4169
      %4577 = vmatprep.subr.bf16.mxu0 0
      %4578 = vmatpush1.bf16.msra.mxu0 %v4170
      %4579 = vmatprep.subr.bf16.mxu0 0
      %4580 = vmatpush1.bf16.msra.mxu0 %v4171
      %4581 = vmatprep.subr.bf16.mxu0 0
      %4582 = vmatpush1.bf16.msra.mxu0 %v4172
      %4583 = vmatprep.subr.bf16.mxu0 0
      %4584 = vmatpush1.bf16.msra.mxu0 %v4173
      %4585 = vmatprep.subr.bf16.mxu0 0
      %4586 = vmatpush1.bf16.msra.mxu0 %v4174
      %4587 = vmatprep.subr.bf16.mxu0 0
      %4588 = vmatpush1.bf16.msra.mxu0 %v4175
      %4589 = vmatprep.subr.bf16.mxu0 0
      %4590 = vmatpush1.bf16.msra.mxu0 %v4176
      %4591 = vmatprep.subr.bf16.mxu0 0
      %4592 = vmatpush1.bf16.msra.mxu0 %v4177
      %4593 = vmatprep.subr.bf16.mxu0 0
      %4594 = vmatpush1.bf16.msra.mxu0 %v4178
      %4595 = vmatprep.mubr.bf16.mxu0 %v3289
      %4596 = vmatmul.mubr.bf16.gmra.mrb[0].mxu0 %v3288
      %v4597 = vpop.f32.mrb[0].mxu0
      %v4598 = vadd.f32 %v4558, %v4597
      %v4599 = vpop.f32.mrb[0].mxu0
      %v4600 = vpop.f32.mrb[0].mxu0
      %v4601 = vpop.f32.mrb[0].mxu0
      %4602 = vdwg.mxu0
      %4603 = vmatprep.subr.bf16.mxu0 0
      %4604 = vmatpush1.bf16.msra.mxu0 %v4179
      %4605 = vmatprep.subr.bf16.mxu0 0
      %4606 = vmatpush1.bf16.msra.mxu0 %v4180
      %4607 = vmatprep.subr.bf16.mxu0 0
      %4608 = vmatpush1.bf16.msra.mxu0 %v4181
      %4609 = vmatprep.subr.bf16.mxu0 0
      %4610 = vmatpush1.bf16.msra.mxu0 %v4182
      %4611 = vmatprep.subr.bf16.mxu0 0
      %4612 = vmatpush1.bf16.msra.mxu0 %v4183
      %4613 = vmatprep.subr.bf16.mxu0 0
      %4614 = vmatpush1.bf16.msra.mxu0 %v4184
      %4615 = vmatprep.subr.bf16.mxu0 0
      %4616 = vmatpush1.bf16.msra.mxu0 %v4185
      %4617 = vmatprep.subr.bf16.mxu0 0
      %4618 = vmatpush1.bf16.msra.mxu0 %v4186
      %4619 = vmatprep.subr.bf16.mxu0 0
      %4620 = vmatpush1.bf16.msra.mxu0 %v4187
      %4621 = vmatprep.subr.bf16.mxu0 0
      %4622 = vmatpush1.bf16.msra.mxu0 %v4188
      %4623 = vmatprep.subr.bf16.mxu0 0
      %4624 = vmatpush1.bf16.msra.mxu0 %v4189
      %4625 = vmatprep.subr.bf16.mxu0 0
      %4626 = vmatpush1.bf16.msra.mxu0 %v4190
      %4627 = vmatprep.subr.bf16.mxu0 0
      %4628 = vmatpush1.bf16.msra.mxu0 %v4191
      %4629 = vmatprep.subr.bf16.mxu0 0
      %4630 = vmatpush1.bf16.msra.mxu0 %v4192
      %4631 = vmatprep.subr.bf16.mxu0 0
      %4632 = vmatpush1.bf16.msra.mxu0 %v4193
      %4633 = vmatprep.subr.bf16.mxu0 0
      %4634 = vmatpush1.bf16.msra.mxu0 %v4194
      %4635 = vmatprep.mubr.bf16.mxu0 %v3291
      %4636 = vmatmul.mubr.bf16.gmra.mrb[0].mxu0 %v3290
      %v4637 = vpop.f32.mrb[0].mxu0
      %v4638 = vadd.f32 %v4598, %v4637
      %v4639 = vpop.f32.mrb[0].mxu0
      %v4640 = vpop.f32.mrb[0].mxu0
      %v4641 = vpop.f32.mrb[0].mxu0
      %4642 = vdwg.mxu0
      %v4643 = vld [vmem:[%s18] sm:$0x1]
      %v4644 = vld [vmem:[%s19] sm:$0x1]
      %v4645 = vadd.f32 %v2651, %v4638
      %v4646 = vsel %vm752, %v4645, 0.0
      %4647 = vadd.xlane.f32.xlu0 %v4646
      %v4648 = vpop.xlane.xlu0 %4647
      %v4649 = vmul.f32 %v4648, %v2471
      %v4650 = vsub.f32 %v4645, %v4649
      %v4651 = vmul.f32 %v4650, %v4650
      %v4652 = vsel %vm752, %v4651, 0.0
      %4653 = vadd.xlane.f32.xlu0 %v4652
      %v4654 = vpop.xlane.xlu0 %4653
      %v4655 = vmul.f32 %v4654, %v2471
      %v4656 = vadd.f32 %v4655, 1e-05
      %v4657 = vrsqrt.pop %v4656
      %v4658 = vmul.f32 %v4650, %v4657
      %v4660 = vlaneseq
      %v4661 = vshrl.u32 %v4660, 7
      %v4662 = vsub.s32 0, %v4661
      %v4663 = vrot.slane %v4643, %v4662
      %v4665 = vmul.f32 %v4658, %v4663
      %v4667 = vlaneseq
      %v4668 = vshrl.u32 %v4667, 7
      %v4669 = vsub.s32 0, %v4668
      %v4670 = vrot.slane %v4644, %v4669
      %v4672 = vadd.f32 %v4665, %v4670
      %4673 = vst.msk [vmem:[%s638] sm:$0xff] %vm752, %v4672
      %p4674 = scmp.lt.s32.totalorder %s31, 1
      %s4675 = scalar_select %p4674, %s31, 1
      %s4676 = smul.addr %s4675, 8
      %s4677 = scalar_lea.vmem %s20, %s4676
      // Predicated region
      $region101: #{graph_captioning_forward.5} parent=99 // pred_check
        %p4678 = pneg %p479
      $region102: #{graph_captioning_forward.5} parent=99 // pred_check_branch
        %4680 = sbr.rel (%p4678) target = $region104
      $region103: #{graph_captioning_forward.5} parent=99 // pred_region
        _
      $region104: #{graph_captioning_forward.5} parent=99 // pred_fallthru
        _
    $region100: #{graph_captioning_forward.5} parent=5 // pred_fallthru
      _
    %p4681 = scmp.le.s32.totalorder 2, %s26
    // Predicated region
    $region105: #{graph_captioning_forward.5} parent=5 // pred_check
      %p4682 = pneg %p4681
    $region106: #{graph_captioning_forward.5} parent=5 // pred_check_branch
      %4684 = sbr.rel (%p4682) target = $region108
    $region107: #{graph_captioning_forward.5} parent=5 // pred_region
      %s4685 = ssub.s32 %s26, 2
      // Predicated region
      $region109: #{graph_captioning_forward.5} parent=107 // pred_check
        %p4686 = pneg %p485
      $region110: #{graph_captioning_forward.5} parent=107 // pred_check_branch
        %4688 = sbr.rel (%p4686) target = $region112
      $region111: #{graph_captioning_forward.5} parent=107 // pred_region
        %p4689 = scmp.lt.s32.totalorder %s32, 1
        %s4690 = scalar_select %p4689, %s32, 1
        %s4691 = smul.addr %s4690, 8
        %s4692 = scalar_lea.vmem %s20, %s4691
      $region112: #{graph_captioning_forward.5} parent=107 // pred_fallthru
        _
    $region108: #{graph_captioning_forward.5} parent=5 // pred_fallthru
      _
  $region6: #{graph_captioning_forward.5} parent=0 // loop_footer
    %s30 = sadd.s32 1, %s26
  $region7: #{graph_captioning_forward.5} parent=0 // loop_footer_branch
    %25 = sbr.rel target = $region3
  $region8: #{graph_captioning_forward.5} parent=0 // loop_exit
    _

</llo_original>
